<compile_context>
chip_gen: v6e
topology: v6e:2x2x1
jax: 0.10.0
libtpu: 0.0.40
codegen_flags: <defaults>
</compile_context>

<pallas_src>
import jax
import jax.numpy as jnp
from jax.experimental import pallas as pl
from jax.experimental.pallas import tpu as pltpu

# ---- model dims (fixed by the module definition) ----
C_IN = 2048
C_MID = 512
C_OUT = 128
SP_H = 10
SP_W = 10
P = SP_H * SP_W              # 100 spatial positions (fc expects 128*100 inputs)
K_FC = C_OUT * P             # 12800
BN_EPS = 1e-5                # torch BatchNorm2d default eps

# ---- demo shapes ----
BATCH = 2
SEQ = 4                      # the "T" axis of (B, T, 2048, 10, 10)
OUTPUT_SIZE = 128            # constructor arg; chosen lane-dense (128 lanes)

# ---- tiling ----
ROW_TILE = 200               # rows per grid step in the conv kernel (mult. of 8)
K_TILE = 1280                # fc contraction tile (mult. of 128, divides 12800)


# --------------------------------------------------------------------------
# Kernel 1: fused 1x1 conv -> BN -> ReLU -> 1x1 conv -> BN -> ReLU
# rows on sublanes, channels on lanes.
# --------------------------------------------------------------------------
def conv_bn_relu_kernel(x_ref, w1_ref, s1_ref, c1_ref, w2_ref, s2_ref, c2_ref,
                        o_ref):
    h = jnp.dot(x_ref[...], w1_ref[...],
                preferred_element_type=jnp.float32)          # (ROW_TILE, C_MID)
    h = jnp.maximum(h * s1_ref[...] + c1_ref[...], 0.0)      # conv bias+BN+ReLU
    h = jnp.dot(h, w2_ref[...],
                preferred_element_type=jnp.float32)          # (ROW_TILE, C_OUT)
    o_ref[...] = jnp.maximum(h * s2_ref[...] + c2_ref[...], 0.0)


# --------------------------------------------------------------------------
# Kernel 2: fc over the flattened (channel, pixel) features.
# Reduction over K tiled on the grid, VMEM accumulator (P3 pattern).
# --------------------------------------------------------------------------
def fc_kernel(x_ref, w_ref, b_ref, o_ref, acc_ref):
    k = pl.program_id(0)

    @pl.when(k == 0)
    def _():
        acc_ref[...] = jnp.zeros_like(acc_ref)

    acc_ref[...] += jnp.dot(x_ref[...], w_ref[...],
                            preferred_element_type=jnp.float32)

    @pl.when(k == pl.num_programs(0) - 1)
    def _():
        o_ref[...] = acc_ref[...] + b_ref[...]


def img_feature_embedding(visual_input, params):
    """visual_input: (B, T, 2048, 10, 10) f32 -> (B, T, OUTPUT_SIZE) f32."""
    (w1, b1, g1, be1, m1, v1,
     w2, b2, g2, be2, m2, v2,
     wfc, bfc) = params

    b, t, c, hh, ww = visual_input.shape
    n = b * t
    p = hh * ww
    rows = n * p
    o = wfc.shape[0]
    assert c == C_IN and p == P and rows % ROW_TILE == 0

    # ---- wrapper-side layout plumbing (one-time) ----
    # activations: rows = (sample, pixel), lanes = channels
    x = visual_input.reshape(n, c, p).transpose(0, 2, 1).reshape(rows, c)
    x = x.astype(jnp.float32)

    # fold conv bias + BatchNorm(eval) into a per-channel scale/shift
    s1 = (g1 / jnp.sqrt(v1 + BN_EPS)).astype(jnp.float32)
    c1 = ((b1 - m1) * s1 + be1).astype(jnp.float32)
    s2 = (g2 / jnp.sqrt(v2 + BN_EPS)).astype(jnp.float32)
    c2 = ((b2 - m2) * s2 + be2).astype(jnp.float32)

    w1t = w1.reshape(C_MID, C_IN).T.astype(jnp.float32)       # (2048, 512)
    w2t = w2.reshape(C_OUT, C_MID).T.astype(jnp.float32)      # (512, 128)

    # fc weight re-ordered so row index = pixel*C_OUT + channel, matching the
    # row-major flatten of the conv-kernel output below.
    wfc_r = (wfc.reshape(o, C_OUT, p).transpose(2, 1, 0)
             .reshape(p * C_OUT, o).astype(jnp.float32))      # (12800, O)
    bfc2 = bfc.reshape(1, o).astype(jnp.float32)

    # ---------------- kernel 1: convs + BN + ReLU ----------------
    n_row_tiles = rows // ROW_TILE
    conv_out = pl.pallas_call(
        conv_bn_relu_kernel,
        out_shape=jax.ShapeDtypeStruct((rows, C_OUT), jnp.float32),
        grid=(n_row_tiles,),
        in_specs=[
            pl.BlockSpec((ROW_TILE, C_IN), lambda i: (i, 0)),   # x tile (streams)
            pl.BlockSpec((C_IN, C_MID), lambda i: (0, 0)),      # W1^T (resident)
            pl.BlockSpec((1, C_MID), lambda i: (0, 0)),         # scale1
            pl.BlockSpec((1, C_MID), lambda i: (0, 0)),         # shift1
            pl.BlockSpec((C_MID, C_OUT), lambda i: (0, 0)),     # W2^T (resident)
            pl.BlockSpec((1, C_OUT), lambda i: (0, 0)),         # scale2
            pl.BlockSpec((1, C_OUT), lambda i: (0, 0)),         # shift2
        ],
        out_specs=pl.BlockSpec((ROW_TILE, C_OUT), lambda i: (i, 0)),
        compiler_params=pltpu.CompilerParams(
            dimension_semantics=("parallel",),
            vmem_limit_bytes=48 * 1024 * 1024),
    )(x, w1t, s1.reshape(1, C_MID), c1.reshape(1, C_MID),
      w2t, s2.reshape(1, C_OUT), c2.reshape(1, C_OUT))

    # ---------------- kernel 2: fc ----------------
    # (rows, C_OUT) -> (N, P*C_OUT): flat index = pixel*128 + channel (matches wfc_r)
    h2_flat = conv_out.reshape(n, p * C_OUT)

    n_k_tiles = K_FC // K_TILE
    out = pl.pallas_call(
        fc_kernel,
        out_shape=jax.ShapeDtypeStruct((n, o), jnp.float32),
        grid=(n_k_tiles,),
        in_specs=[
            pl.BlockSpec((n, K_TILE), lambda k: (0, k)),        # activations
            pl.BlockSpec((K_TILE, o), lambda k: (k, 0)),        # fc weight (streams)
            pl.BlockSpec((1, o), lambda k: (0, 0)),             # fc bias
        ],
        out_specs=pl.BlockSpec((n, o), lambda k: (0, 0)),
        scratch_shapes=[pltpu.VMEM((n, o), jnp.float32)],
        compiler_params=pltpu.CompilerParams(
            dimension_semantics=("arbitrary",)),
    )(h2_flat, wfc_r, bfc2)

    return out.reshape(b, t, o)


# --------------------------------------------------------------------------
# Pure-JAX reference mirroring the torch forward (channel-major layout).
# --------------------------------------------------------------------------
def _reference(visual_input, params):
    (w1, b1, g1, be1, m1, v1,
     w2, b2, g2, be2, m2, v2,
     wfc, bfc) = params
    b, t, c, hh, ww = visual_input.shape
    n = b * t
    hp = jax.lax.Precision.HIGHEST

    def conv_bn_relu(z, w, bias, g, be, m, v):
        z = jnp.einsum('oc,ncp->nop', w, z, precision=hp) + bias[None, :, None]
        z = (z - m[None, :, None]) / jnp.sqrt(v[None, :, None] + BN_EPS)
        z = z * g[None, :, None] + be[None, :, None]
        return jnp.maximum(z, 0.0)

    z = visual_input.reshape(n, c, hh * ww)                    # (N, 2048, 100)
    z = conv_bn_relu(z, w1.reshape(C_MID, C_IN), b1, g1, be1, m1, v1)
    z = conv_bn_relu(z, w2.reshape(C_OUT, C_MID), b2, g2, be2, m2, v2)
    flat = z.reshape(n, -1)                                    # torch .view(N, -1)
    out = jnp.dot(flat, wfc.T, precision=hp) + bfc
    return out.reshape(b, t, -1)


if __name__ == "__main__":
    ks = jax.random.split(jax.random.PRNGKey(0), 15)

    # Conv2d(2048, 512, 1) + BatchNorm2d(512)
    w1 = 0.02 * jax.random.normal(ks[0], (C_MID, C_IN), jnp.float32)
    b1 = 0.02 * jax.random.normal(ks[1], (C_MID,), jnp.float32)
    g1 = 1.0 + 0.1 * jax.random.normal(ks[2], (C_MID,), jnp.float32)
    be1 = 0.1 * jax.random.normal(ks[3], (C_MID,), jnp.float32)
    m1 = 0.1 * jax.random.normal(ks[4], (C_MID,), jnp.float32)
    v1 = jax.random.uniform(ks[5], (C_MID,), jnp.float32, 0.5, 1.5)

    # Conv2d(512, 128, 1) + BatchNorm2d(128)
    w2 = 0.02 * jax.random.normal(ks[6], (C_OUT, C_MID), jnp.float32)
    b2 = 0.02 * jax.random.normal(ks[7], (C_OUT,), jnp.float32)
    g2 = 1.0 + 0.1 * jax.random.normal(ks[8], (C_OUT,), jnp.float32)
    be2 = 0.1 * jax.random.normal(ks[9], (C_OUT,), jnp.float32)
    m2 = 0.1 * jax.random.normal(ks[10], (C_OUT,), jnp.float32)
    v2 = jax.random.uniform(ks[11], (C_OUT,), jnp.float32, 0.5, 1.5)

    # Linear(128*100, OUTPUT_SIZE)
    wfc = 0.02 * jax.random.normal(ks[12], (OUTPUT_SIZE, K_FC), jnp.float32)
    bfc = 0.02 * jax.random.normal(ks[13], (OUTPUT_SIZE,), jnp.float32)

    visual_input = jax.random.normal(ks[14], (BATCH, SEQ, C_IN, SP_H, SP_W),
                                     jnp.float32)

    params = (w1, b1, g1, be1, m1, v1, w2, b2, g2, be2, m2, v2, wfc, bfc)

    out = img_feature_embedding(visual_input, params)
    out = jax.block_until_ready(out)
    assert out.shape == (BATCH, SEQ, OUTPUT_SIZE)

    ref = _reference(visual_input, params)
    # Tolerance accommodates the TPU f32-matmul precision path (default bf16
    # one-pass on the MXU) possibly differing between the Pallas kernels and
    # the XLA reference; any layout/indexing/flatten-order bug shows as O(1)
    # error and would still fail this check.
    assert jnp.allclose(out, ref, atol=2e-2, rtol=2e-2), \
        float(jnp.max(jnp.abs(out - ref)))

    print("KERNEL_OK")
</pallas_src>

<mosaic_0001>
module attributes {stable_mosaic.version = 11 : i64} {
  func.func @conv_bn_relu_kernel(%arg0: i32, %arg1: memref<200x2048xf32, #tpu.memory_space<vmem>>, %arg2: memref<2048x512xf32, #tpu.memory_space<vmem>>, %arg3: memref<1x512xf32, #tpu.memory_space<vmem>>, %arg4: memref<1x512xf32, #tpu.memory_space<vmem>>, %arg5: memref<512x128xf32, #tpu.memory_space<vmem>>, %arg6: memref<1x128xf32, #tpu.memory_space<vmem>>, %arg7: memref<1x128xf32, #tpu.memory_space<vmem>>, %arg8: memref<200x128xf32, #tpu.memory_space<vmem>>) attributes {dimension_semantics = [#tpu.dimension_semantics<parallel>], iteration_bounds = array<i64: 4>, scalar_prefetch = 0 : i64, scratch_operands = 0 : i64, tpu.core_type = #tpu.core_type<tc>, window_params = [{transform_indices = @transform_0, window_bounds = array<i64: 200, 2048>}, {pipeline_mode = #tpu.pipeline_mode<synchronous>, transform_indices = @transform_1, window_bounds = array<i64: 2048, 512>}, {pipeline_mode = #tpu.pipeline_mode<synchronous>, transform_indices = @transform_2, window_bounds = array<i64: 1, 512>}, {pipeline_mode = #tpu.pipeline_mode<synchronous>, transform_indices = @transform_3, window_bounds = array<i64: 1, 512>}, {pipeline_mode = #tpu.pipeline_mode<synchronous>, transform_indices = @transform_4, window_bounds = array<i64: 512, 128>}, {pipeline_mode = #tpu.pipeline_mode<synchronous>, transform_indices = @transform_5, window_bounds = array<i64: 1, 128>}, {pipeline_mode = #tpu.pipeline_mode<synchronous>, transform_indices = @transform_6, window_bounds = array<i64: 1, 128>}, {transform_indices = @transform_7, window_bounds = array<i64: 200, 128>}]} {
    %c0 = arith.constant 0 : index
    %c0_0 = arith.constant 0 : index
    %0 = vector.load %arg1[%c0, %c0_0] : memref<200x2048xf32, #tpu.memory_space<vmem>>, vector<200x2048xf32>
    %c0_1 = arith.constant 0 : index
    %c0_2 = arith.constant 0 : index
    %1 = vector.load %arg2[%c0_1, %c0_2] : memref<2048x512xf32, #tpu.memory_space<vmem>>, vector<2048x512xf32>
    %cst = arith.constant dense<0.000000e+00> : vector<200x512xf32>
    %2 = tpu.matmul %0, %1, %cst {dimension_numbers = #tpu.dot_dimension_numbers<[1], [0], [0], [1], [0, 0, 1, 1], [], []>} : vector<200x2048xf32>, vector<2048x512xf32>, vector<200x512xf32> -> vector<200x512xf32>
    %c0_3 = arith.constant 0 : index
    %c0_4 = arith.constant 0 : index
    %3 = vector.load %arg3[%c0_3, %c0_4] : memref<1x512xf32, #tpu.memory_space<vmem>>, vector<1x512xf32>
    %4 = vector.broadcast %3 : vector<1x512xf32> to vector<200x512xf32>
    %5 = arith.mulf %2, %4 : vector<200x512xf32>
    %c0_5 = arith.constant 0 : index
    %c0_6 = arith.constant 0 : index
    %6 = vector.load %arg4[%c0_5, %c0_6] : memref<1x512xf32, #tpu.memory_space<vmem>>, vector<1x512xf32>
    %7 = vector.broadcast %6 : vector<1x512xf32> to vector<200x512xf32>
    %8 = arith.addf %5, %7 : vector<200x512xf32>
    %cst_7 = arith.constant 0.000000e+00 : f32
    %9 = vector.broadcast %cst_7 : f32 to vector<200x512xf32>
    %10 = arith.maximumf %8, %9 : vector<200x512xf32>
    %c0_8 = arith.constant 0 : index
    %c0_9 = arith.constant 0 : index
    %11 = vector.load %arg5[%c0_8, %c0_9] : memref<512x128xf32, #tpu.memory_space<vmem>>, vector<512x128xf32>
    %cst_10 = arith.constant dense<0.000000e+00> : vector<200x128xf32>
    %12 = tpu.matmul %10, %11, %cst_10 {dimension_numbers = #tpu.dot_dimension_numbers<[1], [0], [0], [1], [0, 0, 1, 1], [], []>} : vector<200x512xf32>, vector<512x128xf32>, vector<200x128xf32> -> vector<200x128xf32>
    %c0_11 = arith.constant 0 : index
    %c0_12 = arith.constant 0 : index
    %13 = vector.load %arg6[%c0_11, %c0_12] : memref<1x128xf32, #tpu.memory_space<vmem>>, vector<1x128xf32>
    %14 = vector.broadcast %13 : vector<1x128xf32> to vector<200x128xf32>
    %15 = arith.mulf %12, %14 : vector<200x128xf32>
    %c0_13 = arith.constant 0 : index
    %c0_14 = arith.constant 0 : index
    %16 = vector.load %arg7[%c0_13, %c0_14] : memref<1x128xf32, #tpu.memory_space<vmem>>, vector<1x128xf32>
    %17 = vector.broadcast %16 : vector<1x128xf32> to vector<200x128xf32>
    %18 = arith.addf %15, %17 : vector<200x128xf32>
    %cst_15 = arith.constant 0.000000e+00 : f32
    %19 = vector.broadcast %cst_15 : f32 to vector<200x128xf32>
    %20 = arith.maximumf %18, %19 : vector<200x128xf32>
    %c0_16 = arith.constant 0 : index
    %c0_17 = arith.constant 0 : index
    %21 = vector.load %arg8[%c0_16, %c0_17] : memref<200x128xf32, #tpu.memory_space<vmem>>, vector<200x128xf32>
    tpu.vector_store %arg8[%c0_16, %c0_17], %20 {strides = array<i32>} : memref<200x128xf32, #tpu.memory_space<vmem>>, vector<200x128xf32>,
    return
  }
  func.func @transform_0(%arg0: i32) -> (i32, i32) {
    %c0_i32 = arith.constant 0 : i32
    %c0_i32_0 = arith.constant 0 : i32
    return %arg0, %c0_i32 : i32, i32
  }
  func.func @transform_1(%arg0: i32) -> (i32, i32) {
    %c0_i32 = arith.constant 0 : i32
    %c0_i32_0 = arith.constant 0 : i32
    %c0_i32_1 = arith.constant 0 : i32
    return %c0_i32, %c0_i32_0 : i32, i32
  }
  func.func @transform_2(%arg0: i32) -> (i32, i32) {
    %c0_i32 = arith.constant 0 : i32
    %c0_i32_0 = arith.constant 0 : i32
    %c0_i32_1 = arith.constant 0 : i32
    return %c0_i32, %c0_i32_0 : i32, i32
  }
  func.func @transform_3(%arg0: i32) -> (i32, i32) {
    %c0_i32 = arith.constant 0 : i32
    %c0_i32_0 = arith.constant 0 : i32
    %c0_i32_1 = arith.constant 0 : i32
    return %c0_i32, %c0_i32_0 : i32, i32
  }
  func.func @transform_4(%arg0: i32) -> (i32, i32) {
    %c0_i32 = arith.constant 0 : i32
    %c0_i32_0 = arith.constant 0 : i32
    %c0_i32_1 = arith.constant 0 : i32
    return %c0_i32, %c0_i32_0 : i32, i32
  }
  func.func @transform_5(%arg0: i32) -> (i32, i32) {
    %c0_i32 = arith.constant 0 : i32
    %c0_i32_0 = arith.constant 0 : i32
    %c0_i32_1 = arith.constant 0 : i32
    return %c0_i32, %c0_i32_0 : i32, i32
  }
  func.func @transform_6(%arg0: i32) -> (i32, i32) {
    %c0_i32 = arith.constant 0 : i32
    %c0_i32_0 = arith.constant 0 : i32
    %c0_i32_1 = arith.constant 0 : i32
    return %c0_i32, %c0_i32_0 : i32, i32
  }
  func.func @transform_7(%arg0: i32) -> (i32, i32) {
    %c0_i32 = arith.constant 0 : i32
    %c0_i32_0 = arith.constant 0 : i32
    return %arg0, %c0_i32 : i32, i32
  }
}

</mosaic_0001>

<llo_original>
// kernel: tpu_custom_call.1
$region0: #{tpu_custom_call.1}
  #allocation0 [shape = 'u32[]', space=smem, size = 0x4, offset = 0x4, fixed_abs, tag = 'smem constant byte address 0x4 - core index']
  #allocation1 [shape = 'u32[144,128]{1,0:T(1,128)}', space=vmem, size = 0x12000, scoped, tag = 'internal scratch']
  %s0 = inlined_call_operand.hbm [shape: f32[800,2048], index: 0, kind: input, shape index: {}]
  %s1 = inlined_call_operand.hbm [shape: f32[2048,512], index: 1, kind: input, shape index: {}]
  %s2 = inlined_call_operand.hbm [shape: f32[1,512], index: 2, kind: input, shape index: {}]
  %s3 = inlined_call_operand.hbm [shape: f32[1,512], index: 3, kind: input, shape index: {}]
  %s4 = inlined_call_operand.hbm [shape: f32[512,128], index: 4, kind: input, shape index: {}]
  %s5 = inlined_call_operand.hbm [shape: f32[1,128], index: 5, kind: input, shape index: {}]
  %s6 = inlined_call_operand.hbm [shape: f32[1,128], index: 6, kind: input, shape index: {}]
  %s7 = inlined_call_operand.hbm [shape: f32[800,128], index: 7, kind: output, shape index: {}]
  %s8 = sld [smem:[#allocation0]]
  $region89: #{tpu_custom_call.1} parent=0
    _
  %s10 = ssub.s32 1, %s8
  %s11 = scalar_select 0, %s10, %s8
  $region1: #{tpu_custom_call.1} parent=0
    #allocation2 [shape = 'u8[3276800]{0}', space=vmem, size = 0x320000, scoped, tag = 'input window, operand 0']
    #allocation3 [shape = 's32[2]{0}', space=sflag, size = 0x8, scoped, tag = 'scoped memory for tpu_custom_call.1']
    #allocation4 [shape = 's32[2]{0}', space=sflag, size = 0x8, scoped, tag = 'scoped memory for tpu_custom_call.1']
    #allocation5 [shape = 'u8[4194304]{0}', space=vmem, size = 0x400000, scoped, tag = 'input window, operand 1, single buffered']
    #allocation6 [shape = 's32[1]{0}', space=sflag, size = 0x4, scoped, tag = 'scoped memory for tpu_custom_call.1']
    #allocation7 [shape = 'u8[2048]{0}', space=vmem, size = 0x800, scoped, tag = 'input window, operand 2, single buffered']
    #allocation8 [shape = 'u8[2048]{0}', space=vmem, size = 0x800, scoped, tag = 'input window, operand 3, single buffered']
    #allocation9 [shape = 's32[1]{0}', space=sflag, size = 0x4, scoped, tag = 'scoped memory for tpu_custom_call.1']
    #allocation10 [shape = 'u8[262144]{0}', space=vmem, size = 0x40000, scoped, tag = 'input window, operand 4, single buffered']
    #allocation11 [shape = 'u8[512]{0}', space=vmem, size = 0x400, scoped, tag = 'input window, operand 5, single buffered']
    #allocation12 [shape = 's32[1]{0}', space=sflag, size = 0x4, scoped, tag = 'scoped memory for tpu_custom_call.1']
    #allocation13 [shape = 'u8[512]{0}', space=vmem, size = 0x400, scoped, tag = 'input window, operand 6, single buffered']
    #allocation14 [shape = 'u8[204800]{0}', space=vmem, size = 0x32000, scoped, tag = 'output window, operand 0']
    %12 = vsyncpa [#allocation3], 0
    %s13 = scalar_lea.sflag [#allocation3], 1
    %14 = vsyncpa %s13, 0
    %15 = vsyncpa [#allocation6], 0
    %16 = vsyncpa [#allocation9], 0
    %17 = vsyncpa [#allocation12], 0
    %18 = vsyncpa [#allocation4], 0
    %s19 = scalar_lea.sflag [#allocation4], 1
    %20 = vsyncpa %s19, 0
    loop: start=0, step=1, limit=6
    $region2: #{tpu_custom_call.1} parent=1 // loop_pre_header
      _
    $region3: #{tpu_custom_call.1} parent=1 // loop_header
      %s22 = sphi 0, %s26
      %p23 = scmp.ge.s32.totalorder %s22, 6
      %s32 = sphi 0, %s34
      %s35 = sphi 0, %s32
      %s36 = sphi 0, %s35
      %s52 = sphi 0, %s36
      %s56 = sphi 0, %s56
      %s58 = sphi 0, %s56
      %s59 = sphi 0, %s58
      %s73 = sphi 0, %s59
      %s77 = sphi 0, %s77
      %s79 = sphi 0, %s77
      %s80 = sphi 0, %s79
      %s94 = sphi 0, %s80
      %s98 = sphi 0, %s98
      %s100 = sphi 0, %s98
      %s101 = sphi 0, %s100
      %s115 = sphi 0, %s101
      %s119 = sphi 0, %s119
      %s121 = sphi 0, %s119
      %s122 = sphi 0, %s121
      %s136 = sphi 0, %s122
      %s140 = sphi 0, %s140
      %s142 = sphi 0, %s140
      %s143 = sphi 0, %s142
      %s157 = sphi 0, %s143
      %s161 = sphi 0, %s161
      %s163 = sphi 0, %s161
      %s164 = sphi 0, %s163
      %s178 = sphi 0, %s164
      %s184 = sphi 0, %s186
      %s187 = sphi 0, %s184
      %s188 = sphi 0, %s187
      %s204 = sphi 0, %s188
    $region4: #{tpu_custom_call.1} parent=1 // loop_header_branch
      %25 = sbr.rel (%p23) target = $region8
    $region5: #{tpu_custom_call.1} parent=1 // loop_body
      %s27 = ssub.s32 %s22, 1
      %s28 = ssub.s32 %s22, 2
      %s29 = sadd.s32 %s22, 1
      %s30 = ssub.s32 %s22, %s29
      %p31 = scmp.eq.s32.totalorder %s30, 0
      %s33 = sadd.s32 %s32, 1
      %s34 = scalar_select %p31, %s32, %s33
      %p37 = pneg %p31
      %p38 = scmp.eq.s32.totalorder %s22, 3
      %p39 = por %p37, %p38
      %p40 = scmp.ne.s32.totalorder %s32, %s35
      %p41 = scmp.eq.s32.totalorder %s22, 0
      %p42 = por %p40, %p41
      %p43 = scmp.ne.s32.totalorder %s32, %s35
      %p44 = scmp.eq.s32.totalorder %s27, 3
      %p45 = por %p43, %p44
      %p46 = scmp.ne.s32.totalorder %s35, %s36
      %p47 = scmp.eq.s32.totalorder %s27, 0
      %p48 = por %p46, %p47
      %p49 = scmp.ne.s32.totalorder %s35, %s36
      %p50 = scmp.eq.s32.totalorder %s28, 3
      %p51 = por %p49, %p50
      %p53 = scmp.ne.s32.totalorder %s36, %s52
      %p54 = scmp.eq.s32.totalorder %s28, 0
      %p55 = por %p53, %p54
      %s57 = sadd.s32 %s56, 1
      %p60 = scmp.eq.s32.totalorder %s22, 3
      %p61 = scmp.ne.s32.totalorder %s56, %s58
      %p62 = scmp.eq.s32.totalorder %s22, 0
      %p63 = por %p61, %p62
      %p64 = scmp.ne.s32.totalorder %s56, %s58
      %p65 = scmp.eq.s32.totalorder %s27, 3
      %p66 = por %p64, %p65
      %p67 = scmp.ne.s32.totalorder %s58, %s59
      %p68 = scmp.eq.s32.totalorder %s27, 0
      %p69 = por %p67, %p68
      %p70 = scmp.ne.s32.totalorder %s58, %s59
      %p71 = scmp.eq.s32.totalorder %s28, 3
      %p72 = por %p70, %p71
      %p74 = scmp.ne.s32.totalorder %s59, %s73
      %p75 = scmp.eq.s32.totalorder %s28, 0
      %p76 = por %p74, %p75
      %s78 = sadd.s32 %s77, 1
      %p81 = scmp.eq.s32.totalorder %s22, 3
      %p82 = scmp.ne.s32.totalorder %s77, %s79
      %p83 = scmp.eq.s32.totalorder %s22, 0
      %p84 = por %p82, %p83
      %p85 = scmp.ne.s32.totalorder %s77, %s79
      %p86 = scmp.eq.s32.totalorder %s27, 3
      %p87 = por %p85, %p86
      %p88 = scmp.ne.s32.totalorder %s79, %s80
      %p89 = scmp.eq.s32.totalorder %s27, 0
      %p90 = por %p88, %p89
      %p91 = scmp.ne.s32.totalorder %s79, %s80
      %p92 = scmp.eq.s32.totalorder %s28, 3
      %p93 = por %p91, %p92
      %p95 = scmp.ne.s32.totalorder %s80, %s94
      %p96 = scmp.eq.s32.totalorder %s28, 0
      %p97 = por %p95, %p96
      %s99 = sadd.s32 %s98, 1
      %p102 = scmp.eq.s32.totalorder %s22, 3
      %p103 = scmp.ne.s32.totalorder %s98, %s100
      %p104 = scmp.eq.s32.totalorder %s22, 0
      %p105 = por %p103, %p104
      %p106 = scmp.ne.s32.totalorder %s98, %s100
      %p107 = scmp.eq.s32.totalorder %s27, 3
      %p108 = por %p106, %p107
      %p109 = scmp.ne.s32.totalorder %s100, %s101
      %p110 = scmp.eq.s32.totalorder %s27, 0
      %p111 = por %p109, %p110
      %p112 = scmp.ne.s32.totalorder %s100, %s101
      %p113 = scmp.eq.s32.totalorder %s28, 3
      %p114 = por %p112, %p113
      %p116 = scmp.ne.s32.totalorder %s101, %s115
      %p117 = scmp.eq.s32.totalorder %s28, 0
      %p118 = por %p116, %p117
      %s120 = sadd.s32 %s119, 1
      %p123 = scmp.eq.s32.totalorder %s22, 3
      %p124 = scmp.ne.s32.totalorder %s119, %s121
      %p125 = scmp.eq.s32.totalorder %s22, 0
      %p126 = por %p124, %p125
      %p127 = scmp.ne.s32.totalorder %s119, %s121
      %p128 = scmp.eq.s32.totalorder %s27, 3
      %p129 = por %p127, %p128
      %p130 = scmp.ne.s32.totalorder %s121, %s122
      %p131 = scmp.eq.s32.totalorder %s27, 0
      %p132 = por %p130, %p131
      %p133 = scmp.ne.s32.totalorder %s121, %s122
      %p134 = scmp.eq.s32.totalorder %s28, 3
      %p135 = por %p133, %p134
      %p137 = scmp.ne.s32.totalorder %s122, %s136
      %p138 = scmp.eq.s32.totalorder %s28, 0
      %p139 = por %p137, %p138
      %s141 = sadd.s32 %s140, 1
      %p144 = scmp.eq.s32.totalorder %s22, 3
      %p145 = scmp.ne.s32.totalorder %s140, %s142
      %p146 = scmp.eq.s32.totalorder %s22, 0
      %p147 = por %p145, %p146
      %p148 = scmp.ne.s32.totalorder %s140, %s142
      %p149 = scmp.eq.s32.totalorder %s27, 3
      %p150 = por %p148, %p149
      %p151 = scmp.ne.s32.totalorder %s142, %s143
      %p152 = scmp.eq.s32.totalorder %s27, 0
      %p153 = por %p151, %p152
      %p154 = scmp.ne.s32.totalorder %s142, %s143
      %p155 = scmp.eq.s32.totalorder %s28, 3
      %p156 = por %p154, %p155
      %p158 = scmp.ne.s32.totalorder %s143, %s157
      %p159 = scmp.eq.s32.totalorder %s28, 0
      %p160 = por %p158, %p159
      %s162 = sadd.s32 %s161, 1
      %p165 = scmp.eq.s32.totalorder %s22, 3
      %p166 = scmp.ne.s32.totalorder %s161, %s163
      %p167 = scmp.eq.s32.totalorder %s22, 0
      %p168 = por %p166, %p167
      %p169 = scmp.ne.s32.totalorder %s161, %s163
      %p170 = scmp.eq.s32.totalorder %s27, 3
      %p171 = por %p169, %p170
      %p172 = scmp.ne.s32.totalorder %s163, %s164
      %p173 = scmp.eq.s32.totalorder %s27, 0
      %p174 = por %p172, %p173
      %p175 = scmp.ne.s32.totalorder %s163, %s164
      %p176 = scmp.eq.s32.totalorder %s28, 3
      %p177 = por %p175, %p176
      %p179 = scmp.ne.s32.totalorder %s164, %s178
      %p180 = scmp.eq.s32.totalorder %s28, 0
      %p181 = por %p179, %p180
      %s182 = ssub.s32 %s22, %s29
      %p183 = scmp.eq.s32.totalorder %s182, 0
      %s185 = sadd.s32 %s184, 1
      %s186 = scalar_select %p183, %s184, %s185
      %p189 = pneg %p183
      %p190 = scmp.eq.s32.totalorder %s22, 3
      %p191 = por %p189, %p190
      %p192 = scmp.ne.s32.totalorder %s184, %s187
      %p193 = scmp.eq.s32.totalorder %s22, 0
      %p194 = por %p192, %p193
      %p195 = scmp.ne.s32.totalorder %s184, %s187
      %p196 = scmp.eq.s32.totalorder %s27, 3
      %p197 = por %p195, %p196
      %p198 = scmp.ne.s32.totalorder %s187, %s188
      %p199 = scmp.eq.s32.totalorder %s27, 0
      %p200 = por %p198, %p199
      %p201 = scmp.ne.s32.totalorder %s187, %s188
      %p202 = scmp.eq.s32.totalorder %s28, 3
      %p203 = por %p201, %p202
      %p205 = scmp.ne.s32.totalorder %s188, %s204
      %p206 = scmp.eq.s32.totalorder %s28, 0
      %p207 = por %p205, %p206
      %p208 = scmp.le.s32.totalorder 1, %s22
      %p209 = scmp.lt.s32.totalorder %s22, 5
      %p210 = pnand %p208, %p209
      %p211 = pneg %p210
      // Predicated region
      $region9: #{tpu_custom_call.1} parent=5 // pred_check
        _
      $region10: #{tpu_custom_call.1} parent=5 // pred_check_branch
        %213 = sbr.rel (%p210) target = $region12
      $region11: #{tpu_custom_call.1} parent=5 // pred_region
        %s214 = ssub.s32 %s22, 1
        // Predicated region
        $region13: #{tpu_custom_call.1} parent=11 // pred_check
          %p215 = pneg %p69
        $region14: #{tpu_custom_call.1} parent=11 // pred_check_branch
          %217 = sbr.rel (%p215) target = $region16
        $region15: #{tpu_custom_call.1} parent=11 // pred_region
          %s219 = ssub.s32 131072, 131072
          %220 = vsyncadd [#allocation6], %s219
          %s221 = sshll.u32 [#allocation5], 4
          %s222 = int_to_ptr.vmem [resolvable:$true] %s221
          %227 = dma.hbm_to_vmem [thread:$0]  %s1, 131072, %s222, [#allocation6], 512, 512, 32
        $region16: #{tpu_custom_call.1} parent=11 // pred_fallthru
          _
        // Predicated region
        $region17: #{tpu_custom_call.1} parent=11 // pred_check
          %p228 = pneg %p90
        $region18: #{tpu_custom_call.1} parent=11 // pred_check_branch
          %230 = sbr.rel (%p228) target = $region20
        $region19: #{tpu_custom_call.1} parent=11 // pred_region
          %s232 = ssub.s32 64, 64
          %233 = vsyncadd [#allocation6], %s232
          %s235 = sshll.u32 [#allocation7], 4
          %s236 = int_to_ptr.vmem [resolvable:$true] %s235
          %238 = dma.hbm_to_vmem [thread:$0]  %s2, 64, %s236, [#allocation6]
        $region20: #{tpu_custom_call.1} parent=11 // pred_fallthru
          _
        // Predicated region
        $region21: #{tpu_custom_call.1} parent=11 // pred_check
          %p239 = pneg %p111
        $region22: #{tpu_custom_call.1} parent=11 // pred_check_branch
          %241 = sbr.rel (%p239) target = $region24
        $region23: #{tpu_custom_call.1} parent=11 // pred_region
          %s243 = ssub.s32 64, 64
          %244 = vsyncadd [#allocation9], %s243
          %s246 = sshll.u32 [#allocation8], 4
          %s247 = int_to_ptr.vmem [resolvable:$true] %s246
          %249 = dma.hbm_to_vmem [thread:$0]  %s3, 64, %s247, [#allocation9]
        $region24: #{tpu_custom_call.1} parent=11 // pred_fallthru
          _
        // Predicated region
        $region25: #{tpu_custom_call.1} parent=11 // pred_check
          %p250 = pneg %p132
        $region26: #{tpu_custom_call.1} parent=11 // pred_check_branch
          %252 = sbr.rel (%p250) target = $region28
        $region27: #{tpu_custom_call.1} parent=11 // pred_region
          %s254 = ssub.s32 8192, 8192
          %255 = vsyncadd [#allocation9], %s254
          %s256 = sshll.u32 [#allocation10], 4
          %s257 = int_to_ptr.vmem [resolvable:$true] %s256
          %262 = dma.hbm_to_vmem [thread:$0]  %s4, 8192, %s257, [#allocation9], 128, 128, 8
        $region28: #{tpu_custom_call.1} parent=11 // pred_fallthru
          _
        // Predicated region
        $region29: #{tpu_custom_call.1} parent=11 // pred_check
          %p263 = pneg %p153
        $region30: #{tpu_custom_call.1} parent=11 // pred_check_branch
          %265 = sbr.rel (%p263) target = $region32
        $region31: #{tpu_custom_call.1} parent=11 // pred_region
          %s267 = ssub.s32 16, 16
          %268 = vsyncadd [#allocation12], %s267
          %s270 = sshll.u32 [#allocation11], 4
          %s271 = int_to_ptr.vmem [resolvable:$true] %s270
          %273 = dma.hbm_to_vmem [thread:$0]  %s5, 16, %s271, [#allocation12]
        $region32: #{tpu_custom_call.1} parent=11 // pred_fallthru
          _
        // Predicated region
        $region33: #{tpu_custom_call.1} parent=11 // pred_check
          %p274 = pneg %p174
        $region34: #{tpu_custom_call.1} parent=11 // pred_check_branch
          %276 = sbr.rel (%p274) target = $region36
        $region35: #{tpu_custom_call.1} parent=11 // pred_region
          %s278 = ssub.s32 16, 16
          %279 = vsyncadd [#allocation12], %s278
          %s281 = sshll.u32 [#allocation13], 4
          %s282 = int_to_ptr.vmem [resolvable:$true] %s281
          %284 = dma.hbm_to_vmem [thread:$0]  %s6, 16, %s282, [#allocation12]
        $region36: #{tpu_custom_call.1} parent=11 // pred_fallthru
          _
      $region12: #{tpu_custom_call.1} parent=5 // pred_fallthru
        _
      %p285 = scmp.lt.s32.totalorder %s22, 4
      // Predicated region
      $region37: #{tpu_custom_call.1} parent=5 // pred_check
        %p286 = pneg %p285
      $region38: #{tpu_custom_call.1} parent=5 // pred_check_branch
        %288 = sbr.rel (%p286) target = $region40
      $region39: #{tpu_custom_call.1} parent=5 // pred_region
        // Predicated region
        $region41: #{tpu_custom_call.1} parent=39 // pred_check
          %p289 = pneg %p42
        $region42: #{tpu_custom_call.1} parent=39 // pred_check_branch
          %291 = sbr.rel (%p289) target = $region44
        $region43: #{tpu_custom_call.1} parent=39 // pred_region
          %s292 = sand.u32 %s32, 1
          %s293 = scalar_lea.sflag [#allocation3], %s292
          %s294 = sand.u32 %s32, 1
          %s295 = smul.addr %s294, 3200
          %s296 = scalar_lea.vmem [#allocation2], %s295
          %s297 = smul.u32 25, %s22
          %s299 = ssub.s32 51200, 51200
          %300 = vsyncadd %s293, %s299
          %s301 = smul.addr %s297, 16
          %s302 = smul.addr %s301, 128
          %s303 = scalar_lea.hbm %s0, %s302
          %s304 = sshll.u32 %s296, 4
          %s305 = int_to_ptr.vmem [resolvable:$true] %s304
          %310 = dma.hbm_to_vmem [thread:$0]  %s303, 51200, %s305, %s293, 2048, 2048, 128
        $region44: #{tpu_custom_call.1} parent=39 // pred_fallthru
          _
      $region40: #{tpu_custom_call.1} parent=5 // pred_fallthru
        _
      %p311 = scmp.le.s32.totalorder 1, %s22
      %p312 = scmp.lt.s32.totalorder %s22, 5
      %p313 = pnand %p311, %p312
      %p314 = pneg %p313
      // Predicated region
      $region45: #{tpu_custom_call.1} parent=5 // pred_check
        _
      $region46: #{tpu_custom_call.1} parent=5 // pred_check_branch
        %316 = sbr.rel (%p313) target = $region48
      $region47: #{tpu_custom_call.1} parent=5 // pred_region
        %s317 = ssub.s32 %s22, 1
        %s318 = sand.u32 %s35, 1
        %s319 = scalar_lea.sflag [#allocation3], %s318
        %s320 = sand.u32 %s35, 1
        %s321 = smul.addr %s320, 3200
        %s322 = scalar_lea.vmem [#allocation2], %s321
        // Predicated region
        $region49: #{tpu_custom_call.1} parent=47 // pred_check
          %p323 = pneg %p48
        $region50: #{tpu_custom_call.1} parent=47 // pred_check_branch
          %325 = sbr.rel (%p323) target = $region52
        $region51: #{tpu_custom_call.1} parent=47 // pred_region
          %326 = dma.done %s319, 51200
        $region52: #{tpu_custom_call.1} parent=47 // pred_fallthru
          _
        // Predicated region
        $region53: #{tpu_custom_call.1} parent=47 // pred_check
          %p327 = pneg %p69
        $region54: #{tpu_custom_call.1} parent=47 // pred_check_branch
          %329 = sbr.rel (%p327) target = $region56
        $region55: #{tpu_custom_call.1} parent=47 // pred_region
          %330 = dma.done [#allocation6], 131072
        $region56: #{tpu_custom_call.1} parent=47 // pred_fallthru
          _
        // Predicated region
        $region57: #{tpu_custom_call.1} parent=47 // pred_check
          %p331 = pneg %p90
        $region58: #{tpu_custom_call.1} parent=47 // pred_check_branch
          %333 = sbr.rel (%p331) target = $region60
        $region59: #{tpu_custom_call.1} parent=47 // pred_region
          %334 = dma.done [#allocation6], 64
        $region60: #{tpu_custom_call.1} parent=47 // pred_fallthru
          _
        // Predicated region
        $region61: #{tpu_custom_call.1} parent=47 // pred_check
          %p335 = pneg %p111
        $region62: #{tpu_custom_call.1} parent=47 // pred_check_branch
          %337 = sbr.rel (%p335) target = $region64
        $region63: #{tpu_custom_call.1} parent=47 // pred_region
          %338 = dma.done [#allocation9], 64
        $region64: #{tpu_custom_call.1} parent=47 // pred_fallthru
          _
        // Predicated region
        $region65: #{tpu_custom_call.1} parent=47 // pred_check
          %p339 = pneg %p132
        $region66: #{tpu_custom_call.1} parent=47 // pred_check_branch
          %341 = sbr.rel (%p339) target = $region68
        $region67: #{tpu_custom_call.1} parent=47 // pred_region
          %342 = dma.done [#allocation9], 8192
        $region68: #{tpu_custom_call.1} parent=47 // pred_fallthru
          _
        // Predicated region
        $region69: #{tpu_custom_call.1} parent=47 // pred_check
          %p343 = pneg %p153
        $region70: #{tpu_custom_call.1} parent=47 // pred_check_branch
          %345 = sbr.rel (%p343) target = $region72
        $region71: #{tpu_custom_call.1} parent=47 // pred_region
          %346 = dma.done [#allocation12], 16
        $region72: #{tpu_custom_call.1} parent=47 // pred_fallthru
          _
        // Predicated region
        $region73: #{tpu_custom_call.1} parent=47 // pred_check
          %p347 = pneg %p174
        $region74: #{tpu_custom_call.1} parent=47 // pred_check_branch
          %349 = sbr.rel (%p347) target = $region76
        $region75: #{tpu_custom_call.1} parent=47 // pred_region
          %350 = dma.done [#allocation12], 16
        $region76: #{tpu_custom_call.1} parent=47 // pred_fallthru
          _
        %s351 = sand.u32 %s35, 1
        %s352 = scalar_lea.sflag [#allocation3], %s351
        %s353 = sand.u32 %s35, 1
        %s354 = smul.addr %s353, 3200
        %s355 = scalar_lea.vmem [#allocation2], %s354
        %p356 = pneg %p48
        %p357 = pneg %p45
        %p358 = pneg %p69
        %p359 = pneg %p66
        %p360 = pneg %p90
        %p361 = pneg %p87
        %p362 = pneg %p111
        %p363 = pneg %p108
        %p364 = pneg %p132
        %p365 = pneg %p129
        %p366 = pneg %p153
        %p367 = pneg %p150
        %p368 = pneg %p174
        %p369 = pneg %p171
        %p370 = pneg %p200
        %p371 = pneg %p197
        %s372 = sand.u32 %s187, 1
        %s373 = scalar_lea.sflag [#allocation4], %s372
        %s374 = sand.u32 %s187, 1
        %s375 = smul.addr %s374, 200
        %s376 = scalar_lea.vmem [#allocation14], %s375
        %s377 = smul.u32 25, %s27
        %s378 = smul.u32 25, %s27
        %v379 = vld [vmem:[%s322] sm:$0xff]
        %v380 = vld [vmem:[%s322 + $0x8] sm:$0xff]
        %v381 = vld [vmem:[%s322 + $0x10] sm:$0xff]
        %v382 = vld [vmem:[%s322 + $0x18] sm:$0xff]
        %v383 = vld [vmem:[%s322 + $0x20] sm:$0xff]
        %v384 = vld [vmem:[%s322 + $0x28] sm:$0xff]
        %v385 = vld [vmem:[%s322 + $0x30] sm:$0xff]
        %v386 = vld [vmem:[%s322 + $0x38] sm:$0xff]
        %v387 = vld [vmem:[%s322 + $0x40] sm:$0xff]
        %v388 = vld [vmem:[%s322 + $0x48] sm:$0xff]
        %v389 = vld [vmem:[%s322 + $0x50] sm:$0xff]
        %v390 = vld [vmem:[%s322 + $0x58] sm:$0xff]
        %v391 = vld [vmem:[%s322 + $0x60] sm:$0xff]
        %v392 = vld [vmem:[%s322 + $0x68] sm:$0xff]
        %v393 = vld [vmem:[%s322 + $0x70] sm:$0xff]
        %v394 = vld [vmem:[%s322 + $0x78] sm:$0xff]
        %v395 = vld [vmem:[%s322 + $0x80] sm:$0xff]
        %v396 = vld [vmem:[%s322 + $0x88] sm:$0xff]
        %v397 = vld [vmem:[%s322 + $0x90] sm:$0xff]
        %v398 = vld [vmem:[%s322 + $0x98] sm:$0xff]
        %v399 = vld [vmem:[%s322 + $0xa0] sm:$0xff]
        %v400 = vld [vmem:[%s322 + $0xa8] sm:$0xff]
        %v401 = vld [vmem:[%s322 + $0xb0] sm:$0xff]
        %v402 = vld [vmem:[%s322 + $0xb8] sm:$0xff]
        %v403 = vld [vmem:[%s322 + $0xc0] sm:$0xff]
        %v404 = vld [vmem:[%s322 + $0xc8] sm:$0xff]
        %v405 = vld [vmem:[%s322 + $0xd0] sm:$0xff]
        %v406 = vld [vmem:[%s322 + $0xd8] sm:$0xff]
        %v407 = vld [vmem:[%s322 + $0xe0] sm:$0xff]
        %v408 = vld [vmem:[%s322 + $0xe8] sm:$0xff]
        %v409 = vld [vmem:[%s322 + $0xf0] sm:$0xff]
        %v410 = vld [vmem:[%s322 + $0xf8] sm:$0xff]
        %v411 = vld [vmem:[%s322 + $0x100] sm:$0xff]
        %v412 = vld [vmem:[%s322 + $0x108] sm:$0xff]
        %v413 = vld [vmem:[%s322 + $0x110] sm:$0xff]
        %v414 = vld [vmem:[%s322 + $0x118] sm:$0xff]
        %v415 = vld [vmem:[%s322 + $0x120] sm:$0xff]
        %v416 = vld [vmem:[%s322 + $0x128] sm:$0xff]
        %v417 = vld [vmem:[%s322 + $0x130] sm:$0xff]
        %v418 = vld [vmem:[%s322 + $0x138] sm:$0xff]
        %v419 = vld [vmem:[%s322 + $0x140] sm:$0xff]
        %v420 = vld [vmem:[%s322 + $0x148] sm:$0xff]
        %v421 = vld [vmem:[%s322 + $0x150] sm:$0xff]
        %v422 = vld [vmem:[%s322 + $0x158] sm:$0xff]
        %v423 = vld [vmem:[%s322 + $0x160] sm:$0xff]
        %v424 = vld [vmem:[%s322 + $0x168] sm:$0xff]
        %v425 = vld [vmem:[%s322 + $0x170] sm:$0xff]
        %v426 = vld [vmem:[%s322 + $0x178] sm:$0xff]
        %v427 = vld [vmem:[%s322 + $0x180] sm:$0xff]
        %v428 = vld [vmem:[%s322 + $0x188] sm:$0xff]
        %v429 = vld [vmem:[%s322 + $0x190] sm:$0xff]
        %v430 = vld [vmem:[%s322 + $0x198] sm:$0xff]
        %v431 = vld [vmem:[%s322 + $0x1a0] sm:$0xff]
        %v432 = vld [vmem:[%s322 + $0x1a8] sm:$0xff]
        %v433 = vld [vmem:[%s322 + $0x1b0] sm:$0xff]
        %v434 = vld [vmem:[%s322 + $0x1b8] sm:$0xff]
        %v435 = vld [vmem:[%s322 + $0x1c0] sm:$0xff]
        %v436 = vld [vmem:[%s322 + $0x1c8] sm:$0xff]
        %v437 = vld [vmem:[%s322 + $0x1d0] sm:$0xff]
        %v438 = vld [vmem:[%s322 + $0x1d8] sm:$0xff]
        %v439 = vld [vmem:[%s322 + $0x1e0] sm:$0xff]
        %v440 = vld [vmem:[%s322 + $0x1e8] sm:$0xff]
        %v441 = vld [vmem:[%s322 + $0x1f0] sm:$0xff]
        %v442 = vld [vmem:[%s322 + $0x1f8] sm:$0xff]
        %v443 = vld [vmem:[%s322 + $0x200] sm:$0xff]
        %v444 = vld [vmem:[%s322 + $0x208] sm:$0xff]
        %v445 = vld [vmem:[%s322 + $0x210] sm:$0xff]
        %v446 = vld [vmem:[%s322 + $0x218] sm:$0xff]
        %v447 = vld [vmem:[%s322 + $0x220] sm:$0xff]
        %v448 = vld [vmem:[%s322 + $0x228] sm:$0xff]
        %v449 = vld [vmem:[%s322 + $0x230] sm:$0xff]
        %v450 = vld [vmem:[%s322 + $0x238] sm:$0xff]
        %v451 = vld [vmem:[%s322 + $0x240] sm:$0xff]
        %v452 = vld [vmem:[%s322 + $0x248] sm:$0xff]
        %v453 = vld [vmem:[%s322 + $0x250] sm:$0xff]
        %v454 = vld [vmem:[%s322 + $0x258] sm:$0xff]
        %v455 = vld [vmem:[%s322 + $0x260] sm:$0xff]
        %v456 = vld [vmem:[%s322 + $0x268] sm:$0xff]
        %v457 = vld [vmem:[%s322 + $0x270] sm:$0xff]
        %v458 = vld [vmem:[%s322 + $0x278] sm:$0xff]
        %v459 = vld [vmem:[%s322 + $0x280] sm:$0xff]
        %v460 = vld [vmem:[%s322 + $0x288] sm:$0xff]
        %v461 = vld [vmem:[%s322 + $0x290] sm:$0xff]
        %v462 = vld [vmem:[%s322 + $0x298] sm:$0xff]
        %v463 = vld [vmem:[%s322 + $0x2a0] sm:$0xff]
        %v464 = vld [vmem:[%s322 + $0x2a8] sm:$0xff]
        %v465 = vld [vmem:[%s322 + $0x2b0] sm:$0xff]
        %v466 = vld [vmem:[%s322 + $0x2b8] sm:$0xff]
        %v467 = vld [vmem:[%s322 + $0x2c0] sm:$0xff]
        %v468 = vld [vmem:[%s322 + $0x2c8] sm:$0xff]
        %v469 = vld [vmem:[%s322 + $0x2d0] sm:$0xff]
        %v470 = vld [vmem:[%s322 + $0x2d8] sm:$0xff]
        %v471 = vld [vmem:[%s322 + $0x2e0] sm:$0xff]
        %v472 = vld [vmem:[%s322 + $0x2e8] sm:$0xff]
        %v473 = vld [vmem:[%s322 + $0x2f0] sm:$0xff]
        %v474 = vld [vmem:[%s322 + $0x2f8] sm:$0xff]
        %v475 = vld [vmem:[%s322 + $0x300] sm:$0xff]
        %v476 = vld [vmem:[%s322 + $0x308] sm:$0xff]
        %v477 = vld [vmem:[%s322 + $0x310] sm:$0xff]
        %v478 = vld [vmem:[%s322 + $0x318] sm:$0xff]
        %v479 = vld [vmem:[%s322 + $0x320] sm:$0xff]
        %v480 = vld [vmem:[%s322 + $0x328] sm:$0xff]
        %v481 = vld [vmem:[%s322 + $0x330] sm:$0xff]
        %v482 = vld [vmem:[%s322 + $0x338] sm:$0xff]
        %v483 = vld [vmem:[%s322 + $0x340] sm:$0xff]
        %v484 = vld [vmem:[%s322 + $0x348] sm:$0xff]
        %v485 = vld [vmem:[%s322 + $0x350] sm:$0xff]
        %v486 = vld [vmem:[%s322 + $0x358] sm:$0xff]
        %v487 = vld [vmem:[%s322 + $0x360] sm:$0xff]
        %v488 = vld [vmem:[%s322 + $0x368] sm:$0xff]
        %v489 = vld [vmem:[%s322 + $0x370] sm:$0xff]
        %v490 = vld [vmem:[%s322 + $0x378] sm:$0xff]
        %v491 = vld [vmem:[%s322 + $0x380] sm:$0xff]
        %v492 = vld [vmem:[%s322 + $0x388] sm:$0xff]
        %v493 = vld [vmem:[%s322 + $0x390] sm:$0xff]
        %v494 = vld [vmem:[%s322 + $0x398] sm:$0xff]
        %v495 = vld [vmem:[%s322 + $0x3a0] sm:$0xff]
        %v496 = vld [vmem:[%s322 + $0x3a8] sm:$0xff]
        %v497 = vld [vmem:[%s322 + $0x3b0] sm:$0xff]
        %v498 = vld [vmem:[%s322 + $0x3b8] sm:$0xff]
        %v499 = vld [vmem:[%s322 + $0x3c0] sm:$0xff]
        %v500 = vld [vmem:[%s322 + $0x3c8] sm:$0xff]
        %v501 = vld [vmem:[%s322 + $0x3d0] sm:$0xff]
        %v502 = vld [vmem:[%s322 + $0x3d8] sm:$0xff]
        %v503 = vld [vmem:[%s322 + $0x3e0] sm:$0xff]
        %v504 = vld [vmem:[%s322 + $0x3e8] sm:$0xff]
        %v505 = vld [vmem:[%s322 + $0x3f0] sm:$0xff]
        %v506 = vld [vmem:[%s322 + $0x3f8] sm:$0xff]
        %v507 = vld [vmem:[%s322 + $0x400] sm:$0xff]
        %v508 = vld [vmem:[%s322 + $0x408] sm:$0xff]
        %v509 = vld [vmem:[%s322 + $0x410] sm:$0xff]
        %v510 = vld [vmem:[%s322 + $0x418] sm:$0xff]
        %v511 = vld [vmem:[%s322 + $0x420] sm:$0xff]
        %v512 = vld [vmem:[%s322 + $0x428] sm:$0xff]
        %v513 = vld [vmem:[%s322 + $0x430] sm:$0xff]
        %v514 = vld [vmem:[%s322 + $0x438] sm:$0xff]
        %v515 = vld [vmem:[%s322 + $0x440] sm:$0xff]
        %v516 = vld [vmem:[%s322 + $0x448] sm:$0xff]
        %v517 = vld [vmem:[%s322 + $0x450] sm:$0xff]
        %v518 = vld [vmem:[%s322 + $0x458] sm:$0xff]
        %v519 = vld [vmem:[%s322 + $0x460] sm:$0xff]
        %v520 = vld [vmem:[%s322 + $0x468] sm:$0xff]
        %v521 = vld [vmem:[%s322 + $0x470] sm:$0xff]
        %v522 = vld [vmem:[%s322 + $0x478] sm:$0xff]
        %v523 = vld [vmem:[%s322 + $0x480] sm:$0xff]
        %v524 = vld [vmem:[%s322 + $0x488] sm:$0xff]
        %v525 = vld [vmem:[%s322 + $0x490] sm:$0xff]
        %v526 = vld [vmem:[%s322 + $0x498] sm:$0xff]
        %v527 = vld [vmem:[%s322 + $0x4a0] sm:$0xff]
        %v528 = vld [vmem:[%s322 + $0x4a8] sm:$0xff]
        %v529 = vld [vmem:[%s322 + $0x4b0] sm:$0xff]
        %v530 = vld [vmem:[%s322 + $0x4b8] sm:$0xff]
        %v531 = vld [vmem:[%s322 + $0x4c0] sm:$0xff]
        %v532 = vld [vmem:[%s322 + $0x4c8] sm:$0xff]
        %v533 = vld [vmem:[%s322 + $0x4d0] sm:$0xff]
        %v534 = vld [vmem:[%s322 + $0x4d8] sm:$0xff]
        %v535 = vld [vmem:[%s322 + $0x4e0] sm:$0xff]
        %v536 = vld [vmem:[%s322 + $0x4e8] sm:$0xff]
        %v537 = vld [vmem:[%s322 + $0x4f0] sm:$0xff]
        %v538 = vld [vmem:[%s322 + $0x4f8] sm:$0xff]
        %v539 = vld [vmem:[%s322 + $0x500] sm:$0xff]
        %v540 = vld [vmem:[%s322 + $0x508] sm:$0xff]
        %v541 = vld [vmem:[%s322 + $0x510] sm:$0xff]
        %v542 = vld [vmem:[%s322 + $0x518] sm:$0xff]
        %v543 = vld [vmem:[%s322 + $0x520] sm:$0xff]
        %v544 = vld [vmem:[%s322 + $0x528] sm:$0xff]
        %v545 = vld [vmem:[%s322 + $0x530] sm:$0xff]
        %v546 = vld [vmem:[%s322 + $0x538] sm:$0xff]
        %v547 = vld [vmem:[%s322 + $0x540] sm:$0xff]
        %v548 = vld [vmem:[%s322 + $0x548] sm:$0xff]
        %v549 = vld [vmem:[%s322 + $0x550] sm:$0xff]
        %v550 = vld [vmem:[%s322 + $0x558] sm:$0xff]
        %v551 = vld [vmem:[%s322 + $0x560] sm:$0xff]
        %v552 = vld [vmem:[%s322 + $0x568] sm:$0xff]
        %v553 = vld [vmem:[%s322 + $0x570] sm:$0xff]
        %v554 = vld [vmem:[%s322 + $0x578] sm:$0xff]
        %v555 = vld [vmem:[%s322 + $0x580] sm:$0xff]
        %v556 = vld [vmem:[%s322 + $0x588] sm:$0xff]
        %v557 = vld [vmem:[%s322 + $0x590] sm:$0xff]
        %v558 = vld [vmem:[%s322 + $0x598] sm:$0xff]
        %v559 = vld [vmem:[%s322 + $0x5a0] sm:$0xff]
        %v560 = vld [vmem:[%s322 + $0x5a8] sm:$0xff]
        %v561 = vld [vmem:[%s322 + $0x5b0] sm:$0xff]
        %v562 = vld [vmem:[%s322 + $0x5b8] sm:$0xff]
        %v563 = vld [vmem:[%s322 + $0x5c0] sm:$0xff]
        %v564 = vld [vmem:[%s322 + $0x5c8] sm:$0xff]
        %v565 = vld [vmem:[%s322 + $0x5d0] sm:$0xff]
        %v566 = vld [vmem:[%s322 + $0x5d8] sm:$0xff]
        %v567 = vld [vmem:[%s322 + $0x5e0] sm:$0xff]
        %v568 = vld [vmem:[%s322 + $0x5e8] sm:$0xff]
        %v569 = vld [vmem:[%s322 + $0x5f0] sm:$0xff]
        %v570 = vld [vmem:[%s322 + $0x5f8] sm:$0xff]
        %v571 = vld [vmem:[%s322 + $0x600] sm:$0xff]
        %v572 = vld [vmem:[%s322 + $0x608] sm:$0xff]
        %v573 = vld [vmem:[%s322 + $0x610] sm:$0xff]
        %v574 = vld [vmem:[%s322 + $0x618] sm:$0xff]
        %v575 = vld [vmem:[%s322 + $0x620] sm:$0xff]
        %v576 = vld [vmem:[%s322 + $0x628] sm:$0xff]
        %v577 = vld [vmem:[%s322 + $0x630] sm:$0xff]
        %v578 = vld [vmem:[%s322 + $0x638] sm:$0xff]
        %v579 = vld [vmem:[%s322 + $0x640] sm:$0xff]
        %v580 = vld [vmem:[%s322 + $0x648] sm:$0xff]
        %v581 = vld [vmem:[%s322 + $0x650] sm:$0xff]
        %v582 = vld [vmem:[%s322 + $0x658] sm:$0xff]
        %v583 = vld [vmem:[%s322 + $0x660] sm:$0xff]
        %v584 = vld [vmem:[%s322 + $0x668] sm:$0xff]
        %v585 = vld [vmem:[%s322 + $0x670] sm:$0xff]
        %v586 = vld [vmem:[%s322 + $0x678] sm:$0xff]
        %v587 = vld [vmem:[%s322 + $0x680] sm:$0xff]
        %v588 = vld [vmem:[%s322 + $0x688] sm:$0xff]
        %v589 = vld [vmem:[%s322 + $0x690] sm:$0xff]
        %v590 = vld [vmem:[%s322 + $0x698] sm:$0xff]
        %v591 = vld [vmem:[%s322 + $0x6a0] sm:$0xff]
        %v592 = vld [vmem:[%s322 + $0x6a8] sm:$0xff]
        %v593 = vld [vmem:[%s322 + $0x6b0] sm:$0xff]
        %v594 = vld [vmem:[%s322 + $0x6b8] sm:$0xff]
        %v595 = vld [vmem:[%s322 + $0x6c0] sm:$0xff]
        %v596 = vld [vmem:[%s322 + $0x6c8] sm:$0xff]
        %v597 = vld [vmem:[%s322 + $0x6d0] sm:$0xff]
        %v598 = vld [vmem:[%s322 + $0x6d8] sm:$0xff]
        %v599 = vld [vmem:[%s322 + $0x6e0] sm:$0xff]
        %v600 = vld [vmem:[%s322 + $0x6e8] sm:$0xff]
        %v601 = vld [vmem:[%s322 + $0x6f0] sm:$0xff]
        %v602 = vld [vmem:[%s322 + $0x6f8] sm:$0xff]
        %v603 = vld [vmem:[%s322 + $0x700] sm:$0xff]
        %v604 = vld [vmem:[%s322 + $0x708] sm:$0xff]
        %v605 = vld [vmem:[%s322 + $0x710] sm:$0xff]
        %v606 = vld [vmem:[%s322 + $0x718] sm:$0xff]
        %v607 = vld [vmem:[%s322 + $0x720] sm:$0xff]
        %v608 = vld [vmem:[%s322 + $0x728] sm:$0xff]
        %v609 = vld [vmem:[%s322 + $0x730] sm:$0xff]
        %v610 = vld [vmem:[%s322 + $0x738] sm:$0xff]
        %v611 = vld [vmem:[%s322 + $0x740] sm:$0xff]
        %v612 = vld [vmem:[%s322 + $0x748] sm:$0xff]
        %v613 = vld [vmem:[%s322 + $0x750] sm:$0xff]
        %v614 = vld [vmem:[%s322 + $0x758] sm:$0xff]
        %v615 = vld [vmem:[%s322 + $0x760] sm:$0xff]
        %v616 = vld [vmem:[%s322 + $0x768] sm:$0xff]
        %v617 = vld [vmem:[%s322 + $0x770] sm:$0xff]
        %v618 = vld [vmem:[%s322 + $0x778] sm:$0xff]
        %v619 = vld [vmem:[%s322 + $0x780] sm:$0xff]
        %v620 = vld [vmem:[%s322 + $0x788] sm:$0xff]
        %v621 = vld [vmem:[%s322 + $0x790] sm:$0xff]
        %v622 = vld [vmem:[%s322 + $0x798] sm:$0xff]
        %v623 = vld [vmem:[%s322 + $0x7a0] sm:$0xff]
        %v624 = vld [vmem:[%s322 + $0x7a8] sm:$0xff]
        %v625 = vld [vmem:[%s322 + $0x7b0] sm:$0xff]
        %v626 = vld [vmem:[%s322 + $0x7b8] sm:$0xff]
        %v627 = vld [vmem:[%s322 + $0x7c0] sm:$0xff]
        %v628 = vld [vmem:[%s322 + $0x7c8] sm:$0xff]
        %v629 = vld [vmem:[%s322 + $0x7d0] sm:$0xff]
        %v630 = vld [vmem:[%s322 + $0x7d8] sm:$0xff]
        %v631 = vld [vmem:[%s322 + $0x7e0] sm:$0xff]
        %v632 = vld [vmem:[%s322 + $0x7e8] sm:$0xff]
        %v633 = vld [vmem:[%s322 + $0x7f0] sm:$0xff]
        %v634 = vld [vmem:[%s322 + $0x7f8] sm:$0xff]
        %v635 = vld [vmem:[%s322 + $0x800] sm:$0xff]
        %v636 = vld [vmem:[%s322 + $0x808] sm:$0xff]
        %v637 = vld [vmem:[%s322 + $0x810] sm:$0xff]
        %v638 = vld [vmem:[%s322 + $0x818] sm:$0xff]
        %v639 = vld [vmem:[%s322 + $0x820] sm:$0xff]
        %v640 = vld [vmem:[%s322 + $0x828] sm:$0xff]
        %v641 = vld [vmem:[%s322 + $0x830] sm:$0xff]
        %v642 = vld [vmem:[%s322 + $0x838] sm:$0xff]
        %v643 = vld [vmem:[%s322 + $0x840] sm:$0xff]
        %v644 = vld [vmem:[%s322 + $0x848] sm:$0xff]
        %v645 = vld [vmem:[%s322 + $0x850] sm:$0xff]
        %v646 = vld [vmem:[%s322 + $0x858] sm:$0xff]
        %v647 = vld [vmem:[%s322 + $0x860] sm:$0xff]
        %v648 = vld [vmem:[%s322 + $0x868] sm:$0xff]
        %v649 = vld [vmem:[%s322 + $0x870] sm:$0xff]
        %v650 = vld [vmem:[%s322 + $0x878] sm:$0xff]
        %v651 = vld [vmem:[%s322 + $0x880] sm:$0xff]
        %v652 = vld [vmem:[%s322 + $0x888] sm:$0xff]
        %v653 = vld [vmem:[%s322 + $0x890] sm:$0xff]
        %v654 = vld [vmem:[%s322 + $0x898] sm:$0xff]
        %v655 = vld [vmem:[%s322 + $0x8a0] sm:$0xff]
        %v656 = vld [vmem:[%s322 + $0x8a8] sm:$0xff]
        %v657 = vld [vmem:[%s322 + $0x8b0] sm:$0xff]
        %v658 = vld [vmem:[%s322 + $0x8b8] sm:$0xff]
        %v659 = vld [vmem:[%s322 + $0x8c0] sm:$0xff]
        %v660 = vld [vmem:[%s322 + $0x8c8] sm:$0xff]
        %v661 = vld [vmem:[%s322 + $0x8d0] sm:$0xff]
        %v662 = vld [vmem:[%s322 + $0x8d8] sm:$0xff]
        %v663 = vld [vmem:[%s322 + $0x8e0] sm:$0xff]
        %v664 = vld [vmem:[%s322 + $0x8e8] sm:$0xff]
        %v665 = vld [vmem:[%s322 + $0x8f0] sm:$0xff]
        %v666 = vld [vmem:[%s322 + $0x8f8] sm:$0xff]
        %v667 = vld [vmem:[%s322 + $0x900] sm:$0xff]
        %v668 = vld [vmem:[%s322 + $0x908] sm:$0xff]
        %v669 = vld [vmem:[%s322 + $0x910] sm:$0xff]
        %v670 = vld [vmem:[%s322 + $0x918] sm:$0xff]
        %v671 = vld [vmem:[%s322 + $0x920] sm:$0xff]
        %v672 = vld [vmem:[%s322 + $0x928] sm:$0xff]
        %v673 = vld [vmem:[%s322 + $0x930] sm:$0xff]
        %v674 = vld [vmem:[%s322 + $0x938] sm:$0xff]
        %v675 = vld [vmem:[%s322 + $0x940] sm:$0xff]
        %v676 = vld [vmem:[%s322 + $0x948] sm:$0xff]
        %v677 = vld [vmem:[%s322 + $0x950] sm:$0xff]
        %v678 = vld [vmem:[%s322 + $0x958] sm:$0xff]
        %v679 = vld [vmem:[%s322 + $0x960] sm:$0xff]
        %v680 = vld [vmem:[%s322 + $0x968] sm:$0xff]
        %v681 = vld [vmem:[%s322 + $0x970] sm:$0xff]
        %v682 = vld [vmem:[%s322 + $0x978] sm:$0xff]
        %v683 = vld [vmem:[%s322 + $0x980] sm:$0xff]
        %v684 = vld [vmem:[%s322 + $0x988] sm:$0xff]
        %v685 = vld [vmem:[%s322 + $0x990] sm:$0xff]
        %v686 = vld [vmem:[%s322 + $0x998] sm:$0xff]
        %v687 = vld [vmem:[%s322 + $0x9a0] sm:$0xff]
        %v688 = vld [vmem:[%s322 + $0x9a8] sm:$0xff]
        %v689 = vld [vmem:[%s322 + $0x9b0] sm:$0xff]
        %v690 = vld [vmem:[%s322 + $0x9b8] sm:$0xff]
        %v691 = vld [vmem:[%s322 + $0x9c0] sm:$0xff]
        %v692 = vld [vmem:[%s322 + $0x9c8] sm:$0xff]
        %v693 = vld [vmem:[%s322 + $0x9d0] sm:$0xff]
        %v694 = vld [vmem:[%s322 + $0x9d8] sm:$0xff]
        %v695 = vld [vmem:[%s322 + $0x9e0] sm:$0xff]
        %v696 = vld [vmem:[%s322 + $0x9e8] sm:$0xff]
        %v697 = vld [vmem:[%s322 + $0x9f0] sm:$0xff]
        %v698 = vld [vmem:[%s322 + $0x9f8] sm:$0xff]
        %v699 = vld [vmem:[%s322 + $0xa00] sm:$0xff]
        %v700 = vld [vmem:[%s322 + $0xa08] sm:$0xff]
        %v701 = vld [vmem:[%s322 + $0xa10] sm:$0xff]
        %v702 = vld [vmem:[%s322 + $0xa18] sm:$0xff]
        %v703 = vld [vmem:[%s322 + $0xa20] sm:$0xff]
        %v704 = vld [vmem:[%s322 + $0xa28] sm:$0xff]
        %v705 = vld [vmem:[%s322 + $0xa30] sm:$0xff]
        %v706 = vld [vmem:[%s322 + $0xa38] sm:$0xff]
        %v707 = vld [vmem:[%s322 + $0xa40] sm:$0xff]
        %v708 = vld [vmem:[%s322 + $0xa48] sm:$0xff]
        %v709 = vld [vmem:[%s322 + $0xa50] sm:$0xff]
        %v710 = vld [vmem:[%s322 + $0xa58] sm:$0xff]
        %v711 = vld [vmem:[%s322 + $0xa60] sm:$0xff]
        %v712 = vld [vmem:[%s322 + $0xa68] sm:$0xff]
        %v713 = vld [vmem:[%s322 + $0xa70] sm:$0xff]
        %v714 = vld [vmem:[%s322 + $0xa78] sm:$0xff]
        %v715 = vld [vmem:[%s322 + $0xa80] sm:$0xff]
        %v716 = vld [vmem:[%s322 + $0xa88] sm:$0xff]
        %v717 = vld [vmem:[%s322 + $0xa90] sm:$0xff]
        %v718 = vld [vmem:[%s322 + $0xa98] sm:$0xff]
        %v719 = vld [vmem:[%s322 + $0xaa0] sm:$0xff]
        %v720 = vld [vmem:[%s322 + $0xaa8] sm:$0xff]
        %v721 = vld [vmem:[%s322 + $0xab0] sm:$0xff]
        %v722 = vld [vmem:[%s322 + $0xab8] sm:$0xff]
        %v723 = vld [vmem:[%s322 + $0xac0] sm:$0xff]
        %v724 = vld [vmem:[%s322 + $0xac8] sm:$0xff]
        %v725 = vld [vmem:[%s322 + $0xad0] sm:$0xff]
        %v726 = vld [vmem:[%s322 + $0xad8] sm:$0xff]
        %v727 = vld [vmem:[%s322 + $0xae0] sm:$0xff]
        %v728 = vld [vmem:[%s322 + $0xae8] sm:$0xff]
        %v729 = vld [vmem:[%s322 + $0xaf0] sm:$0xff]
        %v730 = vld [vmem:[%s322 + $0xaf8] sm:$0xff]
        %v731 = vld [vmem:[%s322 + $0xb00] sm:$0xff]
        %v732 = vld [vmem:[%s322 + $0xb08] sm:$0xff]
        %v733 = vld [vmem:[%s322 + $0xb10] sm:$0xff]
        %v734 = vld [vmem:[%s322 + $0xb18] sm:$0xff]
        %v735 = vld [vmem:[%s322 + $0xb20] sm:$0xff]
        %v736 = vld [vmem:[%s322 + $0xb28] sm:$0xff]
        %v737 = vld [vmem:[%s322 + $0xb30] sm:$0xff]
        %v738 = vld [vmem:[%s322 + $0xb38] sm:$0xff]
        %v739 = vld [vmem:[%s322 + $0xb40] sm:$0xff]
        %v740 = vld [vmem:[%s322 + $0xb48] sm:$0xff]
        %v741 = vld [vmem:[%s322 + $0xb50] sm:$0xff]
        %v742 = vld [vmem:[%s322 + $0xb58] sm:$0xff]
        %v743 = vld [vmem:[%s322 + $0xb60] sm:$0xff]
        %v744 = vld [vmem:[%s322 + $0xb68] sm:$0xff]
        %v745 = vld [vmem:[%s322 + $0xb70] sm:$0xff]
        %v746 = vld [vmem:[%s322 + $0xb78] sm:$0xff]
        %v747 = vld [vmem:[%s322 + $0xb80] sm:$0xff]
        %v748 = vld [vmem:[%s322 + $0xb88] sm:$0xff]
        %v749 = vld [vmem:[%s322 + $0xb90] sm:$0xff]
        %v750 = vld [vmem:[%s322 + $0xb98] sm:$0xff]
        %v751 = vld [vmem:[%s322 + $0xba0] sm:$0xff]
        %v752 = vld [vmem:[%s322 + $0xba8] sm:$0xff]
        %v753 = vld [vmem:[%s322 + $0xbb0] sm:$0xff]
        %v754 = vld [vmem:[%s322 + $0xbb8] sm:$0xff]
        %v755 = vld [vmem:[%s322 + $0xbc0] sm:$0xff]
        %v756 = vld [vmem:[%s322 + $0xbc8] sm:$0xff]
        %v757 = vld [vmem:[%s322 + $0xbd0] sm:$0xff]
        %v758 = vld [vmem:[%s322 + $0xbd8] sm:$0xff]
        %v759 = vld [vmem:[%s322 + $0xbe0] sm:$0xff]
        %v760 = vld [vmem:[%s322 + $0xbe8] sm:$0xff]
        %v761 = vld [vmem:[%s322 + $0xbf0] sm:$0xff]
        %v762 = vld [vmem:[%s322 + $0xbf8] sm:$0xff]
        %v763 = vld [vmem:[%s322 + $0xc00] sm:$0xff]
        %v764 = vld [vmem:[%s322 + $0xc08] sm:$0xff]
        %v765 = vld [vmem:[%s322 + $0xc10] sm:$0xff]
        %v766 = vld [vmem:[%s322 + $0xc18] sm:$0xff]
        %v767 = vld [vmem:[%s322 + $0xc20] sm:$0xff]
        %v768 = vld [vmem:[%s322 + $0xc28] sm:$0xff]
        %v769 = vld [vmem:[%s322 + $0xc30] sm:$0xff]
        %v770 = vld [vmem:[%s322 + $0xc38] sm:$0xff]
        %v771 = vld [vmem:[%s322 + $0xc40] sm:$0xff]
        %v772 = vld [vmem:[%s322 + $0xc48] sm:$0xff]
        %v773 = vld [vmem:[%s322 + $0xc50] sm:$0xff]
        %v774 = vld [vmem:[%s322 + $0xc58] sm:$0xff]
        %v775 = vld [vmem:[%s322 + $0xc60] sm:$0xff]
        %v776 = vld [vmem:[%s322 + $0xc68] sm:$0xff]
        %v777 = vld [vmem:[%s322 + $0xc70] sm:$0xff]
        %v778 = vld [vmem:[%s322 + $0xc78] sm:$0xff]
        %v779 = vld [vmem:[#allocation5] sm:$0xff]
        %v780 = vld [vmem:[#allocation5 + $0x8] sm:$0xff]
        %v781 = vld [vmem:[#allocation5 + $0x10] sm:$0xff]
        %v782 = vld [vmem:[#allocation5 + $0x18] sm:$0xff]
        %v783 = vld [vmem:[#allocation5 + $0x20] sm:$0xff]
        %v784 = vld [vmem:[#allocation5 + $0x28] sm:$0xff]
        %v785 = vld [vmem:[#allocation5 + $0x30] sm:$0xff]
        %v786 = vld [vmem:[#allocation5 + $0x38] sm:$0xff]
        %v787 = vld [vmem:[#allocation5 + $0x40] sm:$0xff]
        %v788 = vld [vmem:[#allocation5 + $0x48] sm:$0xff]
        %v789 = vld [vmem:[#allocation5 + $0x50] sm:$0xff]
        %v790 = vld [vmem:[#allocation5 + $0x58] sm:$0xff]
        %v791 = vld [vmem:[#allocation5 + $0x60] sm:$0xff]
        %v792 = vld [vmem:[#allocation5 + $0x68] sm:$0xff]
        %v793 = vld [vmem:[#allocation5 + $0x70] sm:$0xff]
        %v794 = vld [vmem:[#allocation5 + $0x78] sm:$0xff]
        %v795 = vld [vmem:[#allocation5 + $0x80] sm:$0xff]
        %v796 = vld [vmem:[#allocation5 + $0x88] sm:$0xff]
        %v797 = vld [vmem:[#allocation5 + $0x90] sm:$0xff]
        %v798 = vld [vmem:[#allocation5 + $0x98] sm:$0xff]
        %v799 = vld [vmem:[#allocation5 + $0xa0] sm:$0xff]
        %v800 = vld [vmem:[#allocation5 + $0xa8] sm:$0xff]
        %v801 = vld [vmem:[#allocation5 + $0xb0] sm:$0xff]
        %v802 = vld [vmem:[#allocation5 + $0xb8] sm:$0xff]
        %v803 = vld [vmem:[#allocation5 + $0xc0] sm:$0xff]
        %v804 = vld [vmem:[#allocation5 + $0xc8] sm:$0xff]
        %v805 = vld [vmem:[#allocation5 + $0xd0] sm:$0xff]
        %v806 = vld [vmem:[#allocation5 + $0xd8] sm:$0xff]
        %v807 = vld [vmem:[#allocation5 + $0xe0] sm:$0xff]
        %v808 = vld [vmem:[#allocation5 + $0xe8] sm:$0xff]
        %v809 = vld [vmem:[#allocation5 + $0xf0] sm:$0xff]
        %v810 = vld [vmem:[#allocation5 + $0xf8] sm:$0xff]
        %v811 = vld [vmem:[#allocation5 + $0x100] sm:$0xff]
        %v812 = vld [vmem:[#allocation5 + $0x108] sm:$0xff]
        %v813 = vld [vmem:[#allocation5 + $0x110] sm:$0xff]
        %v814 = vld [vmem:[#allocation5 + $0x118] sm:$0xff]
        %v815 = vld [vmem:[#allocation5 + $0x120] sm:$0xff]
        %v816 = vld [vmem:[#allocation5 + $0x128] sm:$0xff]
        %v817 = vld [vmem:[#allocation5 + $0x130] sm:$0xff]
        %v818 = vld [vmem:[#allocation5 + $0x138] sm:$0xff]
        %v819 = vld [vmem:[#allocation5 + $0x140] sm:$0xff]
        %v820 = vld [vmem:[#allocation5 + $0x148] sm:$0xff]
        %v821 = vld [vmem:[#allocation5 + $0x150] sm:$0xff]
        %v822 = vld [vmem:[#allocation5 + $0x158] sm:$0xff]
        %v823 = vld [vmem:[#allocation5 + $0x160] sm:$0xff]
        %v824 = vld [vmem:[#allocation5 + $0x168] sm:$0xff]
        %v825 = vld [vmem:[#allocation5 + $0x170] sm:$0xff]
        %v826 = vld [vmem:[#allocation5 + $0x178] sm:$0xff]
        %v827 = vld [vmem:[#allocation5 + $0x180] sm:$0xff]
        %v828 = vld [vmem:[#allocation5 + $0x188] sm:$0xff]
        %v829 = vld [vmem:[#allocation5 + $0x190] sm:$0xff]
        %v830 = vld [vmem:[#allocation5 + $0x198] sm:$0xff]
        %v831 = vld [vmem:[#allocation5 + $0x1a0] sm:$0xff]
        %v832 = vld [vmem:[#allocation5 + $0x1a8] sm:$0xff]
        %v833 = vld [vmem:[#allocation5 + $0x1b0] sm:$0xff]
        %v834 = vld [vmem:[#allocation5 + $0x1b8] sm:$0xff]
        %v835 = vld [vmem:[#allocation5 + $0x1c0] sm:$0xff]
        %v836 = vld [vmem:[#allocation5 + $0x1c8] sm:$0xff]
        %v837 = vld [vmem:[#allocation5 + $0x1d0] sm:$0xff]
        %v838 = vld [vmem:[#allocation5 + $0x1d8] sm:$0xff]
        %v839 = vld [vmem:[#allocation5 + $0x1e0] sm:$0xff]
        %v840 = vld [vmem:[#allocation5 + $0x1e8] sm:$0xff]
        %v841 = vld [vmem:[#allocation5 + $0x1f0] sm:$0xff]
        %v842 = vld [vmem:[#allocation5 + $0x1f8] sm:$0xff]
        %v843 = vld [vmem:[#allocation5 + $0x200] sm:$0xff]
        %v844 = vld [vmem:[#allocation5 + $0x208] sm:$0xff]
        %v845 = vld [vmem:[#allocation5 + $0x210] sm:$0xff]
        %v846 = vld [vmem:[#allocation5 + $0x218] sm:$0xff]
        %v847 = vld [vmem:[#allocation5 + $0x220] sm:$0xff]
        %v848 = vld [vmem:[#allocation5 + $0x228] sm:$0xff]
        %v849 = vld [vmem:[#allocation5 + $0x230] sm:$0xff]
        %v850 = vld [vmem:[#allocation5 + $0x238] sm:$0xff]
        %v851 = vld [vmem:[#allocation5 + $0x240] sm:$0xff]
        %v852 = vld [vmem:[#allocation5 + $0x248] sm:$0xff]
        %v853 = vld [vmem:[#allocation5 + $0x250] sm:$0xff]
        %v854 = vld [vmem:[#allocation5 + $0x258] sm:$0xff]
        %v855 = vld [vmem:[#allocation5 + $0x260] sm:$0xff]
        %v856 = vld [vmem:[#allocation5 + $0x268] sm:$0xff]
        %v857 = vld [vmem:[#allocation5 + $0x270] sm:$0xff]
        %v858 = vld [vmem:[#allocation5 + $0x278] sm:$0xff]
        %v859 = vld [vmem:[#allocation5 + $0x280] sm:$0xff]
        %v860 = vld [vmem:[#allocation5 + $0x288] sm:$0xff]
        %v861 = vld [vmem:[#allocation5 + $0x290] sm:$0xff]
        %v862 = vld [vmem:[#allocation5 + $0x298] sm:$0xff]
        %v863 = vld [vmem:[#allocation5 + $0x2a0] sm:$0xff]
        %v864 = vld [vmem:[#allocation5 + $0x2a8] sm:$0xff]
        %v865 = vld [vmem:[#allocation5 + $0x2b0] sm:$0xff]
        %v866 = vld [vmem:[#allocation5 + $0x2b8] sm:$0xff]
        %v867 = vld [vmem:[#allocation5 + $0x2c0] sm:$0xff]
        %v868 = vld [vmem:[#allocation5 + $0x2c8] sm:$0xff]
        %v869 = vld [vmem:[#allocation5 + $0x2d0] sm:$0xff]
        %v870 = vld [vmem:[#allocation5 + $0x2d8] sm:$0xff]
        %v871 = vld [vmem:[#allocation5 + $0x2e0] sm:$0xff]
        %v872 = vld [vmem:[#allocation5 + $0x2e8] sm:$0xff]
        %v873 = vld [vmem:[#allocation5 + $0x2f0] sm:$0xff]
        %v874 = vld [vmem:[#allocation5 + $0x2f8] sm:$0xff]
        %v875 = vld [vmem:[#allocation5 + $0x300] sm:$0xff]
        %v876 = vld [vmem:[#allocation5 + $0x308] sm:$0xff]
        %v877 = vld [vmem:[#allocation5 + $0x310] sm:$0xff]
        %v878 = vld [vmem:[#allocation5 + $0x318] sm:$0xff]
        %v879 = vld [vmem:[#allocation5 + $0x320] sm:$0xff]
        %v880 = vld [vmem:[#allocation5 + $0x328] sm:$0xff]
        %v881 = vld [vmem:[#allocation5 + $0x330] sm:$0xff]
        %v882 = vld [vmem:[#allocation5 + $0x338] sm:$0xff]
        %v883 = vld [vmem:[#allocation5 + $0x340] sm:$0xff]
        %v884 = vld [vmem:[#allocation5 + $0x348] sm:$0xff]
        %v885 = vld [vmem:[#allocation5 + $0x350] sm:$0xff]
        %v886 = vld [vmem:[#allocation5 + $0x358] sm:$0xff]
        %v887 = vld [vmem:[#allocation5 + $0x360] sm:$0xff]
        %v888 = vld [vmem:[#allocation5 + $0x368] sm:$0xff]
        %v889 = vld [vmem:[#allocation5 + $0x370] sm:$0xff]
        %v890 = vld [vmem:[#allocation5 + $0x378] sm:$0xff]
        %v891 = vld [vmem:[#allocation5 + $0x380] sm:$0xff]
        %v892 = vld [vmem:[#allocation5 + $0x388] sm:$0xff]
        %v893 = vld [vmem:[#allocation5 + $0x390] sm:$0xff]
        %v894 = vld [vmem:[#allocation5 + $0x398] sm:$0xff]
        %v895 = vld [vmem:[#allocation5 + $0x3a0] sm:$0xff]
        %v896 = vld [vmem:[#allocation5 + $0x3a8] sm:$0xff]
        %v897 = vld [vmem:[#allocation5 + $0x3b0] sm:$0xff]
        %v898 = vld [vmem:[#allocation5 + $0x3b8] sm:$0xff]
        %v899 = vld [vmem:[#allocation5 + $0x3c0] sm:$0xff]
        %v900 = vld [vmem:[#allocation5 + $0x3c8] sm:$0xff]
        %v901 = vld [vmem:[#allocation5 + $0x3d0] sm:$0xff]
        %v902 = vld [vmem:[#allocation5 + $0x3d8] sm:$0xff]
        %v903 = vld [vmem:[#allocation5 + $0x3e0] sm:$0xff]
        %v904 = vld [vmem:[#allocation5 + $0x3e8] sm:$0xff]
        %v905 = vld [vmem:[#allocation5 + $0x3f0] sm:$0xff]
        %v906 = vld [vmem:[#allocation5 + $0x3f8] sm:$0xff]
        %v907 = vld [vmem:[#allocation5 + $0x400] sm:$0xff]
        %v908 = vld [vmem:[#allocation5 + $0x408] sm:$0xff]
        %v909 = vld [vmem:[#allocation5 + $0x410] sm:$0xff]
        %v910 = vld [vmem:[#allocation5 + $0x418] sm:$0xff]
        %v911 = vld [vmem:[#allocation5 + $0x420] sm:$0xff]
        %v912 = vld [vmem:[#allocation5 + $0x428] sm:$0xff]
        %v913 = vld [vmem:[#allocation5 + $0x430] sm:$0xff]
        %v914 = vld [vmem:[#allocation5 + $0x438] sm:$0xff]
        %v915 = vld [vmem:[#allocation5 + $0x440] sm:$0xff]
        %v916 = vld [vmem:[#allocation5 + $0x448] sm:$0xff]
        %v917 = vld [vmem:[#allocation5 + $0x450] sm:$0xff]
        %v918 = vld [vmem:[#allocation5 + $0x458] sm:$0xff]
        %v919 = vld [vmem:[#allocation5 + $0x460] sm:$0xff]
        %v920 = vld [vmem:[#allocation5 + $0x468] sm:$0xff]
        %v921 = vld [vmem:[#allocation5 + $0x470] sm:$0xff]
        %v922 = vld [vmem:[#allocation5 + $0x478] sm:$0xff]
        %v923 = vld [vmem:[#allocation5 + $0x480] sm:$0xff]
        %v924 = vld [vmem:[#allocation5 + $0x488] sm:$0xff]
        %v925 = vld [vmem:[#allocation5 + $0x490] sm:$0xff]
        %v926 = vld [vmem:[#allocation5 + $0x498] sm:$0xff]
        %v927 = vld [vmem:[#allocation5 + $0x4a0] sm:$0xff]
        %v928 = vld [vmem:[#allocation5 + $0x4a8] sm:$0xff]
        %v929 = vld [vmem:[#allocation5 + $0x4b0] sm:$0xff]
        %v930 = vld [vmem:[#allocation5 + $0x4b8] sm:$0xff]
        %v931 = vld [vmem:[#allocation5 + $0x4c0] sm:$0xff]
        %v932 = vld [vmem:[#allocation5 + $0x4c8] sm:$0xff]
        %v933 = vld [vmem:[#allocation5 + $0x4d0] sm:$0xff]
        %v934 = vld [vmem:[#allocation5 + $0x4d8] sm:$0xff]
        %v935 = vld [vmem:[#allocation5 + $0x4e0] sm:$0xff]
        %v936 = vld [vmem:[#allocation5 + $0x4e8] sm:$0xff]
        %v937 = vld [vmem:[#allocation5 + $0x4f0] sm:$0xff]
        %v938 = vld [vmem:[#allocation5 + $0x4f8] sm:$0xff]
        %v939 = vld [vmem:[#allocation5 + $0x500] sm:$0xff]
        %v940 = vld [vmem:[#allocation5 + $0x508] sm:$0xff]
        %v941 = vld [vmem:[#allocation5 + $0x510] sm:$0xff]
        %v942 = vld [vmem:[#allocation5 + $0x518] sm:$0xff]
        %v943 = vld [vmem:[#allocation5 + $0x520] sm:$0xff]
        %v944 = vld [vmem:[#allocation5 + $0x528] sm:$0xff]
        %v945 = vld [vmem:[#allocation5 + $0x530] sm:$0xff]
        %v946 = vld [vmem:[#allocation5 + $0x538] sm:$0xff]
        %v947 = vld [vmem:[#allocation5 + $0x540] sm:$0xff]
        %v948 = vld [vmem:[#allocation5 + $0x548] sm:$0xff]
        %v949 = vld [vmem:[#allocation5 + $0x550] sm:$0xff]
        %v950 = vld [vmem:[#allocation5 + $0x558] sm:$0xff]
        %v951 = vld [vmem:[#allocation5 + $0x560] sm:$0xff]
        %v952 = vld [vmem:[#allocation5 + $0x568] sm:$0xff]
        %v953 = vld [vmem:[#allocation5 + $0x570] sm:$0xff]
        %v954 = vld [vmem:[#allocation5 + $0x578] sm:$0xff]
        %v955 = vld [vmem:[#allocation5 + $0x580] sm:$0xff]
        %v956 = vld [vmem:[#allocation5 + $0x588] sm:$0xff]
        %v957 = vld [vmem:[#allocation5 + $0x590] sm:$0xff]
        %v958 = vld [vmem:[#allocation5 + $0x598] sm:$0xff]
        %v959 = vld [vmem:[#allocation5 + $0x5a0] sm:$0xff]
        %v960 = vld [vmem:[#allocation5 + $0x5a8] sm:$0xff]
        %v961 = vld [vmem:[#allocation5 + $0x5b0] sm:$0xff]
        %v962 = vld [vmem:[#allocation5 + $0x5b8] sm:$0xff]
        %v963 = vld [vmem:[#allocation5 + $0x5c0] sm:$0xff]
        %v964 = vld [vmem:[#allocation5 + $0x5c8] sm:$0xff]
        %v965 = vld [vmem:[#allocation5 + $0x5d0] sm:$0xff]
        %v966 = vld [vmem:[#allocation5 + $0x5d8] sm:$0xff]
        %v967 = vld [vmem:[#allocation5 + $0x5e0] sm:$0xff]
        %v968 = vld [vmem:[#allocation5 + $0x5e8] sm:$0xff]
        %v969 = vld [vmem:[#allocation5 + $0x5f0] sm:$0xff]
        %v970 = vld [vmem:[#allocation5 + $0x5f8] sm:$0xff]
        %v971 = vld [vmem:[#allocation5 + $0x600] sm:$0xff]
        %v972 = vld [vmem:[#allocation5 + $0x608] sm:$0xff]
        %v973 = vld [vmem:[#allocation5 + $0x610] sm:$0xff]
        %v974 = vld [vmem:[#allocation5 + $0x618] sm:$0xff]
        %v975 = vld [vmem:[#allocation5 + $0x620] sm:$0xff]
        %v976 = vld [vmem:[#allocation5 + $0x628] sm:$0xff]
        %v977 = vld [vmem:[#allocation5 + $0x630] sm:$0xff]
        %v978 = vld [vmem:[#allocation5 + $0x638] sm:$0xff]
        %v979 = vld [vmem:[#allocation5 + $0x640] sm:$0xff]
        %v980 = vld [vmem:[#allocation5 + $0x648] sm:$0xff]
        %v981 = vld [vmem:[#allocation5 + $0x650] sm:$0xff]
        %v982 = vld [vmem:[#allocation5 + $0x658] sm:$0xff]
        %v983 = vld [vmem:[#allocation5 + $0x660] sm:$0xff]
        %v984 = vld [vmem:[#allocation5 + $0x668] sm:$0xff]
        %v985 = vld [vmem:[#allocation5 + $0x670] sm:$0xff]
        %v986 = vld [vmem:[#allocation5 + $0x678] sm:$0xff]
        %v987 = vld [vmem:[#allocation5 + $0x680] sm:$0xff]
        %v988 = vld [vmem:[#allocation5 + $0x688] sm:$0xff]
        %v989 = vld [vmem:[#allocation5 + $0x690] sm:$0xff]
        %v990 = vld [vmem:[#allocation5 + $0x698] sm:$0xff]
        %v991 = vld [vmem:[#allocation5 + $0x6a0] sm:$0xff]
        %v992 = vld [vmem:[#allocation5 + $0x6a8] sm:$0xff]
        %v993 = vld [vmem:[#allocation5 + $0x6b0] sm:$0xff]
        %v994 = vld [vmem:[#allocation5 + $0x6b8] sm:$0xff]
        %v995 = vld [vmem:[#allocation5 + $0x6c0] sm:$0xff]
        %v996 = vld [vmem:[#allocation5 + $0x6c8] sm:$0xff]
        %v997 = vld [vmem:[#allocation5 + $0x6d0] sm:$0xff]
        %v998 = vld [vmem:[#allocation5 + $0x6d8] sm:$0xff]
        %v999 = vld [vmem:[#allocation5 + $0x6e0] sm:$0xff]
        %v1000 = vld [vmem:[#allocation5 + $0x6e8] sm:$0xff]
        %v1001 = vld [vmem:[#allocation5 + $0x6f0] sm:$0xff]
        %v1002 = vld [vmem:[#allocation5 + $0x6f8] sm:$0xff]
        %v1003 = vld [vmem:[#allocation5 + $0x700] sm:$0xff]
        %v1004 = vld [vmem:[#allocation5 + $0x708] sm:$0xff]
        %v1005 = vld [vmem:[#allocation5 + $0x710] sm:$0xff]
        %v1006 = vld [vmem:[#allocation5 + $0x718] sm:$0xff]
        %v1007 = vld [vmem:[#allocation5 + $0x720] sm:$0xff]
        %v1008 = vld [vmem:[#allocation5 + $0x728] sm:$0xff]
        %v1009 = vld [vmem:[#allocation5 + $0x730] sm:$0xff]
        %v1010 = vld [vmem:[#allocation5 + $0x738] sm:$0xff]
        %v1011 = vld [vmem:[#allocation5 + $0x740] sm:$0xff]
        %v1012 = vld [vmem:[#allocation5 + $0x748] sm:$0xff]
        %v1013 = vld [vmem:[#allocation5 + $0x750] sm:$0xff]
        %v1014 = vld [vmem:[#allocation5 + $0x758] sm:$0xff]
        %v1015 = vld [vmem:[#allocation5 + $0x760] sm:$0xff]
        %v1016 = vld [vmem:[#allocation5 + $0x768] sm:$0xff]
        %v1017 = vld [vmem:[#allocation5 + $0x770] sm:$0xff]
        %v1018 = vld [vmem:[#allocation5 + $0x778] sm:$0xff]
        %v1019 = vld [vmem:[#allocation5 + $0x780] sm:$0xff]
        %v1020 = vld [vmem:[#allocation5 + $0x788] sm:$0xff]
        %v1021 = vld [vmem:[#allocation5 + $0x790] sm:$0xff]
        %v1022 = vld [vmem:[#allocation5 + $0x798] sm:$0xff]
        %v1023 = vld [vmem:[#allocation5 + $0x7a0] sm:$0xff]
        %v1024 = vld [vmem:[#allocation5 + $0x7a8] sm:$0xff]
        %v1025 = vld [vmem:[#allocation5 + $0x7b0] sm:$0xff]
        %v1026 = vld [vmem:[#allocation5 + $0x7b8] sm:$0xff]
        %v1027 = vld [vmem:[#allocation5 + $0x7c0] sm:$0xff]
        %v1028 = vld [vmem:[#allocation5 + $0x7c8] sm:$0xff]
        %v1029 = vld [vmem:[#allocation5 + $0x7d0] sm:$0xff]
        %v1030 = vld [vmem:[#allocation5 + $0x7d8] sm:$0xff]
        %v1031 = vld [vmem:[#allocation5 + $0x7e0] sm:$0xff]
        %v1032 = vld [vmem:[#allocation5 + $0x7e8] sm:$0xff]
        %v1033 = vld [vmem:[#allocation5 + $0x7f0] sm:$0xff]
        %v1034 = vld [vmem:[#allocation5 + $0x7f8] sm:$0xff]
        %v1035 = vld [vmem:[#allocation5 + $0x800] sm:$0xff]
        %v1036 = vld [vmem:[#allocation5 + $0x808] sm:$0xff]
        %v1037 = vld [vmem:[#allocation5 + $0x810] sm:$0xff]
        %v1038 = vld [vmem:[#allocation5 + $0x818] sm:$0xff]
        %v1039 = vld [vmem:[#allocation5 + $0x820] sm:$0xff]
        %v1040 = vld [vmem:[#allocation5 + $0x828] sm:$0xff]
        %v1041 = vld [vmem:[#allocation5 + $0x830] sm:$0xff]
        %v1042 = vld [vmem:[#allocation5 + $0x838] sm:$0xff]
        %v1043 = vld [vmem:[#allocation5 + $0x840] sm:$0xff]
        %v1044 = vld [vmem:[#allocation5 + $0x848] sm:$0xff]
        %v1045 = vld [vmem:[#allocation5 + $0x850] sm:$0xff]
        %v1046 = vld [vmem:[#allocation5 + $0x858] sm:$0xff]
        %v1047 = vld [vmem:[#allocation5 + $0x860] sm:$0xff]
        %v1048 = vld [vmem:[#allocation5 + $0x868] sm:$0xff]
        %v1049 = vld [vmem:[#allocation5 + $0x870] sm:$0xff]
        %v1050 = vld [vmem:[#allocation5 + $0x878] sm:$0xff]
        %v1051 = vld [vmem:[#allocation5 + $0x880] sm:$0xff]
        %v1052 = vld [vmem:[#allocation5 + $0x888] sm:$0xff]
        %v1053 = vld [vmem:[#allocation5 + $0x890] sm:$0xff]
        %v1054 = vld [vmem:[#allocation5 + $0x898] sm:$0xff]
        %v1055 = vld [vmem:[#allocation5 + $0x8a0] sm:$0xff]
        %v1056 = vld [vmem:[#allocation5 + $0x8a8] sm:$0xff]
        %v1057 = vld [vmem:[#allocation5 + $0x8b0] sm:$0xff]
        %v1058 = vld [vmem:[#allocation5 + $0x8b8] sm:$0xff]
        %v1059 = vld [vmem:[#allocation5 + $0x8c0] sm:$0xff]
        %v1060 = vld [vmem:[#allocation5 + $0x8c8] sm:$0xff]
        %v1061 = vld [vmem:[#allocation5 + $0x8d0] sm:$0xff]
        %v1062 = vld [vmem:[#allocation5 + $0x8d8] sm:$0xff]
        %v1063 = vld [vmem:[#allocation5 + $0x8e0] sm:$0xff]
        %v1064 = vld [vmem:[#allocation5 + $0x8e8] sm:$0xff]
        %v1065 = vld [vmem:[#allocation5 + $0x8f0] sm:$0xff]
        %v1066 = vld [vmem:[#allocation5 + $0x8f8] sm:$0xff]
        %v1067 = vld [vmem:[#allocation5 + $0x900] sm:$0xff]
        %v1068 = vld [vmem:[#allocation5 + $0x908] sm:$0xff]
        %v1069 = vld [vmem:[#allocation5 + $0x910] sm:$0xff]
        %v1070 = vld [vmem:[#allocation5 + $0x918] sm:$0xff]
        %v1071 = vld [vmem:[#allocation5 + $0x920] sm:$0xff]
        %v1072 = vld [vmem:[#allocation5 + $0x928] sm:$0xff]
        %v1073 = vld [vmem:[#allocation5 + $0x930] sm:$0xff]
        %v1074 = vld [vmem:[#allocation5 + $0x938] sm:$0xff]
        %v1075 = vld [vmem:[#allocation5 + $0x940] sm:$0xff]
        %v1076 = vld [vmem:[#allocation5 + $0x948] sm:$0xff]
        %v1077 = vld [vmem:[#allocation5 + $0x950] sm:$0xff]
        %v1078 = vld [vmem:[#allocation5 + $0x958] sm:$0xff]
        %v1079 = vld [vmem:[#allocation5 + $0x960] sm:$0xff]
        %v1080 = vld [vmem:[#allocation5 + $0x968] sm:$0xff]
        %v1081 = vld [vmem:[#allocation5 + $0x970] sm:$0xff]
        %v1082 = vld [vmem:[#allocation5 + $0x978] sm:$0xff]
        %v1083 = vld [vmem:[#allocation5 + $0x980] sm:$0xff]
        %v1084 = vld [vmem:[#allocation5 + $0x988] sm:$0xff]
        %v1085 = vld [vmem:[#allocation5 + $0x990] sm:$0xff]
        %v1086 = vld [vmem:[#allocation5 + $0x998] sm:$0xff]
        %v1087 = vld [vmem:[#allocation5 + $0x9a0] sm:$0xff]
        %v1088 = vld [vmem:[#allocation5 + $0x9a8] sm:$0xff]
        %v1089 = vld [vmem:[#allocation5 + $0x9b0] sm:$0xff]
        %v1090 = vld [vmem:[#allocation5 + $0x9b8] sm:$0xff]
        %v1091 = vld [vmem:[#allocation5 + $0x9c0] sm:$0xff]
        %v1092 = vld [vmem:[#allocation5 + $0x9c8] sm:$0xff]
        %v1093 = vld [vmem:[#allocation5 + $0x9d0] sm:$0xff]
        %v1094 = vld [vmem:[#allocation5 + $0x9d8] sm:$0xff]
        %v1095 = vld [vmem:[#allocation5 + $0x9e0] sm:$0xff]
        %v1096 = vld [vmem:[#allocation5 + $0x9e8] sm:$0xff]
        %v1097 = vld [vmem:[#allocation5 + $0x9f0] sm:$0xff]
        %v1098 = vld [vmem:[#allocation5 + $0x9f8] sm:$0xff]
        %v1099 = vld [vmem:[#allocation5 + $0xa00] sm:$0xff]
        %v1100 = vld [vmem:[#allocation5 + $0xa08] sm:$0xff]
        %v1101 = vld [vmem:[#allocation5 + $0xa10] sm:$0xff]
        %v1102 = vld [vmem:[#allocation5 + $0xa18] sm:$0xff]
        %v1103 = vld [vmem:[#allocation5 + $0xa20] sm:$0xff]
        %v1104 = vld [vmem:[#allocation5 + $0xa28] sm:$0xff]
        %v1105 = vld [vmem:[#allocation5 + $0xa30] sm:$0xff]
        %v1106 = vld [vmem:[#allocation5 + $0xa38] sm:$0xff]
        %v1107 = vld [vmem:[#allocation5 + $0xa40] sm:$0xff]
        %v1108 = vld [vmem:[#allocation5 + $0xa48] sm:$0xff]
        %v1109 = vld [vmem:[#allocation5 + $0xa50] sm:$0xff]
        %v1110 = vld [vmem:[#allocation5 + $0xa58] sm:$0xff]
        %v1111 = vld [vmem:[#allocation5 + $0xa60] sm:$0xff]
        %v1112 = vld [vmem:[#allocation5 + $0xa68] sm:$0xff]
        %v1113 = vld [vmem:[#allocation5 + $0xa70] sm:$0xff]
        %v1114 = vld [vmem:[#allocation5 + $0xa78] sm:$0xff]
        %v1115 = vld [vmem:[#allocation5 + $0xa80] sm:$0xff]
        %v1116 = vld [vmem:[#allocation5 + $0xa88] sm:$0xff]
        %v1117 = vld [vmem:[#allocation5 + $0xa90] sm:$0xff]
        %v1118 = vld [vmem:[#allocation5 + $0xa98] sm:$0xff]
        %v1119 = vld [vmem:[#allocation5 + $0xaa0] sm:$0xff]
        %v1120 = vld [vmem:[#allocation5 + $0xaa8] sm:$0xff]
        %v1121 = vld [vmem:[#allocation5 + $0xab0] sm:$0xff]
        %v1122 = vld [vmem:[#allocation5 + $0xab8] sm:$0xff]
        %v1123 = vld [vmem:[#allocation5 + $0xac0] sm:$0xff]
        %v1124 = vld [vmem:[#allocation5 + $0xac8] sm:$0xff]
        %v1125 = vld [vmem:[#allocation5 + $0xad0] sm:$0xff]
        %v1126 = vld [vmem:[#allocation5 + $0xad8] sm:$0xff]
        %v1127 = vld [vmem:[#allocation5 + $0xae0] sm:$0xff]
        %v1128 = vld [vmem:[#allocation5 + $0xae8] sm:$0xff]
        %v1129 = vld [vmem:[#allocation5 + $0xaf0] sm:$0xff]
        %v1130 = vld [vmem:[#allocation5 + $0xaf8] sm:$0xff]
        %v1131 = vld [vmem:[#allocation5 + $0xb00] sm:$0xff]
        %v1132 = vld [vmem:[#allocation5 + $0xb08] sm:$0xff]
        %v1133 = vld [vmem:[#allocation5 + $0xb10] sm:$0xff]
        %v1134 = vld [vmem:[#allocation5 + $0xb18] sm:$0xff]
        %v1135 = vld [vmem:[#allocation5 + $0xb20] sm:$0xff]
        %v1136 = vld [vmem:[#allocation5 + $0xb28] sm:$0xff]
        %v1137 = vld [vmem:[#allocation5 + $0xb30] sm:$0xff]
        %v1138 = vld [vmem:[#allocation5 + $0xb38] sm:$0xff]
        %v1139 = vld [vmem:[#allocation5 + $0xb40] sm:$0xff]
        %v1140 = vld [vmem:[#allocation5 + $0xb48] sm:$0xff]
        %v1141 = vld [vmem:[#allocation5 + $0xb50] sm:$0xff]
        %v1142 = vld [vmem:[#allocation5 + $0xb58] sm:$0xff]
        %v1143 = vld [vmem:[#allocation5 + $0xb60] sm:$0xff]
        %v1144 = vld [vmem:[#allocation5 + $0xb68] sm:$0xff]
        %v1145 = vld [vmem:[#allocation5 + $0xb70] sm:$0xff]
        %v1146 = vld [vmem:[#allocation5 + $0xb78] sm:$0xff]
        %v1147 = vld [vmem:[#allocation5 + $0xb80] sm:$0xff]
        %v1148 = vld [vmem:[#allocation5 + $0xb88] sm:$0xff]
        %v1149 = vld [vmem:[#allocation5 + $0xb90] sm:$0xff]
        %v1150 = vld [vmem:[#allocation5 + $0xb98] sm:$0xff]
        %v1151 = vld [vmem:[#allocation5 + $0xba0] sm:$0xff]
        %v1152 = vld [vmem:[#allocation5 + $0xba8] sm:$0xff]
        %v1153 = vld [vmem:[#allocation5 + $0xbb0] sm:$0xff]
        %v1154 = vld [vmem:[#allocation5 + $0xbb8] sm:$0xff]
        %v1155 = vld [vmem:[#allocation5 + $0xbc0] sm:$0xff]
        %v1156 = vld [vmem:[#allocation5 + $0xbc8] sm:$0xff]
        %v1157 = vld [vmem:[#allocation5 + $0xbd0] sm:$0xff]
        %v1158 = vld [vmem:[#allocation5 + $0xbd8] sm:$0xff]
        %v1159 = vld [vmem:[#allocation5 + $0xbe0] sm:$0xff]
        %v1160 = vld [vmem:[#allocation5 + $0xbe8] sm:$0xff]
        %v1161 = vld [vmem:[#allocation5 + $0xbf0] sm:$0xff]
        %v1162 = vld [vmem:[#allocation5 + $0xbf8] sm:$0xff]
        %v1163 = vld [vmem:[#allocation5 + $0xc00] sm:$0xff]
        %v1164 = vld [vmem:[#allocation5 + $0xc08] sm:$0xff]
        %v1165 = vld [vmem:[#allocation5 + $0xc10] sm:$0xff]
        %v1166 = vld [vmem:[#allocation5 + $0xc18] sm:$0xff]
        %v1167 = vld [vmem:[#allocation5 + $0xc20] sm:$0xff]
        %v1168 = vld [vmem:[#allocation5 + $0xc28] sm:$0xff]
        %v1169 = vld [vmem:[#allocation5 + $0xc30] sm:$0xff]
        %v1170 = vld [vmem:[#allocation5 + $0xc38] sm:$0xff]
        %v1171 = vld [vmem:[#allocation5 + $0xc40] sm:$0xff]
        %v1172 = vld [vmem:[#allocation5 + $0xc48] sm:$0xff]
        %v1173 = vld [vmem:[#allocation5 + $0xc50] sm:$0xff]
        %v1174 = vld [vmem:[#allocation5 + $0xc58] sm:$0xff]
        %v1175 = vld [vmem:[#allocation5 + $0xc60] sm:$0xff]
        %v1176 = vld [vmem:[#allocation5 + $0xc68] sm:$0xff]
        %v1177 = vld [vmem:[#allocation5 + $0xc70] sm:$0xff]
        %v1178 = vld [vmem:[#allocation5 + $0xc78] sm:$0xff]
        %v1179 = vld [vmem:[#allocation5 + $0xc80] sm:$0xff]
        %v1180 = vld [vmem:[#allocation5 + $0xc88] sm:$0xff]
        %v1181 = vld [vmem:[#allocation5 + $0xc90] sm:$0xff]
        %v1182 = vld [vmem:[#allocation5 + $0xc98] sm:$0xff]
        %v1183 = vld [vmem:[#allocation5 + $0xca0] sm:$0xff]
        %v1184 = vld [vmem:[#allocation5 + $0xca8] sm:$0xff]
        %v1185 = vld [vmem:[#allocation5 + $0xcb0] sm:$0xff]
        %v1186 = vld [vmem:[#allocation5 + $0xcb8] sm:$0xff]
        %v1187 = vld [vmem:[#allocation5 + $0xcc0] sm:$0xff]
        %v1188 = vld [vmem:[#allocation5 + $0xcc8] sm:$0xff]
        %v1189 = vld [vmem:[#allocation5 + $0xcd0] sm:$0xff]
        %v1190 = vld [vmem:[#allocation5 + $0xcd8] sm:$0xff]
        %v1191 = vld [vmem:[#allocation5 + $0xce0] sm:$0xff]
        %v1192 = vld [vmem:[#allocation5 + $0xce8] sm:$0xff]
        %v1193 = vld [vmem:[#allocation5 + $0xcf0] sm:$0xff]
        %v1194 = vld [vmem:[#allocation5 + $0xcf8] sm:$0xff]
        %v1195 = vld [vmem:[#allocation5 + $0xd00] sm:$0xff]
        %v1196 = vld [vmem:[#allocation5 + $0xd08] sm:$0xff]
        %v1197 = vld [vmem:[#allocation5 + $0xd10] sm:$0xff]
        %v1198 = vld [vmem:[#allocation5 + $0xd18] sm:$0xff]
        %v1199 = vld [vmem:[#allocation5 + $0xd20] sm:$0xff]
        %v1200 = vld [vmem:[#allocation5 + $0xd28] sm:$0xff]
        %v1201 = vld [vmem:[#allocation5 + $0xd30] sm:$0xff]
        %v1202 = vld [vmem:[#allocation5 + $0xd38] sm:$0xff]
        %v1203 = vld [vmem:[#allocation5 + $0xd40] sm:$0xff]
        %v1204 = vld [vmem:[#allocation5 + $0xd48] sm:$0xff]
        %v1205 = vld [vmem:[#allocation5 + $0xd50] sm:$0xff]
        %v1206 = vld [vmem:[#allocation5 + $0xd58] sm:$0xff]
        %v1207 = vld [vmem:[#allocation5 + $0xd60] sm:$0xff]
        %v1208 = vld [vmem:[#allocation5 + $0xd68] sm:$0xff]
        %v1209 = vld [vmem:[#allocation5 + $0xd70] sm:$0xff]
        %v1210 = vld [vmem:[#allocation5 + $0xd78] sm:$0xff]
        %v1211 = vld [vmem:[#allocation5 + $0xd80] sm:$0xff]
        %v1212 = vld [vmem:[#allocation5 + $0xd88] sm:$0xff]
        %v1213 = vld [vmem:[#allocation5 + $0xd90] sm:$0xff]
        %v1214 = vld [vmem:[#allocation5 + $0xd98] sm:$0xff]
        %v1215 = vld [vmem:[#allocation5 + $0xda0] sm:$0xff]
        %v1216 = vld [vmem:[#allocation5 + $0xda8] sm:$0xff]
        %v1217 = vld [vmem:[#allocation5 + $0xdb0] sm:$0xff]
        %v1218 = vld [vmem:[#allocation5 + $0xdb8] sm:$0xff]
        %v1219 = vld [vmem:[#allocation5 + $0xdc0] sm:$0xff]
        %v1220 = vld [vmem:[#allocation5 + $0xdc8] sm:$0xff]
        %v1221 = vld [vmem:[#allocation5 + $0xdd0] sm:$0xff]
        %v1222 = vld [vmem:[#allocation5 + $0xdd8] sm:$0xff]
        %v1223 = vld [vmem:[#allocation5 + $0xde0] sm:$0xff]
        %v1224 = vld [vmem:[#allocation5 + $0xde8] sm:$0xff]
        %v1225 = vld [vmem:[#allocation5 + $0xdf0] sm:$0xff]
        %v1226 = vld [vmem:[#allocation5 + $0xdf8] sm:$0xff]
        %v1227 = vld [vmem:[#allocation5 + $0xe00] sm:$0xff]
        %v1228 = vld [vmem:[#allocation5 + $0xe08] sm:$0xff]
        %v1229 = vld [vmem:[#allocation5 + $0xe10] sm:$0xff]
        %v1230 = vld [vmem:[#allocation5 + $0xe18] sm:$0xff]
        %v1231 = vld [vmem:[#allocation5 + $0xe20] sm:$0xff]
        %v1232 = vld [vmem:[#allocation5 + $0xe28] sm:$0xff]
        %v1233 = vld [vmem:[#allocation5 + $0xe30] sm:$0xff]
        %v1234 = vld [vmem:[#allocation5 + $0xe38] sm:$0xff]
        %v1235 = vld [vmem:[#allocation5 + $0xe40] sm:$0xff]
        %v1236 = vld [vmem:[#allocation5 + $0xe48] sm:$0xff]
        %v1237 = vld [vmem:[#allocation5 + $0xe50] sm:$0xff]
        %v1238 = vld [vmem:[#allocation5 + $0xe58] sm:$0xff]
        %v1239 = vld [vmem:[#allocation5 + $0xe60] sm:$0xff]
        %v1240 = vld [vmem:[#allocation5 + $0xe68] sm:$0xff]
        %v1241 = vld [vmem:[#allocation5 + $0xe70] sm:$0xff]
        %v1242 = vld [vmem:[#allocation5 + $0xe78] sm:$0xff]
        %v1243 = vld [vmem:[#allocation5 + $0xe80] sm:$0xff]
        %v1244 = vld [vmem:[#allocation5 + $0xe88] sm:$0xff]
        %v1245 = vld [vmem:[#allocation5 + $0xe90] sm:$0xff]
        %v1246 = vld [vmem:[#allocation5 + $0xe98] sm:$0xff]
        %v1247 = vld [vmem:[#allocation5 + $0xea0] sm:$0xff]
        %v1248 = vld [vmem:[#allocation5 + $0xea8] sm:$0xff]
        %v1249 = vld [vmem:[#allocation5 + $0xeb0] sm:$0xff]
        %v1250 = vld [vmem:[#allocation5 + $0xeb8] sm:$0xff]
        %v1251 = vld [vmem:[#allocation5 + $0xec0] sm:$0xff]
        %v1252 = vld [vmem:[#allocation5 + $0xec8] sm:$0xff]
        %v1253 = vld [vmem:[#allocation5 + $0xed0] sm:$0xff]
        %v1254 = vld [vmem:[#allocation5 + $0xed8] sm:$0xff]
        %v1255 = vld [vmem:[#allocation5 + $0xee0] sm:$0xff]
        %v1256 = vld [vmem:[#allocation5 + $0xee8] sm:$0xff]
        %v1257 = vld [vmem:[#allocation5 + $0xef0] sm:$0xff]
        %v1258 = vld [vmem:[#allocation5 + $0xef8] sm:$0xff]
        %v1259 = vld [vmem:[#allocation5 + $0xf00] sm:$0xff]
        %v1260 = vld [vmem:[#allocation5 + $0xf08] sm:$0xff]
        %v1261 = vld [vmem:[#allocation5 + $0xf10] sm:$0xff]
        %v1262 = vld [vmem:[#allocation5 + $0xf18] sm:$0xff]
        %v1263 = vld [vmem:[#allocation5 + $0xf20] sm:$0xff]
        %v1264 = vld [vmem:[#allocation5 + $0xf28] sm:$0xff]
        %v1265 = vld [vmem:[#allocation5 + $0xf30] sm:$0xff]
        %v1266 = vld [vmem:[#allocation5 + $0xf38] sm:$0xff]
        %v1267 = vld [vmem:[#allocation5 + $0xf40] sm:$0xff]
        %v1268 = vld [vmem:[#allocation5 + $0xf48] sm:$0xff]
        %v1269 = vld [vmem:[#allocation5 + $0xf50] sm:$0xff]
        %v1270 = vld [vmem:[#allocation5 + $0xf58] sm:$0xff]
        %v1271 = vld [vmem:[#allocation5 + $0xf60] sm:$0xff]
        %v1272 = vld [vmem:[#allocation5 + $0xf68] sm:$0xff]
        %v1273 = vld [vmem:[#allocation5 + $0xf70] sm:$0xff]
        %v1274 = vld [vmem:[#allocation5 + $0xf78] sm:$0xff]
        %v1275 = vld [vmem:[#allocation5 + $0xf80] sm:$0xff]
        %v1276 = vld [vmem:[#allocation5 + $0xf88] sm:$0xff]
        %v1277 = vld [vmem:[#allocation5 + $0xf90] sm:$0xff]
        %v1278 = vld [vmem:[#allocation5 + $0xf98] sm:$0xff]
        %v1279 = vld [vmem:[#allocation5 + $0xfa0] sm:$0xff]
        %v1280 = vld [vmem:[#allocation5 + $0xfa8] sm:$0xff]
        %v1281 = vld [vmem:[#allocation5 + $0xfb0] sm:$0xff]
        %v1282 = vld [vmem:[#allocation5 + $0xfb8] sm:$0xff]
        %v1283 = vld [vmem:[#allocation5 + $0xfc0] sm:$0xff]
        %v1284 = vld [vmem:[#allocation5 + $0xfc8] sm:$0xff]
        %v1285 = vld [vmem:[#allocation5 + $0xfd0] sm:$0xff]
        %v1286 = vld [vmem:[#allocation5 + $0xfd8] sm:$0xff]
        %v1287 = vld [vmem:[#allocation5 + $0xfe0] sm:$0xff]
        %v1288 = vld [vmem:[#allocation5 + $0xfe8] sm:$0xff]
        %v1289 = vld [vmem:[#allocation5 + $0xff0] sm:$0xff]
        %v1290 = vld [vmem:[#allocation5 + $0xff8] sm:$0xff]
        %v1291 = vld [vmem:[#allocation5 + $0x1000] sm:$0xff]
        %v1292 = vld [vmem:[#allocation5 + $0x1008] sm:$0xff]
        %v1293 = vld [vmem:[#allocation5 + $0x1010] sm:$0xff]
        %v1294 = vld [vmem:[#allocation5 + $0x1018] sm:$0xff]
        %v1295 = vld [vmem:[#allocation5 + $0x1020] sm:$0xff]
        %v1296 = vld [vmem:[#allocation5 + $0x1028] sm:$0xff]
        %v1297 = vld [vmem:[#allocation5 + $0x1030] sm:$0xff]
        %v1298 = vld [vmem:[#allocation5 + $0x1038] sm:$0xff]
        %v1299 = vld [vmem:[#allocation5 + $0x1040] sm:$0xff]
        %v1300 = vld [vmem:[#allocation5 + $0x1048] sm:$0xff]
        %v1301 = vld [vmem:[#allocation5 + $0x1050] sm:$0xff]
        %v1302 = vld [vmem:[#allocation5 + $0x1058] sm:$0xff]
        %v1303 = vld [vmem:[#allocation5 + $0x1060] sm:$0xff]
        %v1304 = vld [vmem:[#allocation5 + $0x1068] sm:$0xff]
        %v1305 = vld [vmem:[#allocation5 + $0x1070] sm:$0xff]
        %v1306 = vld [vmem:[#allocation5 + $0x1078] sm:$0xff]
        %v1307 = vld [vmem:[#allocation5 + $0x1080] sm:$0xff]
        %v1308 = vld [vmem:[#allocation5 + $0x1088] sm:$0xff]
        %v1309 = vld [vmem:[#allocation5 + $0x1090] sm:$0xff]
        %v1310 = vld [vmem:[#allocation5 + $0x1098] sm:$0xff]
        %v1311 = vld [vmem:[#allocation5 + $0x10a0] sm:$0xff]
        %v1312 = vld [vmem:[#allocation5 + $0x10a8] sm:$0xff]
        %v1313 = vld [vmem:[#allocation5 + $0x10b0] sm:$0xff]
        %v1314 = vld [vmem:[#allocation5 + $0x10b8] sm:$0xff]
        %v1315 = vld [vmem:[#allocation5 + $0x10c0] sm:$0xff]
        %v1316 = vld [vmem:[#allocation5 + $0x10c8] sm:$0xff]
        %v1317 = vld [vmem:[#allocation5 + $0x10d0] sm:$0xff]
        %v1318 = vld [vmem:[#allocation5 + $0x10d8] sm:$0xff]
        %v1319 = vld [vmem:[#allocation5 + $0x10e0] sm:$0xff]
        %v1320 = vld [vmem:[#allocation5 + $0x10e8] sm:$0xff]
        %v1321 = vld [vmem:[#allocation5 + $0x10f0] sm:$0xff]
        %v1322 = vld [vmem:[#allocation5 + $0x10f8] sm:$0xff]
        %v1323 = vld [vmem:[#allocation5 + $0x1100] sm:$0xff]
        %v1324 = vld [vmem:[#allocation5 + $0x1108] sm:$0xff]
        %v1325 = vld [vmem:[#allocation5 + $0x1110] sm:$0xff]
        %v1326 = vld [vmem:[#allocation5 + $0x1118] sm:$0xff]
        %v1327 = vld [vmem:[#allocation5 + $0x1120] sm:$0xff]
        %v1328 = vld [vmem:[#allocation5 + $0x1128] sm:$0xff]
        %v1329 = vld [vmem:[#allocation5 + $0x1130] sm:$0xff]
        %v1330 = vld [vmem:[#allocation5 + $0x1138] sm:$0xff]
        %v1331 = vld [vmem:[#allocation5 + $0x1140] sm:$0xff]
        %v1332 = vld [vmem:[#allocation5 + $0x1148] sm:$0xff]
        %v1333 = vld [vmem:[#allocation5 + $0x1150] sm:$0xff]
        %v1334 = vld [vmem:[#allocation5 + $0x1158] sm:$0xff]
        %v1335 = vld [vmem:[#allocation5 + $0x1160] sm:$0xff]
        %v1336 = vld [vmem:[#allocation5 + $0x1168] sm:$0xff]
        %v1337 = vld [vmem:[#allocation5 + $0x1170] sm:$0xff]
        %v1338 = vld [vmem:[#allocation5 + $0x1178] sm:$0xff]
        %v1339 = vld [vmem:[#allocation5 + $0x1180] sm:$0xff]
        %v1340 = vld [vmem:[#allocation5 + $0x1188] sm:$0xff]
        %v1341 = vld [vmem:[#allocation5 + $0x1190] sm:$0xff]
        %v1342 = vld [vmem:[#allocation5 + $0x1198] sm:$0xff]
        %v1343 = vld [vmem:[#allocation5 + $0x11a0] sm:$0xff]
        %v1344 = vld [vmem:[#allocation5 + $0x11a8] sm:$0xff]
        %v1345 = vld [vmem:[#allocation5 + $0x11b0] sm:$0xff]
        %v1346 = vld [vmem:[#allocation5 + $0x11b8] sm:$0xff]
        %v1347 = vld [vmem:[#allocation5 + $0x11c0] sm:$0xff]
        %v1348 = vld [vmem:[#allocation5 + $0x11c8] sm:$0xff]
        %v1349 = vld [vmem:[#allocation5 + $0x11d0] sm:$0xff]
        %v1350 = vld [vmem:[#allocation5 + $0x11d8] sm:$0xff]
        %v1351 = vld [vmem:[#allocation5 + $0x11e0] sm:$0xff]
        %v1352 = vld [vmem:[#allocation5 + $0x11e8] sm:$0xff]
        %v1353 = vld [vmem:[#allocation5 + $0x11f0] sm:$0xff]
        %v1354 = vld [vmem:[#allocation5 + $0x11f8] sm:$0xff]
        %v1355 = vld [vmem:[#allocation5 + $0x1200] sm:$0xff]
        %v1356 = vld [vmem:[#allocation5 + $0x1208] sm:$0xff]
        %v1357 = vld [vmem:[#allocation5 + $0x1210] sm:$0xff]
        %v1358 = vld [vmem:[#allocation5 + $0x1218] sm:$0xff]
        %v1359 = vld [vmem:[#allocation5 + $0x1220] sm:$0xff]
        %v1360 = vld [vmem:[#allocation5 + $0x1228] sm:$0xff]
        %v1361 = vld [vmem:[#allocation5 + $0x1230] sm:$0xff]
        %v1362 = vld [vmem:[#allocation5 + $0x1238] sm:$0xff]
        %v1363 = vld [vmem:[#allocation5 + $0x1240] sm:$0xff]
        %v1364 = vld [vmem:[#allocation5 + $0x1248] sm:$0xff]
        %v1365 = vld [vmem:[#allocation5 + $0x1250] sm:$0xff]
        %v1366 = vld [vmem:[#allocation5 + $0x1258] sm:$0xff]
        %v1367 = vld [vmem:[#allocation5 + $0x1260] sm:$0xff]
        %v1368 = vld [vmem:[#allocation5 + $0x1268] sm:$0xff]
        %v1369 = vld [vmem:[#allocation5 + $0x1270] sm:$0xff]
        %v1370 = vld [vmem:[#allocation5 + $0x1278] sm:$0xff]
        %v1371 = vld [vmem:[#allocation5 + $0x1280] sm:$0xff]
        %v1372 = vld [vmem:[#allocation5 + $0x1288] sm:$0xff]
        %v1373 = vld [vmem:[#allocation5 + $0x1290] sm:$0xff]
        %v1374 = vld [vmem:[#allocation5 + $0x1298] sm:$0xff]
        %v1375 = vld [vmem:[#allocation5 + $0x12a0] sm:$0xff]
        %v1376 = vld [vmem:[#allocation5 + $0x12a8] sm:$0xff]
        %v1377 = vld [vmem:[#allocation5 + $0x12b0] sm:$0xff]
        %v1378 = vld [vmem:[#allocation5 + $0x12b8] sm:$0xff]
        %v1379 = vld [vmem:[#allocation5 + $0x12c0] sm:$0xff]
        %v1380 = vld [vmem:[#allocation5 + $0x12c8] sm:$0xff]
        %v1381 = vld [vmem:[#allocation5 + $0x12d0] sm:$0xff]
        %v1382 = vld [vmem:[#allocation5 + $0x12d8] sm:$0xff]
        %v1383 = vld [vmem:[#allocation5 + $0x12e0] sm:$0xff]
        %v1384 = vld [vmem:[#allocation5 + $0x12e8] sm:$0xff]
        %v1385 = vld [vmem:[#allocation5 + $0x12f0] sm:$0xff]
        %v1386 = vld [vmem:[#allocation5 + $0x12f8] sm:$0xff]
        %v1387 = vld [vmem:[#allocation5 + $0x1300] sm:$0xff]
        %v1388 = vld [vmem:[#allocation5 + $0x1308] sm:$0xff]
        %v1389 = vld [vmem:[#allocation5 + $0x1310] sm:$0xff]
        %v1390 = vld [vmem:[#allocation5 + $0x1318] sm:$0xff]
        %v1391 = vld [vmem:[#allocation5 + $0x1320] sm:$0xff]
        %v1392 = vld [vmem:[#allocation5 + $0x1328] sm:$0xff]
        %v1393 = vld [vmem:[#allocation5 + $0x1330] sm:$0xff]
        %v1394 = vld [vmem:[#allocation5 + $0x1338] sm:$0xff]
        %v1395 = vld [vmem:[#allocation5 + $0x1340] sm:$0xff]
        %v1396 = vld [vmem:[#allocation5 + $0x1348] sm:$0xff]
        %v1397 = vld [vmem:[#allocation5 + $0x1350] sm:$0xff]
        %v1398 = vld [vmem:[#allocation5 + $0x1358] sm:$0xff]
        %v1399 = vld [vmem:[#allocation5 + $0x1360] sm:$0xff]
        %v1400 = vld [vmem:[#allocation5 + $0x1368] sm:$0xff]
        %v1401 = vld [vmem:[#allocation5 + $0x1370] sm:$0xff]
        %v1402 = vld [vmem:[#allocation5 + $0x1378] sm:$0xff]
        %v1403 = vld [vmem:[#allocation5 + $0x1380] sm:$0xff]
        %v1404 = vld [vmem:[#allocation5 + $0x1388] sm:$0xff]
        %v1405 = vld [vmem:[#allocation5 + $0x1390] sm:$0xff]
        %v1406 = vld [vmem:[#allocation5 + $0x1398] sm:$0xff]
        %v1407 = vld [vmem:[#allocation5 + $0x13a0] sm:$0xff]
        %v1408 = vld [vmem:[#allocation5 + $0x13a8] sm:$0xff]
        %v1409 = vld [vmem:[#allocation5 + $0x13b0] sm:$0xff]
        %v1410 = vld [vmem:[#allocation5 + $0x13b8] sm:$0xff]
        %v1411 = vld [vmem:[#allocation5 + $0x13c0] sm:$0xff]
        %v1412 = vld [vmem:[#allocation5 + $0x13c8] sm:$0xff]
        %v1413 = vld [vmem:[#allocation5 + $0x13d0] sm:$0xff]
        %v1414 = vld [vmem:[#allocation5 + $0x13d8] sm:$0xff]
        %v1415 = vld [vmem:[#allocation5 + $0x13e0] sm:$0xff]
        %v1416 = vld [vmem:[#allocation5 + $0x13e8] sm:$0xff]
        %v1417 = vld [vmem:[#allocation5 + $0x13f0] sm:$0xff]
        %v1418 = vld [vmem:[#allocation5 + $0x13f8] sm:$0xff]
        %v1419 = vld [vmem:[#allocation5 + $0x1400] sm:$0xff]
        %v1420 = vld [vmem:[#allocation5 + $0x1408] sm:$0xff]
        %v1421 = vld [vmem:[#allocation5 + $0x1410] sm:$0xff]
        %v1422 = vld [vmem:[#allocation5 + $0x1418] sm:$0xff]
        %v1423 = vld [vmem:[#allocation5 + $0x1420] sm:$0xff]
        %v1424 = vld [vmem:[#allocation5 + $0x1428] sm:$0xff]
        %v1425 = vld [vmem:[#allocation5 + $0x1430] sm:$0xff]
        %v1426 = vld [vmem:[#allocation5 + $0x1438] sm:$0xff]
        %v1427 = vld [vmem:[#allocation5 + $0x1440] sm:$0xff]
        %v1428 = vld [vmem:[#allocation5 + $0x1448] sm:$0xff]
        %v1429 = vld [vmem:[#allocation5 + $0x1450] sm:$0xff]
        %v1430 = vld [vmem:[#allocation5 + $0x1458] sm:$0xff]
        %v1431 = vld [vmem:[#allocation5 + $0x1460] sm:$0xff]
        %v1432 = vld [vmem:[#allocation5 + $0x1468] sm:$0xff]
        %v1433 = vld [vmem:[#allocation5 + $0x1470] sm:$0xff]
        %v1434 = vld [vmem:[#allocation5 + $0x1478] sm:$0xff]
        %v1435 = vld [vmem:[#allocation5 + $0x1480] sm:$0xff]
        %v1436 = vld [vmem:[#allocation5 + $0x1488] sm:$0xff]
        %v1437 = vld [vmem:[#allocation5 + $0x1490] sm:$0xff]
        %v1438 = vld [vmem:[#allocation5 + $0x1498] sm:$0xff]
        %v1439 = vld [vmem:[#allocation5 + $0x14a0] sm:$0xff]
        %v1440 = vld [vmem:[#allocation5 + $0x14a8] sm:$0xff]
        %v1441 = vld [vmem:[#allocation5 + $0x14b0] sm:$0xff]
        %v1442 = vld [vmem:[#allocation5 + $0x14b8] sm:$0xff]
        %v1443 = vld [vmem:[#allocation5 + $0x14c0] sm:$0xff]
        %v1444 = vld [vmem:[#allocation5 + $0x14c8] sm:$0xff]
        %v1445 = vld [vmem:[#allocation5 + $0x14d0] sm:$0xff]
        %v1446 = vld [vmem:[#allocation5 + $0x14d8] sm:$0xff]
        %v1447 = vld [vmem:[#allocation5 + $0x14e0] sm:$0xff]
        %v1448 = vld [vmem:[#allocation5 + $0x14e8] sm:$0xff]
        %v1449 = vld [vmem:[#allocation5 + $0x14f0] sm:$0xff]
        %v1450 = vld [vmem:[#allocation5 + $0x14f8] sm:$0xff]
        %v1451 = vld [vmem:[#allocation5 + $0x1500] sm:$0xff]
        %v1452 = vld [vmem:[#allocation5 + $0x1508] sm:$0xff]
        %v1453 = vld [vmem:[#allocation5 + $0x1510] sm:$0xff]
        %v1454 = vld [vmem:[#allocation5 + $0x1518] sm:$0xff]
        %v1455 = vld [vmem:[#allocation5 + $0x1520] sm:$0xff]
        %v1456 = vld [vmem:[#allocation5 + $0x1528] sm:$0xff]
        %v1457 = vld [vmem:[#allocation5 + $0x1530] sm:$0xff]
        %v1458 = vld [vmem:[#allocation5 + $0x1538] sm:$0xff]
        %v1459 = vld [vmem:[#allocation5 + $0x1540] sm:$0xff]
        %v1460 = vld [vmem:[#allocation5 + $0x1548] sm:$0xff]
        %v1461 = vld [vmem:[#allocation5 + $0x1550] sm:$0xff]
        %v1462 = vld [vmem:[#allocation5 + $0x1558] sm:$0xff]
        %v1463 = vld [vmem:[#allocation5 + $0x1560] sm:$0xff]
        %v1464 = vld [vmem:[#allocation5 + $0x1568] sm:$0xff]
        %v1465 = vld [vmem:[#allocation5 + $0x1570] sm:$0xff]
        %v1466 = vld [vmem:[#allocation5 + $0x1578] sm:$0xff]
        %v1467 = vld [vmem:[#allocation5 + $0x1580] sm:$0xff]
        %v1468 = vld [vmem:[#allocation5 + $0x1588] sm:$0xff]
        %v1469 = vld [vmem:[#allocation5 + $0x1590] sm:$0xff]
        %v1470 = vld [vmem:[#allocation5 + $0x1598] sm:$0xff]
        %v1471 = vld [vmem:[#allocation5 + $0x15a0] sm:$0xff]
        %v1472 = vld [vmem:[#allocation5 + $0x15a8] sm:$0xff]
        %v1473 = vld [vmem:[#allocation5 + $0x15b0] sm:$0xff]
        %v1474 = vld [vmem:[#allocation5 + $0x15b8] sm:$0xff]
        %v1475 = vld [vmem:[#allocation5 + $0x15c0] sm:$0xff]
        %v1476 = vld [vmem:[#allocation5 + $0x15c8] sm:$0xff]
        %v1477 = vld [vmem:[#allocation5 + $0x15d0] sm:$0xff]
        %v1478 = vld [vmem:[#allocation5 + $0x15d8] sm:$0xff]
        %v1479 = vld [vmem:[#allocation5 + $0x15e0] sm:$0xff]
        %v1480 = vld [vmem:[#allocation5 + $0x15e8] sm:$0xff]
        %v1481 = vld [vmem:[#allocation5 + $0x15f0] sm:$0xff]
        %v1482 = vld [vmem:[#allocation5 + $0x15f8] sm:$0xff]
        %v1483 = vld [vmem:[#allocation5 + $0x1600] sm:$0xff]
        %v1484 = vld [vmem:[#allocation5 + $0x1608] sm:$0xff]
        %v1485 = vld [vmem:[#allocation5 + $0x1610] sm:$0xff]
        %v1486 = vld [vmem:[#allocation5 + $0x1618] sm:$0xff]
        %v1487 = vld [vmem:[#allocation5 + $0x1620] sm:$0xff]
        %v1488 = vld [vmem:[#allocation5 + $0x1628] sm:$0xff]
        %v1489 = vld [vmem:[#allocation5 + $0x1630] sm:$0xff]
        %v1490 = vld [vmem:[#allocation5 + $0x1638] sm:$0xff]
        %v1491 = vld [vmem:[#allocation5 + $0x1640] sm:$0xff]
        %v1492 = vld [vmem:[#allocation5 + $0x1648] sm:$0xff]
        %v1493 = vld [vmem:[#allocation5 + $0x1650] sm:$0xff]
        %v1494 = vld [vmem:[#allocation5 + $0x1658] sm:$0xff]
        %v1495 = vld [vmem:[#allocation5 + $0x1660] sm:$0xff]
        %v1496 = vld [vmem:[#allocation5 + $0x1668] sm:$0xff]
        %v1497 = vld [vmem:[#allocation5 + $0x1670] sm:$0xff]
        %v1498 = vld [vmem:[#allocation5 + $0x1678] sm:$0xff]
        %v1499 = vld [vmem:[#allocation5 + $0x1680] sm:$0xff]
        %v1500 = vld [vmem:[#allocation5 + $0x1688] sm:$0xff]
        %v1501 = vld [vmem:[#allocation5 + $0x1690] sm:$0xff]
        %v1502 = vld [vmem:[#allocation5 + $0x1698] sm:$0xff]
        %v1503 = vld [vmem:[#allocation5 + $0x16a0] sm:$0xff]
        %v1504 = vld [vmem:[#allocation5 + $0x16a8] sm:$0xff]
        %v1505 = vld [vmem:[#allocation5 + $0x16b0] sm:$0xff]
        %v1506 = vld [vmem:[#allocation5 + $0x16b8] sm:$0xff]
        %v1507 = vld [vmem:[#allocation5 + $0x16c0] sm:$0xff]
        %v1508 = vld [vmem:[#allocation5 + $0x16c8] sm:$0xff]
        %v1509 = vld [vmem:[#allocation5 + $0x16d0] sm:$0xff]
        %v1510 = vld [vmem:[#allocation5 + $0x16d8] sm:$0xff]
        %v1511 = vld [vmem:[#allocation5 + $0x16e0] sm:$0xff]
        %v1512 = vld [vmem:[#allocation5 + $0x16e8] sm:$0xff]
        %v1513 = vld [vmem:[#allocation5 + $0x16f0] sm:$0xff]
        %v1514 = vld [vmem:[#allocation5 + $0x16f8] sm:$0xff]
        %v1515 = vld [vmem:[#allocation5 + $0x1700] sm:$0xff]
        %v1516 = vld [vmem:[#allocation5 + $0x1708] sm:$0xff]
        %v1517 = vld [vmem:[#allocation5 + $0x1710] sm:$0xff]
        %v1518 = vld [vmem:[#allocation5 + $0x1718] sm:$0xff]
        %v1519 = vld [vmem:[#allocation5 + $0x1720] sm:$0xff]
        %v1520 = vld [vmem:[#allocation5 + $0x1728] sm:$0xff]
        %v1521 = vld [vmem:[#allocation5 + $0x1730] sm:$0xff]
        %v1522 = vld [vmem:[#allocation5 + $0x1738] sm:$0xff]
        %v1523 = vld [vmem:[#allocation5 + $0x1740] sm:$0xff]
        %v1524 = vld [vmem:[#allocation5 + $0x1748] sm:$0xff]
        %v1525 = vld [vmem:[#allocation5 + $0x1750] sm:$0xff]
        %v1526 = vld [vmem:[#allocation5 + $0x1758] sm:$0xff]
        %v1527 = vld [vmem:[#allocation5 + $0x1760] sm:$0xff]
        %v1528 = vld [vmem:[#allocation5 + $0x1768] sm:$0xff]
        %v1529 = vld [vmem:[#allocation5 + $0x1770] sm:$0xff]
        %v1530 = vld [vmem:[#allocation5 + $0x1778] sm:$0xff]
        %v1531 = vld [vmem:[#allocation5 + $0x1780] sm:$0xff]
        %v1532 = vld [vmem:[#allocation5 + $0x1788] sm:$0xff]
        %v1533 = vld [vmem:[#allocation5 + $0x1790] sm:$0xff]
        %v1534 = vld [vmem:[#allocation5 + $0x1798] sm:$0xff]
        %v1535 = vld [vmem:[#allocation5 + $0x17a0] sm:$0xff]
        %v1536 = vld [vmem:[#allocation5 + $0x17a8] sm:$0xff]
        %v1537 = vld [vmem:[#allocation5 + $0x17b0] sm:$0xff]
        %v1538 = vld [vmem:[#allocation5 + $0x17b8] sm:$0xff]
        %v1539 = vld [vmem:[#allocation5 + $0x17c0] sm:$0xff]
        %v1540 = vld [vmem:[#allocation5 + $0x17c8] sm:$0xff]
        %v1541 = vld [vmem:[#allocation5 + $0x17d0] sm:$0xff]
        %v1542 = vld [vmem:[#allocation5 + $0x17d8] sm:$0xff]
        %v1543 = vld [vmem:[#allocation5 + $0x17e0] sm:$0xff]
        %v1544 = vld [vmem:[#allocation5 + $0x17e8] sm:$0xff]
        %v1545 = vld [vmem:[#allocation5 + $0x17f0] sm:$0xff]
        %v1546 = vld [vmem:[#allocation5 + $0x17f8] sm:$0xff]
        %v1547 = vld [vmem:[#allocation5 + $0x1800] sm:$0xff]
        %v1548 = vld [vmem:[#allocation5 + $0x1808] sm:$0xff]
        %v1549 = vld [vmem:[#allocation5 + $0x1810] sm:$0xff]
        %v1550 = vld [vmem:[#allocation5 + $0x1818] sm:$0xff]
        %v1551 = vld [vmem:[#allocation5 + $0x1820] sm:$0xff]
        %v1552 = vld [vmem:[#allocation5 + $0x1828] sm:$0xff]
        %v1553 = vld [vmem:[#allocation5 + $0x1830] sm:$0xff]
        %v1554 = vld [vmem:[#allocation5 + $0x1838] sm:$0xff]
        %v1555 = vld [vmem:[#allocation5 + $0x1840] sm:$0xff]
        %v1556 = vld [vmem:[#allocation5 + $0x1848] sm:$0xff]
        %v1557 = vld [vmem:[#allocation5 + $0x1850] sm:$0xff]
        %v1558 = vld [vmem:[#allocation5 + $0x1858] sm:$0xff]
        %v1559 = vld [vmem:[#allocation5 + $0x1860] sm:$0xff]
        %v1560 = vld [vmem:[#allocation5 + $0x1868] sm:$0xff]
        %v1561 = vld [vmem:[#allocation5 + $0x1870] sm:$0xff]
        %v1562 = vld [vmem:[#allocation5 + $0x1878] sm:$0xff]
        %v1563 = vld [vmem:[#allocation5 + $0x1880] sm:$0xff]
        %v1564 = vld [vmem:[#allocation5 + $0x1888] sm:$0xff]
        %v1565 = vld [vmem:[#allocation5 + $0x1890] sm:$0xff]
        %v1566 = vld [vmem:[#allocation5 + $0x1898] sm:$0xff]
        %v1567 = vld [vmem:[#allocation5 + $0x18a0] sm:$0xff]
        %v1568 = vld [vmem:[#allocation5 + $0x18a8] sm:$0xff]
        %v1569 = vld [vmem:[#allocation5 + $0x18b0] sm:$0xff]
        %v1570 = vld [vmem:[#allocation5 + $0x18b8] sm:$0xff]
        %v1571 = vld [vmem:[#allocation5 + $0x18c0] sm:$0xff]
        %v1572 = vld [vmem:[#allocation5 + $0x18c8] sm:$0xff]
        %v1573 = vld [vmem:[#allocation5 + $0x18d0] sm:$0xff]
        %v1574 = vld [vmem:[#allocation5 + $0x18d8] sm:$0xff]
        %v1575 = vld [vmem:[#allocation5 + $0x18e0] sm:$0xff]
        %v1576 = vld [vmem:[#allocation5 + $0x18e8] sm:$0xff]
        %v1577 = vld [vmem:[#allocation5 + $0x18f0] sm:$0xff]
        %v1578 = vld [vmem:[#allocation5 + $0x18f8] sm:$0xff]
        %v1579 = vld [vmem:[#allocation5 + $0x1900] sm:$0xff]
        %v1580 = vld [vmem:[#allocation5 + $0x1908] sm:$0xff]
        %v1581 = vld [vmem:[#allocation5 + $0x1910] sm:$0xff]
        %v1582 = vld [vmem:[#allocation5 + $0x1918] sm:$0xff]
        %v1583 = vld [vmem:[#allocation5 + $0x1920] sm:$0xff]
        %v1584 = vld [vmem:[#allocation5 + $0x1928] sm:$0xff]
        %v1585 = vld [vmem:[#allocation5 + $0x1930] sm:$0xff]
        %v1586 = vld [vmem:[#allocation5 + $0x1938] sm:$0xff]
        %v1587 = vld [vmem:[#allocation5 + $0x1940] sm:$0xff]
        %v1588 = vld [vmem:[#allocation5 + $0x1948] sm:$0xff]
        %v1589 = vld [vmem:[#allocation5 + $0x1950] sm:$0xff]
        %v1590 = vld [vmem:[#allocation5 + $0x1958] sm:$0xff]
        %v1591 = vld [vmem:[#allocation5 + $0x1960] sm:$0xff]
        %v1592 = vld [vmem:[#allocation5 + $0x1968] sm:$0xff]
        %v1593 = vld [vmem:[#allocation5 + $0x1970] sm:$0xff]
        %v1594 = vld [vmem:[#allocation5 + $0x1978] sm:$0xff]
        %v1595 = vld [vmem:[#allocation5 + $0x1980] sm:$0xff]
        %v1596 = vld [vmem:[#allocation5 + $0x1988] sm:$0xff]
        %v1597 = vld [vmem:[#allocation5 + $0x1990] sm:$0xff]
        %v1598 = vld [vmem:[#allocation5 + $0x1998] sm:$0xff]
        %v1599 = vld [vmem:[#allocation5 + $0x19a0] sm:$0xff]
        %v1600 = vld [vmem:[#allocation5 + $0x19a8] sm:$0xff]
        %v1601 = vld [vmem:[#allocation5 + $0x19b0] sm:$0xff]
        %v1602 = vld [vmem:[#allocation5 + $0x19b8] sm:$0xff]
        %v1603 = vld [vmem:[#allocation5 + $0x19c0] sm:$0xff]
        %v1604 = vld [vmem:[#allocation5 + $0x19c8] sm:$0xff]
        %v1605 = vld [vmem:[#allocation5 + $0x19d0] sm:$0xff]
        %v1606 = vld [vmem:[#allocation5 + $0x19d8] sm:$0xff]
        %v1607 = vld [vmem:[#allocation5 + $0x19e0] sm:$0xff]
        %v1608 = vld [vmem:[#allocation5 + $0x19e8] sm:$0xff]
        %v1609 = vld [vmem:[#allocation5 + $0x19f0] sm:$0xff]
        %v1610 = vld [vmem:[#allocation5 + $0x19f8] sm:$0xff]
        %v1611 = vld [vmem:[#allocation5 + $0x1a00] sm:$0xff]
        %v1612 = vld [vmem:[#allocation5 + $0x1a08] sm:$0xff]
        %v1613 = vld [vmem:[#allocation5 + $0x1a10] sm:$0xff]
        %v1614 = vld [vmem:[#allocation5 + $0x1a18] sm:$0xff]
        %v1615 = vld [vmem:[#allocation5 + $0x1a20] sm:$0xff]
        %v1616 = vld [vmem:[#allocation5 + $0x1a28] sm:$0xff]
        %v1617 = vld [vmem:[#allocation5 + $0x1a30] sm:$0xff]
        %v1618 = vld [vmem:[#allocation5 + $0x1a38] sm:$0xff]
        %v1619 = vld [vmem:[#allocation5 + $0x1a40] sm:$0xff]
        %v1620 = vld [vmem:[#allocation5 + $0x1a48] sm:$0xff]
        %v1621 = vld [vmem:[#allocation5 + $0x1a50] sm:$0xff]
        %v1622 = vld [vmem:[#allocation5 + $0x1a58] sm:$0xff]
        %v1623 = vld [vmem:[#allocation5 + $0x1a60] sm:$0xff]
        %v1624 = vld [vmem:[#allocation5 + $0x1a68] sm:$0xff]
        %v1625 = vld [vmem:[#allocation5 + $0x1a70] sm:$0xff]
        %v1626 = vld [vmem:[#allocation5 + $0x1a78] sm:$0xff]
        %v1627 = vld [vmem:[#allocation5 + $0x1a80] sm:$0xff]
        %v1628 = vld [vmem:[#allocation5 + $0x1a88] sm:$0xff]
        %v1629 = vld [vmem:[#allocation5 + $0x1a90] sm:$0xff]
        %v1630 = vld [vmem:[#allocation5 + $0x1a98] sm:$0xff]
        %v1631 = vld [vmem:[#allocation5 + $0x1aa0] sm:$0xff]
        %v1632 = vld [vmem:[#allocation5 + $0x1aa8] sm:$0xff]
        %v1633 = vld [vmem:[#allocation5 + $0x1ab0] sm:$0xff]
        %v1634 = vld [vmem:[#allocation5 + $0x1ab8] sm:$0xff]
        %v1635 = vld [vmem:[#allocation5 + $0x1ac0] sm:$0xff]
        %v1636 = vld [vmem:[#allocation5 + $0x1ac8] sm:$0xff]
        %v1637 = vld [vmem:[#allocation5 + $0x1ad0] sm:$0xff]
        %v1638 = vld [vmem:[#allocation5 + $0x1ad8] sm:$0xff]
        %v1639 = vld [vmem:[#allocation5 + $0x1ae0] sm:$0xff]
        %v1640 = vld [vmem:[#allocation5 + $0x1ae8] sm:$0xff]
        %v1641 = vld [vmem:[#allocation5 + $0x1af0] sm:$0xff]
        %v1642 = vld [vmem:[#allocation5 + $0x1af8] sm:$0xff]
        %v1643 = vld [vmem:[#allocation5 + $0x1b00] sm:$0xff]
        %v1644 = vld [vmem:[#allocation5 + $0x1b08] sm:$0xff]
        %v1645 = vld [vmem:[#allocation5 + $0x1b10] sm:$0xff]
        %v1646 = vld [vmem:[#allocation5 + $0x1b18] sm:$0xff]
        %v1647 = vld [vmem:[#allocation5 + $0x1b20] sm:$0xff]
        %v1648 = vld [vmem:[#allocation5 + $0x1b28] sm:$0xff]
        %v1649 = vld [vmem:[#allocation5 + $0x1b30] sm:$0xff]
        %v1650 = vld [vmem:[#allocation5 + $0x1b38] sm:$0xff]
        %v1651 = vld [vmem:[#allocation5 + $0x1b40] sm:$0xff]
        %v1652 = vld [vmem:[#allocation5 + $0x1b48] sm:$0xff]
        %v1653 = vld [vmem:[#allocation5 + $0x1b50] sm:$0xff]
        %v1654 = vld [vmem:[#allocation5 + $0x1b58] sm:$0xff]
        %v1655 = vld [vmem:[#allocation5 + $0x1b60] sm:$0xff]
        %v1656 = vld [vmem:[#allocation5 + $0x1b68] sm:$0xff]
        %v1657 = vld [vmem:[#allocation5 + $0x1b70] sm:$0xff]
        %v1658 = vld [vmem:[#allocation5 + $0x1b78] sm:$0xff]
        %v1659 = vld [vmem:[#allocation5 + $0x1b80] sm:$0xff]
        %v1660 = vld [vmem:[#allocation5 + $0x1b88] sm:$0xff]
        %v1661 = vld [vmem:[#allocation5 + $0x1b90] sm:$0xff]
        %v1662 = vld [vmem:[#allocation5 + $0x1b98] sm:$0xff]
        %v1663 = vld [vmem:[#allocation5 + $0x1ba0] sm:$0xff]
        %v1664 = vld [vmem:[#allocation5 + $0x1ba8] sm:$0xff]
        %v1665 = vld [vmem:[#allocation5 + $0x1bb0] sm:$0xff]
        %v1666 = vld [vmem:[#allocation5 + $0x1bb8] sm:$0xff]
        %v1667 = vld [vmem:[#allocation5 + $0x1bc0] sm:$0xff]
        %v1668 = vld [vmem:[#allocation5 + $0x1bc8] sm:$0xff]
        %v1669 = vld [vmem:[#allocation5 + $0x1bd0] sm:$0xff]
        %v1670 = vld [vmem:[#allocation5 + $0x1bd8] sm:$0xff]
        %v1671 = vld [vmem:[#allocation5 + $0x1be0] sm:$0xff]
        %v1672 = vld [vmem:[#allocation5 + $0x1be8] sm:$0xff]
        %v1673 = vld [vmem:[#allocation5 + $0x1bf0] sm:$0xff]
        %v1674 = vld [vmem:[#allocation5 + $0x1bf8] sm:$0xff]
        %v1675 = vld [vmem:[#allocation5 + $0x1c00] sm:$0xff]
        %v1676 = vld [vmem:[#allocation5 + $0x1c08] sm:$0xff]
        %v1677 = vld [vmem:[#allocation5 + $0x1c10] sm:$0xff]
        %v1678 = vld [vmem:[#allocation5 + $0x1c18] sm:$0xff]
        %v1679 = vld [vmem:[#allocation5 + $0x1c20] sm:$0xff]
        %v1680 = vld [vmem:[#allocation5 + $0x1c28] sm:$0xff]
        %v1681 = vld [vmem:[#allocation5 + $0x1c30] sm:$0xff]
        %v1682 = vld [vmem:[#allocation5 + $0x1c38] sm:$0xff]
        %v1683 = vld [vmem:[#allocation5 + $0x1c40] sm:$0xff]
        %v1684 = vld [vmem:[#allocation5 + $0x1c48] sm:$0xff]
        %v1685 = vld [vmem:[#allocation5 + $0x1c50] sm:$0xff]
        %v1686 = vld [vmem:[#allocation5 + $0x1c58] sm:$0xff]
        %v1687 = vld [vmem:[#allocation5 + $0x1c60] sm:$0xff]
        %v1688 = vld [vmem:[#allocation5 + $0x1c68] sm:$0xff]
        %v1689 = vld [vmem:[#allocation5 + $0x1c70] sm:$0xff]
        %v1690 = vld [vmem:[#allocation5 + $0x1c78] sm:$0xff]
        %v1691 = vld [vmem:[#allocation5 + $0x1c80] sm:$0xff]
        %v1692 = vld [vmem:[#allocation5 + $0x1c88] sm:$0xff]
        %v1693 = vld [vmem:[#allocation5 + $0x1c90] sm:$0xff]
        %v1694 = vld [vmem:[#allocation5 + $0x1c98] sm:$0xff]
        %v1695 = vld [vmem:[#allocation5 + $0x1ca0] sm:$0xff]
        %v1696 = vld [vmem:[#allocation5 + $0x1ca8] sm:$0xff]
        %v1697 = vld [vmem:[#allocation5 + $0x1cb0] sm:$0xff]
        %v1698 = vld [vmem:[#allocation5 + $0x1cb8] sm:$0xff]
        %v1699 = vld [vmem:[#allocation5 + $0x1cc0] sm:$0xff]
        %v1700 = vld [vmem:[#allocation5 + $0x1cc8] sm:$0xff]
        %v1701 = vld [vmem:[#allocation5 + $0x1cd0] sm:$0xff]
        %v1702 = vld [vmem:[#allocation5 + $0x1cd8] sm:$0xff]
        %v1703 = vld [vmem:[#allocation5 + $0x1ce0] sm:$0xff]
        %v1704 = vld [vmem:[#allocation5 + $0x1ce8] sm:$0xff]
        %v1705 = vld [vmem:[#allocation5 + $0x1cf0] sm:$0xff]
        %v1706 = vld [vmem:[#allocation5 + $0x1cf8] sm:$0xff]
        %v1707 = vld [vmem:[#allocation5 + $0x1d00] sm:$0xff]
        %v1708 = vld [vmem:[#allocation5 + $0x1d08] sm:$0xff]
        %v1709 = vld [vmem:[#allocation5 + $0x1d10] sm:$0xff]
        %v1710 = vld [vmem:[#allocation5 + $0x1d18] sm:$0xff]
        %v1711 = vld [vmem:[#allocation5 + $0x1d20] sm:$0xff]
        %v1712 = vld [vmem:[#allocation5 + $0x1d28] sm:$0xff]
        %v1713 = vld [vmem:[#allocation5 + $0x1d30] sm:$0xff]
        %v1714 = vld [vmem:[#allocation5 + $0x1d38] sm:$0xff]
        %v1715 = vld [vmem:[#allocation5 + $0x1d40] sm:$0xff]
        %v1716 = vld [vmem:[#allocation5 + $0x1d48] sm:$0xff]
        %v1717 = vld [vmem:[#allocation5 + $0x1d50] sm:$0xff]
        %v1718 = vld [vmem:[#allocation5 + $0x1d58] sm:$0xff]
        %v1719 = vld [vmem:[#allocation5 + $0x1d60] sm:$0xff]
        %v1720 = vld [vmem:[#allocation5 + $0x1d68] sm:$0xff]
        %v1721 = vld [vmem:[#allocation5 + $0x1d70] sm:$0xff]
        %v1722 = vld [vmem:[#allocation5 + $0x1d78] sm:$0xff]
        %v1723 = vld [vmem:[#allocation5 + $0x1d80] sm:$0xff]
        %v1724 = vld [vmem:[#allocation5 + $0x1d88] sm:$0xff]
        %v1725 = vld [vmem:[#allocation5 + $0x1d90] sm:$0xff]
        %v1726 = vld [vmem:[#allocation5 + $0x1d98] sm:$0xff]
        %v1727 = vld [vmem:[#allocation5 + $0x1da0] sm:$0xff]
        %v1728 = vld [vmem:[#allocation5 + $0x1da8] sm:$0xff]
        %v1729 = vld [vmem:[#allocation5 + $0x1db0] sm:$0xff]
        %v1730 = vld [vmem:[#allocation5 + $0x1db8] sm:$0xff]
        %v1731 = vld [vmem:[#allocation5 + $0x1dc0] sm:$0xff]
        %v1732 = vld [vmem:[#allocation5 + $0x1dc8] sm:$0xff]
        %v1733 = vld [vmem:[#allocation5 + $0x1dd0] sm:$0xff]
        %v1734 = vld [vmem:[#allocation5 + $0x1dd8] sm:$0xff]
        %v1735 = vld [vmem:[#allocation5 + $0x1de0] sm:$0xff]
        %v1736 = vld [vmem:[#allocation5 + $0x1de8] sm:$0xff]
        %v1737 = vld [vmem:[#allocation5 + $0x1df0] sm:$0xff]
        %v1738 = vld [vmem:[#allocation5 + $0x1df8] sm:$0xff]
        %v1739 = vld [vmem:[#allocation5 + $0x1e00] sm:$0xff]
        %v1740 = vld [vmem:[#allocation5 + $0x1e08] sm:$0xff]
        %v1741 = vld [vmem:[#allocation5 + $0x1e10] sm:$0xff]
        %v1742 = vld [vmem:[#allocation5 + $0x1e18] sm:$0xff]
        %v1743 = vld [vmem:[#allocation5 + $0x1e20] sm:$0xff]
        %v1744 = vld [vmem:[#allocation5 + $0x1e28] sm:$0xff]
        %v1745 = vld [vmem:[#allocation5 + $0x1e30] sm:$0xff]
        %v1746 = vld [vmem:[#allocation5 + $0x1e38] sm:$0xff]
        %v1747 = vld [vmem:[#allocation5 + $0x1e40] sm:$0xff]
        %v1748 = vld [vmem:[#allocation5 + $0x1e48] sm:$0xff]
        %v1749 = vld [vmem:[#allocation5 + $0x1e50] sm:$0xff]
        %v1750 = vld [vmem:[#allocation5 + $0x1e58] sm:$0xff]
        %v1751 = vld [vmem:[#allocation5 + $0x1e60] sm:$0xff]
        %v1752 = vld [vmem:[#allocation5 + $0x1e68] sm:$0xff]
        %v1753 = vld [vmem:[#allocation5 + $0x1e70] sm:$0xff]
        %v1754 = vld [vmem:[#allocation5 + $0x1e78] sm:$0xff]
        %v1755 = vld [vmem:[#allocation5 + $0x1e80] sm:$0xff]
        %v1756 = vld [vmem:[#allocation5 + $0x1e88] sm:$0xff]
        %v1757 = vld [vmem:[#allocation5 + $0x1e90] sm:$0xff]
        %v1758 = vld [vmem:[#allocation5 + $0x1e98] sm:$0xff]
        %v1759 = vld [vmem:[#allocation5 + $0x1ea0] sm:$0xff]
        %v1760 = vld [vmem:[#allocation5 + $0x1ea8] sm:$0xff]
        %v1761 = vld [vmem:[#allocation5 + $0x1eb0] sm:$0xff]
        %v1762 = vld [vmem:[#allocation5 + $0x1eb8] sm:$0xff]
        %v1763 = vld [vmem:[#allocation5 + $0x1ec0] sm:$0xff]
        %v1764 = vld [vmem:[#allocation5 + $0x1ec8] sm:$0xff]
        %v1765 = vld [vmem:[#allocation5 + $0x1ed0] sm:$0xff]
        %v1766 = vld [vmem:[#allocation5 + $0x1ed8] sm:$0xff]
        %v1767 = vld [vmem:[#allocation5 + $0x1ee0] sm:$0xff]
        %v1768 = vld [vmem:[#allocation5 + $0x1ee8] sm:$0xff]
        %v1769 = vld [vmem:[#allocation5 + $0x1ef0] sm:$0xff]
        %v1770 = vld [vmem:[#allocation5 + $0x1ef8] sm:$0xff]
        %v1771 = vld [vmem:[#allocation5 + $0x1f00] sm:$0xff]
        %v1772 = vld [vmem:[#allocation5 + $0x1f08] sm:$0xff]
        %v1773 = vld [vmem:[#allocation5 + $0x1f10] sm:$0xff]
        %v1774 = vld [vmem:[#allocation5 + $0x1f18] sm:$0xff]
        %v1775 = vld [vmem:[#allocation5 + $0x1f20] sm:$0xff]
        %v1776 = vld [vmem:[#allocation5 + $0x1f28] sm:$0xff]
        %v1777 = vld [vmem:[#allocation5 + $0x1f30] sm:$0xff]
        %v1778 = vld [vmem:[#allocation5 + $0x1f38] sm:$0xff]
        %v1779 = vld [vmem:[#allocation5 + $0x1f40] sm:$0xff]
        %v1780 = vld [vmem:[#allocation5 + $0x1f48] sm:$0xff]
        %v1781 = vld [vmem:[#allocation5 + $0x1f50] sm:$0xff]
        %v1782 = vld [vmem:[#allocation5 + $0x1f58] sm:$0xff]
        %v1783 = vld [vmem:[#allocation5 + $0x1f60] sm:$0xff]
        %v1784 = vld [vmem:[#allocation5 + $0x1f68] sm:$0xff]
        %v1785 = vld [vmem:[#allocation5 + $0x1f70] sm:$0xff]
        %v1786 = vld [vmem:[#allocation5 + $0x1f78] sm:$0xff]
        %v1787 = vld [vmem:[#allocation5 + $0x1f80] sm:$0xff]
        %v1788 = vld [vmem:[#allocation5 + $0x1f88] sm:$0xff]
        %v1789 = vld [vmem:[#allocation5 + $0x1f90] sm:$0xff]
        %v1790 = vld [vmem:[#allocation5 + $0x1f98] sm:$0xff]
        %v1791 = vld [vmem:[#allocation5 + $0x1fa0] sm:$0xff]
        %v1792 = vld [vmem:[#allocation5 + $0x1fa8] sm:$0xff]
        %v1793 = vld [vmem:[#allocation5 + $0x1fb0] sm:$0xff]
        %v1794 = vld [vmem:[#allocation5 + $0x1fb8] sm:$0xff]
        %v1795 = vld [vmem:[#allocation5 + $0x1fc0] sm:$0xff]
        %v1796 = vld [vmem:[#allocation5 + $0x1fc8] sm:$0xff]
        %v1797 = vld [vmem:[#allocation5 + $0x1fd0] sm:$0xff]
        %v1798 = vld [vmem:[#allocation5 + $0x1fd8] sm:$0xff]
        %v1799 = vld [vmem:[#allocation5 + $0x1fe0] sm:$0xff]
        %v1800 = vld [vmem:[#allocation5 + $0x1fe8] sm:$0xff]
        %v1801 = vld [vmem:[#allocation5 + $0x1ff0] sm:$0xff]
        %v1802 = vld [vmem:[#allocation5 + $0x1ff8] sm:$0xff]
        %1803 = vmatprep.subr.mxu0 %v840
        %1804 = vmatpush1.msra.mxu0 %v839
        %1805 = vmatprep.subr.mxu0 %v836
        %1806 = vmatpush1.msra.mxu0 %v835
        %1807 = vmatprep.subr.mxu0 %v832
        %1808 = vmatpush1.msra.mxu0 %v831
        %1809 = vmatprep.subr.mxu0 %v828
        %1810 = vmatpush1.msra.mxu0 %v827
        %1811 = vmatprep.subr.mxu0 %v824
        %1812 = vmatpush1.msra.mxu0 %v823
        %1813 = vmatprep.subr.mxu0 %v820
        %1814 = vmatpush1.msra.mxu0 %v819
        %1815 = vmatprep.subr.mxu0 %v816
        %1816 = vmatpush1.msra.mxu0 %v815
        %1817 = vmatprep.subr.mxu0 %v812
        %1818 = vmatpush1.msra.mxu0 %v811
        %1819 = vmatprep.subr.mxu0 %v808
        %1820 = vmatpush1.msra.mxu0 %v807
        %1821 = vmatprep.subr.mxu0 %v804
        %1822 = vmatpush1.msra.mxu0 %v803
        %1823 = vmatprep.subr.mxu0 %v800
        %1824 = vmatpush1.msra.mxu0 %v799
        %1825 = vmatprep.subr.mxu0 %v796
        %1826 = vmatpush1.msra.mxu0 %v795
        %1827 = vmatprep.subr.mxu0 %v792
        %1828 = vmatpush1.msra.mxu0 %v791
        %1829 = vmatprep.subr.mxu0 %v788
        %1830 = vmatpush1.msra.mxu0 %v787
        %1831 = vmatprep.subr.mxu0 %v784
        %1832 = vmatpush1.msra.mxu0 %v783
        %1833 = vmatprep.subr.mxu0 %v780
        %1834 = vmatpush1.msra.mxu0 %v779
        %1835 = vmatprep.subr.mxu0 %v904
        %1836 = vmatpush2.msra.mxu0 %v903
        %1837 = vmatprep.subr.mxu0 %v900
        %1838 = vmatpush2.msra.mxu0 %v899
        %1839 = vmatprep.subr.mxu0 %v896
        %1840 = vmatpush2.msra.mxu0 %v895
        %1841 = vmatprep.subr.mxu0 %v892
        %1842 = vmatpush2.msra.mxu0 %v891
        %1843 = vmatprep.subr.mxu0 %v888
        %1844 = vmatpush2.msra.mxu0 %v887
        %1845 = vmatprep.subr.mxu0 %v884
        %1846 = vmatpush2.msra.mxu0 %v883
        %1847 = vmatprep.subr.mxu0 %v880
        %1848 = vmatpush2.msra.mxu0 %v879
        %1849 = vmatprep.subr.mxu0 %v876
        %1850 = vmatpush2.msra.mxu0 %v875
        %1851 = vmatprep.subr.mxu0 %v872
        %1852 = vmatpush2.msra.mxu0 %v871
        %1853 = vmatprep.subr.mxu0 %v868
        %1854 = vmatpush2.msra.mxu0 %v867
        %1855 = vmatprep.subr.mxu0 %v864
        %1856 = vmatpush2.msra.mxu0 %v863
        %1857 = vmatprep.subr.mxu0 %v860
        %1858 = vmatpush2.msra.mxu0 %v859
        %1859 = vmatprep.subr.mxu0 %v856
        %1860 = vmatpush2.msra.mxu0 %v855
        %1861 = vmatprep.subr.mxu0 %v852
        %1862 = vmatpush2.msra.mxu0 %v851
        %1863 = vmatprep.subr.mxu0 %v848
        %1864 = vmatpush2.msra.mxu0 %v847
        %1865 = vmatprep.subr.mxu0 %v844
        %1866 = vmatpush2.msra.mxu0 %v843
        %1867 = vmatprep.mubr.f32.mxu0 %v380
        %1868 = vmatmul.mubr.f32.gmra.mxu0 %v379
        %v1869 = vpop.f32.mrf.mxu0
        %v1870 = vadd.f32 0.0, %v1869
        %v1871 = vpop.f32.mrf.mxu0
        %v1872 = vadd.f32 0.0, %v1871
        %1873 = vmatprep.mubr.f32.mxu0 %v396
        %1874 = vmatmul.mubr.f32.gmra.mxu0 %v395
        %v1875 = vpop.f32.mrf.mxu0
        %v1876 = vadd.f32 0.0, %v1875
        %v1877 = vpop.f32.mrf.mxu0
        %v1878 = vadd.f32 0.0, %v1877
        %1879 = vmatprep.mubr.f32.mxu0 %v412
        %1880 = vmatmul.mubr.f32.gmra.mxu0 %v411
        %v1881 = vpop.f32.mrf.mxu0
        %v1882 = vadd.f32 0.0, %v1881
        %v1883 = vpop.f32.mrf.mxu0
        %v1884 = vadd.f32 0.0, %v1883
        %1885 = vmatprep.mubr.f32.mxu0 %v428
        %1886 = vmatmul.mubr.f32.gmra.mxu0 %v427
        %v1887 = vpop.f32.mrf.mxu0
        %v1888 = vadd.f32 0.0, %v1887
        %v1889 = vpop.f32.mrf.mxu0
        %v1890 = vadd.f32 0.0, %v1889
        %1891 = vmatprep.mubr.f32.mxu0 %v444
        %1892 = vmatmul.mubr.f32.gmra.mxu0 %v443
        %v1893 = vpop.f32.mrf.mxu0
        %v1894 = vadd.f32 0.0, %v1893
        %v1895 = vpop.f32.mrf.mxu0
        %v1896 = vadd.f32 0.0, %v1895
        %1897 = vmatprep.mubr.f32.mxu0 %v460
        %1898 = vmatmul.mubr.f32.gmra.mxu0 %v459
        %v1899 = vpop.f32.mrf.mxu0
        %v1900 = vadd.f32 0.0, %v1899
        %v1901 = vpop.f32.mrf.mxu0
        %v1902 = vadd.f32 0.0, %v1901
        %1903 = vmatprep.mubr.f32.mxu0 %v476
        %1904 = vmatmul.mubr.f32.gmra.mxu0 %v475
        %v1905 = vpop.f32.mrf.mxu0
        %v1906 = vadd.f32 0.0, %v1905
        %v1907 = vpop.f32.mrf.mxu0
        %v1908 = vadd.f32 0.0, %v1907
        %1909 = vmatprep.mubr.f32.mxu0 %v492
        %1910 = vmatmul.mubr.f32.gmra.mxu0 %v491
        %v1911 = vpop.f32.mrf.mxu0
        %v1912 = vadd.f32 0.0, %v1911
        %v1913 = vpop.f32.mrf.mxu0
        %v1914 = vadd.f32 0.0, %v1913
        %1915 = vmatprep.mubr.f32.mxu0 %v508
        %1916 = vmatmul.mubr.f32.gmra.mxu0 %v507
        %v1917 = vpop.f32.mrf.mxu0
        %v1918 = vadd.f32 0.0, %v1917
        %v1919 = vpop.f32.mrf.mxu0
        %v1920 = vadd.f32 0.0, %v1919
        %1921 = vmatprep.mubr.f32.mxu0 %v524
        %1922 = vmatmul.mubr.f32.gmra.mxu0 %v523
        %v1923 = vpop.f32.mrf.mxu0
        %v1924 = vadd.f32 0.0, %v1923
        %v1925 = vpop.f32.mrf.mxu0
        %v1926 = vadd.f32 0.0, %v1925
        %1927 = vmatprep.mubr.f32.mxu0 %v540
        %1928 = vmatmul.mubr.f32.gmra.mxu0 %v539
        %v1929 = vpop.f32.mrf.mxu0
        %v1930 = vadd.f32 0.0, %v1929
        %v1931 = vpop.f32.mrf.mxu0
        %v1932 = vadd.f32 0.0, %v1931
        %1933 = vmatprep.mubr.f32.mxu0 %v556
        %1934 = vmatmul.mubr.f32.gmra.mxu0 %v555
        %v1935 = vpop.f32.mrf.mxu0
        %v1936 = vadd.f32 0.0, %v1935
        %v1937 = vpop.f32.mrf.mxu0
        %v1938 = vadd.f32 0.0, %v1937
        %1939 = vmatprep.mubr.f32.mxu0 %v572
        %1940 = vmatmul.mubr.f32.gmra.mxu0 %v571
        %v1941 = vpop.f32.mrf.mxu0
        %v1942 = vadd.f32 0.0, %v1941
        %v1943 = vpop.f32.mrf.mxu0
        %v1944 = vadd.f32 0.0, %v1943
        %1945 = vmatprep.mubr.f32.mxu0 %v588
        %1946 = vmatmul.mubr.f32.gmra.mxu0 %v587
        %v1947 = vpop.f32.mrf.mxu0
        %v1948 = vadd.f32 0.0, %v1947
        %v1949 = vpop.f32.mrf.mxu0
        %v1950 = vadd.f32 0.0, %v1949
        %1951 = vmatprep.mubr.f32.mxu0 %v604
        %1952 = vmatmul.mubr.f32.gmra.mxu0 %v603
        %v1953 = vpop.f32.mrf.mxu0
        %v1954 = vadd.f32 0.0, %v1953
        %v1955 = vpop.f32.mrf.mxu0
        %v1956 = vadd.f32 0.0, %v1955
        %1957 = vmatprep.mubr.f32.mxu0 %v620
        %1958 = vmatmul.mubr.f32.gmra.mxu0 %v619
        %v1959 = vpop.f32.mrf.mxu0
        %v1960 = vadd.f32 0.0, %v1959
        %v1961 = vpop.f32.mrf.mxu0
        %v1962 = vadd.f32 0.0, %v1961
        %1963 = vmatprep.mubr.f32.mxu0 %v636
        %1964 = vmatmul.mubr.f32.gmra.mxu0 %v635
        %v1965 = vpop.f32.mrf.mxu0
        %v1966 = vadd.f32 0.0, %v1965
        %v1967 = vpop.f32.mrf.mxu0
        %v1968 = vadd.f32 0.0, %v1967
        %1969 = vmatprep.mubr.f32.mxu0 %v652
        %1970 = vmatmul.mubr.f32.gmra.mxu0 %v651
        %v1971 = vpop.f32.mrf.mxu0
        %v1972 = vadd.f32 0.0, %v1971
        %v1973 = vpop.f32.mrf.mxu0
        %v1974 = vadd.f32 0.0, %v1973
        %1975 = vmatprep.mubr.f32.mxu0 %v668
        %1976 = vmatmul.mubr.f32.gmra.mxu0 %v667
        %v1977 = vpop.f32.mrf.mxu0
        %v1978 = vadd.f32 0.0, %v1977
        %v1979 = vpop.f32.mrf.mxu0
        %v1980 = vadd.f32 0.0, %v1979
        %1981 = vmatprep.mubr.f32.mxu0 %v684
        %1982 = vmatmul.mubr.f32.gmra.mxu0 %v683
        %v1983 = vpop.f32.mrf.mxu0
        %v1984 = vadd.f32 0.0, %v1983
        %v1985 = vpop.f32.mrf.mxu0
        %v1986 = vadd.f32 0.0, %v1985
        %1987 = vmatprep.mubr.f32.mxu0 %v700
        %1988 = vmatmul.mubr.f32.gmra.mxu0 %v699
        %v1989 = vpop.f32.mrf.mxu0
        %v1990 = vadd.f32 0.0, %v1989
        %v1991 = vpop.f32.mrf.mxu0
        %v1992 = vadd.f32 0.0, %v1991
        %1993 = vmatprep.mubr.f32.mxu0 %v716
        %1994 = vmatmul.mubr.f32.gmra.mxu0 %v715
        %v1995 = vpop.f32.mrf.mxu0
        %v1996 = vadd.f32 0.0, %v1995
        %v1997 = vpop.f32.mrf.mxu0
        %v1998 = vadd.f32 0.0, %v1997
        %1999 = vmatprep.mubr.f32.mxu0 %v732
        %2000 = vmatmul.mubr.f32.gmra.mxu0 %v731
        %v2001 = vpop.f32.mrf.mxu0
        %v2002 = vadd.f32 0.0, %v2001
        %v2003 = vpop.f32.mrf.mxu0
        %v2004 = vadd.f32 0.0, %v2003
        %2005 = vmatprep.mubr.f32.mxu0 %v748
        %2006 = vmatmul.mubr.f32.gmra.mxu0 %v747
        %v2007 = vpop.f32.mrf.mxu0
        %v2008 = vadd.f32 0.0, %v2007
        %v2009 = vpop.f32.mrf.mxu0
        %v2010 = vadd.f32 0.0, %v2009
        %2011 = vmatprep.mubr.f32.mxu0 %v764
        %2012 = vmatmul.mubr.f32.gmra.mxu0 %v763
        %v2013 = vpop.f32.mrf.mxu0
        %v2014 = vadd.f32 0.0, %v2013
        %v2015 = vpop.f32.mrf.mxu0
        %v2016 = vadd.f32 0.0, %v2015
        %2017 = vdwg.mxu0
        %2018 = vmatprep.subr.mxu0 %v968
        %2019 = vmatpush1.msra.mxu0 %v967
        %2020 = vmatprep.subr.mxu0 %v964
        %2021 = vmatpush1.msra.mxu0 %v963
        %2022 = vmatprep.subr.mxu0 %v960
        %2023 = vmatpush1.msra.mxu0 %v959
        %2024 = vmatprep.subr.mxu0 %v956
        %2025 = vmatpush1.msra.mxu0 %v955
        %2026 = vmatprep.subr.mxu0 %v952
        %2027 = vmatpush1.msra.mxu0 %v951
        %2028 = vmatprep.subr.mxu0 %v948
        %2029 = vmatpush1.msra.mxu0 %v947
        %2030 = vmatprep.subr.mxu0 %v944
        %2031 = vmatpush1.msra.mxu0 %v943
        %2032 = vmatprep.subr.mxu0 %v940
        %2033 = vmatpush1.msra.mxu0 %v939
        %2034 = vmatprep.subr.mxu0 %v936
        %2035 = vmatpush1.msra.mxu0 %v935
        %2036 = vmatprep.subr.mxu0 %v932
        %2037 = vmatpush1.msra.mxu0 %v931
        %2038 = vmatprep.subr.mxu0 %v928
        %2039 = vmatpush1.msra.mxu0 %v927
        %2040 = vmatprep.subr.mxu0 %v924
        %2041 = vmatpush1.msra.mxu0 %v923
        %2042 = vmatprep.subr.mxu0 %v920
        %2043 = vmatpush1.msra.mxu0 %v919
        %2044 = vmatprep.subr.mxu0 %v916
        %2045 = vmatpush1.msra.mxu0 %v915
        %2046 = vmatprep.subr.mxu0 %v912
        %2047 = vmatpush1.msra.mxu0 %v911
        %2048 = vmatprep.subr.mxu0 %v908
        %2049 = vmatpush1.msra.mxu0 %v907
        %2050 = vmatprep.subr.mxu0 %v1032
        %2051 = vmatpush2.msra.mxu0 %v1031
        %2052 = vmatprep.subr.mxu0 %v1028
        %2053 = vmatpush2.msra.mxu0 %v1027
        %2054 = vmatprep.subr.mxu0 %v1024
        %2055 = vmatpush2.msra.mxu0 %v1023
        %2056 = vmatprep.subr.mxu0 %v1020
        %2057 = vmatpush2.msra.mxu0 %v1019
        %2058 = vmatprep.subr.mxu0 %v1016
        %2059 = vmatpush2.msra.mxu0 %v1015
        %2060 = vmatprep.subr.mxu0 %v1012
        %2061 = vmatpush2.msra.mxu0 %v1011
        %2062 = vmatprep.subr.mxu0 %v1008
        %2063 = vmatpush2.msra.mxu0 %v1007
        %2064 = vmatprep.subr.mxu0 %v1004
        %2065 = vmatpush2.msra.mxu0 %v1003
        %2066 = vmatprep.subr.mxu0 %v1000
        %2067 = vmatpush2.msra.mxu0 %v999
        %2068 = vmatprep.subr.mxu0 %v996
        %2069 = vmatpush2.msra.mxu0 %v995
        %2070 = vmatprep.subr.mxu0 %v992
        %2071 = vmatpush2.msra.mxu0 %v991
        %2072 = vmatprep.subr.mxu0 %v988
        %2073 = vmatpush2.msra.mxu0 %v987
        %2074 = vmatprep.subr.mxu0 %v984
        %2075 = vmatpush2.msra.mxu0 %v983
        %2076 = vmatprep.subr.mxu0 %v980
        %2077 = vmatpush2.msra.mxu0 %v979
        %2078 = vmatprep.subr.mxu0 %v976
        %2079 = vmatpush2.msra.mxu0 %v975
        %2080 = vmatprep.subr.mxu0 %v972
        %2081 = vmatpush2.msra.mxu0 %v971
        %2082 = vmatprep.mubr.f32.mxu0 %v382
        %2083 = vmatmul.mubr.f32.gmra.mxu0 %v381
        %v2084 = vpop.f32.mrf.mxu0
        %v2085 = vadd.f32 %v1870, %v2084
        %v2086 = vpop.f32.mrf.mxu0
        %v2087 = vadd.f32 %v1872, %v2086
        %2088 = vmatprep.mubr.f32.mxu0 %v398
        %2089 = vmatmul.mubr.f32.gmra.mxu0 %v397
        %v2090 = vpop.f32.mrf.mxu0
        %v2091 = vadd.f32 %v1876, %v2090
        %v2092 = vpop.f32.mrf.mxu0
        %v2093 = vadd.f32 %v1878, %v2092
        %2094 = vmatprep.mubr.f32.mxu0 %v414
        %2095 = vmatmul.mubr.f32.gmra.mxu0 %v413
        %v2096 = vpop.f32.mrf.mxu0
        %v2097 = vadd.f32 %v1882, %v2096
        %v2098 = vpop.f32.mrf.mxu0
        %v2099 = vadd.f32 %v1884, %v2098
        %2100 = vmatprep.mubr.f32.mxu0 %v430
        %2101 = vmatmul.mubr.f32.gmra.mxu0 %v429
        %v2102 = vpop.f32.mrf.mxu0
        %v2103 = vadd.f32 %v1888, %v2102
        %v2104 = vpop.f32.mrf.mxu0
        %v2105 = vadd.f32 %v1890, %v2104
        %2106 = vmatprep.mubr.f32.mxu0 %v446
        %2107 = vmatmul.mubr.f32.gmra.mxu0 %v445
        %v2108 = vpop.f32.mrf.mxu0
        %v2109 = vadd.f32 %v1894, %v2108
        %v2110 = vpop.f32.mrf.mxu0
        %v2111 = vadd.f32 %v1896, %v2110
        %2112 = vmatprep.mubr.f32.mxu0 %v462
        %2113 = vmatmul.mubr.f32.gmra.mxu0 %v461
        %v2114 = vpop.f32.mrf.mxu0
        %v2115 = vadd.f32 %v1900, %v2114
        %v2116 = vpop.f32.mrf.mxu0
        %v2117 = vadd.f32 %v1902, %v2116
        %2118 = vmatprep.mubr.f32.mxu0 %v478
        %2119 = vmatmul.mubr.f32.gmra.mxu0 %v477
        %v2120 = vpop.f32.mrf.mxu0
        %v2121 = vadd.f32 %v1906, %v2120
        %v2122 = vpop.f32.mrf.mxu0
        %v2123 = vadd.f32 %v1908, %v2122
        %2124 = vmatprep.mubr.f32.mxu0 %v494
        %2125 = vmatmul.mubr.f32.gmra.mxu0 %v493
        %v2126 = vpop.f32.mrf.mxu0
        %v2127 = vadd.f32 %v1912, %v2126
        %v2128 = vpop.f32.mrf.mxu0
        %v2129 = vadd.f32 %v1914, %v2128
        %2130 = vmatprep.mubr.f32.mxu0 %v510
        %2131 = vmatmul.mubr.f32.gmra.mxu0 %v509
        %v2132 = vpop.f32.mrf.mxu0
        %v2133 = vadd.f32 %v1918, %v2132
        %v2134 = vpop.f32.mrf.mxu0
        %v2135 = vadd.f32 %v1920, %v2134
        %2136 = vmatprep.mubr.f32.mxu0 %v526
        %2137 = vmatmul.mubr.f32.gmra.mxu0 %v525
        %v2138 = vpop.f32.mrf.mxu0
        %v2139 = vadd.f32 %v1924, %v2138
        %v2140 = vpop.f32.mrf.mxu0
        %v2141 = vadd.f32 %v1926, %v2140
        %2142 = vmatprep.mubr.f32.mxu0 %v542
        %2143 = vmatmul.mubr.f32.gmra.mxu0 %v541
        %v2144 = vpop.f32.mrf.mxu0
        %v2145 = vadd.f32 %v1930, %v2144
        %v2146 = vpop.f32.mrf.mxu0
        %v2147 = vadd.f32 %v1932, %v2146
        %2148 = vmatprep.mubr.f32.mxu0 %v558
        %2149 = vmatmul.mubr.f32.gmra.mxu0 %v557
        %v2150 = vpop.f32.mrf.mxu0
        %v2151 = vadd.f32 %v1936, %v2150
        %v2152 = vpop.f32.mrf.mxu0
        %v2153 = vadd.f32 %v1938, %v2152
        %2154 = vmatprep.mubr.f32.mxu0 %v574
        %2155 = vmatmul.mubr.f32.gmra.mxu0 %v573
        %v2156 = vpop.f32.mrf.mxu0
        %v2157 = vadd.f32 %v1942, %v2156
        %v2158 = vpop.f32.mrf.mxu0
        %v2159 = vadd.f32 %v1944, %v2158
        %2160 = vmatprep.mubr.f32.mxu0 %v590
        %2161 = vmatmul.mubr.f32.gmra.mxu0 %v589
        %v2162 = vpop.f32.mrf.mxu0
        %v2163 = vadd.f32 %v1948, %v2162
        %v2164 = vpop.f32.mrf.mxu0
        %v2165 = vadd.f32 %v1950, %v2164
        %2166 = vmatprep.mubr.f32.mxu0 %v606
        %2167 = vmatmul.mubr.f32.gmra.mxu0 %v605
        %v2168 = vpop.f32.mrf.mxu0
        %v2169 = vadd.f32 %v1954, %v2168
        %v2170 = vpop.f32.mrf.mxu0
        %v2171 = vadd.f32 %v1956, %v2170
        %2172 = vmatprep.mubr.f32.mxu0 %v622
        %2173 = vmatmul.mubr.f32.gmra.mxu0 %v621
        %v2174 = vpop.f32.mrf.mxu0
        %v2175 = vadd.f32 %v1960, %v2174
        %v2176 = vpop.f32.mrf.mxu0
        %v2177 = vadd.f32 %v1962, %v2176
        %2178 = vmatprep.mubr.f32.mxu0 %v638
        %2179 = vmatmul.mubr.f32.gmra.mxu0 %v637
        %v2180 = vpop.f32.mrf.mxu0
        %v2181 = vadd.f32 %v1966, %v2180
        %v2182 = vpop.f32.mrf.mxu0
        %v2183 = vadd.f32 %v1968, %v2182
        %2184 = vmatprep.mubr.f32.mxu0 %v654
        %2185 = vmatmul.mubr.f32.gmra.mxu0 %v653
        %v2186 = vpop.f32.mrf.mxu0
        %v2187 = vadd.f32 %v1972, %v2186
        %v2188 = vpop.f32.mrf.mxu0
        %v2189 = vadd.f32 %v1974, %v2188
        %2190 = vmatprep.mubr.f32.mxu0 %v670
        %2191 = vmatmul.mubr.f32.gmra.mxu0 %v669
        %v2192 = vpop.f32.mrf.mxu0
        %v2193 = vadd.f32 %v1978, %v2192
        %v2194 = vpop.f32.mrf.mxu0
        %v2195 = vadd.f32 %v1980, %v2194
        %2196 = vmatprep.mubr.f32.mxu0 %v686
        %2197 = vmatmul.mubr.f32.gmra.mxu0 %v685
        %v2198 = vpop.f32.mrf.mxu0
        %v2199 = vadd.f32 %v1984, %v2198
        %v2200 = vpop.f32.mrf.mxu0
        %v2201 = vadd.f32 %v1986, %v2200
        %2202 = vmatprep.mubr.f32.mxu0 %v702
        %2203 = vmatmul.mubr.f32.gmra.mxu0 %v701
        %v2204 = vpop.f32.mrf.mxu0
        %v2205 = vadd.f32 %v1990, %v2204
        %v2206 = vpop.f32.mrf.mxu0
        %v2207 = vadd.f32 %v1992, %v2206
        %2208 = vmatprep.mubr.f32.mxu0 %v718
        %2209 = vmatmul.mubr.f32.gmra.mxu0 %v717
        %v2210 = vpop.f32.mrf.mxu0
        %v2211 = vadd.f32 %v1996, %v2210
        %v2212 = vpop.f32.mrf.mxu0
        %v2213 = vadd.f32 %v1998, %v2212
        %2214 = vmatprep.mubr.f32.mxu0 %v734
        %2215 = vmatmul.mubr.f32.gmra.mxu0 %v733
        %v2216 = vpop.f32.mrf.mxu0
        %v2217 = vadd.f32 %v2002, %v2216
        %v2218 = vpop.f32.mrf.mxu0
        %v2219 = vadd.f32 %v2004, %v2218
        %2220 = vmatprep.mubr.f32.mxu0 %v750
        %2221 = vmatmul.mubr.f32.gmra.mxu0 %v749
        %v2222 = vpop.f32.mrf.mxu0
        %v2223 = vadd.f32 %v2008, %v2222
        %v2224 = vpop.f32.mrf.mxu0
        %v2225 = vadd.f32 %v2010, %v2224
        %2226 = vmatprep.mubr.f32.mxu0 %v766
        %2227 = vmatmul.mubr.f32.gmra.mxu0 %v765
        %v2228 = vpop.f32.mrf.mxu0
        %v2229 = vadd.f32 %v2014, %v2228
        %v2230 = vpop.f32.mrf.mxu0
        %v2231 = vadd.f32 %v2016, %v2230
        %2232 = vdwg.mxu0
        %2233 = vmatprep.subr.mxu0 %v1096
        %2234 = vmatpush1.msra.mxu0 %v1095
        %2235 = vmatprep.subr.mxu0 %v1092
        %2236 = vmatpush1.msra.mxu0 %v1091
        %2237 = vmatprep.subr.mxu0 %v1088
        %2238 = vmatpush1.msra.mxu0 %v1087
        %2239 = vmatprep.subr.mxu0 %v1084
        %2240 = vmatpush1.msra.mxu0 %v1083
        %2241 = vmatprep.subr.mxu0 %v1080
        %2242 = vmatpush1.msra.mxu0 %v1079
        %2243 = vmatprep.subr.mxu0 %v1076
        %2244 = vmatpush1.msra.mxu0 %v1075
        %2245 = vmatprep.subr.mxu0 %v1072
        %2246 = vmatpush1.msra.mxu0 %v1071
        %2247 = vmatprep.subr.mxu0 %v1068
        %2248 = vmatpush1.msra.mxu0 %v1067
        %2249 = vmatprep.subr.mxu0 %v1064
        %2250 = vmatpush1.msra.mxu0 %v1063
        %2251 = vmatprep.subr.mxu0 %v1060
        %2252 = vmatpush1.msra.mxu0 %v1059
        %2253 = vmatprep.subr.mxu0 %v1056
        %2254 = vmatpush1.msra.mxu0 %v1055
        %2255 = vmatprep.subr.mxu0 %v1052
        %2256 = vmatpush1.msra.mxu0 %v1051
        %2257 = vmatprep.subr.mxu0 %v1048
        %2258 = vmatpush1.msra.mxu0 %v1047
        %2259 = vmatprep.subr.mxu0 %v1044
        %2260 = vmatpush1.msra.mxu0 %v1043
        %2261 = vmatprep.subr.mxu0 %v1040
        %2262 = vmatpush1.msra.mxu0 %v1039
        %2263 = vmatprep.subr.mxu0 %v1036
        %2264 = vmatpush1.msra.mxu0 %v1035
        %2265 = vmatprep.subr.mxu0 %v1160
        %2266 = vmatpush2.msra.mxu0 %v1159
        %2267 = vmatprep.subr.mxu0 %v1156
        %2268 = vmatpush2.msra.mxu0 %v1155
        %2269 = vmatprep.subr.mxu0 %v1152
        %2270 = vmatpush2.msra.mxu0 %v1151
        %2271 = vmatprep.subr.mxu0 %v1148
        %2272 = vmatpush2.msra.mxu0 %v1147
        %2273 = vmatprep.subr.mxu0 %v1144
        %2274 = vmatpush2.msra.mxu0 %v1143
        %2275 = vmatprep.subr.mxu0 %v1140
        %2276 = vmatpush2.msra.mxu0 %v1139
        %2277 = vmatprep.subr.mxu0 %v1136
        %2278 = vmatpush2.msra.mxu0 %v1135
        %2279 = vmatprep.subr.mxu0 %v1132
        %2280 = vmatpush2.msra.mxu0 %v1131
        %2281 = vmatprep.subr.mxu0 %v1128
        %2282 = vmatpush2.msra.mxu0 %v1127
        %2283 = vmatprep.subr.mxu0 %v1124
        %2284 = vmatpush2.msra.mxu0 %v1123
        %2285 = vmatprep.subr.mxu0 %v1120
        %2286 = vmatpush2.msra.mxu0 %v1119
        %2287 = vmatprep.subr.mxu0 %v1116
        %2288 = vmatpush2.msra.mxu0 %v1115
        %2289 = vmatprep.subr.mxu0 %v1112
        %2290 = vmatpush2.msra.mxu0 %v1111
        %2291 = vmatprep.subr.mxu0 %v1108
        %2292 = vmatpush2.msra.mxu0 %v1107
        %2293 = vmatprep.subr.mxu0 %v1104
        %2294 = vmatpush2.msra.mxu0 %v1103
        %2295 = vmatprep.subr.mxu0 %v1100
        %2296 = vmatpush2.msra.mxu0 %v1099
        %2297 = vmatprep.mubr.f32.mxu0 %v384
        %2298 = vmatmul.mubr.f32.gmra.mxu0 %v383
        %v2299 = vpop.f32.mrf.mxu0
        %v2300 = vadd.f32 %v2085, %v2299
        %v2301 = vpop.f32.mrf.mxu0
        %v2302 = vadd.f32 %v2087, %v2301
        %2303 = vmatprep.mubr.f32.mxu0 %v400
        %2304 = vmatmul.mubr.f32.gmra.mxu0 %v399
        %v2305 = vpop.f32.mrf.mxu0
        %v2306 = vadd.f32 %v2091, %v2305
        %v2307 = vpop.f32.mrf.mxu0
        %v2308 = vadd.f32 %v2093, %v2307
        %2309 = vmatprep.mubr.f32.mxu0 %v416
        %2310 = vmatmul.mubr.f32.gmra.mxu0 %v415
        %v2311 = vpop.f32.mrf.mxu0
        %v2312 = vadd.f32 %v2097, %v2311
        %v2313 = vpop.f32.mrf.mxu0
        %v2314 = vadd.f32 %v2099, %v2313
        %2315 = vmatprep.mubr.f32.mxu0 %v432
        %2316 = vmatmul.mubr.f32.gmra.mxu0 %v431
        %v2317 = vpop.f32.mrf.mxu0
        %v2318 = vadd.f32 %v2103, %v2317
        %v2319 = vpop.f32.mrf.mxu0
        %v2320 = vadd.f32 %v2105, %v2319
        %2321 = vmatprep.mubr.f32.mxu0 %v448
        %2322 = vmatmul.mubr.f32.gmra.mxu0 %v447
        %v2323 = vpop.f32.mrf.mxu0
        %v2324 = vadd.f32 %v2109, %v2323
        %v2325 = vpop.f32.mrf.mxu0
        %v2326 = vadd.f32 %v2111, %v2325
        %2327 = vmatprep.mubr.f32.mxu0 %v464
        %2328 = vmatmul.mubr.f32.gmra.mxu0 %v463
        %v2329 = vpop.f32.mrf.mxu0
        %v2330 = vadd.f32 %v2115, %v2329
        %v2331 = vpop.f32.mrf.mxu0
        %v2332 = vadd.f32 %v2117, %v2331
        %2333 = vmatprep.mubr.f32.mxu0 %v480
        %2334 = vmatmul.mubr.f32.gmra.mxu0 %v479
        %v2335 = vpop.f32.mrf.mxu0
        %v2336 = vadd.f32 %v2121, %v2335
        %v2337 = vpop.f32.mrf.mxu0
        %v2338 = vadd.f32 %v2123, %v2337
        %2339 = vmatprep.mubr.f32.mxu0 %v496
        %2340 = vmatmul.mubr.f32.gmra.mxu0 %v495
        %v2341 = vpop.f32.mrf.mxu0
        %v2342 = vadd.f32 %v2127, %v2341
        %v2343 = vpop.f32.mrf.mxu0
        %v2344 = vadd.f32 %v2129, %v2343
        %2345 = vmatprep.mubr.f32.mxu0 %v512
        %2346 = vmatmul.mubr.f32.gmra.mxu0 %v511
        %v2347 = vpop.f32.mrf.mxu0
        %v2348 = vadd.f32 %v2133, %v2347
        %v2349 = vpop.f32.mrf.mxu0
        %v2350 = vadd.f32 %v2135, %v2349
        %2351 = vmatprep.mubr.f32.mxu0 %v528
        %2352 = vmatmul.mubr.f32.gmra.mxu0 %v527
        %v2353 = vpop.f32.mrf.mxu0
        %v2354 = vadd.f32 %v2139, %v2353
        %v2355 = vpop.f32.mrf.mxu0
        %v2356 = vadd.f32 %v2141, %v2355
        %2357 = vmatprep.mubr.f32.mxu0 %v544
        %2358 = vmatmul.mubr.f32.gmra.mxu0 %v543
        %v2359 = vpop.f32.mrf.mxu0
        %v2360 = vadd.f32 %v2145, %v2359
        %v2361 = vpop.f32.mrf.mxu0
        %v2362 = vadd.f32 %v2147, %v2361
        %2363 = vmatprep.mubr.f32.mxu0 %v560
        %2364 = vmatmul.mubr.f32.gmra.mxu0 %v559
        %v2365 = vpop.f32.mrf.mxu0
        %v2366 = vadd.f32 %v2151, %v2365
        %v2367 = vpop.f32.mrf.mxu0
        %v2368 = vadd.f32 %v2153, %v2367
        %2369 = vmatprep.mubr.f32.mxu0 %v576
        %2370 = vmatmul.mubr.f32.gmra.mxu0 %v575
        %v2371 = vpop.f32.mrf.mxu0
        %v2372 = vadd.f32 %v2157, %v2371
        %v2373 = vpop.f32.mrf.mxu0
        %v2374 = vadd.f32 %v2159, %v2373
        %2375 = vmatprep.mubr.f32.mxu0 %v592
        %2376 = vmatmul.mubr.f32.gmra.mxu0 %v591
        %v2377 = vpop.f32.mrf.mxu0
        %v2378 = vadd.f32 %v2163, %v2377
        %v2379 = vpop.f32.mrf.mxu0
        %v2380 = vadd.f32 %v2165, %v2379
        %2381 = vmatprep.mubr.f32.mxu0 %v608
        %2382 = vmatmul.mubr.f32.gmra.mxu0 %v607
        %v2383 = vpop.f32.mrf.mxu0
        %v2384 = vadd.f32 %v2169, %v2383
        %v2385 = vpop.f32.mrf.mxu0
        %v2386 = vadd.f32 %v2171, %v2385
        %2387 = vmatprep.mubr.f32.mxu0 %v624
        %2388 = vmatmul.mubr.f32.gmra.mxu0 %v623
        %v2389 = vpop.f32.mrf.mxu0
        %v2390 = vadd.f32 %v2175, %v2389
        %v2391 = vpop.f32.mrf.mxu0
        %v2392 = vadd.f32 %v2177, %v2391
        %2393 = vmatprep.mubr.f32.mxu0 %v640
        %2394 = vmatmul.mubr.f32.gmra.mxu0 %v639
        %v2395 = vpop.f32.mrf.mxu0
        %v2396 = vadd.f32 %v2181, %v2395
        %v2397 = vpop.f32.mrf.mxu0
        %v2398 = vadd.f32 %v2183, %v2397
        %2399 = vmatprep.mubr.f32.mxu0 %v656
        %2400 = vmatmul.mubr.f32.gmra.mxu0 %v655
        %v2401 = vpop.f32.mrf.mxu0
        %v2402 = vadd.f32 %v2187, %v2401
        %v2403 = vpop.f32.mrf.mxu0
        %v2404 = vadd.f32 %v2189, %v2403
        %2405 = vmatprep.mubr.f32.mxu0 %v672
        %2406 = vmatmul.mubr.f32.gmra.mxu0 %v671
        %v2407 = vpop.f32.mrf.mxu0
        %v2408 = vadd.f32 %v2193, %v2407
        %v2409 = vpop.f32.mrf.mxu0
        %v2410 = vadd.f32 %v2195, %v2409
        %2411 = vmatprep.mubr.f32.mxu0 %v688
        %2412 = vmatmul.mubr.f32.gmra.mxu0 %v687
        %v2413 = vpop.f32.mrf.mxu0
        %v2414 = vadd.f32 %v2199, %v2413
        %v2415 = vpop.f32.mrf.mxu0
        %v2416 = vadd.f32 %v2201, %v2415
        %2417 = vmatprep.mubr.f32.mxu0 %v704
        %2418 = vmatmul.mubr.f32.gmra.mxu0 %v703
        %v2419 = vpop.f32.mrf.mxu0
        %v2420 = vadd.f32 %v2205, %v2419
        %v2421 = vpop.f32.mrf.mxu0
        %v2422 = vadd.f32 %v2207, %v2421
        %2423 = vmatprep.mubr.f32.mxu0 %v720
        %2424 = vmatmul.mubr.f32.gmra.mxu0 %v719
        %v2425 = vpop.f32.mrf.mxu0
        %v2426 = vadd.f32 %v2211, %v2425
        %v2427 = vpop.f32.mrf.mxu0
        %v2428 = vadd.f32 %v2213, %v2427
        %2429 = vmatprep.mubr.f32.mxu0 %v736
        %2430 = vmatmul.mubr.f32.gmra.mxu0 %v735
        %v2431 = vpop.f32.mrf.mxu0
        %v2432 = vadd.f32 %v2217, %v2431
        %v2433 = vpop.f32.mrf.mxu0
        %v2434 = vadd.f32 %v2219, %v2433
        %2435 = vmatprep.mubr.f32.mxu0 %v752
        %2436 = vmatmul.mubr.f32.gmra.mxu0 %v751
        %v2437 = vpop.f32.mrf.mxu0
        %v2438 = vadd.f32 %v2223, %v2437
        %v2439 = vpop.f32.mrf.mxu0
        %v2440 = vadd.f32 %v2225, %v2439
        %2441 = vmatprep.mubr.f32.mxu0 %v768
        %2442 = vmatmul.mubr.f32.gmra.mxu0 %v767
        %v2443 = vpop.f32.mrf.mxu0
        %v2444 = vadd.f32 %v2229, %v2443
        %v2445 = vpop.f32.mrf.mxu0
        %v2446 = vadd.f32 %v2231, %v2445
        %2447 = vdwg.mxu0
        %2448 = vmatprep.subr.mxu0 %v1224
        %2449 = vmatpush1.msra.mxu0 %v1223
        %2450 = vmatprep.subr.mxu0 %v1220
        %2451 = vmatpush1.msra.mxu0 %v1219
        %2452 = vmatprep.subr.mxu0 %v1216
        %2453 = vmatpush1.msra.mxu0 %v1215
        %2454 = vmatprep.subr.mxu0 %v1212
        %2455 = vmatpush1.msra.mxu0 %v1211
        %2456 = vmatprep.subr.mxu0 %v1208
        %2457 = vmatpush1.msra.mxu0 %v1207
        %2458 = vmatprep.subr.mxu0 %v1204
        %2459 = vmatpush1.msra.mxu0 %v1203
        %2460 = vmatprep.subr.mxu0 %v1200
        %2461 = vmatpush1.msra.mxu0 %v1199
        %2462 = vmatprep.subr.mxu0 %v1196
        %2463 = vmatpush1.msra.mxu0 %v1195
        %2464 = vmatprep.subr.mxu0 %v1192
        %2465 = vmatpush1.msra.mxu0 %v1191
        %2466 = vmatprep.subr.mxu0 %v1188
        %2467 = vmatpush1.msra.mxu0 %v1187
        %2468 = vmatprep.subr.mxu0 %v1184
        %2469 = vmatpush1.msra.mxu0 %v1183
        %2470 = vmatprep.subr.mxu0 %v1180
        %2471 = vmatpush1.msra.mxu0 %v1179
        %2472 = vmatprep.subr.mxu0 %v1176
        %2473 = vmatpush1.msra.mxu0 %v1175
        %2474 = vmatprep.subr.mxu0 %v1172
        %2475 = vmatpush1.msra.mxu0 %v1171
        %2476 = vmatprep.subr.mxu0 %v1168
        %2477 = vmatpush1.msra.mxu0 %v1167
        %2478 = vmatprep.subr.mxu0 %v1164
        %2479 = vmatpush1.msra.mxu0 %v1163
        %2480 = vmatprep.subr.mxu0 %v1288
        %2481 = vmatpush2.msra.mxu0 %v1287
        %2482 = vmatprep.subr.mxu0 %v1284
        %2483 = vmatpush2.msra.mxu0 %v1283
        %2484 = vmatprep.subr.mxu0 %v1280
        %2485 = vmatpush2.msra.mxu0 %v1279
        %2486 = vmatprep.subr.mxu0 %v1276
        %2487 = vmatpush2.msra.mxu0 %v1275
        %2488 = vmatprep.subr.mxu0 %v1272
        %2489 = vmatpush2.msra.mxu0 %v1271
        %2490 = vmatprep.subr.mxu0 %v1268
        %2491 = vmatpush2.msra.mxu0 %v1267
        %2492 = vmatprep.subr.mxu0 %v1264
        %2493 = vmatpush2.msra.mxu0 %v1263
        %2494 = vmatprep.subr.mxu0 %v1260
        %2495 = vmatpush2.msra.mxu0 %v1259
        %2496 = vmatprep.subr.mxu0 %v1256
        %2497 = vmatpush2.msra.mxu0 %v1255
        %2498 = vmatprep.subr.mxu0 %v1252
        %2499 = vmatpush2.msra.mxu0 %v1251
        %2500 = vmatprep.subr.mxu0 %v1248
        %2501 = vmatpush2.msra.mxu0 %v1247
        %2502 = vmatprep.subr.mxu0 %v1244
        %2503 = vmatpush2.msra.mxu0 %v1243
        %2504 = vmatprep.subr.mxu0 %v1240
        %2505 = vmatpush2.msra.mxu0 %v1239
        %2506 = vmatprep.subr.mxu0 %v1236
        %2507 = vmatpush2.msra.mxu0 %v1235
        %2508 = vmatprep.subr.mxu0 %v1232
        %2509 = vmatpush2.msra.mxu0 %v1231
        %2510 = vmatprep.subr.mxu0 %v1228
        %2511 = vmatpush2.msra.mxu0 %v1227
        %2512 = vmatprep.mubr.f32.mxu0 %v386
        %2513 = vmatmul.mubr.f32.gmra.mxu0 %v385
        %v2514 = vpop.f32.mrf.mxu0
        %v2515 = vadd.f32 %v2300, %v2514
        %v2516 = vpop.f32.mrf.mxu0
        %v2517 = vadd.f32 %v2302, %v2516
        %2518 = vmatprep.mubr.f32.mxu0 %v402
        %2519 = vmatmul.mubr.f32.gmra.mxu0 %v401
        %v2520 = vpop.f32.mrf.mxu0
        %v2521 = vadd.f32 %v2306, %v2520
        %v2522 = vpop.f32.mrf.mxu0
        %v2523 = vadd.f32 %v2308, %v2522
        %2524 = vmatprep.mubr.f32.mxu0 %v418
        %2525 = vmatmul.mubr.f32.gmra.mxu0 %v417
        %v2526 = vpop.f32.mrf.mxu0
        %v2527 = vadd.f32 %v2312, %v2526
        %v2528 = vpop.f32.mrf.mxu0
        %v2529 = vadd.f32 %v2314, %v2528
        %2530 = vmatprep.mubr.f32.mxu0 %v434
        %2531 = vmatmul.mubr.f32.gmra.mxu0 %v433
        %v2532 = vpop.f32.mrf.mxu0
        %v2533 = vadd.f32 %v2318, %v2532
        %v2534 = vpop.f32.mrf.mxu0
        %v2535 = vadd.f32 %v2320, %v2534
        %2536 = vmatprep.mubr.f32.mxu0 %v450
        %2537 = vmatmul.mubr.f32.gmra.mxu0 %v449
        %v2538 = vpop.f32.mrf.mxu0
        %v2539 = vadd.f32 %v2324, %v2538
        %v2540 = vpop.f32.mrf.mxu0
        %v2541 = vadd.f32 %v2326, %v2540
        %2542 = vmatprep.mubr.f32.mxu0 %v466
        %2543 = vmatmul.mubr.f32.gmra.mxu0 %v465
        %v2544 = vpop.f32.mrf.mxu0
        %v2545 = vadd.f32 %v2330, %v2544
        %v2546 = vpop.f32.mrf.mxu0
        %v2547 = vadd.f32 %v2332, %v2546
        %2548 = vmatprep.mubr.f32.mxu0 %v482
        %2549 = vmatmul.mubr.f32.gmra.mxu0 %v481
        %v2550 = vpop.f32.mrf.mxu0
        %v2551 = vadd.f32 %v2336, %v2550
        %v2552 = vpop.f32.mrf.mxu0
        %v2553 = vadd.f32 %v2338, %v2552
        %2554 = vmatprep.mubr.f32.mxu0 %v498
        %2555 = vmatmul.mubr.f32.gmra.mxu0 %v497
        %v2556 = vpop.f32.mrf.mxu0
        %v2557 = vadd.f32 %v2342, %v2556
        %v2558 = vpop.f32.mrf.mxu0
        %v2559 = vadd.f32 %v2344, %v2558
        %2560 = vmatprep.mubr.f32.mxu0 %v514
        %2561 = vmatmul.mubr.f32.gmra.mxu0 %v513
        %v2562 = vpop.f32.mrf.mxu0
        %v2563 = vadd.f32 %v2348, %v2562
        %v2564 = vpop.f32.mrf.mxu0
        %v2565 = vadd.f32 %v2350, %v2564
        %2566 = vmatprep.mubr.f32.mxu0 %v530
        %2567 = vmatmul.mubr.f32.gmra.mxu0 %v529
        %v2568 = vpop.f32.mrf.mxu0
        %v2569 = vadd.f32 %v2354, %v2568
        %v2570 = vpop.f32.mrf.mxu0
        %v2571 = vadd.f32 %v2356, %v2570
        %2572 = vmatprep.mubr.f32.mxu0 %v546
        %2573 = vmatmul.mubr.f32.gmra.mxu0 %v545
        %v2574 = vpop.f32.mrf.mxu0
        %v2575 = vadd.f32 %v2360, %v2574
        %v2576 = vpop.f32.mrf.mxu0
        %v2577 = vadd.f32 %v2362, %v2576
        %2578 = vmatprep.mubr.f32.mxu0 %v562
        %2579 = vmatmul.mubr.f32.gmra.mxu0 %v561
        %v2580 = vpop.f32.mrf.mxu0
        %v2581 = vadd.f32 %v2366, %v2580
        %v2582 = vpop.f32.mrf.mxu0
        %v2583 = vadd.f32 %v2368, %v2582
        %2584 = vmatprep.mubr.f32.mxu0 %v578
        %2585 = vmatmul.mubr.f32.gmra.mxu0 %v577
        %v2586 = vpop.f32.mrf.mxu0
        %v2587 = vadd.f32 %v2372, %v2586
        %v2588 = vpop.f32.mrf.mxu0
        %v2589 = vadd.f32 %v2374, %v2588
        %2590 = vmatprep.mubr.f32.mxu0 %v594
        %2591 = vmatmul.mubr.f32.gmra.mxu0 %v593
        %v2592 = vpop.f32.mrf.mxu0
        %v2593 = vadd.f32 %v2378, %v2592
        %v2594 = vpop.f32.mrf.mxu0
        %v2595 = vadd.f32 %v2380, %v2594
        %2596 = vmatprep.mubr.f32.mxu0 %v610
        %2597 = vmatmul.mubr.f32.gmra.mxu0 %v609
        %v2598 = vpop.f32.mrf.mxu0
        %v2599 = vadd.f32 %v2384, %v2598
        %v2600 = vpop.f32.mrf.mxu0
        %v2601 = vadd.f32 %v2386, %v2600
        %2602 = vmatprep.mubr.f32.mxu0 %v626
        %2603 = vmatmul.mubr.f32.gmra.mxu0 %v625
        %v2604 = vpop.f32.mrf.mxu0
        %v2605 = vadd.f32 %v2390, %v2604
        %v2606 = vpop.f32.mrf.mxu0
        %v2607 = vadd.f32 %v2392, %v2606
        %2608 = vmatprep.mubr.f32.mxu0 %v642
        %2609 = vmatmul.mubr.f32.gmra.mxu0 %v641
        %v2610 = vpop.f32.mrf.mxu0
        %v2611 = vadd.f32 %v2396, %v2610
        %v2612 = vpop.f32.mrf.mxu0
        %v2613 = vadd.f32 %v2398, %v2612
        %2614 = vmatprep.mubr.f32.mxu0 %v658
        %2615 = vmatmul.mubr.f32.gmra.mxu0 %v657
        %v2616 = vpop.f32.mrf.mxu0
        %v2617 = vadd.f32 %v2402, %v2616
        %v2618 = vpop.f32.mrf.mxu0
        %v2619 = vadd.f32 %v2404, %v2618
        %2620 = vmatprep.mubr.f32.mxu0 %v674
        %2621 = vmatmul.mubr.f32.gmra.mxu0 %v673
        %v2622 = vpop.f32.mrf.mxu0
        %v2623 = vadd.f32 %v2408, %v2622
        %v2624 = vpop.f32.mrf.mxu0
        %v2625 = vadd.f32 %v2410, %v2624
        %2626 = vmatprep.mubr.f32.mxu0 %v690
        %2627 = vmatmul.mubr.f32.gmra.mxu0 %v689
        %v2628 = vpop.f32.mrf.mxu0
        %v2629 = vadd.f32 %v2414, %v2628
        %v2630 = vpop.f32.mrf.mxu0
        %v2631 = vadd.f32 %v2416, %v2630
        %2632 = vmatprep.mubr.f32.mxu0 %v706
        %2633 = vmatmul.mubr.f32.gmra.mxu0 %v705
        %v2634 = vpop.f32.mrf.mxu0
        %v2635 = vadd.f32 %v2420, %v2634
        %v2636 = vpop.f32.mrf.mxu0
        %v2637 = vadd.f32 %v2422, %v2636
        %2638 = vmatprep.mubr.f32.mxu0 %v722
        %2639 = vmatmul.mubr.f32.gmra.mxu0 %v721
        %v2640 = vpop.f32.mrf.mxu0
        %v2641 = vadd.f32 %v2426, %v2640
        %v2642 = vpop.f32.mrf.mxu0
        %v2643 = vadd.f32 %v2428, %v2642
        %2644 = vmatprep.mubr.f32.mxu0 %v738
        %2645 = vmatmul.mubr.f32.gmra.mxu0 %v737
        %v2646 = vpop.f32.mrf.mxu0
        %v2647 = vadd.f32 %v2432, %v2646
        %v2648 = vpop.f32.mrf.mxu0
        %v2649 = vadd.f32 %v2434, %v2648
        %2650 = vmatprep.mubr.f32.mxu0 %v754
        %2651 = vmatmul.mubr.f32.gmra.mxu0 %v753
        %v2652 = vpop.f32.mrf.mxu0
        %v2653 = vadd.f32 %v2438, %v2652
        %v2654 = vpop.f32.mrf.mxu0
        %v2655 = vadd.f32 %v2440, %v2654
        %2656 = vmatprep.mubr.f32.mxu0 %v770
        %2657 = vmatmul.mubr.f32.gmra.mxu0 %v769
        %v2658 = vpop.f32.mrf.mxu0
        %v2659 = vadd.f32 %v2444, %v2658
        %v2660 = vpop.f32.mrf.mxu0
        %v2661 = vadd.f32 %v2446, %v2660
        %2662 = vdwg.mxu0
        %2663 = vmatprep.subr.mxu0 %v1352
        %2664 = vmatpush1.msra.mxu0 %v1351
        %2665 = vmatprep.subr.mxu0 %v1348
        %2666 = vmatpush1.msra.mxu0 %v1347
        %2667 = vmatprep.subr.mxu0 %v1344
        %2668 = vmatpush1.msra.mxu0 %v1343
        %2669 = vmatprep.subr.mxu0 %v1340
        %2670 = vmatpush1.msra.mxu0 %v1339
        %2671 = vmatprep.subr.mxu0 %v1336
        %2672 = vmatpush1.msra.mxu0 %v1335
        %2673 = vmatprep.subr.mxu0 %v1332
        %2674 = vmatpush1.msra.mxu0 %v1331
        %2675 = vmatprep.subr.mxu0 %v1328
        %2676 = vmatpush1.msra.mxu0 %v1327
        %2677 = vmatprep.subr.mxu0 %v1324
        %2678 = vmatpush1.msra.mxu0 %v1323
        %2679 = vmatprep.subr.mxu0 %v1320
        %2680 = vmatpush1.msra.mxu0 %v1319
        %2681 = vmatprep.subr.mxu0 %v1316
        %2682 = vmatpush1.msra.mxu0 %v1315
        %2683 = vmatprep.subr.mxu0 %v1312
        %2684 = vmatpush1.msra.mxu0 %v1311
        %2685 = vmatprep.subr.mxu0 %v1308
        %2686 = vmatpush1.msra.mxu0 %v1307
        %2687 = vmatprep.subr.mxu0 %v1304
        %2688 = vmatpush1.msra.mxu0 %v1303
        %2689 = vmatprep.subr.mxu0 %v1300
        %2690 = vmatpush1.msra.mxu0 %v1299
        %2691 = vmatprep.subr.mxu0 %v1296
        %2692 = vmatpush1.msra.mxu0 %v1295
        %2693 = vmatprep.subr.mxu0 %v1292
        %2694 = vmatpush1.msra.mxu0 %v1291
        %2695 = vmatprep.subr.mxu0 %v1416
        %2696 = vmatpush2.msra.mxu0 %v1415
        %2697 = vmatprep.subr.mxu0 %v1412
        %2698 = vmatpush2.msra.mxu0 %v1411
        %2699 = vmatprep.subr.mxu0 %v1408
        %2700 = vmatpush2.msra.mxu0 %v1407
        %2701 = vmatprep.subr.mxu0 %v1404
        %2702 = vmatpush2.msra.mxu0 %v1403
        %2703 = vmatprep.subr.mxu0 %v1400
        %2704 = vmatpush2.msra.mxu0 %v1399
        %2705 = vmatprep.subr.mxu0 %v1396
        %2706 = vmatpush2.msra.mxu0 %v1395
        %2707 = vmatprep.subr.mxu0 %v1392
        %2708 = vmatpush2.msra.mxu0 %v1391
        %2709 = vmatprep.subr.mxu0 %v1388
        %2710 = vmatpush2.msra.mxu0 %v1387
        %2711 = vmatprep.subr.mxu0 %v1384
        %2712 = vmatpush2.msra.mxu0 %v1383
        %2713 = vmatprep.subr.mxu0 %v1380
        %2714 = vmatpush2.msra.mxu0 %v1379
        %2715 = vmatprep.subr.mxu0 %v1376
        %2716 = vmatpush2.msra.mxu0 %v1375
        %2717 = vmatprep.subr.mxu0 %v1372
        %2718 = vmatpush2.msra.mxu0 %v1371
        %2719 = vmatprep.subr.mxu0 %v1368
        %2720 = vmatpush2.msra.mxu0 %v1367
        %2721 = vmatprep.subr.mxu0 %v1364
        %2722 = vmatpush2.msra.mxu0 %v1363
        %2723 = vmatprep.subr.mxu0 %v1360
        %2724 = vmatpush2.msra.mxu0 %v1359
        %2725 = vmatprep.subr.mxu0 %v1356
        %2726 = vmatpush2.msra.mxu0 %v1355
        %2727 = vmatprep.mubr.f32.mxu0 %v388
        %2728 = vmatmul.mubr.f32.gmra.mxu0 %v387
        %v2729 = vpop.f32.mrf.mxu0
        %v2730 = vadd.f32 %v2515, %v2729
        %v2731 = vpop.f32.mrf.mxu0
        %v2732 = vadd.f32 %v2517, %v2731
        %2733 = vmatprep.mubr.f32.mxu0 %v404
        %2734 = vmatmul.mubr.f32.gmra.mxu0 %v403
        %v2735 = vpop.f32.mrf.mxu0
        %v2736 = vadd.f32 %v2521, %v2735
        %v2737 = vpop.f32.mrf.mxu0
        %v2738 = vadd.f32 %v2523, %v2737
        %2739 = vmatprep.mubr.f32.mxu0 %v420
        %2740 = vmatmul.mubr.f32.gmra.mxu0 %v419
        %v2741 = vpop.f32.mrf.mxu0
        %v2742 = vadd.f32 %v2527, %v2741
        %v2743 = vpop.f32.mrf.mxu0
        %v2744 = vadd.f32 %v2529, %v2743
        %2745 = vmatprep.mubr.f32.mxu0 %v436
        %2746 = vmatmul.mubr.f32.gmra.mxu0 %v435
        %v2747 = vpop.f32.mrf.mxu0
        %v2748 = vadd.f32 %v2533, %v2747
        %v2749 = vpop.f32.mrf.mxu0
        %v2750 = vadd.f32 %v2535, %v2749
        %2751 = vmatprep.mubr.f32.mxu0 %v452
        %2752 = vmatmul.mubr.f32.gmra.mxu0 %v451
        %v2753 = vpop.f32.mrf.mxu0
        %v2754 = vadd.f32 %v2539, %v2753
        %v2755 = vpop.f32.mrf.mxu0
        %v2756 = vadd.f32 %v2541, %v2755
        %2757 = vmatprep.mubr.f32.mxu0 %v468
        %2758 = vmatmul.mubr.f32.gmra.mxu0 %v467
        %v2759 = vpop.f32.mrf.mxu0
        %v2760 = vadd.f32 %v2545, %v2759
        %v2761 = vpop.f32.mrf.mxu0
        %v2762 = vadd.f32 %v2547, %v2761
        %2763 = vmatprep.mubr.f32.mxu0 %v484
        %2764 = vmatmul.mubr.f32.gmra.mxu0 %v483
        %v2765 = vpop.f32.mrf.mxu0
        %v2766 = vadd.f32 %v2551, %v2765
        %v2767 = vpop.f32.mrf.mxu0
        %v2768 = vadd.f32 %v2553, %v2767
        %2769 = vmatprep.mubr.f32.mxu0 %v500
        %2770 = vmatmul.mubr.f32.gmra.mxu0 %v499
        %v2771 = vpop.f32.mrf.mxu0
        %v2772 = vadd.f32 %v2557, %v2771
        %v2773 = vpop.f32.mrf.mxu0
        %v2774 = vadd.f32 %v2559, %v2773
        %2775 = vmatprep.mubr.f32.mxu0 %v516
        %2776 = vmatmul.mubr.f32.gmra.mxu0 %v515
        %v2777 = vpop.f32.mrf.mxu0
        %v2778 = vadd.f32 %v2563, %v2777
        %v2779 = vpop.f32.mrf.mxu0
        %v2780 = vadd.f32 %v2565, %v2779
        %2781 = vmatprep.mubr.f32.mxu0 %v532
        %2782 = vmatmul.mubr.f32.gmra.mxu0 %v531
        %v2783 = vpop.f32.mrf.mxu0
        %v2784 = vadd.f32 %v2569, %v2783
        %v2785 = vpop.f32.mrf.mxu0
        %v2786 = vadd.f32 %v2571, %v2785
        %2787 = vmatprep.mubr.f32.mxu0 %v548
        %2788 = vmatmul.mubr.f32.gmra.mxu0 %v547
        %v2789 = vpop.f32.mrf.mxu0
        %v2790 = vadd.f32 %v2575, %v2789
        %v2791 = vpop.f32.mrf.mxu0
        %v2792 = vadd.f32 %v2577, %v2791
        %2793 = vmatprep.mubr.f32.mxu0 %v564
        %2794 = vmatmul.mubr.f32.gmra.mxu0 %v563
        %v2795 = vpop.f32.mrf.mxu0
        %v2796 = vadd.f32 %v2581, %v2795
        %v2797 = vpop.f32.mrf.mxu0
        %v2798 = vadd.f32 %v2583, %v2797
        %2799 = vmatprep.mubr.f32.mxu0 %v580
        %2800 = vmatmul.mubr.f32.gmra.mxu0 %v579
        %v2801 = vpop.f32.mrf.mxu0
        %v2802 = vadd.f32 %v2587, %v2801
        %v2803 = vpop.f32.mrf.mxu0
        %v2804 = vadd.f32 %v2589, %v2803
        %2805 = vmatprep.mubr.f32.mxu0 %v596
        %2806 = vmatmul.mubr.f32.gmra.mxu0 %v595
        %v2807 = vpop.f32.mrf.mxu0
        %v2808 = vadd.f32 %v2593, %v2807
        %v2809 = vpop.f32.mrf.mxu0
        %v2810 = vadd.f32 %v2595, %v2809
        %2811 = vmatprep.mubr.f32.mxu0 %v612
        %2812 = vmatmul.mubr.f32.gmra.mxu0 %v611
        %v2813 = vpop.f32.mrf.mxu0
        %v2814 = vadd.f32 %v2599, %v2813
        %v2815 = vpop.f32.mrf.mxu0
        %v2816 = vadd.f32 %v2601, %v2815
        %2817 = vmatprep.mubr.f32.mxu0 %v628
        %2818 = vmatmul.mubr.f32.gmra.mxu0 %v627
        %v2819 = vpop.f32.mrf.mxu0
        %v2820 = vadd.f32 %v2605, %v2819
        %v2821 = vpop.f32.mrf.mxu0
        %v2822 = vadd.f32 %v2607, %v2821
        %2823 = vmatprep.mubr.f32.mxu0 %v644
        %2824 = vmatmul.mubr.f32.gmra.mxu0 %v643
        %v2825 = vpop.f32.mrf.mxu0
        %v2826 = vadd.f32 %v2611, %v2825
        %v2827 = vpop.f32.mrf.mxu0
        %v2828 = vadd.f32 %v2613, %v2827
        %2829 = vmatprep.mubr.f32.mxu0 %v660
        %2830 = vmatmul.mubr.f32.gmra.mxu0 %v659
        %v2831 = vpop.f32.mrf.mxu0
        %v2832 = vadd.f32 %v2617, %v2831
        %v2833 = vpop.f32.mrf.mxu0
        %v2834 = vadd.f32 %v2619, %v2833
        %2835 = vmatprep.mubr.f32.mxu0 %v676
        %2836 = vmatmul.mubr.f32.gmra.mxu0 %v675
        %v2837 = vpop.f32.mrf.mxu0
        %v2838 = vadd.f32 %v2623, %v2837
        %v2839 = vpop.f32.mrf.mxu0
        %v2840 = vadd.f32 %v2625, %v2839
        %2841 = vmatprep.mubr.f32.mxu0 %v692
        %2842 = vmatmul.mubr.f32.gmra.mxu0 %v691
        %v2843 = vpop.f32.mrf.mxu0
        %v2844 = vadd.f32 %v2629, %v2843
        %v2845 = vpop.f32.mrf.mxu0
        %v2846 = vadd.f32 %v2631, %v2845
        %2847 = vmatprep.mubr.f32.mxu0 %v708
        %2848 = vmatmul.mubr.f32.gmra.mxu0 %v707
        %v2849 = vpop.f32.mrf.mxu0
        %v2850 = vadd.f32 %v2635, %v2849
        %v2851 = vpop.f32.mrf.mxu0
        %v2852 = vadd.f32 %v2637, %v2851
        %2853 = vmatprep.mubr.f32.mxu0 %v724
        %2854 = vmatmul.mubr.f32.gmra.mxu0 %v723
        %v2855 = vpop.f32.mrf.mxu0
        %v2856 = vadd.f32 %v2641, %v2855
        %v2857 = vpop.f32.mrf.mxu0
        %v2858 = vadd.f32 %v2643, %v2857
        %2859 = vmatprep.mubr.f32.mxu0 %v740
        %2860 = vmatmul.mubr.f32.gmra.mxu0 %v739
        %v2861 = vpop.f32.mrf.mxu0
        %v2862 = vadd.f32 %v2647, %v2861
        %v2863 = vpop.f32.mrf.mxu0
        %v2864 = vadd.f32 %v2649, %v2863
        %2865 = vmatprep.mubr.f32.mxu0 %v756
        %2866 = vmatmul.mubr.f32.gmra.mxu0 %v755
        %v2867 = vpop.f32.mrf.mxu0
        %v2868 = vadd.f32 %v2653, %v2867
        %v2869 = vpop.f32.mrf.mxu0
        %v2870 = vadd.f32 %v2655, %v2869
        %2871 = vmatprep.mubr.f32.mxu0 %v772
        %2872 = vmatmul.mubr.f32.gmra.mxu0 %v771
        %v2873 = vpop.f32.mrf.mxu0
        %v2874 = vadd.f32 %v2659, %v2873
        %v2875 = vpop.f32.mrf.mxu0
        %v2876 = vadd.f32 %v2661, %v2875
        %2877 = vdwg.mxu0
        %2878 = vmatprep.subr.mxu0 %v1480
        %2879 = vmatpush1.msra.mxu0 %v1479
        %2880 = vmatprep.subr.mxu0 %v1476
        %2881 = vmatpush1.msra.mxu0 %v1475
        %2882 = vmatprep.subr.mxu0 %v1472
        %2883 = vmatpush1.msra.mxu0 %v1471
        %2884 = vmatprep.subr.mxu0 %v1468
        %2885 = vmatpush1.msra.mxu0 %v1467
        %2886 = vmatprep.subr.mxu0 %v1464
        %2887 = vmatpush1.msra.mxu0 %v1463
        %2888 = vmatprep.subr.mxu0 %v1460
        %2889 = vmatpush1.msra.mxu0 %v1459
        %2890 = vmatprep.subr.mxu0 %v1456
        %2891 = vmatpush1.msra.mxu0 %v1455
        %2892 = vmatprep.subr.mxu0 %v1452
        %2893 = vmatpush1.msra.mxu0 %v1451
        %2894 = vmatprep.subr.mxu0 %v1448
        %2895 = vmatpush1.msra.mxu0 %v1447
        %2896 = vmatprep.subr.mxu0 %v1444
        %2897 = vmatpush1.msra.mxu0 %v1443
        %2898 = vmatprep.subr.mxu0 %v1440
        %2899 = vmatpush1.msra.mxu0 %v1439
        %2900 = vmatprep.subr.mxu0 %v1436
        %2901 = vmatpush1.msra.mxu0 %v1435
        %2902 = vmatprep.subr.mxu0 %v1432
        %2903 = vmatpush1.msra.mxu0 %v1431
        %2904 = vmatprep.subr.mxu0 %v1428
        %2905 = vmatpush1.msra.mxu0 %v1427
        %2906 = vmatprep.subr.mxu0 %v1424
        %2907 = vmatpush1.msra.mxu0 %v1423
        %2908 = vmatprep.subr.mxu0 %v1420
        %2909 = vmatpush1.msra.mxu0 %v1419
        %2910 = vmatprep.subr.mxu0 %v1544
        %2911 = vmatpush2.msra.mxu0 %v1543
        %2912 = vmatprep.subr.mxu0 %v1540
        %2913 = vmatpush2.msra.mxu0 %v1539
        %2914 = vmatprep.subr.mxu0 %v1536
        %2915 = vmatpush2.msra.mxu0 %v1535
        %2916 = vmatprep.subr.mxu0 %v1532
        %2917 = vmatpush2.msra.mxu0 %v1531
        %2918 = vmatprep.subr.mxu0 %v1528
        %2919 = vmatpush2.msra.mxu0 %v1527
        %2920 = vmatprep.subr.mxu0 %v1524
        %2921 = vmatpush2.msra.mxu0 %v1523
        %2922 = vmatprep.subr.mxu0 %v1520
        %2923 = vmatpush2.msra.mxu0 %v1519
        %2924 = vmatprep.subr.mxu0 %v1516
        %2925 = vmatpush2.msra.mxu0 %v1515
        %2926 = vmatprep.subr.mxu0 %v1512
        %2927 = vmatpush2.msra.mxu0 %v1511
        %2928 = vmatprep.subr.mxu0 %v1508
        %2929 = vmatpush2.msra.mxu0 %v1507
        %2930 = vmatprep.subr.mxu0 %v1504
        %2931 = vmatpush2.msra.mxu0 %v1503
        %2932 = vmatprep.subr.mxu0 %v1500
        %2933 = vmatpush2.msra.mxu0 %v1499
        %2934 = vmatprep.subr.mxu0 %v1496
        %2935 = vmatpush2.msra.mxu0 %v1495
        %2936 = vmatprep.subr.mxu0 %v1492
        %2937 = vmatpush2.msra.mxu0 %v1491
        %2938 = vmatprep.subr.mxu0 %v1488
        %2939 = vmatpush2.msra.mxu0 %v1487
        %2940 = vmatprep.subr.mxu0 %v1484
        %2941 = vmatpush2.msra.mxu0 %v1483
        %2942 = vmatprep.mubr.f32.mxu0 %v390
        %2943 = vmatmul.mubr.f32.gmra.mxu0 %v389
        %v2944 = vpop.f32.mrf.mxu0
        %v2945 = vadd.f32 %v2730, %v2944
        %v2946 = vpop.f32.mrf.mxu0
        %v2947 = vadd.f32 %v2732, %v2946
        %2948 = vmatprep.mubr.f32.mxu0 %v406
        %2949 = vmatmul.mubr.f32.gmra.mxu0 %v405
        %v2950 = vpop.f32.mrf.mxu0
        %v2951 = vadd.f32 %v2736, %v2950
        %v2952 = vpop.f32.mrf.mxu0
        %v2953 = vadd.f32 %v2738, %v2952
        %2954 = vmatprep.mubr.f32.mxu0 %v422
        %2955 = vmatmul.mubr.f32.gmra.mxu0 %v421
        %v2956 = vpop.f32.mrf.mxu0
        %v2957 = vadd.f32 %v2742, %v2956
        %v2958 = vpop.f32.mrf.mxu0
        %v2959 = vadd.f32 %v2744, %v2958
        %2960 = vmatprep.mubr.f32.mxu0 %v438
        %2961 = vmatmul.mubr.f32.gmra.mxu0 %v437
        %v2962 = vpop.f32.mrf.mxu0
        %v2963 = vadd.f32 %v2748, %v2962
        %v2964 = vpop.f32.mrf.mxu0
        %v2965 = vadd.f32 %v2750, %v2964
        %2966 = vmatprep.mubr.f32.mxu0 %v454
        %2967 = vmatmul.mubr.f32.gmra.mxu0 %v453
        %v2968 = vpop.f32.mrf.mxu0
        %v2969 = vadd.f32 %v2754, %v2968
        %v2970 = vpop.f32.mrf.mxu0
        %v2971 = vadd.f32 %v2756, %v2970
        %2972 = vmatprep.mubr.f32.mxu0 %v470
        %2973 = vmatmul.mubr.f32.gmra.mxu0 %v469
        %v2974 = vpop.f32.mrf.mxu0
        %v2975 = vadd.f32 %v2760, %v2974
        %v2976 = vpop.f32.mrf.mxu0
        %v2977 = vadd.f32 %v2762, %v2976
        %2978 = vmatprep.mubr.f32.mxu0 %v486
        %2979 = vmatmul.mubr.f32.gmra.mxu0 %v485
        %v2980 = vpop.f32.mrf.mxu0
        %v2981 = vadd.f32 %v2766, %v2980
        %v2982 = vpop.f32.mrf.mxu0
        %v2983 = vadd.f32 %v2768, %v2982
        %2984 = vmatprep.mubr.f32.mxu0 %v502
        %2985 = vmatmul.mubr.f32.gmra.mxu0 %v501
        %v2986 = vpop.f32.mrf.mxu0
        %v2987 = vadd.f32 %v2772, %v2986
        %v2988 = vpop.f32.mrf.mxu0
        %v2989 = vadd.f32 %v2774, %v2988
        %2990 = vmatprep.mubr.f32.mxu0 %v518
        %2991 = vmatmul.mubr.f32.gmra.mxu0 %v517
        %v2992 = vpop.f32.mrf.mxu0
        %v2993 = vadd.f32 %v2778, %v2992
        %v2994 = vpop.f32.mrf.mxu0
        %v2995 = vadd.f32 %v2780, %v2994
        %2996 = vmatprep.mubr.f32.mxu0 %v534
        %2997 = vmatmul.mubr.f32.gmra.mxu0 %v533
        %v2998 = vpop.f32.mrf.mxu0
        %v2999 = vadd.f32 %v2784, %v2998
        %v3000 = vpop.f32.mrf.mxu0
        %v3001 = vadd.f32 %v2786, %v3000
        %3002 = vmatprep.mubr.f32.mxu0 %v550
        %3003 = vmatmul.mubr.f32.gmra.mxu0 %v549
        %v3004 = vpop.f32.mrf.mxu0
        %v3005 = vadd.f32 %v2790, %v3004
        %v3006 = vpop.f32.mrf.mxu0
        %v3007 = vadd.f32 %v2792, %v3006
        %3008 = vmatprep.mubr.f32.mxu0 %v566
        %3009 = vmatmul.mubr.f32.gmra.mxu0 %v565
        %v3010 = vpop.f32.mrf.mxu0
        %v3011 = vadd.f32 %v2796, %v3010
        %v3012 = vpop.f32.mrf.mxu0
        %v3013 = vadd.f32 %v2798, %v3012
        %3014 = vmatprep.mubr.f32.mxu0 %v582
        %3015 = vmatmul.mubr.f32.gmra.mxu0 %v581
        %v3016 = vpop.f32.mrf.mxu0
        %v3017 = vadd.f32 %v2802, %v3016
        %v3018 = vpop.f32.mrf.mxu0
        %v3019 = vadd.f32 %v2804, %v3018
        %3020 = vmatprep.mubr.f32.mxu0 %v598
        %3021 = vmatmul.mubr.f32.gmra.mxu0 %v597
        %v3022 = vpop.f32.mrf.mxu0
        %v3023 = vadd.f32 %v2808, %v3022
        %v3024 = vpop.f32.mrf.mxu0
        %v3025 = vadd.f32 %v2810, %v3024
        %3026 = vmatprep.mubr.f32.mxu0 %v614
        %3027 = vmatmul.mubr.f32.gmra.mxu0 %v613
        %v3028 = vpop.f32.mrf.mxu0
        %v3029 = vadd.f32 %v2814, %v3028
        %v3030 = vpop.f32.mrf.mxu0
        %v3031 = vadd.f32 %v2816, %v3030
        %3032 = vmatprep.mubr.f32.mxu0 %v630
        %3033 = vmatmul.mubr.f32.gmra.mxu0 %v629
        %v3034 = vpop.f32.mrf.mxu0
        %v3035 = vadd.f32 %v2820, %v3034
        %v3036 = vpop.f32.mrf.mxu0
        %v3037 = vadd.f32 %v2822, %v3036
        %3038 = vmatprep.mubr.f32.mxu0 %v646
        %3039 = vmatmul.mubr.f32.gmra.mxu0 %v645
        %v3040 = vpop.f32.mrf.mxu0
        %v3041 = vadd.f32 %v2826, %v3040
        %v3042 = vpop.f32.mrf.mxu0
        %v3043 = vadd.f32 %v2828, %v3042
        %3044 = vmatprep.mubr.f32.mxu0 %v662
        %3045 = vmatmul.mubr.f32.gmra.mxu0 %v661
        %v3046 = vpop.f32.mrf.mxu0
        %v3047 = vadd.f32 %v2832, %v3046
        %v3048 = vpop.f32.mrf.mxu0
        %v3049 = vadd.f32 %v2834, %v3048
        %3050 = vmatprep.mubr.f32.mxu0 %v678
        %3051 = vmatmul.mubr.f32.gmra.mxu0 %v677
        %v3052 = vpop.f32.mrf.mxu0
        %v3053 = vadd.f32 %v2838, %v3052
        %v3054 = vpop.f32.mrf.mxu0
        %v3055 = vadd.f32 %v2840, %v3054
        %3056 = vmatprep.mubr.f32.mxu0 %v694
        %3057 = vmatmul.mubr.f32.gmra.mxu0 %v693
        %v3058 = vpop.f32.mrf.mxu0
        %v3059 = vadd.f32 %v2844, %v3058
        %v3060 = vpop.f32.mrf.mxu0
        %v3061 = vadd.f32 %v2846, %v3060
        %3062 = vmatprep.mubr.f32.mxu0 %v710
        %3063 = vmatmul.mubr.f32.gmra.mxu0 %v709
        %v3064 = vpop.f32.mrf.mxu0
        %v3065 = vadd.f32 %v2850, %v3064
        %v3066 = vpop.f32.mrf.mxu0
        %v3067 = vadd.f32 %v2852, %v3066
        %3068 = vmatprep.mubr.f32.mxu0 %v726
        %3069 = vmatmul.mubr.f32.gmra.mxu0 %v725
        %v3070 = vpop.f32.mrf.mxu0
        %v3071 = vadd.f32 %v2856, %v3070
        %v3072 = vpop.f32.mrf.mxu0
        %v3073 = vadd.f32 %v2858, %v3072
        %3074 = vmatprep.mubr.f32.mxu0 %v742
        %3075 = vmatmul.mubr.f32.gmra.mxu0 %v741
        %v3076 = vpop.f32.mrf.mxu0
        %v3077 = vadd.f32 %v2862, %v3076
        %v3078 = vpop.f32.mrf.mxu0
        %v3079 = vadd.f32 %v2864, %v3078
        %3080 = vmatprep.mubr.f32.mxu0 %v758
        %3081 = vmatmul.mubr.f32.gmra.mxu0 %v757
        %v3082 = vpop.f32.mrf.mxu0
        %v3083 = vadd.f32 %v2868, %v3082
        %v3084 = vpop.f32.mrf.mxu0
        %v3085 = vadd.f32 %v2870, %v3084
        %3086 = vmatprep.mubr.f32.mxu0 %v774
        %3087 = vmatmul.mubr.f32.gmra.mxu0 %v773
        %v3088 = vpop.f32.mrf.mxu0
        %v3089 = vadd.f32 %v2874, %v3088
        %v3090 = vpop.f32.mrf.mxu0
        %v3091 = vadd.f32 %v2876, %v3090
        %3092 = vdwg.mxu0
        %3093 = vmatprep.subr.mxu0 %v1608
        %3094 = vmatpush1.msra.mxu0 %v1607
        %3095 = vmatprep.subr.mxu0 %v1604
        %3096 = vmatpush1.msra.mxu0 %v1603
        %3097 = vmatprep.subr.mxu0 %v1600
        %3098 = vmatpush1.msra.mxu0 %v1599
        %3099 = vmatprep.subr.mxu0 %v1596
        %3100 = vmatpush1.msra.mxu0 %v1595
        %3101 = vmatprep.subr.mxu0 %v1592
        %3102 = vmatpush1.msra.mxu0 %v1591
        %3103 = vmatprep.subr.mxu0 %v1588
        %3104 = vmatpush1.msra.mxu0 %v1587
        %3105 = vmatprep.subr.mxu0 %v1584
        %3106 = vmatpush1.msra.mxu0 %v1583
        %3107 = vmatprep.subr.mxu0 %v1580
        %3108 = vmatpush1.msra.mxu0 %v1579
        %3109 = vmatprep.subr.mxu0 %v1576
        %3110 = vmatpush1.msra.mxu0 %v1575
        %3111 = vmatprep.subr.mxu0 %v1572
        %3112 = vmatpush1.msra.mxu0 %v1571
        %3113 = vmatprep.subr.mxu0 %v1568
        %3114 = vmatpush1.msra.mxu0 %v1567
        %3115 = vmatprep.subr.mxu0 %v1564
        %3116 = vmatpush1.msra.mxu0 %v1563
        %3117 = vmatprep.subr.mxu0 %v1560
        %3118 = vmatpush1.msra.mxu0 %v1559
        %3119 = vmatprep.subr.mxu0 %v1556
        %3120 = vmatpush1.msra.mxu0 %v1555
        %3121 = vmatprep.subr.mxu0 %v1552
        %3122 = vmatpush1.msra.mxu0 %v1551
        %3123 = vmatprep.subr.mxu0 %v1548
        %3124 = vmatpush1.msra.mxu0 %v1547
        %3125 = vmatprep.subr.mxu0 %v1672
        %3126 = vmatpush2.msra.mxu0 %v1671
        %3127 = vmatprep.subr.mxu0 %v1668
        %3128 = vmatpush2.msra.mxu0 %v1667
        %3129 = vmatprep.subr.mxu0 %v1664
        %3130 = vmatpush2.msra.mxu0 %v1663
        %3131 = vmatprep.subr.mxu0 %v1660
        %3132 = vmatpush2.msra.mxu0 %v1659
        %3133 = vmatprep.subr.mxu0 %v1656
        %3134 = vmatpush2.msra.mxu0 %v1655
        %3135 = vmatprep.subr.mxu0 %v1652
        %3136 = vmatpush2.msra.mxu0 %v1651
        %3137 = vmatprep.subr.mxu0 %v1648
        %3138 = vmatpush2.msra.mxu0 %v1647
        %3139 = vmatprep.subr.mxu0 %v1644
        %3140 = vmatpush2.msra.mxu0 %v1643
        %3141 = vmatprep.subr.mxu0 %v1640
        %3142 = vmatpush2.msra.mxu0 %v1639
        %3143 = vmatprep.subr.mxu0 %v1636
        %3144 = vmatpush2.msra.mxu0 %v1635
        %3145 = vmatprep.subr.mxu0 %v1632
        %3146 = vmatpush2.msra.mxu0 %v1631
        %3147 = vmatprep.subr.mxu0 %v1628
        %3148 = vmatpush2.msra.mxu0 %v1627
        %3149 = vmatprep.subr.mxu0 %v1624
        %3150 = vmatpush2.msra.mxu0 %v1623
        %3151 = vmatprep.subr.mxu0 %v1620
        %3152 = vmatpush2.msra.mxu0 %v1619
        %3153 = vmatprep.subr.mxu0 %v1616
        %3154 = vmatpush2.msra.mxu0 %v1615
        %3155 = vmatprep.subr.mxu0 %v1612
        %3156 = vmatpush2.msra.mxu0 %v1611
        %3157 = vmatprep.mubr.f32.mxu0 %v392
        %3158 = vmatmul.mubr.f32.gmra.mxu0 %v391
        %v3159 = vpop.f32.mrf.mxu0
        %v3160 = vadd.f32 %v2945, %v3159
        %v3161 = vpop.f32.mrf.mxu0
        %v3162 = vadd.f32 %v2947, %v3161
        %3163 = vmatprep.mubr.f32.mxu0 %v408
        %3164 = vmatmul.mubr.f32.gmra.mxu0 %v407
        %v3165 = vpop.f32.mrf.mxu0
        %v3166 = vadd.f32 %v2951, %v3165
        %v3167 = vpop.f32.mrf.mxu0
        %v3168 = vadd.f32 %v2953, %v3167
        %3169 = vmatprep.mubr.f32.mxu0 %v424
        %3170 = vmatmul.mubr.f32.gmra.mxu0 %v423
        %v3171 = vpop.f32.mrf.mxu0
        %v3172 = vadd.f32 %v2957, %v3171
        %v3173 = vpop.f32.mrf.mxu0
        %v3174 = vadd.f32 %v2959, %v3173
        %3175 = vmatprep.mubr.f32.mxu0 %v440
        %3176 = vmatmul.mubr.f32.gmra.mxu0 %v439
        %v3177 = vpop.f32.mrf.mxu0
        %v3178 = vadd.f32 %v2963, %v3177
        %v3179 = vpop.f32.mrf.mxu0
        %v3180 = vadd.f32 %v2965, %v3179
        %3181 = vmatprep.mubr.f32.mxu0 %v456
        %3182 = vmatmul.mubr.f32.gmra.mxu0 %v455
        %v3183 = vpop.f32.mrf.mxu0
        %v3184 = vadd.f32 %v2969, %v3183
        %v3185 = vpop.f32.mrf.mxu0
        %v3186 = vadd.f32 %v2971, %v3185
        %3187 = vmatprep.mubr.f32.mxu0 %v472
        %3188 = vmatmul.mubr.f32.gmra.mxu0 %v471
        %v3189 = vpop.f32.mrf.mxu0
        %v3190 = vadd.f32 %v2975, %v3189
        %v3191 = vpop.f32.mrf.mxu0
        %v3192 = vadd.f32 %v2977, %v3191
        %3193 = vmatprep.mubr.f32.mxu0 %v488
        %3194 = vmatmul.mubr.f32.gmra.mxu0 %v487
        %v3195 = vpop.f32.mrf.mxu0
        %v3196 = vadd.f32 %v2981, %v3195
        %v3197 = vpop.f32.mrf.mxu0
        %v3198 = vadd.f32 %v2983, %v3197
        %3199 = vmatprep.mubr.f32.mxu0 %v504
        %3200 = vmatmul.mubr.f32.gmra.mxu0 %v503
        %v3201 = vpop.f32.mrf.mxu0
        %v3202 = vadd.f32 %v2987, %v3201
        %v3203 = vpop.f32.mrf.mxu0
        %v3204 = vadd.f32 %v2989, %v3203
        %3205 = vmatprep.mubr.f32.mxu0 %v520
        %3206 = vmatmul.mubr.f32.gmra.mxu0 %v519
        %v3207 = vpop.f32.mrf.mxu0
        %v3208 = vadd.f32 %v2993, %v3207
        %v3209 = vpop.f32.mrf.mxu0
        %v3210 = vadd.f32 %v2995, %v3209
        %3211 = vmatprep.mubr.f32.mxu0 %v536
        %3212 = vmatmul.mubr.f32.gmra.mxu0 %v535
        %v3213 = vpop.f32.mrf.mxu0
        %v3214 = vadd.f32 %v2999, %v3213
        %v3215 = vpop.f32.mrf.mxu0
        %v3216 = vadd.f32 %v3001, %v3215
        %3217 = vmatprep.mubr.f32.mxu0 %v552
        %3218 = vmatmul.mubr.f32.gmra.mxu0 %v551
        %v3219 = vpop.f32.mrf.mxu0
        %v3220 = vadd.f32 %v3005, %v3219
        %v3221 = vpop.f32.mrf.mxu0
        %v3222 = vadd.f32 %v3007, %v3221
        %3223 = vmatprep.mubr.f32.mxu0 %v568
        %3224 = vmatmul.mubr.f32.gmra.mxu0 %v567
        %v3225 = vpop.f32.mrf.mxu0
        %v3226 = vadd.f32 %v3011, %v3225
        %v3227 = vpop.f32.mrf.mxu0
        %v3228 = vadd.f32 %v3013, %v3227
        %3229 = vmatprep.mubr.f32.mxu0 %v584
        %3230 = vmatmul.mubr.f32.gmra.mxu0 %v583
        %v3231 = vpop.f32.mrf.mxu0
        %v3232 = vadd.f32 %v3017, %v3231
        %v3233 = vpop.f32.mrf.mxu0
        %v3234 = vadd.f32 %v3019, %v3233
        %3235 = vmatprep.mubr.f32.mxu0 %v600
        %3236 = vmatmul.mubr.f32.gmra.mxu0 %v599
        %v3237 = vpop.f32.mrf.mxu0
        %v3238 = vadd.f32 %v3023, %v3237
        %v3239 = vpop.f32.mrf.mxu0
        %v3240 = vadd.f32 %v3025, %v3239
        %3241 = vmatprep.mubr.f32.mxu0 %v616
        %3242 = vmatmul.mubr.f32.gmra.mxu0 %v615
        %v3243 = vpop.f32.mrf.mxu0
        %v3244 = vadd.f32 %v3029, %v3243
        %v3245 = vpop.f32.mrf.mxu0
        %v3246 = vadd.f32 %v3031, %v3245
        %3247 = vmatprep.mubr.f32.mxu0 %v632
        %3248 = vmatmul.mubr.f32.gmra.mxu0 %v631
        %v3249 = vpop.f32.mrf.mxu0
        %v3250 = vadd.f32 %v3035, %v3249
        %v3251 = vpop.f32.mrf.mxu0
        %v3252 = vadd.f32 %v3037, %v3251
        %3253 = vmatprep.mubr.f32.mxu0 %v648
        %3254 = vmatmul.mubr.f32.gmra.mxu0 %v647
        %v3255 = vpop.f32.mrf.mxu0
        %v3256 = vadd.f32 %v3041, %v3255
        %v3257 = vpop.f32.mrf.mxu0
        %v3258 = vadd.f32 %v3043, %v3257
        %3259 = vmatprep.mubr.f32.mxu0 %v664
        %3260 = vmatmul.mubr.f32.gmra.mxu0 %v663
        %v3261 = vpop.f32.mrf.mxu0
        %v3262 = vadd.f32 %v3047, %v3261
        %v3263 = vpop.f32.mrf.mxu0
        %v3264 = vadd.f32 %v3049, %v3263
        %3265 = vmatprep.mubr.f32.mxu0 %v680
        %3266 = vmatmul.mubr.f32.gmra.mxu0 %v679
        %v3267 = vpop.f32.mrf.mxu0
        %v3268 = vadd.f32 %v3053, %v3267
        %v3269 = vpop.f32.mrf.mxu0
        %v3270 = vadd.f32 %v3055, %v3269
        %3271 = vmatprep.mubr.f32.mxu0 %v696
        %3272 = vmatmul.mubr.f32.gmra.mxu0 %v695
        %v3273 = vpop.f32.mrf.mxu0
        %v3274 = vadd.f32 %v3059, %v3273
        %v3275 = vpop.f32.mrf.mxu0
        %v3276 = vadd.f32 %v3061, %v3275
        %3277 = vmatprep.mubr.f32.mxu0 %v712
        %3278 = vmatmul.mubr.f32.gmra.mxu0 %v711
        %v3279 = vpop.f32.mrf.mxu0
        %v3280 = vadd.f32 %v3065, %v3279
        %v3281 = vpop.f32.mrf.mxu0
        %v3282 = vadd.f32 %v3067, %v3281
        %3283 = vmatprep.mubr.f32.mxu0 %v728
        %3284 = vmatmul.mubr.f32.gmra.mxu0 %v727
        %v3285 = vpop.f32.mrf.mxu0
        %v3286 = vadd.f32 %v3071, %v3285
        %v3287 = vpop.f32.mrf.mxu0
        %v3288 = vadd.f32 %v3073, %v3287
        %3289 = vmatprep.mubr.f32.mxu0 %v744
        %3290 = vmatmul.mubr.f32.gmra.mxu0 %v743
        %v3291 = vpop.f32.mrf.mxu0
        %v3292 = vadd.f32 %v3077, %v3291
        %v3293 = vpop.f32.mrf.mxu0
        %v3294 = vadd.f32 %v3079, %v3293
        %3295 = vmatprep.mubr.f32.mxu0 %v760
        %3296 = vmatmul.mubr.f32.gmra.mxu0 %v759
        %v3297 = vpop.f32.mrf.mxu0
        %v3298 = vadd.f32 %v3083, %v3297
        %v3299 = vpop.f32.mrf.mxu0
        %v3300 = vadd.f32 %v3085, %v3299
        %3301 = vmatprep.mubr.f32.mxu0 %v776
        %3302 = vmatmul.mubr.f32.gmra.mxu0 %v775
        %v3303 = vpop.f32.mrf.mxu0
        %v3304 = vadd.f32 %v3089, %v3303
        %v3305 = vpop.f32.mrf.mxu0
        %v3306 = vadd.f32 %v3091, %v3305
        %3307 = vdwg.mxu0
        %3308 = vmatprep.subr.mxu0 %v1736
        %3309 = vmatpush1.msra.mxu0 %v1735
        %3310 = vmatprep.subr.mxu0 %v1732
        %3311 = vmatpush1.msra.mxu0 %v1731
        %3312 = vmatprep.subr.mxu0 %v1728
        %3313 = vmatpush1.msra.mxu0 %v1727
        %3314 = vmatprep.subr.mxu0 %v1724
        %3315 = vmatpush1.msra.mxu0 %v1723
        %3316 = vmatprep.subr.mxu0 %v1720
        %3317 = vmatpush1.msra.mxu0 %v1719
        %3318 = vmatprep.subr.mxu0 %v1716
        %3319 = vmatpush1.msra.mxu0 %v1715
        %3320 = vmatprep.subr.mxu0 %v1712
        %3321 = vmatpush1.msra.mxu0 %v1711
        %3322 = vmatprep.subr.mxu0 %v1708
        %3323 = vmatpush1.msra.mxu0 %v1707
        %3324 = vmatprep.subr.mxu0 %v1704
        %3325 = vmatpush1.msra.mxu0 %v1703
        %3326 = vmatprep.subr.mxu0 %v1700
        %3327 = vmatpush1.msra.mxu0 %v1699
        %3328 = vmatprep.subr.mxu0 %v1696
        %3329 = vmatpush1.msra.mxu0 %v1695
        %3330 = vmatprep.subr.mxu0 %v1692
        %3331 = vmatpush1.msra.mxu0 %v1691
        %3332 = vmatprep.subr.mxu0 %v1688
        %3333 = vmatpush1.msra.mxu0 %v1687
        %3334 = vmatprep.subr.mxu0 %v1684
        %3335 = vmatpush1.msra.mxu0 %v1683
        %3336 = vmatprep.subr.mxu0 %v1680
        %3337 = vmatpush1.msra.mxu0 %v1679
        %3338 = vmatprep.subr.mxu0 %v1676
        %3339 = vmatpush1.msra.mxu0 %v1675
        %3340 = vmatprep.subr.mxu0 %v1800
        %3341 = vmatpush2.msra.mxu0 %v1799
        %3342 = vmatprep.subr.mxu0 %v1796
        %3343 = vmatpush2.msra.mxu0 %v1795
        %3344 = vmatprep.subr.mxu0 %v1792
        %3345 = vmatpush2.msra.mxu0 %v1791
        %3346 = vmatprep.subr.mxu0 %v1788
        %3347 = vmatpush2.msra.mxu0 %v1787
        %3348 = vmatprep.subr.mxu0 %v1784
        %3349 = vmatpush2.msra.mxu0 %v1783
        %3350 = vmatprep.subr.mxu0 %v1780
        %3351 = vmatpush2.msra.mxu0 %v1779
        %3352 = vmatprep.subr.mxu0 %v1776
        %3353 = vmatpush2.msra.mxu0 %v1775
        %3354 = vmatprep.subr.mxu0 %v1772
        %3355 = vmatpush2.msra.mxu0 %v1771
        %3356 = vmatprep.subr.mxu0 %v1768
        %3357 = vmatpush2.msra.mxu0 %v1767
        %3358 = vmatprep.subr.mxu0 %v1764
        %3359 = vmatpush2.msra.mxu0 %v1763
        %3360 = vmatprep.subr.mxu0 %v1760
        %3361 = vmatpush2.msra.mxu0 %v1759
        %3362 = vmatprep.subr.mxu0 %v1756
        %3363 = vmatpush2.msra.mxu0 %v1755
        %3364 = vmatprep.subr.mxu0 %v1752
        %3365 = vmatpush2.msra.mxu0 %v1751
        %3366 = vmatprep.subr.mxu0 %v1748
        %3367 = vmatpush2.msra.mxu0 %v1747
        %3368 = vmatprep.subr.mxu0 %v1744
        %3369 = vmatpush2.msra.mxu0 %v1743
        %3370 = vmatprep.subr.mxu0 %v1740
        %3371 = vmatpush2.msra.mxu0 %v1739
        %3372 = vmatprep.mubr.f32.mxu0 %v394
        %3373 = vmatmul.mubr.f32.gmra.mxu0 %v393
        %v3374 = vpop.f32.mrf.mxu0
        %v3375 = vadd.f32 %v3160, %v3374
        %v3376 = vpop.f32.mrf.mxu0
        %v3377 = vadd.f32 %v3162, %v3376
        %3378 = vmatprep.mubr.f32.mxu0 %v410
        %3379 = vmatmul.mubr.f32.gmra.mxu0 %v409
        %v3380 = vpop.f32.mrf.mxu0
        %v3381 = vadd.f32 %v3166, %v3380
        %v3382 = vpop.f32.mrf.mxu0
        %v3383 = vadd.f32 %v3168, %v3382
        %3384 = vmatprep.mubr.f32.mxu0 %v426
        %3385 = vmatmul.mubr.f32.gmra.mxu0 %v425
        %v3386 = vpop.f32.mrf.mxu0
        %v3387 = vadd.f32 %v3172, %v3386
        %v3388 = vpop.f32.mrf.mxu0
        %v3389 = vadd.f32 %v3174, %v3388
        %3390 = vmatprep.mubr.f32.mxu0 %v442
        %3391 = vmatmul.mubr.f32.gmra.mxu0 %v441
        %v3392 = vpop.f32.mrf.mxu0
        %v3393 = vadd.f32 %v3178, %v3392
        %v3394 = vpop.f32.mrf.mxu0
        %v3395 = vadd.f32 %v3180, %v3394
        %3396 = vmatprep.mubr.f32.mxu0 %v458
        %3397 = vmatmul.mubr.f32.gmra.mxu0 %v457
        %v3398 = vpop.f32.mrf.mxu0
        %v3399 = vadd.f32 %v3184, %v3398
        %v3400 = vpop.f32.mrf.mxu0
        %v3401 = vadd.f32 %v3186, %v3400
        %3402 = vmatprep.mubr.f32.mxu0 %v474
        %3403 = vmatmul.mubr.f32.gmra.mxu0 %v473
        %v3404 = vpop.f32.mrf.mxu0
        %v3405 = vadd.f32 %v3190, %v3404
        %v3406 = vpop.f32.mrf.mxu0
        %v3407 = vadd.f32 %v3192, %v3406
        %3408 = vmatprep.mubr.f32.mxu0 %v490
        %3409 = vmatmul.mubr.f32.gmra.mxu0 %v489
        %v3410 = vpop.f32.mrf.mxu0
        %v3411 = vadd.f32 %v3196, %v3410
        %v3412 = vpop.f32.mrf.mxu0
        %v3413 = vadd.f32 %v3198, %v3412
        %3414 = vmatprep.mubr.f32.mxu0 %v506
        %3415 = vmatmul.mubr.f32.gmra.mxu0 %v505
        %v3416 = vpop.f32.mrf.mxu0
        %v3417 = vadd.f32 %v3202, %v3416
        %v3418 = vpop.f32.mrf.mxu0
        %v3419 = vadd.f32 %v3204, %v3418
        %3420 = vmatprep.mubr.f32.mxu0 %v522
        %3421 = vmatmul.mubr.f32.gmra.mxu0 %v521
        %v3422 = vpop.f32.mrf.mxu0
        %v3423 = vadd.f32 %v3208, %v3422
        %v3424 = vpop.f32.mrf.mxu0
        %v3425 = vadd.f32 %v3210, %v3424
        %3426 = vmatprep.mubr.f32.mxu0 %v538
        %3427 = vmatmul.mubr.f32.gmra.mxu0 %v537
        %v3428 = vpop.f32.mrf.mxu0
        %v3429 = vadd.f32 %v3214, %v3428
        %v3430 = vpop.f32.mrf.mxu0
        %v3431 = vadd.f32 %v3216, %v3430
        %3432 = vmatprep.mubr.f32.mxu0 %v554
        %3433 = vmatmul.mubr.f32.gmra.mxu0 %v553
        %v3434 = vpop.f32.mrf.mxu0
        %v3435 = vadd.f32 %v3220, %v3434
        %v3436 = vpop.f32.mrf.mxu0
        %v3437 = vadd.f32 %v3222, %v3436
        %3438 = vmatprep.mubr.f32.mxu0 %v570
        %3439 = vmatmul.mubr.f32.gmra.mxu0 %v569
        %v3440 = vpop.f32.mrf.mxu0
        %v3441 = vadd.f32 %v3226, %v3440
        %v3442 = vpop.f32.mrf.mxu0
        %v3443 = vadd.f32 %v3228, %v3442
        %3444 = vmatprep.mubr.f32.mxu0 %v586
        %3445 = vmatmul.mubr.f32.gmra.mxu0 %v585
        %v3446 = vpop.f32.mrf.mxu0
        %v3447 = vadd.f32 %v3232, %v3446
        %v3448 = vpop.f32.mrf.mxu0
        %v3449 = vadd.f32 %v3234, %v3448
        %3450 = vmatprep.mubr.f32.mxu0 %v602
        %3451 = vmatmul.mubr.f32.gmra.mxu0 %v601
        %v3452 = vpop.f32.mrf.mxu0
        %v3453 = vadd.f32 %v3238, %v3452
        %v3454 = vpop.f32.mrf.mxu0
        %v3455 = vadd.f32 %v3240, %v3454
        %3456 = vmatprep.mubr.f32.mxu0 %v618
        %3457 = vmatmul.mubr.f32.gmra.mxu0 %v617
        %v3458 = vpop.f32.mrf.mxu0
        %v3459 = vadd.f32 %v3244, %v3458
        %v3460 = vpop.f32.mrf.mxu0
        %v3461 = vadd.f32 %v3246, %v3460
        %3462 = vmatprep.mubr.f32.mxu0 %v634
        %3463 = vmatmul.mubr.f32.gmra.mxu0 %v633
        %v3464 = vpop.f32.mrf.mxu0
        %v3465 = vadd.f32 %v3250, %v3464
        %v3466 = vpop.f32.mrf.mxu0
        %v3467 = vadd.f32 %v3252, %v3466
        %3468 = vmatprep.mubr.f32.mxu0 %v650
        %3469 = vmatmul.mubr.f32.gmra.mxu0 %v649
        %v3470 = vpop.f32.mrf.mxu0
        %v3471 = vadd.f32 %v3256, %v3470
        %v3472 = vpop.f32.mrf.mxu0
        %v3473 = vadd.f32 %v3258, %v3472
        %3474 = vmatprep.mubr.f32.mxu0 %v666
        %3475 = vmatmul.mubr.f32.gmra.mxu0 %v665
        %v3476 = vpop.f32.mrf.mxu0
        %v3477 = vadd.f32 %v3262, %v3476
        %v3478 = vpop.f32.mrf.mxu0
        %v3479 = vadd.f32 %v3264, %v3478
        %3480 = vmatprep.mubr.f32.mxu0 %v682
        %3481 = vmatmul.mubr.f32.gmra.mxu0 %v681
        %v3482 = vpop.f32.mrf.mxu0
        %v3483 = vadd.f32 %v3268, %v3482
        %v3484 = vpop.f32.mrf.mxu0
        %v3485 = vadd.f32 %v3270, %v3484
        %3486 = vmatprep.mubr.f32.mxu0 %v698
        %3487 = vmatmul.mubr.f32.gmra.mxu0 %v697
        %v3488 = vpop.f32.mrf.mxu0
        %v3489 = vadd.f32 %v3274, %v3488
        %v3490 = vpop.f32.mrf.mxu0
        %v3491 = vadd.f32 %v3276, %v3490
        %3492 = vmatprep.mubr.f32.mxu0 %v714
        %3493 = vmatmul.mubr.f32.gmra.mxu0 %v713
        %v3494 = vpop.f32.mrf.mxu0
        %v3495 = vadd.f32 %v3280, %v3494
        %v3496 = vpop.f32.mrf.mxu0
        %v3497 = vadd.f32 %v3282, %v3496
        %3498 = vmatprep.mubr.f32.mxu0 %v730
        %3499 = vmatmul.mubr.f32.gmra.mxu0 %v729
        %v3500 = vpop.f32.mrf.mxu0
        %v3501 = vadd.f32 %v3286, %v3500
        %v3502 = vpop.f32.mrf.mxu0
        %v3503 = vadd.f32 %v3288, %v3502
        %3504 = vmatprep.mubr.f32.mxu0 %v746
        %3505 = vmatmul.mubr.f32.gmra.mxu0 %v745
        %v3506 = vpop.f32.mrf.mxu0
        %v3507 = vadd.f32 %v3292, %v3506
        %v3508 = vpop.f32.mrf.mxu0
        %v3509 = vadd.f32 %v3294, %v3508
        %3510 = vmatprep.mubr.f32.mxu0 %v762
        %3511 = vmatmul.mubr.f32.gmra.mxu0 %v761
        %v3512 = vpop.f32.mrf.mxu0
        %v3513 = vadd.f32 %v3298, %v3512
        %v3514 = vpop.f32.mrf.mxu0
        %v3515 = vadd.f32 %v3300, %v3514
        %3516 = vmatprep.mubr.f32.mxu0 %v778
        %3517 = vmatmul.mubr.f32.gmra.mxu0 %v777
        %v3518 = vpop.f32.mrf.mxu0
        %v3519 = vadd.f32 %v3304, %v3518
        %v3520 = vpop.f32.mrf.mxu0
        %v3521 = vadd.f32 %v3306, %v3520
        %3522 = vdwg.mxu0
        %3523 = vmatprep.subr.mxu0 %v842
        %3524 = vmatpush1.msra.mxu0 %v841
        %3525 = vmatprep.subr.mxu0 %v838
        %3526 = vmatpush1.msra.mxu0 %v837
        %3527 = vmatprep.subr.mxu0 %v834
        %3528 = vmatpush1.msra.mxu0 %v833
        %3529 = vmatprep.subr.mxu0 %v830
        %3530 = vmatpush1.msra.mxu0 %v829
        %3531 = vmatprep.subr.mxu0 %v826
        %3532 = vmatpush1.msra.mxu0 %v825
        %3533 = vmatprep.subr.mxu0 %v822
        %3534 = vmatpush1.msra.mxu0 %v821
        %3535 = vmatprep.subr.mxu0 %v818
        %3536 = vmatpush1.msra.mxu0 %v817
        %3537 = vmatprep.subr.mxu0 %v814
        %3538 = vmatpush1.msra.mxu0 %v813
        %3539 = vmatprep.subr.mxu0 %v810
        %3540 = vmatpush1.msra.mxu0 %v809
        %3541 = vmatprep.subr.mxu0 %v806
        %3542 = vmatpush1.msra.mxu0 %v805
        %3543 = vmatprep.subr.mxu0 %v802
        %3544 = vmatpush1.msra.mxu0 %v801
        %3545 = vmatprep.subr.mxu0 %v798
        %3546 = vmatpush1.msra.mxu0 %v797
        %3547 = vmatprep.subr.mxu0 %v794
        %3548 = vmatpush1.msra.mxu0 %v793
        %3549 = vmatprep.subr.mxu0 %v790
        %3550 = vmatpush1.msra.mxu0 %v789
        %3551 = vmatprep.subr.mxu0 %v786
        %3552 = vmatpush1.msra.mxu0 %v785
        %3553 = vmatprep.subr.mxu0 %v782
        %3554 = vmatpush1.msra.mxu0 %v781
        %3555 = vmatprep.subr.mxu0 %v906
        %3556 = vmatpush2.msra.mxu0 %v905
        %3557 = vmatprep.subr.mxu0 %v902
        %3558 = vmatpush2.msra.mxu0 %v901
        %3559 = vmatprep.subr.mxu0 %v898
        %3560 = vmatpush2.msra.mxu0 %v897
        %3561 = vmatprep.subr.mxu0 %v894
        %3562 = vmatpush2.msra.mxu0 %v893
        %3563 = vmatprep.subr.mxu0 %v890
        %3564 = vmatpush2.msra.mxu0 %v889
        %3565 = vmatprep.subr.mxu0 %v886
        %3566 = vmatpush2.msra.mxu0 %v885
        %3567 = vmatprep.subr.mxu0 %v882
        %3568 = vmatpush2.msra.mxu0 %v881
        %3569 = vmatprep.subr.mxu0 %v878
        %3570 = vmatpush2.msra.mxu0 %v877
        %3571 = vmatprep.subr.mxu0 %v874
        %3572 = vmatpush2.msra.mxu0 %v873
        %3573 = vmatprep.subr.mxu0 %v870
        %3574 = vmatpush2.msra.mxu0 %v869
        %3575 = vmatprep.subr.mxu0 %v866
        %3576 = vmatpush2.msra.mxu0 %v865
        %3577 = vmatprep.subr.mxu0 %v862
        %3578 = vmatpush2.msra.mxu0 %v861
        %3579 = vmatprep.subr.mxu0 %v858
        %3580 = vmatpush2.msra.mxu0 %v857
        %3581 = vmatprep.subr.mxu0 %v854
        %3582 = vmatpush2.msra.mxu0 %v853
        %3583 = vmatprep.subr.mxu0 %v850
        %3584 = vmatpush2.msra.mxu0 %v849
        %3585 = vmatprep.subr.mxu0 %v846
        %3586 = vmatpush2.msra.mxu0 %v845
        %3587 = vmatprep.mubr.f32.mxu0 %v380
        %3588 = vmatmul.mubr.f32.gmra.mxu0 %v379
        %v3589 = vpop.f32.mrf.mxu0
        %v3590 = vadd.f32 0.0, %v3589
        %v3591 = vpop.f32.mrf.mxu0
        %v3592 = vadd.f32 0.0, %v3591
        %3593 = vmatprep.mubr.f32.mxu0 %v396
        %3594 = vmatmul.mubr.f32.gmra.mxu0 %v395
        %v3595 = vpop.f32.mrf.mxu0
        %v3596 = vadd.f32 0.0, %v3595
        %v3597 = vpop.f32.mrf.mxu0
        %v3598 = vadd.f32 0.0, %v3597
        %3599 = vmatprep.mubr.f32.mxu0 %v412
        %3600 = vmatmul.mubr.f32.gmra.mxu0 %v411
        %v3601 = vpop.f32.mrf.mxu0
        %v3602 = vadd.f32 0.0, %v3601
        %v3603 = vpop.f32.mrf.mxu0
        %v3604 = vadd.f32 0.0, %v3603
        %3605 = vmatprep.mubr.f32.mxu0 %v428
        %3606 = vmatmul.mubr.f32.gmra.mxu0 %v427
        %v3607 = vpop.f32.mrf.mxu0
        %v3608 = vadd.f32 0.0, %v3607
        %v3609 = vpop.f32.mrf.mxu0
        %v3610 = vadd.f32 0.0, %v3609
        %3611 = vmatprep.mubr.f32.mxu0 %v444
        %3612 = vmatmul.mubr.f32.gmra.mxu0 %v443
        %v3613 = vpop.f32.mrf.mxu0
        %v3614 = vadd.f32 0.0, %v3613
        %v3615 = vpop.f32.mrf.mxu0
        %v3616 = vadd.f32 0.0, %v3615
        %3617 = vmatprep.mubr.f32.mxu0 %v460
        %3618 = vmatmul.mubr.f32.gmra.mxu0 %v459
        %v3619 = vpop.f32.mrf.mxu0
        %v3620 = vadd.f32 0.0, %v3619
        %v3621 = vpop.f32.mrf.mxu0
        %v3622 = vadd.f32 0.0, %v3621
        %3623 = vmatprep.mubr.f32.mxu0 %v476
        %3624 = vmatmul.mubr.f32.gmra.mxu0 %v475
        %v3625 = vpop.f32.mrf.mxu0
        %v3626 = vadd.f32 0.0, %v3625
        %v3627 = vpop.f32.mrf.mxu0
        %v3628 = vadd.f32 0.0, %v3627
        %3629 = vmatprep.mubr.f32.mxu0 %v492
        %3630 = vmatmul.mubr.f32.gmra.mxu0 %v491
        %v3631 = vpop.f32.mrf.mxu0
        %v3632 = vadd.f32 0.0, %v3631
        %v3633 = vpop.f32.mrf.mxu0
        %v3634 = vadd.f32 0.0, %v3633
        %3635 = vmatprep.mubr.f32.mxu0 %v508
        %3636 = vmatmul.mubr.f32.gmra.mxu0 %v507
        %v3637 = vpop.f32.mrf.mxu0
        %v3638 = vadd.f32 0.0, %v3637
        %v3639 = vpop.f32.mrf.mxu0
        %v3640 = vadd.f32 0.0, %v3639
        %3641 = vmatprep.mubr.f32.mxu0 %v524
        %3642 = vmatmul.mubr.f32.gmra.mxu0 %v523
        %v3643 = vpop.f32.mrf.mxu0
        %v3644 = vadd.f32 0.0, %v3643
        %v3645 = vpop.f32.mrf.mxu0
        %v3646 = vadd.f32 0.0, %v3645
        %3647 = vmatprep.mubr.f32.mxu0 %v540
        %3648 = vmatmul.mubr.f32.gmra.mxu0 %v539
        %v3649 = vpop.f32.mrf.mxu0
        %v3650 = vadd.f32 0.0, %v3649
        %v3651 = vpop.f32.mrf.mxu0
        %v3652 = vadd.f32 0.0, %v3651
        %3653 = vmatprep.mubr.f32.mxu0 %v556
        %3654 = vmatmul.mubr.f32.gmra.mxu0 %v555
        %v3655 = vpop.f32.mrf.mxu0
        %v3656 = vadd.f32 0.0, %v3655
        %v3657 = vpop.f32.mrf.mxu0
        %v3658 = vadd.f32 0.0, %v3657
        %3659 = vmatprep.mubr.f32.mxu0 %v572
        %3660 = vmatmul.mubr.f32.gmra.mxu0 %v571
        %v3661 = vpop.f32.mrf.mxu0
        %v3662 = vadd.f32 0.0, %v3661
        %v3663 = vpop.f32.mrf.mxu0
        %v3664 = vadd.f32 0.0, %v3663
        %3665 = vmatprep.mubr.f32.mxu0 %v588
        %3666 = vmatmul.mubr.f32.gmra.mxu0 %v587
        %v3667 = vpop.f32.mrf.mxu0
        %v3668 = vadd.f32 0.0, %v3667
        %v3669 = vpop.f32.mrf.mxu0
        %v3670 = vadd.f32 0.0, %v3669
        %3671 = vmatprep.mubr.f32.mxu0 %v604
        %3672 = vmatmul.mubr.f32.gmra.mxu0 %v603
        %v3673 = vpop.f32.mrf.mxu0
        %v3674 = vadd.f32 0.0, %v3673
        %v3675 = vpop.f32.mrf.mxu0
        %v3676 = vadd.f32 0.0, %v3675
        %3677 = vmatprep.mubr.f32.mxu0 %v620
        %3678 = vmatmul.mubr.f32.gmra.mxu0 %v619
        %v3679 = vpop.f32.mrf.mxu0
        %v3680 = vadd.f32 0.0, %v3679
        %v3681 = vpop.f32.mrf.mxu0
        %v3682 = vadd.f32 0.0, %v3681
        %3683 = vmatprep.mubr.f32.mxu0 %v636
        %3684 = vmatmul.mubr.f32.gmra.mxu0 %v635
        %v3685 = vpop.f32.mrf.mxu0
        %v3686 = vadd.f32 0.0, %v3685
        %v3687 = vpop.f32.mrf.mxu0
        %v3688 = vadd.f32 0.0, %v3687
        %3689 = vmatprep.mubr.f32.mxu0 %v652
        %3690 = vmatmul.mubr.f32.gmra.mxu0 %v651
        %v3691 = vpop.f32.mrf.mxu0
        %v3692 = vadd.f32 0.0, %v3691
        %v3693 = vpop.f32.mrf.mxu0
        %v3694 = vadd.f32 0.0, %v3693
        %3695 = vmatprep.mubr.f32.mxu0 %v668
        %3696 = vmatmul.mubr.f32.gmra.mxu0 %v667
        %v3697 = vpop.f32.mrf.mxu0
        %v3698 = vadd.f32 0.0, %v3697
        %v3699 = vpop.f32.mrf.mxu0
        %v3700 = vadd.f32 0.0, %v3699
        %3701 = vmatprep.mubr.f32.mxu0 %v684
        %3702 = vmatmul.mubr.f32.gmra.mxu0 %v683
        %v3703 = vpop.f32.mrf.mxu0
        %v3704 = vadd.f32 0.0, %v3703
        %v3705 = vpop.f32.mrf.mxu0
        %v3706 = vadd.f32 0.0, %v3705
        %3707 = vmatprep.mubr.f32.mxu0 %v700
        %3708 = vmatmul.mubr.f32.gmra.mxu0 %v699
        %v3709 = vpop.f32.mrf.mxu0
        %v3710 = vadd.f32 0.0, %v3709
        %v3711 = vpop.f32.mrf.mxu0
        %v3712 = vadd.f32 0.0, %v3711
        %3713 = vmatprep.mubr.f32.mxu0 %v716
        %3714 = vmatmul.mubr.f32.gmra.mxu0 %v715
        %v3715 = vpop.f32.mrf.mxu0
        %v3716 = vadd.f32 0.0, %v3715
        %v3717 = vpop.f32.mrf.mxu0
        %v3718 = vadd.f32 0.0, %v3717
        %3719 = vmatprep.mubr.f32.mxu0 %v732
        %3720 = vmatmul.mubr.f32.gmra.mxu0 %v731
        %v3721 = vpop.f32.mrf.mxu0
        %v3722 = vadd.f32 0.0, %v3721
        %v3723 = vpop.f32.mrf.mxu0
        %v3724 = vadd.f32 0.0, %v3723
        %3725 = vmatprep.mubr.f32.mxu0 %v748
        %3726 = vmatmul.mubr.f32.gmra.mxu0 %v747
        %v3727 = vpop.f32.mrf.mxu0
        %v3728 = vadd.f32 0.0, %v3727
        %v3729 = vpop.f32.mrf.mxu0
        %v3730 = vadd.f32 0.0, %v3729
        %3731 = vmatprep.mubr.f32.mxu0 %v764
        %3732 = vmatmul.mubr.f32.gmra.mxu0 %v763
        %v3733 = vpop.f32.mrf.mxu0
        %v3734 = vadd.f32 0.0, %v3733
        %v3735 = vpop.f32.mrf.mxu0
        %v3736 = vadd.f32 0.0, %v3735
        %3737 = vdwg.mxu0
        %3738 = vmatprep.subr.mxu0 %v970
        %3739 = vmatpush1.msra.mxu0 %v969
        %3740 = vmatprep.subr.mxu0 %v966
        %3741 = vmatpush1.msra.mxu0 %v965
        %3742 = vmatprep.subr.mxu0 %v962
        %3743 = vmatpush1.msra.mxu0 %v961
        %3744 = vmatprep.subr.mxu0 %v958
        %3745 = vmatpush1.msra.mxu0 %v957
        %3746 = vmatprep.subr.mxu0 %v954
        %3747 = vmatpush1.msra.mxu0 %v953
        %3748 = vmatprep.subr.mxu0 %v950
        %3749 = vmatpush1.msra.mxu0 %v949
        %3750 = vmatprep.subr.mxu0 %v946
        %3751 = vmatpush1.msra.mxu0 %v945
        %3752 = vmatprep.subr.mxu0 %v942
        %3753 = vmatpush1.msra.mxu0 %v941
        %3754 = vmatprep.subr.mxu0 %v938
        %3755 = vmatpush1.msra.mxu0 %v937
        %3756 = vmatprep.subr.mxu0 %v934
        %3757 = vmatpush1.msra.mxu0 %v933
        %3758 = vmatprep.subr.mxu0 %v930
        %3759 = vmatpush1.msra.mxu0 %v929
        %3760 = vmatprep.subr.mxu0 %v926
        %3761 = vmatpush1.msra.mxu0 %v925
        %3762 = vmatprep.subr.mxu0 %v922
        %3763 = vmatpush1.msra.mxu0 %v921
        %3764 = vmatprep.subr.mxu0 %v918
        %3765 = vmatpush1.msra.mxu0 %v917
        %3766 = vmatprep.subr.mxu0 %v914
        %3767 = vmatpush1.msra.mxu0 %v913
        %3768 = vmatprep.subr.mxu0 %v910
        %3769 = vmatpush1.msra.mxu0 %v909
        %3770 = vmatprep.subr.mxu0 %v1034
        %3771 = vmatpush2.msra.mxu0 %v1033
        %3772 = vmatprep.subr.mxu0 %v1030
        %3773 = vmatpush2.msra.mxu0 %v1029
        %3774 = vmatprep.subr.mxu0 %v1026
        %3775 = vmatpush2.msra.mxu0 %v1025
        %3776 = vmatprep.subr.mxu0 %v1022
        %3777 = vmatpush2.msra.mxu0 %v1021
        %3778 = vmatprep.subr.mxu0 %v1018
        %3779 = vmatpush2.msra.mxu0 %v1017
        %3780 = vmatprep.subr.mxu0 %v1014
        %3781 = vmatpush2.msra.mxu0 %v1013
        %3782 = vmatprep.subr.mxu0 %v1010
        %3783 = vmatpush2.msra.mxu0 %v1009
        %3784 = vmatprep.subr.mxu0 %v1006
        %3785 = vmatpush2.msra.mxu0 %v1005
        %3786 = vmatprep.subr.mxu0 %v1002
        %3787 = vmatpush2.msra.mxu0 %v1001
        %3788 = vmatprep.subr.mxu0 %v998
        %3789 = vmatpush2.msra.mxu0 %v997
        %3790 = vmatprep.subr.mxu0 %v994
        %3791 = vmatpush2.msra.mxu0 %v993
        %3792 = vmatprep.subr.mxu0 %v990
        %3793 = vmatpush2.msra.mxu0 %v989
        %3794 = vmatprep.subr.mxu0 %v986
        %3795 = vmatpush2.msra.mxu0 %v985
        %3796 = vmatprep.subr.mxu0 %v982
        %3797 = vmatpush2.msra.mxu0 %v981
        %3798 = vmatprep.subr.mxu0 %v978
        %3799 = vmatpush2.msra.mxu0 %v977
        %3800 = vmatprep.subr.mxu0 %v974
        %3801 = vmatpush2.msra.mxu0 %v973
        %3802 = vmatprep.mubr.f32.mxu0 %v382
        %3803 = vmatmul.mubr.f32.gmra.mxu0 %v381
        %v3804 = vpop.f32.mrf.mxu0
        %v3805 = vadd.f32 %v3590, %v3804
        %v3806 = vpop.f32.mrf.mxu0
        %v3807 = vadd.f32 %v3592, %v3806
        %3808 = vmatprep.mubr.f32.mxu0 %v398
        %3809 = vmatmul.mubr.f32.gmra.mxu0 %v397
        %v3810 = vpop.f32.mrf.mxu0
        %v3811 = vadd.f32 %v3596, %v3810
        %v3812 = vpop.f32.mrf.mxu0
        %v3813 = vadd.f32 %v3598, %v3812
        %3814 = vmatprep.mubr.f32.mxu0 %v414
        %3815 = vmatmul.mubr.f32.gmra.mxu0 %v413
        %v3816 = vpop.f32.mrf.mxu0
        %v3817 = vadd.f32 %v3602, %v3816
        %v3818 = vpop.f32.mrf.mxu0
        %v3819 = vadd.f32 %v3604, %v3818
        %3820 = vmatprep.mubr.f32.mxu0 %v430
        %3821 = vmatmul.mubr.f32.gmra.mxu0 %v429
        %v3822 = vpop.f32.mrf.mxu0
        %v3823 = vadd.f32 %v3608, %v3822
        %v3824 = vpop.f32.mrf.mxu0
        %v3825 = vadd.f32 %v3610, %v3824
        %3826 = vmatprep.mubr.f32.mxu0 %v446
        %3827 = vmatmul.mubr.f32.gmra.mxu0 %v445
        %v3828 = vpop.f32.mrf.mxu0
        %v3829 = vadd.f32 %v3614, %v3828
        %v3830 = vpop.f32.mrf.mxu0
        %v3831 = vadd.f32 %v3616, %v3830
        %3832 = vmatprep.mubr.f32.mxu0 %v462
        %3833 = vmatmul.mubr.f32.gmra.mxu0 %v461
        %v3834 = vpop.f32.mrf.mxu0
        %v3835 = vadd.f32 %v3620, %v3834
        %v3836 = vpop.f32.mrf.mxu0
        %v3837 = vadd.f32 %v3622, %v3836
        %3838 = vmatprep.mubr.f32.mxu0 %v478
        %3839 = vmatmul.mubr.f32.gmra.mxu0 %v477
        %v3840 = vpop.f32.mrf.mxu0
        %v3841 = vadd.f32 %v3626, %v3840
        %v3842 = vpop.f32.mrf.mxu0
        %v3843 = vadd.f32 %v3628, %v3842
        %3844 = vmatprep.mubr.f32.mxu0 %v494
        %3845 = vmatmul.mubr.f32.gmra.mxu0 %v493
        %v3846 = vpop.f32.mrf.mxu0
        %v3847 = vadd.f32 %v3632, %v3846
        %v3848 = vpop.f32.mrf.mxu0
        %v3849 = vadd.f32 %v3634, %v3848
        %3850 = vmatprep.mubr.f32.mxu0 %v510
        %3851 = vmatmul.mubr.f32.gmra.mxu0 %v509
        %v3852 = vpop.f32.mrf.mxu0
        %v3853 = vadd.f32 %v3638, %v3852
        %v3854 = vpop.f32.mrf.mxu0
        %v3855 = vadd.f32 %v3640, %v3854
        %3856 = vmatprep.mubr.f32.mxu0 %v526
        %3857 = vmatmul.mubr.f32.gmra.mxu0 %v525
        %v3858 = vpop.f32.mrf.mxu0
        %v3859 = vadd.f32 %v3644, %v3858
        %v3860 = vpop.f32.mrf.mxu0
        %v3861 = vadd.f32 %v3646, %v3860
        %3862 = vmatprep.mubr.f32.mxu0 %v542
        %3863 = vmatmul.mubr.f32.gmra.mxu0 %v541
        %v3864 = vpop.f32.mrf.mxu0
        %v3865 = vadd.f32 %v3650, %v3864
        %v3866 = vpop.f32.mrf.mxu0
        %v3867 = vadd.f32 %v3652, %v3866
        %3868 = vmatprep.mubr.f32.mxu0 %v558
        %3869 = vmatmul.mubr.f32.gmra.mxu0 %v557
        %v3870 = vpop.f32.mrf.mxu0
        %v3871 = vadd.f32 %v3656, %v3870
        %v3872 = vpop.f32.mrf.mxu0
        %v3873 = vadd.f32 %v3658, %v3872
        %3874 = vmatprep.mubr.f32.mxu0 %v574
        %3875 = vmatmul.mubr.f32.gmra.mxu0 %v573
        %v3876 = vpop.f32.mrf.mxu0
        %v3877 = vadd.f32 %v3662, %v3876
        %v3878 = vpop.f32.mrf.mxu0
        %v3879 = vadd.f32 %v3664, %v3878
        %3880 = vmatprep.mubr.f32.mxu0 %v590
        %3881 = vmatmul.mubr.f32.gmra.mxu0 %v589
        %v3882 = vpop.f32.mrf.mxu0
        %v3883 = vadd.f32 %v3668, %v3882
        %v3884 = vpop.f32.mrf.mxu0
        %v3885 = vadd.f32 %v3670, %v3884
        %3886 = vmatprep.mubr.f32.mxu0 %v606
        %3887 = vmatmul.mubr.f32.gmra.mxu0 %v605
        %v3888 = vpop.f32.mrf.mxu0
        %v3889 = vadd.f32 %v3674, %v3888
        %v3890 = vpop.f32.mrf.mxu0
        %v3891 = vadd.f32 %v3676, %v3890
        %3892 = vmatprep.mubr.f32.mxu0 %v622
        %3893 = vmatmul.mubr.f32.gmra.mxu0 %v621
        %v3894 = vpop.f32.mrf.mxu0
        %v3895 = vadd.f32 %v3680, %v3894
        %v3896 = vpop.f32.mrf.mxu0
        %v3897 = vadd.f32 %v3682, %v3896
        %3898 = vmatprep.mubr.f32.mxu0 %v638
        %3899 = vmatmul.mubr.f32.gmra.mxu0 %v637
        %v3900 = vpop.f32.mrf.mxu0
        %v3901 = vadd.f32 %v3686, %v3900
        %v3902 = vpop.f32.mrf.mxu0
        %v3903 = vadd.f32 %v3688, %v3902
        %3904 = vmatprep.mubr.f32.mxu0 %v654
        %3905 = vmatmul.mubr.f32.gmra.mxu0 %v653
        %v3906 = vpop.f32.mrf.mxu0
        %v3907 = vadd.f32 %v3692, %v3906
        %v3908 = vpop.f32.mrf.mxu0
        %v3909 = vadd.f32 %v3694, %v3908
        %3910 = vmatprep.mubr.f32.mxu0 %v670
        %3911 = vmatmul.mubr.f32.gmra.mxu0 %v669
        %v3912 = vpop.f32.mrf.mxu0
        %v3913 = vadd.f32 %v3698, %v3912
        %v3914 = vpop.f32.mrf.mxu0
        %v3915 = vadd.f32 %v3700, %v3914
        %3916 = vmatprep.mubr.f32.mxu0 %v686
        %3917 = vmatmul.mubr.f32.gmra.mxu0 %v685
        %v3918 = vpop.f32.mrf.mxu0
        %v3919 = vadd.f32 %v3704, %v3918
        %v3920 = vpop.f32.mrf.mxu0
        %v3921 = vadd.f32 %v3706, %v3920
        %3922 = vmatprep.mubr.f32.mxu0 %v702
        %3923 = vmatmul.mubr.f32.gmra.mxu0 %v701
        %v3924 = vpop.f32.mrf.mxu0
        %v3925 = vadd.f32 %v3710, %v3924
        %v3926 = vpop.f32.mrf.mxu0
        %v3927 = vadd.f32 %v3712, %v3926
        %3928 = vmatprep.mubr.f32.mxu0 %v718
        %3929 = vmatmul.mubr.f32.gmra.mxu0 %v717
        %v3930 = vpop.f32.mrf.mxu0
        %v3931 = vadd.f32 %v3716, %v3930
        %v3932 = vpop.f32.mrf.mxu0
        %v3933 = vadd.f32 %v3718, %v3932
        %3934 = vmatprep.mubr.f32.mxu0 %v734
        %3935 = vmatmul.mubr.f32.gmra.mxu0 %v733
        %v3936 = vpop.f32.mrf.mxu0
        %v3937 = vadd.f32 %v3722, %v3936
        %v3938 = vpop.f32.mrf.mxu0
        %v3939 = vadd.f32 %v3724, %v3938
        %3940 = vmatprep.mubr.f32.mxu0 %v750
        %3941 = vmatmul.mubr.f32.gmra.mxu0 %v749
        %v3942 = vpop.f32.mrf.mxu0
        %v3943 = vadd.f32 %v3728, %v3942
        %v3944 = vpop.f32.mrf.mxu0
        %v3945 = vadd.f32 %v3730, %v3944
        %3946 = vmatprep.mubr.f32.mxu0 %v766
        %3947 = vmatmul.mubr.f32.gmra.mxu0 %v765
        %v3948 = vpop.f32.mrf.mxu0
        %v3949 = vadd.f32 %v3734, %v3948
        %v3950 = vpop.f32.mrf.mxu0
        %v3951 = vadd.f32 %v3736, %v3950
        %3952 = vdwg.mxu0
        %3953 = vmatprep.subr.mxu0 %v1098
        %3954 = vmatpush1.msra.mxu0 %v1097
        %3955 = vmatprep.subr.mxu0 %v1094
        %3956 = vmatpush1.msra.mxu0 %v1093
        %3957 = vmatprep.subr.mxu0 %v1090
        %3958 = vmatpush1.msra.mxu0 %v1089
        %3959 = vmatprep.subr.mxu0 %v1086
        %3960 = vmatpush1.msra.mxu0 %v1085
        %3961 = vmatprep.subr.mxu0 %v1082
        %3962 = vmatpush1.msra.mxu0 %v1081
        %3963 = vmatprep.subr.mxu0 %v1078
        %3964 = vmatpush1.msra.mxu0 %v1077
        %3965 = vmatprep.subr.mxu0 %v1074
        %3966 = vmatpush1.msra.mxu0 %v1073
        %3967 = vmatprep.subr.mxu0 %v1070
        %3968 = vmatpush1.msra.mxu0 %v1069
        %3969 = vmatprep.subr.mxu0 %v1066
        %3970 = vmatpush1.msra.mxu0 %v1065
        %3971 = vmatprep.subr.mxu0 %v1062
        %3972 = vmatpush1.msra.mxu0 %v1061
        %3973 = vmatprep.subr.mxu0 %v1058
        %3974 = vmatpush1.msra.mxu0 %v1057
        %3975 = vmatprep.subr.mxu0 %v1054
        %3976 = vmatpush1.msra.mxu0 %v1053
        %3977 = vmatprep.subr.mxu0 %v1050
        %3978 = vmatpush1.msra.mxu0 %v1049
        %3979 = vmatprep.subr.mxu0 %v1046
        %3980 = vmatpush1.msra.mxu0 %v1045
        %3981 = vmatprep.subr.mxu0 %v1042
        %3982 = vmatpush1.msra.mxu0 %v1041
        %3983 = vmatprep.subr.mxu0 %v1038
        %3984 = vmatpush1.msra.mxu0 %v1037
        %3985 = vmatprep.subr.mxu0 %v1162
        %3986 = vmatpush2.msra.mxu0 %v1161
        %3987 = vmatprep.subr.mxu0 %v1158
        %3988 = vmatpush2.msra.mxu0 %v1157
        %3989 = vmatprep.subr.mxu0 %v1154
        %3990 = vmatpush2.msra.mxu0 %v1153
        %3991 = vmatprep.subr.mxu0 %v1150
        %3992 = vmatpush2.msra.mxu0 %v1149
        %3993 = vmatprep.subr.mxu0 %v1146
        %3994 = vmatpush2.msra.mxu0 %v1145
        %3995 = vmatprep.subr.mxu0 %v1142
        %3996 = vmatpush2.msra.mxu0 %v1141
        %3997 = vmatprep.subr.mxu0 %v1138
        %3998 = vmatpush2.msra.mxu0 %v1137
        %3999 = vmatprep.subr.mxu0 %v1134
        %4000 = vmatpush2.msra.mxu0 %v1133
        %4001 = vmatprep.subr.mxu0 %v1130
        %4002 = vmatpush2.msra.mxu0 %v1129
        %4003 = vmatprep.subr.mxu0 %v1126
        %4004 = vmatpush2.msra.mxu0 %v1125
        %4005 = vmatprep.subr.mxu0 %v1122
        %4006 = vmatpush2.msra.mxu0 %v1121
        %4007 = vmatprep.subr.mxu0 %v1118
        %4008 = vmatpush2.msra.mxu0 %v1117
        %4009 = vmatprep.subr.mxu0 %v1114
        %4010 = vmatpush2.msra.mxu0 %v1113
        %4011 = vmatprep.subr.mxu0 %v1110
        %4012 = vmatpush2.msra.mxu0 %v1109
        %4013 = vmatprep.subr.mxu0 %v1106
        %4014 = vmatpush2.msra.mxu0 %v1105
        %4015 = vmatprep.subr.mxu0 %v1102
        %4016 = vmatpush2.msra.mxu0 %v1101
        %4017 = vmatprep.mubr.f32.mxu0 %v384
        %4018 = vmatmul.mubr.f32.gmra.mxu0 %v383
        %v4019 = vpop.f32.mrf.mxu0
        %v4020 = vadd.f32 %v3805, %v4019
        %v4021 = vpop.f32.mrf.mxu0
        %v4022 = vadd.f32 %v3807, %v4021
        %4023 = vmatprep.mubr.f32.mxu0 %v400
        %4024 = vmatmul.mubr.f32.gmra.mxu0 %v399
        %v4025 = vpop.f32.mrf.mxu0
        %v4026 = vadd.f32 %v3811, %v4025
        %v4027 = vpop.f32.mrf.mxu0
        %v4028 = vadd.f32 %v3813, %v4027
        %4029 = vmatprep.mubr.f32.mxu0 %v416
        %4030 = vmatmul.mubr.f32.gmra.mxu0 %v415
        %v4031 = vpop.f32.mrf.mxu0
        %v4032 = vadd.f32 %v3817, %v4031
        %v4033 = vpop.f32.mrf.mxu0
        %v4034 = vadd.f32 %v3819, %v4033
        %4035 = vmatprep.mubr.f32.mxu0 %v432
        %4036 = vmatmul.mubr.f32.gmra.mxu0 %v431
        %v4037 = vpop.f32.mrf.mxu0
        %v4038 = vadd.f32 %v3823, %v4037
        %v4039 = vpop.f32.mrf.mxu0
        %v4040 = vadd.f32 %v3825, %v4039
        %4041 = vmatprep.mubr.f32.mxu0 %v448
        %4042 = vmatmul.mubr.f32.gmra.mxu0 %v447
        %v4043 = vpop.f32.mrf.mxu0
        %v4044 = vadd.f32 %v3829, %v4043
        %v4045 = vpop.f32.mrf.mxu0
        %v4046 = vadd.f32 %v3831, %v4045
        %4047 = vmatprep.mubr.f32.mxu0 %v464
        %4048 = vmatmul.mubr.f32.gmra.mxu0 %v463
        %v4049 = vpop.f32.mrf.mxu0
        %v4050 = vadd.f32 %v3835, %v4049
        %v4051 = vpop.f32.mrf.mxu0
        %v4052 = vadd.f32 %v3837, %v4051
        %4053 = vmatprep.mubr.f32.mxu0 %v480
        %4054 = vmatmul.mubr.f32.gmra.mxu0 %v479
        %v4055 = vpop.f32.mrf.mxu0
        %v4056 = vadd.f32 %v3841, %v4055
        %v4057 = vpop.f32.mrf.mxu0
        %v4058 = vadd.f32 %v3843, %v4057
        %4059 = vmatprep.mubr.f32.mxu0 %v496
        %4060 = vmatmul.mubr.f32.gmra.mxu0 %v495
        %v4061 = vpop.f32.mrf.mxu0
        %v4062 = vadd.f32 %v3847, %v4061
        %v4063 = vpop.f32.mrf.mxu0
        %v4064 = vadd.f32 %v3849, %v4063
        %4065 = vmatprep.mubr.f32.mxu0 %v512
        %4066 = vmatmul.mubr.f32.gmra.mxu0 %v511
        %v4067 = vpop.f32.mrf.mxu0
        %v4068 = vadd.f32 %v3853, %v4067
        %v4069 = vpop.f32.mrf.mxu0
        %v4070 = vadd.f32 %v3855, %v4069
        %4071 = vmatprep.mubr.f32.mxu0 %v528
        %4072 = vmatmul.mubr.f32.gmra.mxu0 %v527
        %v4073 = vpop.f32.mrf.mxu0
        %v4074 = vadd.f32 %v3859, %v4073
        %v4075 = vpop.f32.mrf.mxu0
        %v4076 = vadd.f32 %v3861, %v4075
        %4077 = vmatprep.mubr.f32.mxu0 %v544
        %4078 = vmatmul.mubr.f32.gmra.mxu0 %v543
        %v4079 = vpop.f32.mrf.mxu0
        %v4080 = vadd.f32 %v3865, %v4079
        %v4081 = vpop.f32.mrf.mxu0
        %v4082 = vadd.f32 %v3867, %v4081
        %4083 = vmatprep.mubr.f32.mxu0 %v560
        %4084 = vmatmul.mubr.f32.gmra.mxu0 %v559
        %v4085 = vpop.f32.mrf.mxu0
        %v4086 = vadd.f32 %v3871, %v4085
        %v4087 = vpop.f32.mrf.mxu0
        %v4088 = vadd.f32 %v3873, %v4087
        %4089 = vmatprep.mubr.f32.mxu0 %v576
        %4090 = vmatmul.mubr.f32.gmra.mxu0 %v575
        %v4091 = vpop.f32.mrf.mxu0
        %v4092 = vadd.f32 %v3877, %v4091
        %v4093 = vpop.f32.mrf.mxu0
        %v4094 = vadd.f32 %v3879, %v4093
        %4095 = vmatprep.mubr.f32.mxu0 %v592
        %4096 = vmatmul.mubr.f32.gmra.mxu0 %v591
        %v4097 = vpop.f32.mrf.mxu0
        %v4098 = vadd.f32 %v3883, %v4097
        %v4099 = vpop.f32.mrf.mxu0
        %v4100 = vadd.f32 %v3885, %v4099
        %4101 = vmatprep.mubr.f32.mxu0 %v608
        %4102 = vmatmul.mubr.f32.gmra.mxu0 %v607
        %v4103 = vpop.f32.mrf.mxu0
        %v4104 = vadd.f32 %v3889, %v4103
        %v4105 = vpop.f32.mrf.mxu0
        %v4106 = vadd.f32 %v3891, %v4105
        %4107 = vmatprep.mubr.f32.mxu0 %v624
        %4108 = vmatmul.mubr.f32.gmra.mxu0 %v623
        %v4109 = vpop.f32.mrf.mxu0
        %v4110 = vadd.f32 %v3895, %v4109
        %v4111 = vpop.f32.mrf.mxu0
        %v4112 = vadd.f32 %v3897, %v4111
        %4113 = vmatprep.mubr.f32.mxu0 %v640
        %4114 = vmatmul.mubr.f32.gmra.mxu0 %v639
        %v4115 = vpop.f32.mrf.mxu0
        %v4116 = vadd.f32 %v3901, %v4115
        %v4117 = vpop.f32.mrf.mxu0
        %v4118 = vadd.f32 %v3903, %v4117
        %4119 = vmatprep.mubr.f32.mxu0 %v656
        %4120 = vmatmul.mubr.f32.gmra.mxu0 %v655
        %v4121 = vpop.f32.mrf.mxu0
        %v4122 = vadd.f32 %v3907, %v4121
        %v4123 = vpop.f32.mrf.mxu0
        %v4124 = vadd.f32 %v3909, %v4123
        %4125 = vmatprep.mubr.f32.mxu0 %v672
        %4126 = vmatmul.mubr.f32.gmra.mxu0 %v671
        %v4127 = vpop.f32.mrf.mxu0
        %v4128 = vadd.f32 %v3913, %v4127
        %v4129 = vpop.f32.mrf.mxu0
        %v4130 = vadd.f32 %v3915, %v4129
        %4131 = vmatprep.mubr.f32.mxu0 %v688
        %4132 = vmatmul.mubr.f32.gmra.mxu0 %v687
        %v4133 = vpop.f32.mrf.mxu0
        %v4134 = vadd.f32 %v3919, %v4133
        %v4135 = vpop.f32.mrf.mxu0
        %v4136 = vadd.f32 %v3921, %v4135
        %4137 = vmatprep.mubr.f32.mxu0 %v704
        %4138 = vmatmul.mubr.f32.gmra.mxu0 %v703
        %v4139 = vpop.f32.mrf.mxu0
        %v4140 = vadd.f32 %v3925, %v4139
        %v4141 = vpop.f32.mrf.mxu0
        %v4142 = vadd.f32 %v3927, %v4141
        %4143 = vmatprep.mubr.f32.mxu0 %v720
        %4144 = vmatmul.mubr.f32.gmra.mxu0 %v719
        %v4145 = vpop.f32.mrf.mxu0
        %v4146 = vadd.f32 %v3931, %v4145
        %v4147 = vpop.f32.mrf.mxu0
        %v4148 = vadd.f32 %v3933, %v4147
        %4149 = vmatprep.mubr.f32.mxu0 %v736
        %4150 = vmatmul.mubr.f32.gmra.mxu0 %v735
        %v4151 = vpop.f32.mrf.mxu0
        %v4152 = vadd.f32 %v3937, %v4151
        %v4153 = vpop.f32.mrf.mxu0
        %v4154 = vadd.f32 %v3939, %v4153
        %4155 = vmatprep.mubr.f32.mxu0 %v752
        %4156 = vmatmul.mubr.f32.gmra.mxu0 %v751
        %v4157 = vpop.f32.mrf.mxu0
        %v4158 = vadd.f32 %v3943, %v4157
        %v4159 = vpop.f32.mrf.mxu0
        %v4160 = vadd.f32 %v3945, %v4159
        %4161 = vmatprep.mubr.f32.mxu0 %v768
        %4162 = vmatmul.mubr.f32.gmra.mxu0 %v767
        %v4163 = vpop.f32.mrf.mxu0
        %v4164 = vadd.f32 %v3949, %v4163
        %v4165 = vpop.f32.mrf.mxu0
        %v4166 = vadd.f32 %v3951, %v4165
        %4167 = vdwg.mxu0
        %4168 = vmatprep.subr.mxu0 %v1226
        %4169 = vmatpush1.msra.mxu0 %v1225
        %4170 = vmatprep.subr.mxu0 %v1222
        %4171 = vmatpush1.msra.mxu0 %v1221
        %4172 = vmatprep.subr.mxu0 %v1218
        %4173 = vmatpush1.msra.mxu0 %v1217
        %4174 = vmatprep.subr.mxu0 %v1214
        %4175 = vmatpush1.msra.mxu0 %v1213
        %4176 = vmatprep.subr.mxu0 %v1210
        %4177 = vmatpush1.msra.mxu0 %v1209
        %4178 = vmatprep.subr.mxu0 %v1206
        %4179 = vmatpush1.msra.mxu0 %v1205
        %4180 = vmatprep.subr.mxu0 %v1202
        %4181 = vmatpush1.msra.mxu0 %v1201
        %4182 = vmatprep.subr.mxu0 %v1198
        %4183 = vmatpush1.msra.mxu0 %v1197
        %4184 = vmatprep.subr.mxu0 %v1194
        %4185 = vmatpush1.msra.mxu0 %v1193
        %4186 = vmatprep.subr.mxu0 %v1190
        %4187 = vmatpush1.msra.mxu0 %v1189
        %4188 = vmatprep.subr.mxu0 %v1186
        %4189 = vmatpush1.msra.mxu0 %v1185
        %4190 = vmatprep.subr.mxu0 %v1182
        %4191 = vmatpush1.msra.mxu0 %v1181
        %4192 = vmatprep.subr.mxu0 %v1178
        %4193 = vmatpush1.msra.mxu0 %v1177
        %4194 = vmatprep.subr.mxu0 %v1174
        %4195 = vmatpush1.msra.mxu0 %v1173
        %4196 = vmatprep.subr.mxu0 %v1170
        %4197 = vmatpush1.msra.mxu0 %v1169
        %4198 = vmatprep.subr.mxu0 %v1166
        %4199 = vmatpush1.msra.mxu0 %v1165
        %4200 = vmatprep.subr.mxu0 %v1290
        %4201 = vmatpush2.msra.mxu0 %v1289
        %4202 = vmatprep.subr.mxu0 %v1286
        %4203 = vmatpush2.msra.mxu0 %v1285
        %4204 = vmatprep.subr.mxu0 %v1282
        %4205 = vmatpush2.msra.mxu0 %v1281
        %4206 = vmatprep.subr.mxu0 %v1278
        %4207 = vmatpush2.msra.mxu0 %v1277
        %4208 = vmatprep.subr.mxu0 %v1274
        %4209 = vmatpush2.msra.mxu0 %v1273
        %4210 = vmatprep.subr.mxu0 %v1270
        %4211 = vmatpush2.msra.mxu0 %v1269
        %4212 = vmatprep.subr.mxu0 %v1266
        %4213 = vmatpush2.msra.mxu0 %v1265
        %4214 = vmatprep.subr.mxu0 %v1262
        %4215 = vmatpush2.msra.mxu0 %v1261
        %4216 = vmatprep.subr.mxu0 %v1258
        %4217 = vmatpush2.msra.mxu0 %v1257
        %4218 = vmatprep.subr.mxu0 %v1254
        %4219 = vmatpush2.msra.mxu0 %v1253
        %4220 = vmatprep.subr.mxu0 %v1250
        %4221 = vmatpush2.msra.mxu0 %v1249
        %4222 = vmatprep.subr.mxu0 %v1246
        %4223 = vmatpush2.msra.mxu0 %v1245
        %4224 = vmatprep.subr.mxu0 %v1242
        %4225 = vmatpush2.msra.mxu0 %v1241
        %4226 = vmatprep.subr.mxu0 %v1238
        %4227 = vmatpush2.msra.mxu0 %v1237
        %4228 = vmatprep.subr.mxu0 %v1234
        %4229 = vmatpush2.msra.mxu0 %v1233
        %4230 = vmatprep.subr.mxu0 %v1230
        %4231 = vmatpush2.msra.mxu0 %v1229
        %4232 = vmatprep.mubr.f32.mxu0 %v386
        %4233 = vmatmul.mubr.f32.gmra.mxu0 %v385
        %v4234 = vpop.f32.mrf.mxu0
        %v4235 = vadd.f32 %v4020, %v4234
        %v4236 = vpop.f32.mrf.mxu0
        %v4237 = vadd.f32 %v4022, %v4236
        %4238 = vmatprep.mubr.f32.mxu0 %v402
        %4239 = vmatmul.mubr.f32.gmra.mxu0 %v401
        %v4240 = vpop.f32.mrf.mxu0
        %v4241 = vadd.f32 %v4026, %v4240
        %v4242 = vpop.f32.mrf.mxu0
        %v4243 = vadd.f32 %v4028, %v4242
        %4244 = vmatprep.mubr.f32.mxu0 %v418
        %4245 = vmatmul.mubr.f32.gmra.mxu0 %v417
        %v4246 = vpop.f32.mrf.mxu0
        %v4247 = vadd.f32 %v4032, %v4246
        %v4248 = vpop.f32.mrf.mxu0
        %v4249 = vadd.f32 %v4034, %v4248
        %4250 = vmatprep.mubr.f32.mxu0 %v434
        %4251 = vmatmul.mubr.f32.gmra.mxu0 %v433
        %v4252 = vpop.f32.mrf.mxu0
        %v4253 = vadd.f32 %v4038, %v4252
        %v4254 = vpop.f32.mrf.mxu0
        %v4255 = vadd.f32 %v4040, %v4254
        %4256 = vmatprep.mubr.f32.mxu0 %v450
        %4257 = vmatmul.mubr.f32.gmra.mxu0 %v449
        %v4258 = vpop.f32.mrf.mxu0
        %v4259 = vadd.f32 %v4044, %v4258
        %v4260 = vpop.f32.mrf.mxu0
        %v4261 = vadd.f32 %v4046, %v4260
        %4262 = vmatprep.mubr.f32.mxu0 %v466
        %4263 = vmatmul.mubr.f32.gmra.mxu0 %v465
        %v4264 = vpop.f32.mrf.mxu0
        %v4265 = vadd.f32 %v4050, %v4264
        %v4266 = vpop.f32.mrf.mxu0
        %v4267 = vadd.f32 %v4052, %v4266
        %4268 = vmatprep.mubr.f32.mxu0 %v482
        %4269 = vmatmul.mubr.f32.gmra.mxu0 %v481
        %v4270 = vpop.f32.mrf.mxu0
        %v4271 = vadd.f32 %v4056, %v4270
        %v4272 = vpop.f32.mrf.mxu0
        %v4273 = vadd.f32 %v4058, %v4272
        %4274 = vmatprep.mubr.f32.mxu0 %v498
        %4275 = vmatmul.mubr.f32.gmra.mxu0 %v497
        %v4276 = vpop.f32.mrf.mxu0
        %v4277 = vadd.f32 %v4062, %v4276
        %v4278 = vpop.f32.mrf.mxu0
        %v4279 = vadd.f32 %v4064, %v4278
        %4280 = vmatprep.mubr.f32.mxu0 %v514
        %4281 = vmatmul.mubr.f32.gmra.mxu0 %v513
        %v4282 = vpop.f32.mrf.mxu0
        %v4283 = vadd.f32 %v4068, %v4282
        %v4284 = vpop.f32.mrf.mxu0
        %v4285 = vadd.f32 %v4070, %v4284
        %4286 = vmatprep.mubr.f32.mxu0 %v530
        %4287 = vmatmul.mubr.f32.gmra.mxu0 %v529
        %v4288 = vpop.f32.mrf.mxu0
        %v4289 = vadd.f32 %v4074, %v4288
        %v4290 = vpop.f32.mrf.mxu0
        %v4291 = vadd.f32 %v4076, %v4290
        %4292 = vmatprep.mubr.f32.mxu0 %v546
        %4293 = vmatmul.mubr.f32.gmra.mxu0 %v545
        %v4294 = vpop.f32.mrf.mxu0
        %v4295 = vadd.f32 %v4080, %v4294
        %v4296 = vpop.f32.mrf.mxu0
        %v4297 = vadd.f32 %v4082, %v4296
        %4298 = vmatprep.mubr.f32.mxu0 %v562
        %4299 = vmatmul.mubr.f32.gmra.mxu0 %v561
        %v4300 = vpop.f32.mrf.mxu0
        %v4301 = vadd.f32 %v4086, %v4300
        %v4302 = vpop.f32.mrf.mxu0
        %v4303 = vadd.f32 %v4088, %v4302
        %4304 = vmatprep.mubr.f32.mxu0 %v578
        %4305 = vmatmul.mubr.f32.gmra.mxu0 %v577
        %v4306 = vpop.f32.mrf.mxu0
        %v4307 = vadd.f32 %v4092, %v4306
        %v4308 = vpop.f32.mrf.mxu0
        %v4309 = vadd.f32 %v4094, %v4308
        %4310 = vmatprep.mubr.f32.mxu0 %v594
        %4311 = vmatmul.mubr.f32.gmra.mxu0 %v593
        %v4312 = vpop.f32.mrf.mxu0
        %v4313 = vadd.f32 %v4098, %v4312
        %v4314 = vpop.f32.mrf.mxu0
        %v4315 = vadd.f32 %v4100, %v4314
        %4316 = vmatprep.mubr.f32.mxu0 %v610
        %4317 = vmatmul.mubr.f32.gmra.mxu0 %v609
        %v4318 = vpop.f32.mrf.mxu0
        %v4319 = vadd.f32 %v4104, %v4318
        %v4320 = vpop.f32.mrf.mxu0
        %v4321 = vadd.f32 %v4106, %v4320
        %4322 = vmatprep.mubr.f32.mxu0 %v626
        %4323 = vmatmul.mubr.f32.gmra.mxu0 %v625
        %v4324 = vpop.f32.mrf.mxu0
        %v4325 = vadd.f32 %v4110, %v4324
        %v4326 = vpop.f32.mrf.mxu0
        %v4327 = vadd.f32 %v4112, %v4326
        %4328 = vmatprep.mubr.f32.mxu0 %v642
        %4329 = vmatmul.mubr.f32.gmra.mxu0 %v641
        %v4330 = vpop.f32.mrf.mxu0
        %v4331 = vadd.f32 %v4116, %v4330
        %v4332 = vpop.f32.mrf.mxu0
        %v4333 = vadd.f32 %v4118, %v4332
        %4334 = vmatprep.mubr.f32.mxu0 %v658
        %4335 = vmatmul.mubr.f32.gmra.mxu0 %v657
        %v4336 = vpop.f32.mrf.mxu0
        %v4337 = vadd.f32 %v4122, %v4336
        %v4338 = vpop.f32.mrf.mxu0
        %v4339 = vadd.f32 %v4124, %v4338
        %4340 = vmatprep.mubr.f32.mxu0 %v674
        %4341 = vmatmul.mubr.f32.gmra.mxu0 %v673
        %v4342 = vpop.f32.mrf.mxu0
        %v4343 = vadd.f32 %v4128, %v4342
        %v4344 = vpop.f32.mrf.mxu0
        %v4345 = vadd.f32 %v4130, %v4344
        %4346 = vmatprep.mubr.f32.mxu0 %v690
        %4347 = vmatmul.mubr.f32.gmra.mxu0 %v689
        %v4348 = vpop.f32.mrf.mxu0
        %v4349 = vadd.f32 %v4134, %v4348
        %v4350 = vpop.f32.mrf.mxu0
        %v4351 = vadd.f32 %v4136, %v4350
        %4352 = vmatprep.mubr.f32.mxu0 %v706
        %4353 = vmatmul.mubr.f32.gmra.mxu0 %v705
        %v4354 = vpop.f32.mrf.mxu0
        %v4355 = vadd.f32 %v4140, %v4354
        %v4356 = vpop.f32.mrf.mxu0
        %v4357 = vadd.f32 %v4142, %v4356
        %4358 = vmatprep.mubr.f32.mxu0 %v722
        %4359 = vmatmul.mubr.f32.gmra.mxu0 %v721
        %v4360 = vpop.f32.mrf.mxu0
        %v4361 = vadd.f32 %v4146, %v4360
        %v4362 = vpop.f32.mrf.mxu0
        %v4363 = vadd.f32 %v4148, %v4362
        %4364 = vmatprep.mubr.f32.mxu0 %v738
        %4365 = vmatmul.mubr.f32.gmra.mxu0 %v737
        %v4366 = vpop.f32.mrf.mxu0
        %v4367 = vadd.f32 %v4152, %v4366
        %v4368 = vpop.f32.mrf.mxu0
        %v4369 = vadd.f32 %v4154, %v4368
        %4370 = vmatprep.mubr.f32.mxu0 %v754
        %4371 = vmatmul.mubr.f32.gmra.mxu0 %v753
        %v4372 = vpop.f32.mrf.mxu0
        %v4373 = vadd.f32 %v4158, %v4372
        %v4374 = vpop.f32.mrf.mxu0
        %v4375 = vadd.f32 %v4160, %v4374
        %4376 = vmatprep.mubr.f32.mxu0 %v770
        %4377 = vmatmul.mubr.f32.gmra.mxu0 %v769
        %v4378 = vpop.f32.mrf.mxu0
        %v4379 = vadd.f32 %v4164, %v4378
        %v4380 = vpop.f32.mrf.mxu0
        %v4381 = vadd.f32 %v4166, %v4380
        %4382 = vdwg.mxu0
        %4383 = vmatprep.subr.mxu0 %v1354
        %4384 = vmatpush1.msra.mxu0 %v1353
        %4385 = vmatprep.subr.mxu0 %v1350
        %4386 = vmatpush1.msra.mxu0 %v1349
        %4387 = vmatprep.subr.mxu0 %v1346
        %4388 = vmatpush1.msra.mxu0 %v1345
        %4389 = vmatprep.subr.mxu0 %v1342
        %4390 = vmatpush1.msra.mxu0 %v1341
        %4391 = vmatprep.subr.mxu0 %v1338
        %4392 = vmatpush1.msra.mxu0 %v1337
        %4393 = vmatprep.subr.mxu0 %v1334
        %4394 = vmatpush1.msra.mxu0 %v1333
        %4395 = vmatprep.subr.mxu0 %v1330
        %4396 = vmatpush1.msra.mxu0 %v1329
        %4397 = vmatprep.subr.mxu0 %v1326
        %4398 = vmatpush1.msra.mxu0 %v1325
        %4399 = vmatprep.subr.mxu0 %v1322
        %4400 = vmatpush1.msra.mxu0 %v1321
        %4401 = vmatprep.subr.mxu0 %v1318
        %4402 = vmatpush1.msra.mxu0 %v1317
        %4403 = vmatprep.subr.mxu0 %v1314
        %4404 = vmatpush1.msra.mxu0 %v1313
        %4405 = vmatprep.subr.mxu0 %v1310
        %4406 = vmatpush1.msra.mxu0 %v1309
        %4407 = vmatprep.subr.mxu0 %v1306
        %4408 = vmatpush1.msra.mxu0 %v1305
        %4409 = vmatprep.subr.mxu0 %v1302
        %4410 = vmatpush1.msra.mxu0 %v1301
        %4411 = vmatprep.subr.mxu0 %v1298
        %4412 = vmatpush1.msra.mxu0 %v1297
        %4413 = vmatprep.subr.mxu0 %v1294
        %4414 = vmatpush1.msra.mxu0 %v1293
        %4415 = vmatprep.subr.mxu0 %v1418
        %4416 = vmatpush2.msra.mxu0 %v1417
        %4417 = vmatprep.subr.mxu0 %v1414
        %4418 = vmatpush2.msra.mxu0 %v1413
        %4419 = vmatprep.subr.mxu0 %v1410
        %4420 = vmatpush2.msra.mxu0 %v1409
        %4421 = vmatprep.subr.mxu0 %v1406
        %4422 = vmatpush2.msra.mxu0 %v1405
        %4423 = vmatprep.subr.mxu0 %v1402
        %4424 = vmatpush2.msra.mxu0 %v1401
        %4425 = vmatprep.subr.mxu0 %v1398
        %4426 = vmatpush2.msra.mxu0 %v1397
        %4427 = vmatprep.subr.mxu0 %v1394
        %4428 = vmatpush2.msra.mxu0 %v1393
        %4429 = vmatprep.subr.mxu0 %v1390
        %4430 = vmatpush2.msra.mxu0 %v1389
        %4431 = vmatprep.subr.mxu0 %v1386
        %4432 = vmatpush2.msra.mxu0 %v1385
        %4433 = vmatprep.subr.mxu0 %v1382
        %4434 = vmatpush2.msra.mxu0 %v1381
        %4435 = vmatprep.subr.mxu0 %v1378
        %4436 = vmatpush2.msra.mxu0 %v1377
        %4437 = vmatprep.subr.mxu0 %v1374
        %4438 = vmatpush2.msra.mxu0 %v1373
        %4439 = vmatprep.subr.mxu0 %v1370
        %4440 = vmatpush2.msra.mxu0 %v1369
        %4441 = vmatprep.subr.mxu0 %v1366
        %4442 = vmatpush2.msra.mxu0 %v1365
        %4443 = vmatprep.subr.mxu0 %v1362
        %4444 = vmatpush2.msra.mxu0 %v1361
        %4445 = vmatprep.subr.mxu0 %v1358
        %4446 = vmatpush2.msra.mxu0 %v1357
        %4447 = vmatprep.mubr.f32.mxu0 %v388
        %4448 = vmatmul.mubr.f32.gmra.mxu0 %v387
        %v4449 = vpop.f32.mrf.mxu0
        %v4450 = vadd.f32 %v4235, %v4449
        %v4451 = vpop.f32.mrf.mxu0
        %v4452 = vadd.f32 %v4237, %v4451
        %4453 = vmatprep.mubr.f32.mxu0 %v404
        %4454 = vmatmul.mubr.f32.gmra.mxu0 %v403
        %v4455 = vpop.f32.mrf.mxu0
        %v4456 = vadd.f32 %v4241, %v4455
        %v4457 = vpop.f32.mrf.mxu0
        %v4458 = vadd.f32 %v4243, %v4457
        %4459 = vmatprep.mubr.f32.mxu0 %v420
        %4460 = vmatmul.mubr.f32.gmra.mxu0 %v419
        %v4461 = vpop.f32.mrf.mxu0
        %v4462 = vadd.f32 %v4247, %v4461
        %v4463 = vpop.f32.mrf.mxu0
        %v4464 = vadd.f32 %v4249, %v4463
        %4465 = vmatprep.mubr.f32.mxu0 %v436
        %4466 = vmatmul.mubr.f32.gmra.mxu0 %v435
        %v4467 = vpop.f32.mrf.mxu0
        %v4468 = vadd.f32 %v4253, %v4467
        %v4469 = vpop.f32.mrf.mxu0
        %v4470 = vadd.f32 %v4255, %v4469
        %4471 = vmatprep.mubr.f32.mxu0 %v452
        %4472 = vmatmul.mubr.f32.gmra.mxu0 %v451
        %v4473 = vpop.f32.mrf.mxu0
        %v4474 = vadd.f32 %v4259, %v4473
        %v4475 = vpop.f32.mrf.mxu0
        %v4476 = vadd.f32 %v4261, %v4475
        %4477 = vmatprep.mubr.f32.mxu0 %v468
        %4478 = vmatmul.mubr.f32.gmra.mxu0 %v467
        %v4479 = vpop.f32.mrf.mxu0
        %v4480 = vadd.f32 %v4265, %v4479
        %v4481 = vpop.f32.mrf.mxu0
        %v4482 = vadd.f32 %v4267, %v4481
        %4483 = vmatprep.mubr.f32.mxu0 %v484
        %4484 = vmatmul.mubr.f32.gmra.mxu0 %v483
        %v4485 = vpop.f32.mrf.mxu0
        %v4486 = vadd.f32 %v4271, %v4485
        %v4487 = vpop.f32.mrf.mxu0
        %v4488 = vadd.f32 %v4273, %v4487
        %4489 = vmatprep.mubr.f32.mxu0 %v500
        %4490 = vmatmul.mubr.f32.gmra.mxu0 %v499
        %v4491 = vpop.f32.mrf.mxu0
        %v4492 = vadd.f32 %v4277, %v4491
        %v4493 = vpop.f32.mrf.mxu0
        %v4494 = vadd.f32 %v4279, %v4493
        %4495 = vmatprep.mubr.f32.mxu0 %v516
        %4496 = vmatmul.mubr.f32.gmra.mxu0 %v515
        %v4497 = vpop.f32.mrf.mxu0
        %v4498 = vadd.f32 %v4283, %v4497
        %v4499 = vpop.f32.mrf.mxu0
        %v4500 = vadd.f32 %v4285, %v4499
        %4501 = vmatprep.mubr.f32.mxu0 %v532
        %4502 = vmatmul.mubr.f32.gmra.mxu0 %v531
        %v4503 = vpop.f32.mrf.mxu0
        %v4504 = vadd.f32 %v4289, %v4503
        %v4505 = vpop.f32.mrf.mxu0
        %v4506 = vadd.f32 %v4291, %v4505
        %4507 = vmatprep.mubr.f32.mxu0 %v548
        %4508 = vmatmul.mubr.f32.gmra.mxu0 %v547
        %v4509 = vpop.f32.mrf.mxu0
        %v4510 = vadd.f32 %v4295, %v4509
        %v4511 = vpop.f32.mrf.mxu0
        %v4512 = vadd.f32 %v4297, %v4511
        %4513 = vmatprep.mubr.f32.mxu0 %v564
        %4514 = vmatmul.mubr.f32.gmra.mxu0 %v563
        %v4515 = vpop.f32.mrf.mxu0
        %v4516 = vadd.f32 %v4301, %v4515
        %v4517 = vpop.f32.mrf.mxu0
        %v4518 = vadd.f32 %v4303, %v4517
        %4519 = vmatprep.mubr.f32.mxu0 %v580
        %4520 = vmatmul.mubr.f32.gmra.mxu0 %v579
        %v4521 = vpop.f32.mrf.mxu0
        %v4522 = vadd.f32 %v4307, %v4521
        %v4523 = vpop.f32.mrf.mxu0
        %v4524 = vadd.f32 %v4309, %v4523
        %4525 = vmatprep.mubr.f32.mxu0 %v596
        %4526 = vmatmul.mubr.f32.gmra.mxu0 %v595
        %v4527 = vpop.f32.mrf.mxu0
        %v4528 = vadd.f32 %v4313, %v4527
        %v4529 = vpop.f32.mrf.mxu0
        %v4530 = vadd.f32 %v4315, %v4529
        %4531 = vmatprep.mubr.f32.mxu0 %v612
        %4532 = vmatmul.mubr.f32.gmra.mxu0 %v611
        %v4533 = vpop.f32.mrf.mxu0
        %v4534 = vadd.f32 %v4319, %v4533
        %v4535 = vpop.f32.mrf.mxu0
        %v4536 = vadd.f32 %v4321, %v4535
        %4537 = vmatprep.mubr.f32.mxu0 %v628
        %4538 = vmatmul.mubr.f32.gmra.mxu0 %v627
        %v4539 = vpop.f32.mrf.mxu0
        %v4540 = vadd.f32 %v4325, %v4539
        %v4541 = vpop.f32.mrf.mxu0
        %v4542 = vadd.f32 %v4327, %v4541
        %4543 = vmatprep.mubr.f32.mxu0 %v644
        %4544 = vmatmul.mubr.f32.gmra.mxu0 %v643
        %v4545 = vpop.f32.mrf.mxu0
        %v4546 = vadd.f32 %v4331, %v4545
        %v4547 = vpop.f32.mrf.mxu0
        %v4548 = vadd.f32 %v4333, %v4547
        %4549 = vmatprep.mubr.f32.mxu0 %v660
        %4550 = vmatmul.mubr.f32.gmra.mxu0 %v659
        %v4551 = vpop.f32.mrf.mxu0
        %v4552 = vadd.f32 %v4337, %v4551
        %v4553 = vpop.f32.mrf.mxu0
        %v4554 = vadd.f32 %v4339, %v4553
        %4555 = vmatprep.mubr.f32.mxu0 %v676
        %4556 = vmatmul.mubr.f32.gmra.mxu0 %v675
        %v4557 = vpop.f32.mrf.mxu0
        %v4558 = vadd.f32 %v4343, %v4557
        %v4559 = vpop.f32.mrf.mxu0
        %v4560 = vadd.f32 %v4345, %v4559
        %4561 = vmatprep.mubr.f32.mxu0 %v692
        %4562 = vmatmul.mubr.f32.gmra.mxu0 %v691
        %v4563 = vpop.f32.mrf.mxu0
        %v4564 = vadd.f32 %v4349, %v4563
        %v4565 = vpop.f32.mrf.mxu0
        %v4566 = vadd.f32 %v4351, %v4565
        %4567 = vmatprep.mubr.f32.mxu0 %v708
        %4568 = vmatmul.mubr.f32.gmra.mxu0 %v707
        %v4569 = vpop.f32.mrf.mxu0
        %v4570 = vadd.f32 %v4355, %v4569
        %v4571 = vpop.f32.mrf.mxu0
        %v4572 = vadd.f32 %v4357, %v4571
        %4573 = vmatprep.mubr.f32.mxu0 %v724
        %4574 = vmatmul.mubr.f32.gmra.mxu0 %v723
        %v4575 = vpop.f32.mrf.mxu0
        %v4576 = vadd.f32 %v4361, %v4575
        %v4577 = vpop.f32.mrf.mxu0
        %v4578 = vadd.f32 %v4363, %v4577
        %4579 = vmatprep.mubr.f32.mxu0 %v740
        %4580 = vmatmul.mubr.f32.gmra.mxu0 %v739
        %v4581 = vpop.f32.mrf.mxu0
        %v4582 = vadd.f32 %v4367, %v4581
        %v4583 = vpop.f32.mrf.mxu0
        %v4584 = vadd.f32 %v4369, %v4583
        %4585 = vmatprep.mubr.f32.mxu0 %v756
        %4586 = vmatmul.mubr.f32.gmra.mxu0 %v755
        %v4587 = vpop.f32.mrf.mxu0
        %v4588 = vadd.f32 %v4373, %v4587
        %v4589 = vpop.f32.mrf.mxu0
        %v4590 = vadd.f32 %v4375, %v4589
        %4591 = vmatprep.mubr.f32.mxu0 %v772
        %4592 = vmatmul.mubr.f32.gmra.mxu0 %v771
        %v4593 = vpop.f32.mrf.mxu0
        %v4594 = vadd.f32 %v4379, %v4593
        %v4595 = vpop.f32.mrf.mxu0
        %v4596 = vadd.f32 %v4381, %v4595
        %4597 = vdwg.mxu0
        %4598 = vmatprep.subr.mxu0 %v1482
        %4599 = vmatpush1.msra.mxu0 %v1481
        %4600 = vmatprep.subr.mxu0 %v1478
        %4601 = vmatpush1.msra.mxu0 %v1477
        %4602 = vmatprep.subr.mxu0 %v1474
        %4603 = vmatpush1.msra.mxu0 %v1473
        %4604 = vmatprep.subr.mxu0 %v1470
        %4605 = vmatpush1.msra.mxu0 %v1469
        %4606 = vmatprep.subr.mxu0 %v1466
        %4607 = vmatpush1.msra.mxu0 %v1465
        %4608 = vmatprep.subr.mxu0 %v1462
        %4609 = vmatpush1.msra.mxu0 %v1461
        %4610 = vmatprep.subr.mxu0 %v1458
        %4611 = vmatpush1.msra.mxu0 %v1457
        %4612 = vmatprep.subr.mxu0 %v1454
        %4613 = vmatpush1.msra.mxu0 %v1453
        %4614 = vmatprep.subr.mxu0 %v1450
        %4615 = vmatpush1.msra.mxu0 %v1449
        %4616 = vmatprep.subr.mxu0 %v1446
        %4617 = vmatpush1.msra.mxu0 %v1445
        %4618 = vmatprep.subr.mxu0 %v1442
        %4619 = vmatpush1.msra.mxu0 %v1441
        %4620 = vmatprep.subr.mxu0 %v1438
        %4621 = vmatpush1.msra.mxu0 %v1437
        %4622 = vmatprep.subr.mxu0 %v1434
        %4623 = vmatpush1.msra.mxu0 %v1433
        %4624 = vmatprep.subr.mxu0 %v1430
        %4625 = vmatpush1.msra.mxu0 %v1429
        %4626 = vmatprep.subr.mxu0 %v1426
        %4627 = vmatpush1.msra.mxu0 %v1425
        %4628 = vmatprep.subr.mxu0 %v1422
        %4629 = vmatpush1.msra.mxu0 %v1421
        %4630 = vmatprep.subr.mxu0 %v1546
        %4631 = vmatpush2.msra.mxu0 %v1545
        %4632 = vmatprep.subr.mxu0 %v1542
        %4633 = vmatpush2.msra.mxu0 %v1541
        %4634 = vmatprep.subr.mxu0 %v1538
        %4635 = vmatpush2.msra.mxu0 %v1537
        %4636 = vmatprep.subr.mxu0 %v1534
        %4637 = vmatpush2.msra.mxu0 %v1533
        %4638 = vmatprep.subr.mxu0 %v1530
        %4639 = vmatpush2.msra.mxu0 %v1529
        %4640 = vmatprep.subr.mxu0 %v1526
        %4641 = vmatpush2.msra.mxu0 %v1525
        %4642 = vmatprep.subr.mxu0 %v1522
        %4643 = vmatpush2.msra.mxu0 %v1521
        %4644 = vmatprep.subr.mxu0 %v1518
        %4645 = vmatpush2.msra.mxu0 %v1517
        %4646 = vmatprep.subr.mxu0 %v1514
        %4647 = vmatpush2.msra.mxu0 %v1513
        %4648 = vmatprep.subr.mxu0 %v1510
        %4649 = vmatpush2.msra.mxu0 %v1509
        %4650 = vmatprep.subr.mxu0 %v1506
        %4651 = vmatpush2.msra.mxu0 %v1505
        %4652 = vmatprep.subr.mxu0 %v1502
        %4653 = vmatpush2.msra.mxu0 %v1501
        %4654 = vmatprep.subr.mxu0 %v1498
        %4655 = vmatpush2.msra.mxu0 %v1497
        %4656 = vmatprep.subr.mxu0 %v1494
        %4657 = vmatpush2.msra.mxu0 %v1493
        %4658 = vmatprep.subr.mxu0 %v1490
        %4659 = vmatpush2.msra.mxu0 %v1489
        %4660 = vmatprep.subr.mxu0 %v1486
        %4661 = vmatpush2.msra.mxu0 %v1485
        %4662 = vmatprep.mubr.f32.mxu0 %v390
        %4663 = vmatmul.mubr.f32.gmra.mxu0 %v389
        %v4664 = vpop.f32.mrf.mxu0
        %v4665 = vadd.f32 %v4450, %v4664
        %v4666 = vpop.f32.mrf.mxu0
        %v4667 = vadd.f32 %v4452, %v4666
        %4668 = vmatprep.mubr.f32.mxu0 %v406
        %4669 = vmatmul.mubr.f32.gmra.mxu0 %v405
        %v4670 = vpop.f32.mrf.mxu0
        %v4671 = vadd.f32 %v4456, %v4670
        %v4672 = vpop.f32.mrf.mxu0
        %v4673 = vadd.f32 %v4458, %v4672
        %4674 = vmatprep.mubr.f32.mxu0 %v422
        %4675 = vmatmul.mubr.f32.gmra.mxu0 %v421
        %v4676 = vpop.f32.mrf.mxu0
        %v4677 = vadd.f32 %v4462, %v4676
        %v4678 = vpop.f32.mrf.mxu0
        %v4679 = vadd.f32 %v4464, %v4678
        %4680 = vmatprep.mubr.f32.mxu0 %v438
        %4681 = vmatmul.mubr.f32.gmra.mxu0 %v437
        %v4682 = vpop.f32.mrf.mxu0
        %v4683 = vadd.f32 %v4468, %v4682
        %v4684 = vpop.f32.mrf.mxu0
        %v4685 = vadd.f32 %v4470, %v4684
        %4686 = vmatprep.mubr.f32.mxu0 %v454
        %4687 = vmatmul.mubr.f32.gmra.mxu0 %v453
        %v4688 = vpop.f32.mrf.mxu0
        %v4689 = vadd.f32 %v4474, %v4688
        %v4690 = vpop.f32.mrf.mxu0
        %v4691 = vadd.f32 %v4476, %v4690
        %4692 = vmatprep.mubr.f32.mxu0 %v470
        %4693 = vmatmul.mubr.f32.gmra.mxu0 %v469
        %v4694 = vpop.f32.mrf.mxu0
        %v4695 = vadd.f32 %v4480, %v4694
        %v4696 = vpop.f32.mrf.mxu0
        %v4697 = vadd.f32 %v4482, %v4696
        %4698 = vmatprep.mubr.f32.mxu0 %v486
        %4699 = vmatmul.mubr.f32.gmra.mxu0 %v485
        %v4700 = vpop.f32.mrf.mxu0
        %v4701 = vadd.f32 %v4486, %v4700
        %v4702 = vpop.f32.mrf.mxu0
        %v4703 = vadd.f32 %v4488, %v4702
        %4704 = vmatprep.mubr.f32.mxu0 %v502
        %4705 = vmatmul.mubr.f32.gmra.mxu0 %v501
        %v4706 = vpop.f32.mrf.mxu0
        %v4707 = vadd.f32 %v4492, %v4706
        %v4708 = vpop.f32.mrf.mxu0
        %v4709 = vadd.f32 %v4494, %v4708
        %4710 = vmatprep.mubr.f32.mxu0 %v518
        %4711 = vmatmul.mubr.f32.gmra.mxu0 %v517
        %v4712 = vpop.f32.mrf.mxu0
        %v4713 = vadd.f32 %v4498, %v4712
        %v4714 = vpop.f32.mrf.mxu0
        %v4715 = vadd.f32 %v4500, %v4714
        %4716 = vmatprep.mubr.f32.mxu0 %v534
        %4717 = vmatmul.mubr.f32.gmra.mxu0 %v533
        %v4718 = vpop.f32.mrf.mxu0
        %v4719 = vadd.f32 %v4504, %v4718
        %v4720 = vpop.f32.mrf.mxu0
        %v4721 = vadd.f32 %v4506, %v4720
        %4722 = vmatprep.mubr.f32.mxu0 %v550
        %4723 = vmatmul.mubr.f32.gmra.mxu0 %v549
        %v4724 = vpop.f32.mrf.mxu0
        %v4725 = vadd.f32 %v4510, %v4724
        %v4726 = vpop.f32.mrf.mxu0
        %v4727 = vadd.f32 %v4512, %v4726
        %4728 = vmatprep.mubr.f32.mxu0 %v566
        %4729 = vmatmul.mubr.f32.gmra.mxu0 %v565
        %v4730 = vpop.f32.mrf.mxu0
        %v4731 = vadd.f32 %v4516, %v4730
        %v4732 = vpop.f32.mrf.mxu0
        %v4733 = vadd.f32 %v4518, %v4732
        %4734 = vmatprep.mubr.f32.mxu0 %v582
        %4735 = vmatmul.mubr.f32.gmra.mxu0 %v581
        %v4736 = vpop.f32.mrf.mxu0
        %v4737 = vadd.f32 %v4522, %v4736
        %v4738 = vpop.f32.mrf.mxu0
        %v4739 = vadd.f32 %v4524, %v4738
        %4740 = vmatprep.mubr.f32.mxu0 %v598
        %4741 = vmatmul.mubr.f32.gmra.mxu0 %v597
        %v4742 = vpop.f32.mrf.mxu0
        %v4743 = vadd.f32 %v4528, %v4742
        %v4744 = vpop.f32.mrf.mxu0
        %v4745 = vadd.f32 %v4530, %v4744
        %4746 = vmatprep.mubr.f32.mxu0 %v614
        %4747 = vmatmul.mubr.f32.gmra.mxu0 %v613
        %v4748 = vpop.f32.mrf.mxu0
        %v4749 = vadd.f32 %v4534, %v4748
        %v4750 = vpop.f32.mrf.mxu0
        %v4751 = vadd.f32 %v4536, %v4750
        %4752 = vmatprep.mubr.f32.mxu0 %v630
        %4753 = vmatmul.mubr.f32.gmra.mxu0 %v629
        %v4754 = vpop.f32.mrf.mxu0
        %v4755 = vadd.f32 %v4540, %v4754
        %v4756 = vpop.f32.mrf.mxu0
        %v4757 = vadd.f32 %v4542, %v4756
        %4758 = vmatprep.mubr.f32.mxu0 %v646
        %4759 = vmatmul.mubr.f32.gmra.mxu0 %v645
        %v4760 = vpop.f32.mrf.mxu0
        %v4761 = vadd.f32 %v4546, %v4760
        %v4762 = vpop.f32.mrf.mxu0
        %v4763 = vadd.f32 %v4548, %v4762
        %4764 = vmatprep.mubr.f32.mxu0 %v662
        %4765 = vmatmul.mubr.f32.gmra.mxu0 %v661
        %v4766 = vpop.f32.mrf.mxu0
        %v4767 = vadd.f32 %v4552, %v4766
        %v4768 = vpop.f32.mrf.mxu0
        %v4769 = vadd.f32 %v4554, %v4768
        %4770 = vmatprep.mubr.f32.mxu0 %v678
        %4771 = vmatmul.mubr.f32.gmra.mxu0 %v677
        %v4772 = vpop.f32.mrf.mxu0
        %v4773 = vadd.f32 %v4558, %v4772
        %v4774 = vpop.f32.mrf.mxu0
        %v4775 = vadd.f32 %v4560, %v4774
        %4776 = vmatprep.mubr.f32.mxu0 %v694
        %4777 = vmatmul.mubr.f32.gmra.mxu0 %v693
        %v4778 = vpop.f32.mrf.mxu0
        %v4779 = vadd.f32 %v4564, %v4778
        %v4780 = vpop.f32.mrf.mxu0
        %v4781 = vadd.f32 %v4566, %v4780
        %4782 = vmatprep.mubr.f32.mxu0 %v710
        %4783 = vmatmul.mubr.f32.gmra.mxu0 %v709
        %v4784 = vpop.f32.mrf.mxu0
        %v4785 = vadd.f32 %v4570, %v4784
        %v4786 = vpop.f32.mrf.mxu0
        %v4787 = vadd.f32 %v4572, %v4786
        %4788 = vmatprep.mubr.f32.mxu0 %v726
        %4789 = vmatmul.mubr.f32.gmra.mxu0 %v725
        %v4790 = vpop.f32.mrf.mxu0
        %v4791 = vadd.f32 %v4576, %v4790
        %v4792 = vpop.f32.mrf.mxu0
        %v4793 = vadd.f32 %v4578, %v4792
        %4794 = vmatprep.mubr.f32.mxu0 %v742
        %4795 = vmatmul.mubr.f32.gmra.mxu0 %v741
        %v4796 = vpop.f32.mrf.mxu0
        %v4797 = vadd.f32 %v4582, %v4796
        %v4798 = vpop.f32.mrf.mxu0
        %v4799 = vadd.f32 %v4584, %v4798
        %4800 = vmatprep.mubr.f32.mxu0 %v758
        %4801 = vmatmul.mubr.f32.gmra.mxu0 %v757
        %v4802 = vpop.f32.mrf.mxu0
        %v4803 = vadd.f32 %v4588, %v4802
        %v4804 = vpop.f32.mrf.mxu0
        %v4805 = vadd.f32 %v4590, %v4804
        %4806 = vmatprep.mubr.f32.mxu0 %v774
        %4807 = vmatmul.mubr.f32.gmra.mxu0 %v773
        %v4808 = vpop.f32.mrf.mxu0
        %v4809 = vadd.f32 %v4594, %v4808
        %v4810 = vpop.f32.mrf.mxu0
        %v4811 = vadd.f32 %v4596, %v4810
        %4812 = vdwg.mxu0
        %4813 = vmatprep.subr.mxu0 %v1610
        %4814 = vmatpush1.msra.mxu0 %v1609
        %4815 = vmatprep.subr.mxu0 %v1606
        %4816 = vmatpush1.msra.mxu0 %v1605
        %4817 = vmatprep.subr.mxu0 %v1602
        %4818 = vmatpush1.msra.mxu0 %v1601
        %4819 = vmatprep.subr.mxu0 %v1598
        %4820 = vmatpush1.msra.mxu0 %v1597
        %4821 = vmatprep.subr.mxu0 %v1594
        %4822 = vmatpush1.msra.mxu0 %v1593
        %4823 = vmatprep.subr.mxu0 %v1590
        %4824 = vmatpush1.msra.mxu0 %v1589
        %4825 = vmatprep.subr.mxu0 %v1586
        %4826 = vmatpush1.msra.mxu0 %v1585
        %4827 = vmatprep.subr.mxu0 %v1582
        %4828 = vmatpush1.msra.mxu0 %v1581
        %4829 = vmatprep.subr.mxu0 %v1578
        %4830 = vmatpush1.msra.mxu0 %v1577
        %4831 = vmatprep.subr.mxu0 %v1574
        %4832 = vmatpush1.msra.mxu0 %v1573
        %4833 = vmatprep.subr.mxu0 %v1570
        %4834 = vmatpush1.msra.mxu0 %v1569
        %4835 = vmatprep.subr.mxu0 %v1566
        %4836 = vmatpush1.msra.mxu0 %v1565
        %4837 = vmatprep.subr.mxu0 %v1562
        %4838 = vmatpush1.msra.mxu0 %v1561
        %4839 = vmatprep.subr.mxu0 %v1558
        %4840 = vmatpush1.msra.mxu0 %v1557
        %4841 = vmatprep.subr.mxu0 %v1554
        %4842 = vmatpush1.msra.mxu0 %v1553
        %4843 = vmatprep.subr.mxu0 %v1550
        %4844 = vmatpush1.msra.mxu0 %v1549
        %4845 = vmatprep.subr.mxu0 %v1674
        %4846 = vmatpush2.msra.mxu0 %v1673
        %4847 = vmatprep.subr.mxu0 %v1670
        %4848 = vmatpush2.msra.mxu0 %v1669
        %4849 = vmatprep.subr.mxu0 %v1666
        %4850 = vmatpush2.msra.mxu0 %v1665
        %4851 = vmatprep.subr.mxu0 %v1662
        %4852 = vmatpush2.msra.mxu0 %v1661
        %4853 = vmatprep.subr.mxu0 %v1658
        %4854 = vmatpush2.msra.mxu0 %v1657
        %4855 = vmatprep.subr.mxu0 %v1654
        %4856 = vmatpush2.msra.mxu0 %v1653
        %4857 = vmatprep.subr.mxu0 %v1650
        %4858 = vmatpush2.msra.mxu0 %v1649
        %4859 = vmatprep.subr.mxu0 %v1646
        %4860 = vmatpush2.msra.mxu0 %v1645
        %4861 = vmatprep.subr.mxu0 %v1642
        %4862 = vmatpush2.msra.mxu0 %v1641
        %4863 = vmatprep.subr.mxu0 %v1638
        %4864 = vmatpush2.msra.mxu0 %v1637
        %4865 = vmatprep.subr.mxu0 %v1634
        %4866 = vmatpush2.msra.mxu0 %v1633
        %4867 = vmatprep.subr.mxu0 %v1630
        %4868 = vmatpush2.msra.mxu0 %v1629
        %4869 = vmatprep.subr.mxu0 %v1626
        %4870 = vmatpush2.msra.mxu0 %v1625
        %4871 = vmatprep.subr.mxu0 %v1622
        %4872 = vmatpush2.msra.mxu0 %v1621
        %4873 = vmatprep.subr.mxu0 %v1618
        %4874 = vmatpush2.msra.mxu0 %v1617
        %4875 = vmatprep.subr.mxu0 %v1614
        %4876 = vmatpush2.msra.mxu0 %v1613
        %4877 = vmatprep.mubr.f32.mxu0 %v392
        %4878 = vmatmul.mubr.f32.gmra.mxu0 %v391
        %v4879 = vpop.f32.mrf.mxu0
        %v4880 = vadd.f32 %v4665, %v4879
        %v4881 = vpop.f32.mrf.mxu0
        %v4882 = vadd.f32 %v4667, %v4881
        %4883 = vmatprep.mubr.f32.mxu0 %v408
        %4884 = vmatmul.mubr.f32.gmra.mxu0 %v407
        %v4885 = vpop.f32.mrf.mxu0
        %v4886 = vadd.f32 %v4671, %v4885
        %v4887 = vpop.f32.mrf.mxu0
        %v4888 = vadd.f32 %v4673, %v4887
        %4889 = vmatprep.mubr.f32.mxu0 %v424
        %4890 = vmatmul.mubr.f32.gmra.mxu0 %v423
        %v4891 = vpop.f32.mrf.mxu0
        %v4892 = vadd.f32 %v4677, %v4891
        %v4893 = vpop.f32.mrf.mxu0
        %v4894 = vadd.f32 %v4679, %v4893
        %4895 = vmatprep.mubr.f32.mxu0 %v440
        %4896 = vmatmul.mubr.f32.gmra.mxu0 %v439
        %v4897 = vpop.f32.mrf.mxu0
        %v4898 = vadd.f32 %v4683, %v4897
        %v4899 = vpop.f32.mrf.mxu0
        %v4900 = vadd.f32 %v4685, %v4899
        %4901 = vmatprep.mubr.f32.mxu0 %v456
        %4902 = vmatmul.mubr.f32.gmra.mxu0 %v455
        %v4903 = vpop.f32.mrf.mxu0
        %v4904 = vadd.f32 %v4689, %v4903
        %v4905 = vpop.f32.mrf.mxu0
        %v4906 = vadd.f32 %v4691, %v4905
        %4907 = vmatprep.mubr.f32.mxu0 %v472
        %4908 = vmatmul.mubr.f32.gmra.mxu0 %v471
        %v4909 = vpop.f32.mrf.mxu0
        %v4910 = vadd.f32 %v4695, %v4909
        %v4911 = vpop.f32.mrf.mxu0
        %v4912 = vadd.f32 %v4697, %v4911
        %4913 = vmatprep.mubr.f32.mxu0 %v488
        %4914 = vmatmul.mubr.f32.gmra.mxu0 %v487
        %v4915 = vpop.f32.mrf.mxu0
        %v4916 = vadd.f32 %v4701, %v4915
        %v4917 = vpop.f32.mrf.mxu0
        %v4918 = vadd.f32 %v4703, %v4917
        %4919 = vmatprep.mubr.f32.mxu0 %v504
        %4920 = vmatmul.mubr.f32.gmra.mxu0 %v503
        %v4921 = vpop.f32.mrf.mxu0
        %v4922 = vadd.f32 %v4707, %v4921
        %v4923 = vpop.f32.mrf.mxu0
        %v4924 = vadd.f32 %v4709, %v4923
        %4925 = vmatprep.mubr.f32.mxu0 %v520
        %4926 = vmatmul.mubr.f32.gmra.mxu0 %v519
        %v4927 = vpop.f32.mrf.mxu0
        %v4928 = vadd.f32 %v4713, %v4927
        %v4929 = vpop.f32.mrf.mxu0
        %v4930 = vadd.f32 %v4715, %v4929
        %4931 = vmatprep.mubr.f32.mxu0 %v536
        %4932 = vmatmul.mubr.f32.gmra.mxu0 %v535
        %v4933 = vpop.f32.mrf.mxu0
        %v4934 = vadd.f32 %v4719, %v4933
        %v4935 = vpop.f32.mrf.mxu0
        %v4936 = vadd.f32 %v4721, %v4935
        %4937 = vmatprep.mubr.f32.mxu0 %v552
        %4938 = vmatmul.mubr.f32.gmra.mxu0 %v551
        %v4939 = vpop.f32.mrf.mxu0
        %v4940 = vadd.f32 %v4725, %v4939
        %v4941 = vpop.f32.mrf.mxu0
        %v4942 = vadd.f32 %v4727, %v4941
        %4943 = vmatprep.mubr.f32.mxu0 %v568
        %4944 = vmatmul.mubr.f32.gmra.mxu0 %v567
        %v4945 = vpop.f32.mrf.mxu0
        %v4946 = vadd.f32 %v4731, %v4945
        %v4947 = vpop.f32.mrf.mxu0
        %v4948 = vadd.f32 %v4733, %v4947
        %4949 = vmatprep.mubr.f32.mxu0 %v584
        %4950 = vmatmul.mubr.f32.gmra.mxu0 %v583
        %v4951 = vpop.f32.mrf.mxu0
        %v4952 = vadd.f32 %v4737, %v4951
        %v4953 = vpop.f32.mrf.mxu0
        %v4954 = vadd.f32 %v4739, %v4953
        %4955 = vmatprep.mubr.f32.mxu0 %v600
        %4956 = vmatmul.mubr.f32.gmra.mxu0 %v599
        %v4957 = vpop.f32.mrf.mxu0
        %v4958 = vadd.f32 %v4743, %v4957
        %v4959 = vpop.f32.mrf.mxu0
        %v4960 = vadd.f32 %v4745, %v4959
        %4961 = vmatprep.mubr.f32.mxu0 %v616
        %4962 = vmatmul.mubr.f32.gmra.mxu0 %v615
        %v4963 = vpop.f32.mrf.mxu0
        %v4964 = vadd.f32 %v4749, %v4963
        %v4965 = vpop.f32.mrf.mxu0
        %v4966 = vadd.f32 %v4751, %v4965
        %4967 = vmatprep.mubr.f32.mxu0 %v632
        %4968 = vmatmul.mubr.f32.gmra.mxu0 %v631
        %v4969 = vpop.f32.mrf.mxu0
        %v4970 = vadd.f32 %v4755, %v4969
        %v4971 = vpop.f32.mrf.mxu0
        %v4972 = vadd.f32 %v4757, %v4971
        %4973 = vmatprep.mubr.f32.mxu0 %v648
        %4974 = vmatmul.mubr.f32.gmra.mxu0 %v647
        %v4975 = vpop.f32.mrf.mxu0
        %v4976 = vadd.f32 %v4761, %v4975
        %v4977 = vpop.f32.mrf.mxu0
        %v4978 = vadd.f32 %v4763, %v4977
        %4979 = vmatprep.mubr.f32.mxu0 %v664
        %4980 = vmatmul.mubr.f32.gmra.mxu0 %v663
        %v4981 = vpop.f32.mrf.mxu0
        %v4982 = vadd.f32 %v4767, %v4981
        %v4983 = vpop.f32.mrf.mxu0
        %v4984 = vadd.f32 %v4769, %v4983
        %4985 = vmatprep.mubr.f32.mxu0 %v680
        %4986 = vmatmul.mubr.f32.gmra.mxu0 %v679
        %v4987 = vpop.f32.mrf.mxu0
        %v4988 = vadd.f32 %v4773, %v4987
        %v4989 = vpop.f32.mrf.mxu0
        %v4990 = vadd.f32 %v4775, %v4989
        %4991 = vmatprep.mubr.f32.mxu0 %v696
        %4992 = vmatmul.mubr.f32.gmra.mxu0 %v695
        %v4993 = vpop.f32.mrf.mxu0
        %v4994 = vadd.f32 %v4779, %v4993
        %v4995 = vpop.f32.mrf.mxu0
        %v4996 = vadd.f32 %v4781, %v4995
        %4997 = vmatprep.mubr.f32.mxu0 %v712
        %4998 = vmatmul.mubr.f32.gmra.mxu0 %v711
        %v4999 = vpop.f32.mrf.mxu0
        %v5000 = vadd.f32 %v4785, %v4999
        %v5001 = vpop.f32.mrf.mxu0
        %v5002 = vadd.f32 %v4787, %v5001
        %5003 = vmatprep.mubr.f32.mxu0 %v728
        %5004 = vmatmul.mubr.f32.gmra.mxu0 %v727
        %v5005 = vpop.f32.mrf.mxu0
        %v5006 = vadd.f32 %v4791, %v5005
        %v5007 = vpop.f32.mrf.mxu0
        %v5008 = vadd.f32 %v4793, %v5007
        %5009 = vmatprep.mubr.f32.mxu0 %v744
        %5010 = vmatmul.mubr.f32.gmra.mxu0 %v743
        %v5011 = vpop.f32.mrf.mxu0
        %v5012 = vadd.f32 %v4797, %v5011
        %v5013 = vpop.f32.mrf.mxu0
        %v5014 = vadd.f32 %v4799, %v5013
        %5015 = vmatprep.mubr.f32.mxu0 %v760
        %5016 = vmatmul.mubr.f32.gmra.mxu0 %v759
        %v5017 = vpop.f32.mrf.mxu0
        %v5018 = vadd.f32 %v4803, %v5017
        %v5019 = vpop.f32.mrf.mxu0
        %v5020 = vadd.f32 %v4805, %v5019
        %5021 = vmatprep.mubr.f32.mxu0 %v776
        %5022 = vmatmul.mubr.f32.gmra.mxu0 %v775
        %v5023 = vpop.f32.mrf.mxu0
        %v5024 = vadd.f32 %v4809, %v5023
        %v5025 = vpop.f32.mrf.mxu0
        %v5026 = vadd.f32 %v4811, %v5025
        %5027 = vdwg.mxu0
        %5028 = vmatprep.subr.mxu0 %v1738
        %5029 = vmatpush1.msra.mxu0 %v1737
        %5030 = vmatprep.subr.mxu0 %v1734
        %5031 = vmatpush1.msra.mxu0 %v1733
        %5032 = vmatprep.subr.mxu0 %v1730
        %5033 = vmatpush1.msra.mxu0 %v1729
        %5034 = vmatprep.subr.mxu0 %v1726
        %5035 = vmatpush1.msra.mxu0 %v1725
        %5036 = vmatprep.subr.mxu0 %v1722
        %5037 = vmatpush1.msra.mxu0 %v1721
        %5038 = vmatprep.subr.mxu0 %v1718
        %5039 = vmatpush1.msra.mxu0 %v1717
        %5040 = vmatprep.subr.mxu0 %v1714
        %5041 = vmatpush1.msra.mxu0 %v1713
        %5042 = vmatprep.subr.mxu0 %v1710
        %5043 = vmatpush1.msra.mxu0 %v1709
        %5044 = vmatprep.subr.mxu0 %v1706
        %5045 = vmatpush1.msra.mxu0 %v1705
        %5046 = vmatprep.subr.mxu0 %v1702
        %5047 = vmatpush1.msra.mxu0 %v1701
        %5048 = vmatprep.subr.mxu0 %v1698
        %5049 = vmatpush1.msra.mxu0 %v1697
        %5050 = vmatprep.subr.mxu0 %v1694
        %5051 = vmatpush1.msra.mxu0 %v1693
        %5052 = vmatprep.subr.mxu0 %v1690
        %5053 = vmatpush1.msra.mxu0 %v1689
        %5054 = vmatprep.subr.mxu0 %v1686
        %5055 = vmatpush1.msra.mxu0 %v1685
        %5056 = vmatprep.subr.mxu0 %v1682
        %5057 = vmatpush1.msra.mxu0 %v1681
        %5058 = vmatprep.subr.mxu0 %v1678
        %5059 = vmatpush1.msra.mxu0 %v1677
        %5060 = vmatprep.subr.mxu0 %v1802
        %5061 = vmatpush2.msra.mxu0 %v1801
        %5062 = vmatprep.subr.mxu0 %v1798
        %5063 = vmatpush2.msra.mxu0 %v1797
        %5064 = vmatprep.subr.mxu0 %v1794
        %5065 = vmatpush2.msra.mxu0 %v1793
        %5066 = vmatprep.subr.mxu0 %v1790
        %5067 = vmatpush2.msra.mxu0 %v1789
        %5068 = vmatprep.subr.mxu0 %v1786
        %5069 = vmatpush2.msra.mxu0 %v1785
        %5070 = vmatprep.subr.mxu0 %v1782
        %5071 = vmatpush2.msra.mxu0 %v1781
        %5072 = vmatprep.subr.mxu0 %v1778
        %5073 = vmatpush2.msra.mxu0 %v1777
        %5074 = vmatprep.subr.mxu0 %v1774
        %5075 = vmatpush2.msra.mxu0 %v1773
        %5076 = vmatprep.subr.mxu0 %v1770
        %5077 = vmatpush2.msra.mxu0 %v1769
        %5078 = vmatprep.subr.mxu0 %v1766
        %5079 = vmatpush2.msra.mxu0 %v1765
        %5080 = vmatprep.subr.mxu0 %v1762
        %5081 = vmatpush2.msra.mxu0 %v1761
        %5082 = vmatprep.subr.mxu0 %v1758
        %5083 = vmatpush2.msra.mxu0 %v1757
        %5084 = vmatprep.subr.mxu0 %v1754
        %5085 = vmatpush2.msra.mxu0 %v1753
        %5086 = vmatprep.subr.mxu0 %v1750
        %5087 = vmatpush2.msra.mxu0 %v1749
        %5088 = vmatprep.subr.mxu0 %v1746
        %5089 = vmatpush2.msra.mxu0 %v1745
        %5090 = vmatprep.subr.mxu0 %v1742
        %5091 = vmatpush2.msra.mxu0 %v1741
        %5092 = vmatprep.mubr.f32.mxu0 %v394
        %5093 = vmatmul.mubr.f32.gmra.mxu0 %v393
        %v5094 = vpop.f32.mrf.mxu0
        %v5095 = vadd.f32 %v4880, %v5094
        %v5096 = vpop.f32.mrf.mxu0
        %v5097 = vadd.f32 %v4882, %v5096
        %5098 = vmatprep.mubr.f32.mxu0 %v410
        %5099 = vmatmul.mubr.f32.gmra.mxu0 %v409
        %v5100 = vpop.f32.mrf.mxu0
        %v5101 = vadd.f32 %v4886, %v5100
        %v5102 = vpop.f32.mrf.mxu0
        %v5103 = vadd.f32 %v4888, %v5102
        %5104 = vmatprep.mubr.f32.mxu0 %v426
        %5105 = vmatmul.mubr.f32.gmra.mxu0 %v425
        %v5106 = vpop.f32.mrf.mxu0
        %v5107 = vadd.f32 %v4892, %v5106
        %v5108 = vpop.f32.mrf.mxu0
        %v5109 = vadd.f32 %v4894, %v5108
        %5110 = vmatprep.mubr.f32.mxu0 %v442
        %5111 = vmatmul.mubr.f32.gmra.mxu0 %v441
        %v5112 = vpop.f32.mrf.mxu0
        %v5113 = vadd.f32 %v4898, %v5112
        %v5114 = vpop.f32.mrf.mxu0
        %v5115 = vadd.f32 %v4900, %v5114
        %5116 = vmatprep.mubr.f32.mxu0 %v458
        %5117 = vmatmul.mubr.f32.gmra.mxu0 %v457
        %v5118 = vpop.f32.mrf.mxu0
        %v5119 = vadd.f32 %v4904, %v5118
        %v5120 = vpop.f32.mrf.mxu0
        %v5121 = vadd.f32 %v4906, %v5120
        %5122 = vmatprep.mubr.f32.mxu0 %v474
        %5123 = vmatmul.mubr.f32.gmra.mxu0 %v473
        %v5124 = vpop.f32.mrf.mxu0
        %v5125 = vadd.f32 %v4910, %v5124
        %v5126 = vpop.f32.mrf.mxu0
        %v5127 = vadd.f32 %v4912, %v5126
        %5128 = vmatprep.mubr.f32.mxu0 %v490
        %5129 = vmatmul.mubr.f32.gmra.mxu0 %v489
        %v5130 = vpop.f32.mrf.mxu0
        %v5131 = vadd.f32 %v4916, %v5130
        %v5132 = vpop.f32.mrf.mxu0
        %v5133 = vadd.f32 %v4918, %v5132
        %5134 = vmatprep.mubr.f32.mxu0 %v506
        %5135 = vmatmul.mubr.f32.gmra.mxu0 %v505
        %v5136 = vpop.f32.mrf.mxu0
        %v5137 = vadd.f32 %v4922, %v5136
        %v5138 = vpop.f32.mrf.mxu0
        %v5139 = vadd.f32 %v4924, %v5138
        %5140 = vmatprep.mubr.f32.mxu0 %v522
        %5141 = vmatmul.mubr.f32.gmra.mxu0 %v521
        %v5142 = vpop.f32.mrf.mxu0
        %v5143 = vadd.f32 %v4928, %v5142
        %v5144 = vpop.f32.mrf.mxu0
        %v5145 = vadd.f32 %v4930, %v5144
        %5146 = vmatprep.mubr.f32.mxu0 %v538
        %5147 = vmatmul.mubr.f32.gmra.mxu0 %v537
        %v5148 = vpop.f32.mrf.mxu0
        %v5149 = vadd.f32 %v4934, %v5148
        %v5150 = vpop.f32.mrf.mxu0
        %v5151 = vadd.f32 %v4936, %v5150
        %5152 = vmatprep.mubr.f32.mxu0 %v554
        %5153 = vmatmul.mubr.f32.gmra.mxu0 %v553
        %v5154 = vpop.f32.mrf.mxu0
        %v5155 = vadd.f32 %v4940, %v5154
        %v5156 = vpop.f32.mrf.mxu0
        %v5157 = vadd.f32 %v4942, %v5156
        %5158 = vmatprep.mubr.f32.mxu0 %v570
        %5159 = vmatmul.mubr.f32.gmra.mxu0 %v569
        %v5160 = vpop.f32.mrf.mxu0
        %v5161 = vadd.f32 %v4946, %v5160
        %v5162 = vpop.f32.mrf.mxu0
        %v5163 = vadd.f32 %v4948, %v5162
        %5164 = vmatprep.mubr.f32.mxu0 %v586
        %5165 = vmatmul.mubr.f32.gmra.mxu0 %v585
        %v5166 = vpop.f32.mrf.mxu0
        %v5167 = vadd.f32 %v4952, %v5166
        %v5168 = vpop.f32.mrf.mxu0
        %v5169 = vadd.f32 %v4954, %v5168
        %5170 = vmatprep.mubr.f32.mxu0 %v602
        %5171 = vmatmul.mubr.f32.gmra.mxu0 %v601
        %v5172 = vpop.f32.mrf.mxu0
        %v5173 = vadd.f32 %v4958, %v5172
        %v5174 = vpop.f32.mrf.mxu0
        %v5175 = vadd.f32 %v4960, %v5174
        %5176 = vmatprep.mubr.f32.mxu0 %v618
        %5177 = vmatmul.mubr.f32.gmra.mxu0 %v617
        %v5178 = vpop.f32.mrf.mxu0
        %v5179 = vadd.f32 %v4964, %v5178
        %v5180 = vpop.f32.mrf.mxu0
        %v5181 = vadd.f32 %v4966, %v5180
        %5182 = vmatprep.mubr.f32.mxu0 %v634
        %5183 = vmatmul.mubr.f32.gmra.mxu0 %v633
        %v5184 = vpop.f32.mrf.mxu0
        %v5185 = vadd.f32 %v4970, %v5184
        %v5186 = vpop.f32.mrf.mxu0
        %v5187 = vadd.f32 %v4972, %v5186
        %5188 = vmatprep.mubr.f32.mxu0 %v650
        %5189 = vmatmul.mubr.f32.gmra.mxu0 %v649
        %v5190 = vpop.f32.mrf.mxu0
        %v5191 = vadd.f32 %v4976, %v5190
        %v5192 = vpop.f32.mrf.mxu0
        %v5193 = vadd.f32 %v4978, %v5192
        %5194 = vmatprep.mubr.f32.mxu0 %v666
        %5195 = vmatmul.mubr.f32.gmra.mxu0 %v665
        %v5196 = vpop.f32.mrf.mxu0
        %v5197 = vadd.f32 %v4982, %v5196
        %v5198 = vpop.f32.mrf.mxu0
        %v5199 = vadd.f32 %v4984, %v5198
        %5200 = vmatprep.mubr.f32.mxu0 %v682
        %5201 = vmatmul.mubr.f32.gmra.mxu0 %v681
        %v5202 = vpop.f32.mrf.mxu0
        %v5203 = vadd.f32 %v4988, %v5202
        %v5204 = vpop.f32.mrf.mxu0
        %v5205 = vadd.f32 %v4990, %v5204
        %5206 = vmatprep.mubr.f32.mxu0 %v698
        %5207 = vmatmul.mubr.f32.gmra.mxu0 %v697
        %v5208 = vpop.f32.mrf.mxu0
        %v5209 = vadd.f32 %v4994, %v5208
        %v5210 = vpop.f32.mrf.mxu0
        %v5211 = vadd.f32 %v4996, %v5210
        %5212 = vmatprep.mubr.f32.mxu0 %v714
        %5213 = vmatmul.mubr.f32.gmra.mxu0 %v713
        %v5214 = vpop.f32.mrf.mxu0
        %v5215 = vadd.f32 %v5000, %v5214
        %v5216 = vpop.f32.mrf.mxu0
        %v5217 = vadd.f32 %v5002, %v5216
        %5218 = vmatprep.mubr.f32.mxu0 %v730
        %5219 = vmatmul.mubr.f32.gmra.mxu0 %v729
        %v5220 = vpop.f32.mrf.mxu0
        %v5221 = vadd.f32 %v5006, %v5220
        %v5222 = vpop.f32.mrf.mxu0
        %v5223 = vadd.f32 %v5008, %v5222
        %5224 = vmatprep.mubr.f32.mxu0 %v746
        %5225 = vmatmul.mubr.f32.gmra.mxu0 %v745
        %v5226 = vpop.f32.mrf.mxu0
        %v5227 = vadd.f32 %v5012, %v5226
        %v5228 = vpop.f32.mrf.mxu0
        %v5229 = vadd.f32 %v5014, %v5228
        %5230 = vmatprep.mubr.f32.mxu0 %v762
        %5231 = vmatmul.mubr.f32.gmra.mxu0 %v761
        %v5232 = vpop.f32.mrf.mxu0
        %v5233 = vadd.f32 %v5018, %v5232
        %v5234 = vpop.f32.mrf.mxu0
        %v5235 = vadd.f32 %v5020, %v5234
        %5236 = vmatprep.mubr.f32.mxu0 %v778
        %5237 = vmatmul.mubr.f32.gmra.mxu0 %v777
        %v5238 = vpop.f32.mrf.mxu0
        %v5239 = vadd.f32 %v5024, %v5238
        %v5240 = vpop.f32.mrf.mxu0
        %v5241 = vadd.f32 %v5026, %v5240
        %5242 = vdwg.mxu0
        %v5243 = vld [vmem:[#allocation7] sm:$0xf]
        %v5245 = vlaneseq
        %v5246 = vshrl.u32 %v5245, 7
        %v5247 = vsub.s32 0, %v5246
        %v5248 = vrot.slane %v5243, %v5247
        %v5249 = vlaneseq
        %v5250 = vshrl.u32 %v5249, 7
        %v5251 = vsub.s32 1, %v5250
        %v5252 = vrot.slane %v5243, %v5251
        %v5253 = vlaneseq
        %v5254 = vshrl.u32 %v5253, 7
        %v5255 = vsub.s32 2, %v5254
        %v5256 = vrot.slane %v5243, %v5255
        %v5257 = vlaneseq
        %v5258 = vshrl.u32 %v5257, 7
        %v5259 = vsub.s32 3, %v5258
        %v5260 = vrot.slane %v5243, %v5259
        %v5265 = vmul.f32 %v3375, %v5248
        %v5266 = vmul.f32 %v3377, %v5252
        %v5267 = vmul.f32 %v5095, %v5256
        %v5268 = vmul.f32 %v5097, %v5260
        %v5269 = vmul.f32 %v3381, %v5248
        %v5270 = vmul.f32 %v3383, %v5252
        %v5271 = vmul.f32 %v5101, %v5256
        %v5272 = vmul.f32 %v5103, %v5260
        %v5273 = vmul.f32 %v3387, %v5248
        %v5274 = vmul.f32 %v3389, %v5252
        %v5275 = vmul.f32 %v5107, %v5256
        %v5276 = vmul.f32 %v5109, %v5260
        %v5277 = vmul.f32 %v3393, %v5248
        %v5278 = vmul.f32 %v3395, %v5252
        %v5279 = vmul.f32 %v5113, %v5256
        %v5280 = vmul.f32 %v5115, %v5260
        %v5281 = vmul.f32 %v3399, %v5248
        %v5282 = vmul.f32 %v3401, %v5252
        %v5283 = vmul.f32 %v5119, %v5256
        %v5284 = vmul.f32 %v5121, %v5260
        %v5285 = vmul.f32 %v3405, %v5248
        %v5286 = vmul.f32 %v3407, %v5252
        %v5287 = vmul.f32 %v5125, %v5256
        %v5288 = vmul.f32 %v5127, %v5260
        %v5289 = vmul.f32 %v3411, %v5248
        %v5290 = vmul.f32 %v3413, %v5252
        %v5291 = vmul.f32 %v5131, %v5256
        %v5292 = vmul.f32 %v5133, %v5260
        %v5293 = vmul.f32 %v3417, %v5248
        %v5294 = vmul.f32 %v3419, %v5252
        %v5295 = vmul.f32 %v5137, %v5256
        %v5296 = vmul.f32 %v5139, %v5260
        %v5297 = vmul.f32 %v3423, %v5248
        %v5298 = vmul.f32 %v3425, %v5252
        %v5299 = vmul.f32 %v5143, %v5256
        %v5300 = vmul.f32 %v5145, %v5260
        %v5301 = vmul.f32 %v3429, %v5248
        %v5302 = vmul.f32 %v3431, %v5252
        %v5303 = vmul.f32 %v5149, %v5256
        %v5304 = vmul.f32 %v5151, %v5260
        %v5305 = vmul.f32 %v3435, %v5248
        %v5306 = vmul.f32 %v3437, %v5252
        %v5307 = vmul.f32 %v5155, %v5256
        %v5308 = vmul.f32 %v5157, %v5260
        %v5309 = vmul.f32 %v3441, %v5248
        %v5310 = vmul.f32 %v3443, %v5252
        %v5311 = vmul.f32 %v5161, %v5256
        %v5312 = vmul.f32 %v5163, %v5260
        %v5313 = vmul.f32 %v3447, %v5248
        %v5314 = vmul.f32 %v3449, %v5252
        %v5315 = vmul.f32 %v5167, %v5256
        %v5316 = vmul.f32 %v5169, %v5260
        %v5317 = vmul.f32 %v3453, %v5248
        %v5318 = vmul.f32 %v3455, %v5252
        %v5319 = vmul.f32 %v5173, %v5256
        %v5320 = vmul.f32 %v5175, %v5260
        %v5321 = vmul.f32 %v3459, %v5248
        %v5322 = vmul.f32 %v3461, %v5252
        %v5323 = vmul.f32 %v5179, %v5256
        %v5324 = vmul.f32 %v5181, %v5260
        %v5325 = vmul.f32 %v3465, %v5248
        %v5326 = vmul.f32 %v3467, %v5252
        %v5327 = vmul.f32 %v5185, %v5256
        %v5328 = vmul.f32 %v5187, %v5260
        %v5329 = vmul.f32 %v3471, %v5248
        %v5330 = vmul.f32 %v3473, %v5252
        %v5331 = vmul.f32 %v5191, %v5256
        %v5332 = vmul.f32 %v5193, %v5260
        %v5333 = vmul.f32 %v3477, %v5248
        %v5334 = vmul.f32 %v3479, %v5252
        %v5335 = vmul.f32 %v5197, %v5256
        %v5336 = vmul.f32 %v5199, %v5260
        %v5337 = vmul.f32 %v3483, %v5248
        %v5338 = vmul.f32 %v3485, %v5252
        %v5339 = vmul.f32 %v5203, %v5256
        %v5340 = vmul.f32 %v5205, %v5260
        %v5341 = vmul.f32 %v3489, %v5248
        %v5342 = vmul.f32 %v3491, %v5252
        %v5343 = vmul.f32 %v5209, %v5256
        %v5344 = vmul.f32 %v5211, %v5260
        %v5345 = vmul.f32 %v3495, %v5248
        %v5346 = vmul.f32 %v3497, %v5252
        %v5347 = vmul.f32 %v5215, %v5256
        %v5348 = vmul.f32 %v5217, %v5260
        %v5349 = vmul.f32 %v3501, %v5248
        %v5350 = vmul.f32 %v3503, %v5252
        %v5351 = vmul.f32 %v5221, %v5256
        %v5352 = vmul.f32 %v5223, %v5260
        %v5353 = vmul.f32 %v3507, %v5248
        %v5354 = vmul.f32 %v3509, %v5252
        %v5355 = vmul.f32 %v5227, %v5256
        %v5356 = vmul.f32 %v5229, %v5260
        %v5357 = vmul.f32 %v3513, %v5248
        %v5358 = vmul.f32 %v3515, %v5252
        %v5359 = vmul.f32 %v5233, %v5256
        %v5360 = vmul.f32 %v5235, %v5260
        %v5361 = vmul.f32 %v3519, %v5248
        %v5362 = vmul.f32 %v3521, %v5252
        %v5363 = vmul.f32 %v5239, %v5256
        %v5364 = vmul.f32 %v5241, %v5260
        %v5365 = vld [vmem:[#allocation8] sm:$0xf]
        %v5367 = vlaneseq
        %v5368 = vshrl.u32 %v5367, 7
        %v5369 = vsub.s32 0, %v5368
        %v5370 = vrot.slane %v5365, %v5369
        %v5371 = vlaneseq
        %v5372 = vshrl.u32 %v5371, 7
        %v5373 = vsub.s32 1, %v5372
        %v5374 = vrot.slane %v5365, %v5373
        %v5375 = vlaneseq
        %v5376 = vshrl.u32 %v5375, 7
        %v5377 = vsub.s32 2, %v5376
        %v5378 = vrot.slane %v5365, %v5377
        %v5379 = vlaneseq
        %v5380 = vshrl.u32 %v5379, 7
        %v5381 = vsub.s32 3, %v5380
        %v5382 = vrot.slane %v5365, %v5381
        %v5387 = vadd.f32 %v5265, %v5370
        %v5388 = vadd.f32 %v5266, %v5374
        %v5389 = vadd.f32 %v5267, %v5378
        %v5390 = vadd.f32 %v5268, %v5382
        %v5391 = vadd.f32 %v5269, %v5370
        %v5392 = vadd.f32 %v5270, %v5374
        %v5393 = vadd.f32 %v5271, %v5378
        %v5394 = vadd.f32 %v5272, %v5382
        %v5395 = vadd.f32 %v5273, %v5370
        %v5396 = vadd.f32 %v5274, %v5374
        %v5397 = vadd.f32 %v5275, %v5378
        %v5398 = vadd.f32 %v5276, %v5382
        %v5399 = vadd.f32 %v5277, %v5370
        %v5400 = vadd.f32 %v5278, %v5374
        %v5401 = vadd.f32 %v5279, %v5378
        %v5402 = vadd.f32 %v5280, %v5382
        %v5403 = vadd.f32 %v5281, %v5370
        %v5404 = vadd.f32 %v5282, %v5374
        %v5405 = vadd.f32 %v5283, %v5378
        %v5406 = vadd.f32 %v5284, %v5382
        %v5407 = vadd.f32 %v5285, %v5370
        %v5408 = vadd.f32 %v5286, %v5374
        %v5409 = vadd.f32 %v5287, %v5378
        %v5410 = vadd.f32 %v5288, %v5382
        %v5411 = vadd.f32 %v5289, %v5370
        %v5412 = vadd.f32 %v5290, %v5374
        %v5413 = vadd.f32 %v5291, %v5378
        %v5414 = vadd.f32 %v5292, %v5382
        %v5415 = vadd.f32 %v5293, %v5370
        %v5416 = vadd.f32 %v5294, %v5374
        %v5417 = vadd.f32 %v5295, %v5378
        %v5418 = vadd.f32 %v5296, %v5382
        %v5419 = vadd.f32 %v5297, %v5370
        %v5420 = vadd.f32 %v5298, %v5374
        %v5421 = vadd.f32 %v5299, %v5378
        %v5422 = vadd.f32 %v5300, %v5382
        %v5423 = vadd.f32 %v5301, %v5370
        %v5424 = vadd.f32 %v5302, %v5374
        %v5425 = vadd.f32 %v5303, %v5378
        %v5426 = vadd.f32 %v5304, %v5382
        %v5427 = vadd.f32 %v5305, %v5370
        %v5428 = vadd.f32 %v5306, %v5374
        %v5429 = vadd.f32 %v5307, %v5378
        %v5430 = vadd.f32 %v5308, %v5382
        %v5431 = vadd.f32 %v5309, %v5370
        %v5432 = vadd.f32 %v5310, %v5374
        %v5433 = vadd.f32 %v5311, %v5378
        %v5434 = vadd.f32 %v5312, %v5382
        %v5435 = vadd.f32 %v5313, %v5370
        %v5436 = vadd.f32 %v5314, %v5374
        %v5437 = vadd.f32 %v5315, %v5378
        %v5438 = vadd.f32 %v5316, %v5382
        %v5439 = vadd.f32 %v5317, %v5370
        %v5440 = vadd.f32 %v5318, %v5374
        %v5441 = vadd.f32 %v5319, %v5378
        %v5442 = vadd.f32 %v5320, %v5382
        %v5443 = vadd.f32 %v5321, %v5370
        %v5444 = vadd.f32 %v5322, %v5374
        %v5445 = vadd.f32 %v5323, %v5378
        %v5446 = vadd.f32 %v5324, %v5382
        %v5447 = vadd.f32 %v5325, %v5370
        %v5448 = vadd.f32 %v5326, %v5374
        %v5449 = vadd.f32 %v5327, %v5378
        %v5450 = vadd.f32 %v5328, %v5382
        %v5451 = vadd.f32 %v5329, %v5370
        %v5452 = vadd.f32 %v5330, %v5374
        %v5453 = vadd.f32 %v5331, %v5378
        %v5454 = vadd.f32 %v5332, %v5382
        %v5455 = vadd.f32 %v5333, %v5370
        %v5456 = vadd.f32 %v5334, %v5374
        %v5457 = vadd.f32 %v5335, %v5378
        %v5458 = vadd.f32 %v5336, %v5382
        %v5459 = vadd.f32 %v5337, %v5370
        %v5460 = vadd.f32 %v5338, %v5374
        %v5461 = vadd.f32 %v5339, %v5378
        %v5462 = vadd.f32 %v5340, %v5382
        %v5463 = vadd.f32 %v5341, %v5370
        %v5464 = vadd.f32 %v5342, %v5374
        %v5465 = vadd.f32 %v5343, %v5378
        %v5466 = vadd.f32 %v5344, %v5382
        %v5467 = vadd.f32 %v5345, %v5370
        %v5468 = vadd.f32 %v5346, %v5374
        %v5469 = vadd.f32 %v5347, %v5378
        %v5470 = vadd.f32 %v5348, %v5382
        %v5471 = vadd.f32 %v5349, %v5370
        %v5472 = vadd.f32 %v5350, %v5374
        %v5473 = vadd.f32 %v5351, %v5378
        %v5474 = vadd.f32 %v5352, %v5382
        %v5475 = vadd.f32 %v5353, %v5370
        %v5476 = vadd.f32 %v5354, %v5374
        %v5477 = vadd.f32 %v5355, %v5378
        %v5478 = vadd.f32 %v5356, %v5382
        %v5479 = vadd.f32 %v5357, %v5370
        %v5480 = vadd.f32 %v5358, %v5374
        %v5481 = vadd.f32 %v5359, %v5378
        %v5482 = vadd.f32 %v5360, %v5382
        %v5483 = vadd.f32 %v5361, %v5370
        %v5484 = vadd.f32 %v5362, %v5374
        %v5485 = vadd.f32 %v5363, %v5378
        %v5486 = vadd.f32 %v5364, %v5382
        %v5487 = vmax.f32 %v5387, 0.0
        %v5488 = vmax.f32 %v5388, 0.0
        %v5489 = vmax.f32 %v5389, 0.0
        %v5490 = vmax.f32 %v5390, 0.0
        %v5491 = vmax.f32 %v5391, 0.0
        %v5492 = vmax.f32 %v5392, 0.0
        %v5493 = vmax.f32 %v5393, 0.0
        %v5494 = vmax.f32 %v5394, 0.0
        %v5495 = vmax.f32 %v5395, 0.0
        %v5496 = vmax.f32 %v5396, 0.0
        %v5497 = vmax.f32 %v5397, 0.0
        %v5498 = vmax.f32 %v5398, 0.0
        %v5499 = vmax.f32 %v5399, 0.0
        %v5500 = vmax.f32 %v5400, 0.0
        %v5501 = vmax.f32 %v5401, 0.0
        %v5502 = vmax.f32 %v5402, 0.0
        %v5503 = vmax.f32 %v5403, 0.0
        %v5504 = vmax.f32 %v5404, 0.0
        %v5505 = vmax.f32 %v5405, 0.0
        %v5506 = vmax.f32 %v5406, 0.0
        %v5507 = vmax.f32 %v5407, 0.0
        %v5508 = vmax.f32 %v5408, 0.0
        %v5509 = vmax.f32 %v5409, 0.0
        %v5510 = vmax.f32 %v5410, 0.0
        %v5511 = vmax.f32 %v5411, 0.0
        %v5512 = vmax.f32 %v5412, 0.0
        %v5513 = vmax.f32 %v5413, 0.0
        %v5514 = vmax.f32 %v5414, 0.0
        %v5515 = vmax.f32 %v5415, 0.0
        %v5516 = vmax.f32 %v5416, 0.0
        %v5517 = vmax.f32 %v5417, 0.0
        %v5518 = vmax.f32 %v5418, 0.0
        %v5519 = vmax.f32 %v5419, 0.0
        %v5520 = vmax.f32 %v5420, 0.0
        %v5521 = vmax.f32 %v5421, 0.0
        %v5522 = vmax.f32 %v5422, 0.0
        %v5523 = vmax.f32 %v5423, 0.0
        %v5524 = vmax.f32 %v5424, 0.0
        %v5525 = vmax.f32 %v5425, 0.0
        %v5526 = vmax.f32 %v5426, 0.0
        %v5527 = vmax.f32 %v5427, 0.0
        %v5528 = vmax.f32 %v5428, 0.0
        %v5529 = vmax.f32 %v5429, 0.0
        %v5530 = vmax.f32 %v5430, 0.0
        %v5531 = vmax.f32 %v5431, 0.0
        %v5532 = vmax.f32 %v5432, 0.0
        %v5533 = vmax.f32 %v5433, 0.0
        %v5534 = vmax.f32 %v5434, 0.0
        %v5535 = vmax.f32 %v5435, 0.0
        %v5536 = vmax.f32 %v5436, 0.0
        %v5537 = vmax.f32 %v5437, 0.0
        %v5538 = vmax.f32 %v5438, 0.0
        %v5539 = vmax.f32 %v5439, 0.0
        %v5540 = vmax.f32 %v5440, 0.0
        %v5541 = vmax.f32 %v5441, 0.0
        %v5542 = vmax.f32 %v5442, 0.0
        %v5543 = vmax.f32 %v5443, 0.0
        %v5544 = vmax.f32 %v5444, 0.0
        %v5545 = vmax.f32 %v5445, 0.0
        %v5546 = vmax.f32 %v5446, 0.0
        %v5547 = vmax.f32 %v5447, 0.0
        %v5548 = vmax.f32 %v5448, 0.0
        %v5549 = vmax.f32 %v5449, 0.0
        %v5550 = vmax.f32 %v5450, 0.0
        %v5551 = vmax.f32 %v5451, 0.0
        %v5552 = vmax.f32 %v5452, 0.0
        %v5553 = vmax.f32 %v5453, 0.0
        %v5554 = vmax.f32 %v5454, 0.0
        %v5555 = vmax.f32 %v5455, 0.0
        %v5556 = vmax.f32 %v5456, 0.0
        %v5557 = vmax.f32 %v5457, 0.0
        %v5558 = vmax.f32 %v5458, 0.0
        %v5559 = vmax.f32 %v5459, 0.0
        %v5560 = vmax.f32 %v5460, 0.0
        %v5561 = vmax.f32 %v5461, 0.0
        %v5562 = vmax.f32 %v5462, 0.0
        %v5563 = vmax.f32 %v5463, 0.0
        %v5564 = vmax.f32 %v5464, 0.0
        %v5565 = vmax.f32 %v5465, 0.0
        %v5566 = vmax.f32 %v5466, 0.0
        %v5567 = vmax.f32 %v5467, 0.0
        %v5568 = vmax.f32 %v5468, 0.0
        %v5569 = vmax.f32 %v5469, 0.0
        %v5570 = vmax.f32 %v5470, 0.0
        %v5571 = vmax.f32 %v5471, 0.0
        %v5572 = vmax.f32 %v5472, 0.0
        %v5573 = vmax.f32 %v5473, 0.0
        %v5574 = vmax.f32 %v5474, 0.0
        %v5575 = vmax.f32 %v5475, 0.0
        %v5576 = vmax.f32 %v5476, 0.0
        %v5577 = vmax.f32 %v5477, 0.0
        %v5578 = vmax.f32 %v5478, 0.0
        %v5579 = vmax.f32 %v5479, 0.0
        %v5580 = vmax.f32 %v5480, 0.0
        %v5581 = vmax.f32 %v5481, 0.0
        %v5582 = vmax.f32 %v5482, 0.0
        %v5583 = vmax.f32 %v5483, 0.0
        %v5584 = vmax.f32 %v5484, 0.0
        %v5585 = vmax.f32 %v5485, 0.0
        %v5586 = vmax.f32 %v5486, 0.0
        %v5587 = vld [vmem:[#allocation10] sm:$0xff]
        %v5588 = vld [vmem:[#allocation10 + $0x8] sm:$0xff]
        %v5589 = vld [vmem:[#allocation10 + $0x10] sm:$0xff]
        %v5590 = vld [vmem:[#allocation10 + $0x18] sm:$0xff]
        %v5591 = vld [vmem:[#allocation10 + $0x20] sm:$0xff]
        %v5592 = vld [vmem:[#allocation10 + $0x28] sm:$0xff]
        %v5593 = vld [vmem:[#allocation10 + $0x30] sm:$0xff]
        %v5594 = vld [vmem:[#allocation10 + $0x38] sm:$0xff]
        %v5595 = vld [vmem:[#allocation10 + $0x40] sm:$0xff]
        %v5596 = vld [vmem:[#allocation10 + $0x48] sm:$0xff]
        %v5597 = vld [vmem:[#allocation10 + $0x50] sm:$0xff]
        %v5598 = vld [vmem:[#allocation10 + $0x58] sm:$0xff]
        %v5599 = vld [vmem:[#allocation10 + $0x60] sm:$0xff]
        %v5600 = vld [vmem:[#allocation10 + $0x68] sm:$0xff]
        %v5601 = vld [vmem:[#allocation10 + $0x70] sm:$0xff]
        %v5602 = vld [vmem:[#allocation10 + $0x78] sm:$0xff]
        %v5603 = vld [vmem:[#allocation10 + $0x80] sm:$0xff]
        %v5604 = vld [vmem:[#allocation10 + $0x88] sm:$0xff]
        %v5605 = vld [vmem:[#allocation10 + $0x90] sm:$0xff]
        %v5606 = vld [vmem:[#allocation10 + $0x98] sm:$0xff]
        %v5607 = vld [vmem:[#allocation10 + $0xa0] sm:$0xff]
        %v5608 = vld [vmem:[#allocation10 + $0xa8] sm:$0xff]
        %v5609 = vld [vmem:[#allocation10 + $0xb0] sm:$0xff]
        %v5610 = vld [vmem:[#allocation10 + $0xb8] sm:$0xff]
        %v5611 = vld [vmem:[#allocation10 + $0xc0] sm:$0xff]
        %v5612 = vld [vmem:[#allocation10 + $0xc8] sm:$0xff]
        %v5613 = vld [vmem:[#allocation10 + $0xd0] sm:$0xff]
        %v5614 = vld [vmem:[#allocation10 + $0xd8] sm:$0xff]
        %v5615 = vld [vmem:[#allocation10 + $0xe0] sm:$0xff]
        %v5616 = vld [vmem:[#allocation10 + $0xe8] sm:$0xff]
        %v5617 = vld [vmem:[#allocation10 + $0xf0] sm:$0xff]
        %v5618 = vld [vmem:[#allocation10 + $0xf8] sm:$0xff]
        %v5619 = vld [vmem:[#allocation10 + $0x100] sm:$0xff]
        %v5620 = vld [vmem:[#allocation10 + $0x108] sm:$0xff]
        %v5621 = vld [vmem:[#allocation10 + $0x110] sm:$0xff]
        %v5622 = vld [vmem:[#allocation10 + $0x118] sm:$0xff]
        %v5623 = vld [vmem:[#allocation10 + $0x120] sm:$0xff]
        %v5624 = vld [vmem:[#allocation10 + $0x128] sm:$0xff]
        %v5625 = vld [vmem:[#allocation10 + $0x130] sm:$0xff]
        %v5626 = vld [vmem:[#allocation10 + $0x138] sm:$0xff]
        %v5627 = vld [vmem:[#allocation10 + $0x140] sm:$0xff]
        %v5628 = vld [vmem:[#allocation10 + $0x148] sm:$0xff]
        %v5629 = vld [vmem:[#allocation10 + $0x150] sm:$0xff]
        %v5630 = vld [vmem:[#allocation10 + $0x158] sm:$0xff]
        %v5631 = vld [vmem:[#allocation10 + $0x160] sm:$0xff]
        %v5632 = vld [vmem:[#allocation10 + $0x168] sm:$0xff]
        %v5633 = vld [vmem:[#allocation10 + $0x170] sm:$0xff]
        %v5634 = vld [vmem:[#allocation10 + $0x178] sm:$0xff]
        %v5635 = vld [vmem:[#allocation10 + $0x180] sm:$0xff]
        %v5636 = vld [vmem:[#allocation10 + $0x188] sm:$0xff]
        %v5637 = vld [vmem:[#allocation10 + $0x190] sm:$0xff]
        %v5638 = vld [vmem:[#allocation10 + $0x198] sm:$0xff]
        %v5639 = vld [vmem:[#allocation10 + $0x1a0] sm:$0xff]
        %v5640 = vld [vmem:[#allocation10 + $0x1a8] sm:$0xff]
        %v5641 = vld [vmem:[#allocation10 + $0x1b0] sm:$0xff]
        %v5642 = vld [vmem:[#allocation10 + $0x1b8] sm:$0xff]
        %v5643 = vld [vmem:[#allocation10 + $0x1c0] sm:$0xff]
        %v5644 = vld [vmem:[#allocation10 + $0x1c8] sm:$0xff]
        %v5645 = vld [vmem:[#allocation10 + $0x1d0] sm:$0xff]
        %v5646 = vld [vmem:[#allocation10 + $0x1d8] sm:$0xff]
        %v5647 = vld [vmem:[#allocation10 + $0x1e0] sm:$0xff]
        %v5648 = vld [vmem:[#allocation10 + $0x1e8] sm:$0xff]
        %v5649 = vld [vmem:[#allocation10 + $0x1f0] sm:$0xff]
        %v5650 = vld [vmem:[#allocation10 + $0x1f8] sm:$0xff]
        %5651 = vmatprep.subr.mxu0 0.0
        %5652 = vmatpush1.msra.mxu0 %v5602
        %5653 = vmatprep.subr.mxu0 0.0
        %5654 = vmatpush1.msra.mxu0 %v5601
        %5655 = vmatprep.subr.mxu0 0.0
        %5656 = vmatpush1.msra.mxu0 %v5600
        %5657 = vmatprep.subr.mxu0 0.0
        %5658 = vmatpush1.msra.mxu0 %v5599
        %5659 = vmatprep.subr.mxu0 0.0
        %5660 = vmatpush1.msra.mxu0 %v5598
        %5661 = vmatprep.subr.mxu0 0.0
        %5662 = vmatpush1.msra.mxu0 %v5597
        %5663 = vmatprep.subr.mxu0 0.0
        %5664 = vmatpush1.msra.mxu0 %v5596
        %5665 = vmatprep.subr.mxu0 0.0
        %5666 = vmatpush1.msra.mxu0 %v5595
        %5667 = vmatprep.subr.mxu0 0.0
        %5668 = vmatpush1.msra.mxu0 %v5594
        %5669 = vmatprep.subr.mxu0 0.0
        %5670 = vmatpush1.msra.mxu0 %v5593
        %5671 = vmatprep.subr.mxu0 0.0
        %5672 = vmatpush1.msra.mxu0 %v5592
        %5673 = vmatprep.subr.mxu0 0.0
        %5674 = vmatpush1.msra.mxu0 %v5591
        %5675 = vmatprep.subr.mxu0 0.0
        %5676 = vmatpush1.msra.mxu0 %v5590
        %5677 = vmatprep.subr.mxu0 0.0
        %5678 = vmatpush1.msra.mxu0 %v5589
        %5679 = vmatprep.subr.mxu0 0.0
        %5680 = vmatpush1.msra.mxu0 %v5588
        %5681 = vmatprep.subr.mxu0 0.0
        %5682 = vmatpush1.msra.mxu0 %v5587
        %5683 = vmatprep.subr.mxu0 0.0
        %5684 = vmatpush2.msra.mxu0 %v5618
        %5685 = vmatprep.subr.mxu0 0.0
        %5686 = vmatpush2.msra.mxu0 %v5617
        %5687 = vmatprep.subr.mxu0 0.0
        %5688 = vmatpush2.msra.mxu0 %v5616
        %5689 = vmatprep.subr.mxu0 0.0
        %5690 = vmatpush2.msra.mxu0 %v5615
        %5691 = vmatprep.subr.mxu0 0.0
        %5692 = vmatpush2.msra.mxu0 %v5614
        %5693 = vmatprep.subr.mxu0 0.0
        %5694 = vmatpush2.msra.mxu0 %v5613
        %5695 = vmatprep.subr.mxu0 0.0
        %5696 = vmatpush2.msra.mxu0 %v5612
        %5697 = vmatprep.subr.mxu0 0.0
        %5698 = vmatpush2.msra.mxu0 %v5611
        %5699 = vmatprep.subr.mxu0 0.0
        %5700 = vmatpush2.msra.mxu0 %v5610
        %5701 = vmatprep.subr.mxu0 0.0
        %5702 = vmatpush2.msra.mxu0 %v5609
        %5703 = vmatprep.subr.mxu0 0.0
        %5704 = vmatpush2.msra.mxu0 %v5608
        %5705 = vmatprep.subr.mxu0 0.0
        %5706 = vmatpush2.msra.mxu0 %v5607
        %5707 = vmatprep.subr.mxu0 0.0
        %5708 = vmatpush2.msra.mxu0 %v5606
        %5709 = vmatprep.subr.mxu0 0.0
        %5710 = vmatpush2.msra.mxu0 %v5605
        %5711 = vmatprep.subr.mxu0 0.0
        %5712 = vmatpush2.msra.mxu0 %v5604
        %5713 = vmatprep.subr.mxu0 0.0
        %5714 = vmatpush2.msra.mxu0 %v5603
        %5715 = vmatprep.mubr.f32.mxu0 %v5488
        %5716 = vmatmul.mubr.f32.gmra.mxu0 %v5487
        %v5717 = vpop.f32.mrf.mxu0
        %v5718 = vadd.f32 0.0, %v5717
        %v5719 = vpop.f32.mrf.mxu0
        %5720 = vmatprep.mubr.f32.mxu0 %v5492
        %5721 = vmatmul.mubr.f32.gmra.mxu0 %v5491
        %v5722 = vpop.f32.mrf.mxu0
        %v5723 = vadd.f32 0.0, %v5722
        %v5724 = vpop.f32.mrf.mxu0
        %5725 = vmatprep.mubr.f32.mxu0 %v5496
        %5726 = vmatmul.mubr.f32.gmra.mxu0 %v5495
        %v5727 = vpop.f32.mrf.mxu0
        %v5728 = vadd.f32 0.0, %v5727
        %v5729 = vpop.f32.mrf.mxu0
        %5730 = vmatprep.mubr.f32.mxu0 %v5500
        %5731 = vmatmul.mubr.f32.gmra.mxu0 %v5499
        %v5732 = vpop.f32.mrf.mxu0
        %v5733 = vadd.f32 0.0, %v5732
        %v5734 = vpop.f32.mrf.mxu0
        %5735 = vmatprep.mubr.f32.mxu0 %v5504
        %5736 = vmatmul.mubr.f32.gmra.mxu0 %v5503
        %v5737 = vpop.f32.mrf.mxu0
        %v5738 = vadd.f32 0.0, %v5737
        %v5739 = vpop.f32.mrf.mxu0
        %5740 = vmatprep.mubr.f32.mxu0 %v5508
        %5741 = vmatmul.mubr.f32.gmra.mxu0 %v5507
        %v5742 = vpop.f32.mrf.mxu0
        %v5743 = vadd.f32 0.0, %v5742
        %v5744 = vpop.f32.mrf.mxu0
        %5745 = vmatprep.mubr.f32.mxu0 %v5512
        %5746 = vmatmul.mubr.f32.gmra.mxu0 %v5511
        %v5747 = vpop.f32.mrf.mxu0
        %v5748 = vadd.f32 0.0, %v5747
        %v5749 = vpop.f32.mrf.mxu0
        %5750 = vmatprep.mubr.f32.mxu0 %v5516
        %5751 = vmatmul.mubr.f32.gmra.mxu0 %v5515
        %v5752 = vpop.f32.mrf.mxu0
        %v5753 = vadd.f32 0.0, %v5752
        %v5754 = vpop.f32.mrf.mxu0
        %5755 = vmatprep.mubr.f32.mxu0 %v5520
        %5756 = vmatmul.mubr.f32.gmra.mxu0 %v5519
        %v5757 = vpop.f32.mrf.mxu0
        %v5758 = vadd.f32 0.0, %v5757
        %v5759 = vpop.f32.mrf.mxu0
        %5760 = vmatprep.mubr.f32.mxu0 %v5524
        %5761 = vmatmul.mubr.f32.gmra.mxu0 %v5523
        %v5762 = vpop.f32.mrf.mxu0
        %v5763 = vadd.f32 0.0, %v5762
        %v5764 = vpop.f32.mrf.mxu0
        %5765 = vmatprep.mubr.f32.mxu0 %v5528
        %5766 = vmatmul.mubr.f32.gmra.mxu0 %v5527
        %v5767 = vpop.f32.mrf.mxu0
        %v5768 = vadd.f32 0.0, %v5767
        %v5769 = vpop.f32.mrf.mxu0
        %5770 = vmatprep.mubr.f32.mxu0 %v5532
        %5771 = vmatmul.mubr.f32.gmra.mxu0 %v5531
        %v5772 = vpop.f32.mrf.mxu0
        %v5773 = vadd.f32 0.0, %v5772
        %v5774 = vpop.f32.mrf.mxu0
        %5775 = vmatprep.mubr.f32.mxu0 %v5536
        %5776 = vmatmul.mubr.f32.gmra.mxu0 %v5535
        %v5777 = vpop.f32.mrf.mxu0
        %v5778 = vadd.f32 0.0, %v5777
        %v5779 = vpop.f32.mrf.mxu0
        %5780 = vmatprep.mubr.f32.mxu0 %v5540
        %5781 = vmatmul.mubr.f32.gmra.mxu0 %v5539
        %v5782 = vpop.f32.mrf.mxu0
        %v5783 = vadd.f32 0.0, %v5782
        %v5784 = vpop.f32.mrf.mxu0
        %5785 = vmatprep.mubr.f32.mxu0 %v5544
        %5786 = vmatmul.mubr.f32.gmra.mxu0 %v5543
        %v5787 = vpop.f32.mrf.mxu0
        %v5788 = vadd.f32 0.0, %v5787
        %v5789 = vpop.f32.mrf.mxu0
        %5790 = vmatprep.mubr.f32.mxu0 %v5548
        %5791 = vmatmul.mubr.f32.gmra.mxu0 %v5547
        %v5792 = vpop.f32.mrf.mxu0
        %v5793 = vadd.f32 0.0, %v5792
        %v5794 = vpop.f32.mrf.mxu0
        %5795 = vmatprep.mubr.f32.mxu0 %v5552
        %5796 = vmatmul.mubr.f32.gmra.mxu0 %v5551
        %v5797 = vpop.f32.mrf.mxu0
        %v5798 = vadd.f32 0.0, %v5797
        %v5799 = vpop.f32.mrf.mxu0
        %5800 = vmatprep.mubr.f32.mxu0 %v5556
        %5801 = vmatmul.mubr.f32.gmra.mxu0 %v5555
        %v5802 = vpop.f32.mrf.mxu0
        %v5803 = vadd.f32 0.0, %v5802
        %v5804 = vpop.f32.mrf.mxu0
        %5805 = vmatprep.mubr.f32.mxu0 %v5560
        %5806 = vmatmul.mubr.f32.gmra.mxu0 %v5559
        %v5807 = vpop.f32.mrf.mxu0
        %v5808 = vadd.f32 0.0, %v5807
        %v5809 = vpop.f32.mrf.mxu0
        %5810 = vmatprep.mubr.f32.mxu0 %v5564
        %5811 = vmatmul.mubr.f32.gmra.mxu0 %v5563
        %v5812 = vpop.f32.mrf.mxu0
        %v5813 = vadd.f32 0.0, %v5812
        %v5814 = vpop.f32.mrf.mxu0
        %5815 = vmatprep.mubr.f32.mxu0 %v5568
        %5816 = vmatmul.mubr.f32.gmra.mxu0 %v5567
        %v5817 = vpop.f32.mrf.mxu0
        %v5818 = vadd.f32 0.0, %v5817
        %v5819 = vpop.f32.mrf.mxu0
        %5820 = vmatprep.mubr.f32.mxu0 %v5572
        %5821 = vmatmul.mubr.f32.gmra.mxu0 %v5571
        %v5822 = vpop.f32.mrf.mxu0
        %v5823 = vadd.f32 0.0, %v5822
        %v5824 = vpop.f32.mrf.mxu0
        %5825 = vmatprep.mubr.f32.mxu0 %v5576
        %5826 = vmatmul.mubr.f32.gmra.mxu0 %v5575
        %v5827 = vpop.f32.mrf.mxu0
        %v5828 = vadd.f32 0.0, %v5827
        %v5829 = vpop.f32.mrf.mxu0
        %5830 = vmatprep.mubr.f32.mxu0 %v5580
        %5831 = vmatmul.mubr.f32.gmra.mxu0 %v5579
        %v5832 = vpop.f32.mrf.mxu0
        %v5833 = vadd.f32 0.0, %v5832
        %v5834 = vpop.f32.mrf.mxu0
        %5835 = vmatprep.mubr.f32.mxu0 %v5584
        %5836 = vmatmul.mubr.f32.gmra.mxu0 %v5583
        %v5837 = vpop.f32.mrf.mxu0
        %v5838 = vadd.f32 0.0, %v5837
        %v5839 = vpop.f32.mrf.mxu0
        %5840 = vdwg.mxu0
        %5841 = vmatprep.subr.mxu0 0.0
        %5842 = vmatpush1.msra.mxu0 %v5634
        %5843 = vmatprep.subr.mxu0 0.0
        %5844 = vmatpush1.msra.mxu0 %v5633
        %5845 = vmatprep.subr.mxu0 0.0
        %5846 = vmatpush1.msra.mxu0 %v5632
        %5847 = vmatprep.subr.mxu0 0.0
        %5848 = vmatpush1.msra.mxu0 %v5631
        %5849 = vmatprep.subr.mxu0 0.0
        %5850 = vmatpush1.msra.mxu0 %v5630
        %5851 = vmatprep.subr.mxu0 0.0
        %5852 = vmatpush1.msra.mxu0 %v5629
        %5853 = vmatprep.subr.mxu0 0.0
        %5854 = vmatpush1.msra.mxu0 %v5628
        %5855 = vmatprep.subr.mxu0 0.0
        %5856 = vmatpush1.msra.mxu0 %v5627
        %5857 = vmatprep.subr.mxu0 0.0
        %5858 = vmatpush1.msra.mxu0 %v5626
        %5859 = vmatprep.subr.mxu0 0.0
        %5860 = vmatpush1.msra.mxu0 %v5625
        %5861 = vmatprep.subr.mxu0 0.0
        %5862 = vmatpush1.msra.mxu0 %v5624
        %5863 = vmatprep.subr.mxu0 0.0
        %5864 = vmatpush1.msra.mxu0 %v5623
        %5865 = vmatprep.subr.mxu0 0.0
        %5866 = vmatpush1.msra.mxu0 %v5622
        %5867 = vmatprep.subr.mxu0 0.0
        %5868 = vmatpush1.msra.mxu0 %v5621
        %5869 = vmatprep.subr.mxu0 0.0
        %5870 = vmatpush1.msra.mxu0 %v5620
        %5871 = vmatprep.subr.mxu0 0.0
        %5872 = vmatpush1.msra.mxu0 %v5619
        %5873 = vmatprep.subr.mxu0 0.0
        %5874 = vmatpush2.msra.mxu0 %v5650
        %5875 = vmatprep.subr.mxu0 0.0
        %5876 = vmatpush2.msra.mxu0 %v5649
        %5877 = vmatprep.subr.mxu0 0.0
        %5878 = vmatpush2.msra.mxu0 %v5648
        %5879 = vmatprep.subr.mxu0 0.0
        %5880 = vmatpush2.msra.mxu0 %v5647
        %5881 = vmatprep.subr.mxu0 0.0
        %5882 = vmatpush2.msra.mxu0 %v5646
        %5883 = vmatprep.subr.mxu0 0.0
        %5884 = vmatpush2.msra.mxu0 %v5645
        %5885 = vmatprep.subr.mxu0 0.0
        %5886 = vmatpush2.msra.mxu0 %v5644
        %5887 = vmatprep.subr.mxu0 0.0
        %5888 = vmatpush2.msra.mxu0 %v5643
        %5889 = vmatprep.subr.mxu0 0.0
        %5890 = vmatpush2.msra.mxu0 %v5642
        %5891 = vmatprep.subr.mxu0 0.0
        %5892 = vmatpush2.msra.mxu0 %v5641
        %5893 = vmatprep.subr.mxu0 0.0
        %5894 = vmatpush2.msra.mxu0 %v5640
        %5895 = vmatprep.subr.mxu0 0.0
        %5896 = vmatpush2.msra.mxu0 %v5639
        %5897 = vmatprep.subr.mxu0 0.0
        %5898 = vmatpush2.msra.mxu0 %v5638
        %5899 = vmatprep.subr.mxu0 0.0
        %5900 = vmatpush2.msra.mxu0 %v5637
        %5901 = vmatprep.subr.mxu0 0.0
        %5902 = vmatpush2.msra.mxu0 %v5636
        %5903 = vmatprep.subr.mxu0 0.0
        %5904 = vmatpush2.msra.mxu0 %v5635
        %5905 = vmatprep.mubr.f32.mxu0 %v5490
        %5906 = vmatmul.mubr.f32.gmra.mxu0 %v5489
        %v5907 = vpop.f32.mrf.mxu0
        %v5908 = vadd.f32 %v5718, %v5907
        %v5909 = vpop.f32.mrf.mxu0
        %5910 = vmatprep.mubr.f32.mxu0 %v5494
        %5911 = vmatmul.mubr.f32.gmra.mxu0 %v5493
        %v5912 = vpop.f32.mrf.mxu0
        %v5913 = vadd.f32 %v5723, %v5912
        %v5914 = vpop.f32.mrf.mxu0
        %5915 = vmatprep.mubr.f32.mxu0 %v5498
        %5916 = vmatmul.mubr.f32.gmra.mxu0 %v5497
        %v5917 = vpop.f32.mrf.mxu0
        %v5918 = vadd.f32 %v5728, %v5917
        %v5919 = vpop.f32.mrf.mxu0
        %5920 = vmatprep.mubr.f32.mxu0 %v5502
        %5921 = vmatmul.mubr.f32.gmra.mxu0 %v5501
        %v5922 = vpop.f32.mrf.mxu0
        %v5923 = vadd.f32 %v5733, %v5922
        %v5924 = vpop.f32.mrf.mxu0
        %5925 = vmatprep.mubr.f32.mxu0 %v5506
        %5926 = vmatmul.mubr.f32.gmra.mxu0 %v5505
        %v5927 = vpop.f32.mrf.mxu0
        %v5928 = vadd.f32 %v5738, %v5927
        %v5929 = vpop.f32.mrf.mxu0
        %5930 = vmatprep.mubr.f32.mxu0 %v5510
        %5931 = vmatmul.mubr.f32.gmra.mxu0 %v5509
        %v5932 = vpop.f32.mrf.mxu0
        %v5933 = vadd.f32 %v5743, %v5932
        %v5934 = vpop.f32.mrf.mxu0
        %5935 = vmatprep.mubr.f32.mxu0 %v5514
        %5936 = vmatmul.mubr.f32.gmra.mxu0 %v5513
        %v5937 = vpop.f32.mrf.mxu0
        %v5938 = vadd.f32 %v5748, %v5937
        %v5939 = vpop.f32.mrf.mxu0
        %5940 = vmatprep.mubr.f32.mxu0 %v5518
        %5941 = vmatmul.mubr.f32.gmra.mxu0 %v5517
        %v5942 = vpop.f32.mrf.mxu0
        %v5943 = vadd.f32 %v5753, %v5942
        %v5944 = vpop.f32.mrf.mxu0
        %5945 = vmatprep.mubr.f32.mxu0 %v5522
        %5946 = vmatmul.mubr.f32.gmra.mxu0 %v5521
        %v5947 = vpop.f32.mrf.mxu0
        %v5948 = vadd.f32 %v5758, %v5947
        %v5949 = vpop.f32.mrf.mxu0
        %5950 = vmatprep.mubr.f32.mxu0 %v5526
        %5951 = vmatmul.mubr.f32.gmra.mxu0 %v5525
        %v5952 = vpop.f32.mrf.mxu0
        %v5953 = vadd.f32 %v5763, %v5952
        %v5954 = vpop.f32.mrf.mxu0
        %5955 = vmatprep.mubr.f32.mxu0 %v5530
        %5956 = vmatmul.mubr.f32.gmra.mxu0 %v5529
        %v5957 = vpop.f32.mrf.mxu0
        %v5958 = vadd.f32 %v5768, %v5957
        %v5959 = vpop.f32.mrf.mxu0
        %5960 = vmatprep.mubr.f32.mxu0 %v5534
        %5961 = vmatmul.mubr.f32.gmra.mxu0 %v5533
        %v5962 = vpop.f32.mrf.mxu0
        %v5963 = vadd.f32 %v5773, %v5962
        %v5964 = vpop.f32.mrf.mxu0
        %5965 = vmatprep.mubr.f32.mxu0 %v5538
        %5966 = vmatmul.mubr.f32.gmra.mxu0 %v5537
        %v5967 = vpop.f32.mrf.mxu0
        %v5968 = vadd.f32 %v5778, %v5967
        %v5969 = vpop.f32.mrf.mxu0
        %5970 = vmatprep.mubr.f32.mxu0 %v5542
        %5971 = vmatmul.mubr.f32.gmra.mxu0 %v5541
        %v5972 = vpop.f32.mrf.mxu0
        %v5973 = vadd.f32 %v5783, %v5972
        %v5974 = vpop.f32.mrf.mxu0
        %5975 = vmatprep.mubr.f32.mxu0 %v5546
        %5976 = vmatmul.mubr.f32.gmra.mxu0 %v5545
        %v5977 = vpop.f32.mrf.mxu0
        %v5978 = vadd.f32 %v5788, %v5977
        %v5979 = vpop.f32.mrf.mxu0
        %5980 = vmatprep.mubr.f32.mxu0 %v5550
        %5981 = vmatmul.mubr.f32.gmra.mxu0 %v5549
        %v5982 = vpop.f32.mrf.mxu0
        %v5983 = vadd.f32 %v5793, %v5982
        %v5984 = vpop.f32.mrf.mxu0
        %5985 = vmatprep.mubr.f32.mxu0 %v5554
        %5986 = vmatmul.mubr.f32.gmra.mxu0 %v5553
        %v5987 = vpop.f32.mrf.mxu0
        %v5988 = vadd.f32 %v5798, %v5987
        %v5989 = vpop.f32.mrf.mxu0
        %5990 = vmatprep.mubr.f32.mxu0 %v5558
        %5991 = vmatmul.mubr.f32.gmra.mxu0 %v5557
        %v5992 = vpop.f32.mrf.mxu0
        %v5993 = vadd.f32 %v5803, %v5992
        %v5994 = vpop.f32.mrf.mxu0
        %5995 = vmatprep.mubr.f32.mxu0 %v5562
        %5996 = vmatmul.mubr.f32.gmra.mxu0 %v5561
        %v5997 = vpop.f32.mrf.mxu0
        %v5998 = vadd.f32 %v5808, %v5997
        %v5999 = vpop.f32.mrf.mxu0
        %6000 = vmatprep.mubr.f32.mxu0 %v5566
        %6001 = vmatmul.mubr.f32.gmra.mxu0 %v5565
        %v6002 = vpop.f32.mrf.mxu0
        %v6003 = vadd.f32 %v5813, %v6002
        %v6004 = vpop.f32.mrf.mxu0
        %6005 = vmatprep.mubr.f32.mxu0 %v5570
        %6006 = vmatmul.mubr.f32.gmra.mxu0 %v5569
        %v6007 = vpop.f32.mrf.mxu0
        %v6008 = vadd.f32 %v5818, %v6007
        %v6009 = vpop.f32.mrf.mxu0
        %6010 = vmatprep.mubr.f32.mxu0 %v5574
        %6011 = vmatmul.mubr.f32.gmra.mxu0 %v5573
        %v6012 = vpop.f32.mrf.mxu0
        %v6013 = vadd.f32 %v5823, %v6012
        %v6014 = vpop.f32.mrf.mxu0
        %6015 = vmatprep.mubr.f32.mxu0 %v5578
        %6016 = vmatmul.mubr.f32.gmra.mxu0 %v5577
        %v6017 = vpop.f32.mrf.mxu0
        %v6018 = vadd.f32 %v5828, %v6017
        %v6019 = vpop.f32.mrf.mxu0
        %6020 = vmatprep.mubr.f32.mxu0 %v5582
        %6021 = vmatmul.mubr.f32.gmra.mxu0 %v5581
        %v6022 = vpop.f32.mrf.mxu0
        %v6023 = vadd.f32 %v5833, %v6022
        %v6024 = vpop.f32.mrf.mxu0
        %6025 = vmatprep.mubr.f32.mxu0 %v5586
        %6026 = vmatmul.mubr.f32.gmra.mxu0 %v5585
        %v6027 = vpop.f32.mrf.mxu0
        %v6028 = vadd.f32 %v5838, %v6027
        %v6029 = vpop.f32.mrf.mxu0
        %6030 = vdwg.mxu0
        %v6031 = vld [vmem:[#allocation11] sm:$0x1]
        %v6033 = vlaneseq
        %v6034 = vshrl.u32 %v6033, 7
        %v6035 = vsub.s32 0, %v6034
        %v6036 = vrot.slane %v6031, %v6035
        %v6038 = vmul.f32 %v5908, %v6036
        %v6039 = vmul.f32 %v5913, %v6036
        %v6040 = vmul.f32 %v5918, %v6036
        %v6041 = vmul.f32 %v5923, %v6036
        %v6042 = vmul.f32 %v5928, %v6036
        %v6043 = vmul.f32 %v5933, %v6036
        %v6044 = vmul.f32 %v5938, %v6036
        %v6045 = vmul.f32 %v5943, %v6036
        %v6046 = vmul.f32 %v5948, %v6036
        %v6047 = vmul.f32 %v5953, %v6036
        %v6048 = vmul.f32 %v5958, %v6036
        %v6049 = vmul.f32 %v5963, %v6036
        %v6050 = vmul.f32 %v5968, %v6036
        %v6051 = vmul.f32 %v5973, %v6036
        %v6052 = vmul.f32 %v5978, %v6036
        %v6053 = vmul.f32 %v5983, %v6036
        %v6054 = vmul.f32 %v5988, %v6036
        %v6055 = vmul.f32 %v5993, %v6036
        %v6056 = vmul.f32 %v5998, %v6036
        %v6057 = vmul.f32 %v6003, %v6036
        %v6058 = vmul.f32 %v6008, %v6036
        %v6059 = vmul.f32 %v6013, %v6036
        %v6060 = vmul.f32 %v6018, %v6036
        %v6061 = vmul.f32 %v6023, %v6036
        %v6062 = vmul.f32 %v6028, %v6036
        %v6063 = vld [vmem:[#allocation13] sm:$0x1]
        %v6065 = vlaneseq
        %v6066 = vshrl.u32 %v6065, 7
        %v6067 = vsub.s32 0, %v6066
        %v6068 = vrot.slane %v6063, %v6067
        %v6070 = vadd.f32 %v6038, %v6068
        %v6071 = vadd.f32 %v6039, %v6068
        %v6072 = vadd.f32 %v6040, %v6068
        %v6073 = vadd.f32 %v6041, %v6068
        %v6074 = vadd.f32 %v6042, %v6068
        %v6075 = vadd.f32 %v6043, %v6068
        %v6076 = vadd.f32 %v6044, %v6068
        %v6077 = vadd.f32 %v6045, %v6068
        %v6078 = vadd.f32 %v6046, %v6068
        %v6079 = vadd.f32 %v6047, %v6068
        %v6080 = vadd.f32 %v6048, %v6068
        %v6081 = vadd.f32 %v6049, %v6068
        %v6082 = vadd.f32 %v6050, %v6068
        %v6083 = vadd.f32 %v6051, %v6068
        %v6084 = vadd.f32 %v6052, %v6068
        %v6085 = vadd.f32 %v6053, %v6068
        %v6086 = vadd.f32 %v6054, %v6068
        %v6087 = vadd.f32 %v6055, %v6068
        %v6088 = vadd.f32 %v6056, %v6068
        %v6089 = vadd.f32 %v6057, %v6068
        %v6090 = vadd.f32 %v6058, %v6068
        %v6091 = vadd.f32 %v6059, %v6068
        %v6092 = vadd.f32 %v6060, %v6068
        %v6093 = vadd.f32 %v6061, %v6068
        %v6094 = vadd.f32 %v6062, %v6068
        %v6095 = vmax.f32 %v6070, 0.0
        %v6096 = vmax.f32 %v6071, 0.0
        %v6097 = vmax.f32 %v6072, 0.0
        %v6098 = vmax.f32 %v6073, 0.0
        %v6099 = vmax.f32 %v6074, 0.0
        %v6100 = vmax.f32 %v6075, 0.0
        %v6101 = vmax.f32 %v6076, 0.0
        %v6102 = vmax.f32 %v6077, 0.0
        %v6103 = vmax.f32 %v6078, 0.0
        %v6104 = vmax.f32 %v6079, 0.0
        %v6105 = vmax.f32 %v6080, 0.0
        %v6106 = vmax.f32 %v6081, 0.0
        %v6107 = vmax.f32 %v6082, 0.0
        %v6108 = vmax.f32 %v6083, 0.0
        %v6109 = vmax.f32 %v6084, 0.0
        %v6110 = vmax.f32 %v6085, 0.0
        %v6111 = vmax.f32 %v6086, 0.0
        %v6112 = vmax.f32 %v6087, 0.0
        %v6113 = vmax.f32 %v6088, 0.0
        %v6114 = vmax.f32 %v6089, 0.0
        %v6115 = vmax.f32 %v6090, 0.0
        %v6116 = vmax.f32 %v6091, 0.0
        %v6117 = vmax.f32 %v6092, 0.0
        %v6118 = vmax.f32 %v6093, 0.0
        %v6119 = vmax.f32 %v6094, 0.0
        %6120 = vst [vmem:[%s376] sm:$0xff] %v6095
        %6121 = vst [vmem:[%s376 + $0x8] sm:$0xff] %v6096
        %6122 = vst [vmem:[%s376 + $0x10] sm:$0xff] %v6097
        %6123 = vst [vmem:[%s376 + $0x18] sm:$0xff] %v6098
        %6124 = vst [vmem:[%s376 + $0x20] sm:$0xff] %v6099
        %6125 = vst [vmem:[%s376 + $0x28] sm:$0xff] %v6100
        %6126 = vst [vmem:[%s376 + $0x30] sm:$0xff] %v6101
        %6127 = vst [vmem:[%s376 + $0x38] sm:$0xff] %v6102
        %6128 = vst [vmem:[%s376 + $0x40] sm:$0xff] %v6103
        %6129 = vst [vmem:[%s376 + $0x48] sm:$0xff] %v6104
        %6130 = vst [vmem:[%s376 + $0x50] sm:$0xff] %v6105
        %6131 = vst [vmem:[%s376 + $0x58] sm:$0xff] %v6106
        %6132 = vst [vmem:[%s376 + $0x60] sm:$0xff] %v6107
        %6133 = vst [vmem:[%s376 + $0x68] sm:$0xff] %v6108
        %6134 = vst [vmem:[%s376 + $0x70] sm:$0xff] %v6109
        %6135 = vst [vmem:[%s376 + $0x78] sm:$0xff] %v6110
        %6136 = vst [vmem:[%s376 + $0x80] sm:$0xff] %v6111
        %6137 = vst [vmem:[%s376 + $0x88] sm:$0xff] %v6112
        %6138 = vst [vmem:[%s376 + $0x90] sm:$0xff] %v6113
        %6139 = vst [vmem:[%s376 + $0x98] sm:$0xff] %v6114
        %6140 = vst [vmem:[%s376 + $0xa0] sm:$0xff] %v6115
        %6141 = vst [vmem:[%s376 + $0xa8] sm:$0xff] %v6116
        %6142 = vst [vmem:[%s376 + $0xb0] sm:$0xff] %v6117
        %6143 = vst [vmem:[%s376 + $0xb8] sm:$0xff] %v6118
        %6144 = vst [vmem:[%s376 + $0xc0] sm:$0xff] %v6119
        %s6145 = sand.u32 %s187, 1
        %s6146 = scalar_lea.sflag [#allocation4], %s6145
        %s6147 = sand.u32 %s187, 1
        %s6148 = smul.addr %s6147, 200
        %s6149 = scalar_lea.vmem [#allocation14], %s6148
        // Predicated region
        $region77: #{tpu_custom_call.1} parent=47 // pred_check
          %p6150 = pneg %p197
        $region78: #{tpu_custom_call.1} parent=47 // pred_check_branch
          %6152 = sbr.rel (%p6150) target = $region80
        $region79: #{tpu_custom_call.1} parent=47 // pred_region
          %s6153 = smul.u32 25, %s27
          %s6155 = ssub.s32 3200, 3200
          %6156 = vsyncadd %s6146, %s6155
          %s6157 = smul.addr %s6153, 128
          %s6158 = scalar_lea.hbm %s7, %s6157
          %s6159 = sshll.u32 %s6149, 4
          %s6160 = int_to_ptr.vmem [resolvable:$true] %s6159
          %6165 = dma.vmem_to_hbm [thread:$0]  %s6160, 3200, %s6158, %s6146, 128, 128, 8
        $region80: #{tpu_custom_call.1} parent=47 // pred_fallthru
          _
      $region48: #{tpu_custom_call.1} parent=5 // pred_fallthru
        _
      %p6166 = scmp.le.s32.totalorder 2, %s22
      // Predicated region
      $region81: #{tpu_custom_call.1} parent=5 // pred_check
        %p6167 = pneg %p6166
      $region82: #{tpu_custom_call.1} parent=5 // pred_check_branch
        %6169 = sbr.rel (%p6167) target = $region84
      $region83: #{tpu_custom_call.1} parent=5 // pred_region
        %s6170 = ssub.s32 %s22, 2
        // Predicated region
        $region85: #{tpu_custom_call.1} parent=83 // pred_check
          %p6171 = pneg %p203
        $region86: #{tpu_custom_call.1} parent=83 // pred_check_branch
          %6173 = sbr.rel (%p6171) target = $region88
        $region87: #{tpu_custom_call.1} parent=83 // pred_region
          %s6174 = sand.u32 %s188, 1
          %s6175 = scalar_lea.sflag [#allocation4], %s6174
          %s6176 = sand.u32 %s188, 1
          %s6177 = smul.addr %s6176, 200
          %s6178 = scalar_lea.vmem [#allocation14], %s6177
          %6179 = dma.done %s6175, 3200
        $region88: #{tpu_custom_call.1} parent=83 // pred_fallthru
          _
      $region84: #{tpu_custom_call.1} parent=5 // pred_fallthru
        _
    $region6: #{tpu_custom_call.1} parent=1 // loop_footer
      %s26 = sadd.s32 1, %s22
    $region7: #{tpu_custom_call.1} parent=1 // loop_footer_branch
      %21 = sbr.rel target = $region3
    $region8: #{tpu_custom_call.1} parent=1 // loop_exit
      _
    %6180 = vsyncpa [#allocation3], 1
    %s6181 = scalar_lea.sflag [#allocation3], 1
    %6182 = vsyncpa %s6181, 1
    %6183 = vsyncpa [#allocation6], 1
    %6184 = vsyncpa [#allocation9], 1
    %6185 = vsyncpa [#allocation12], 1
    %6186 = vsyncpa [#allocation4], 1
    %s6187 = scalar_lea.sflag [#allocation4], 1
    %6188 = vsyncpa %s6187, 1

</llo_original>
